<compile_context>
chip_gen: v6e
topology: v6e:2x2x1
jax: 0.10.0
libtpu: 0.0.40
codegen_flags: <defaults>
</compile_context>

<pallas_src>
import functools

import jax
import jax.numpy as jnp
from jax.experimental import pallas as pl
from jax.experimental.pallas import tpu as pltpu

EPS = 1e-5      # torch.nn.BatchNorm2d default eps
LANE = 128      # channel (lane) padding; keep 128 per perf review


def _round_up(n, m):
    return ((n + m - 1) // m) * m


def _prod(t):
    r = 1
    for v in t:
        r *= int(v)
    return r


def _vmem_limit(block_bytes):
    """Generation-aware VMEM budget (blocks are double-buffered by Pallas)."""
    try:
        cap = getattr(pltpu.get_tpu_info(), "vmem_capacity_bytes", 64 << 20)
    except Exception:
        cap = 64 << 20
    budget = int(0.5 * cap)               # ~32 MiB on v7x, ~64 MiB on v5e/v6e
    need = 2 * block_bytes + (2 << 20)
    return int(min(max(need, 8 << 20), budget))


def _bn_affine(st, g, b, inv_m):
    """Finalize BN affine from partial stats rows.

    st: (R, 8, C) f32; row 0 = partial sum, row 1 = partial sum of squares.
    Returns (a, b) of shape (1, C) such that bn(x) = a * x + b.
    """
    s = jnp.sum(st[:, 0:1, :], axis=0)              # (1, C)
    ss = jnp.sum(st[:, 1:2, :], axis=0)             # (1, C)
    mu = s * inv_m
    var = jnp.maximum(ss * inv_m - mu * mu, 0.0)    # guard cancellation
    a = g * jax.lax.rsqrt(var + EPS)
    return a, b - a * mu


def _emit_y_stats(acc, y_ref, st_ref, pad_out, Ho, Wo):
    """Store the conv result (optionally in spatially padded layout) + stats."""
    Co = acc.shape[-1]
    s = jnp.sum(acc, axis=0, keepdims=True)         # (1, Co)
    ss = jnp.sum(acc * acc, axis=0, keepdims=True)  # (1, Co)
    rows = jax.lax.broadcasted_iota(jnp.int32, (8, Co), 0)
    st_ref[0] = jnp.where(rows == 0, s, jnp.where(rows == 1, ss, 0.0))
    y = acc.astype(y_ref.dtype).reshape(Ho, Wo, Co)
    if pad_out:
        y_ref[...] = jnp.zeros(y_ref.shape, y_ref.dtype)
        y_ref[0, pl.ds(1, Ho), pl.ds(1, Wo), :] = y
    else:
        y_ref[0] = y


# ---------------------------------------------------------------------------
# Pass 1: conv (in-kernel halo im2col or prebuilt patches) + BN partial stats.
# Optionally fuses the previous layer's BN affine + ReLU on the input taps and
# a 1x1 projection-shortcut matmul.
# ---------------------------------------------------------------------------
def _conv_pass1_kernel(*refs, mode, Ho, Wo, in_affine, inv_m, pad_out, has_sc):
    it = iter(refs)
    x_ref = next(it)
    if in_affine:
        st_in_ref = next(it)
        g_in_ref = next(it)
        b_in_ref = next(it)
    w_ref = next(it)
    if has_sc:
        xsc_ref = next(it)
        wsc_ref = next(it)
    y_ref = next(it)
    st_ref = next(it)
    if has_sc:
        ysc_ref = next(it)
        stsc_ref = next(it)

    Ci = x_ref.shape[-1]

    if in_affine:
        a_in, b_in = _bn_affine(st_in_ref[...], g_in_ref[...], b_in_ref[...],
                                inv_m)
        a_in = a_in.reshape(1, 1, Ci)
        b_in = b_in.reshape(1, 1, Ci)
        hi = jax.lax.broadcasted_iota(jnp.int32, (Ho, Wo, Ci), 0)
        wi = jax.lax.broadcasted_iota(jnp.int32, (Ho, Wo, Ci), 1)

    def tap(t):
        if mode != "halo":
            return x_ref[0, t]                               # (Ho*Wo, Ci)
        kh, kw = t // 3, t % 3
        v = x_ref[0, kh:kh + Ho, kw:kw + Wo, :]              # (Ho, Wo, Ci)
        if in_affine:
            # previous layer's BN + ReLU, fused; the zero-padded border of the
            # previous activation must stay exactly zero after the affine.
            v = jnp.maximum(v.astype(jnp.float32) * a_in + b_in, 0.0)
            conds = []
            if kh == 0:
                conds.append(hi > 0)
            elif kh == 2:
                conds.append(hi < Ho - 1)
            if kw == 0:
                conds.append(wi > 0)
            elif kw == 2:
                conds.append(wi < Wo - 1)
            if conds:
                keep = conds[0]
                for c in conds[1:]:
                    keep = keep & c
                v = jnp.where(keep, v, 0.0)
            v = v.astype(jnp.bfloat16)
        return v.reshape(Ho * Wo, Ci)

    acc = jnp.dot(tap(0), w_ref[0], preferred_element_type=jnp.float32)
    for t in range(1, 9):
        acc = acc + jnp.dot(tap(t), w_ref[t],
                            preferred_element_type=jnp.float32)
    _emit_y_stats(acc, y_ref, st_ref, pad_out, Ho, Wo)

    if has_sc:
        acc_sc = jnp.dot(xsc_ref[0], wsc_ref[...],
                         preferred_element_type=jnp.float32)
        _emit_y_stats(acc_sc, ysc_ref, stsc_ref, False, Ho, Wo)


def conv_pass1(x, w, *, mode, Ho, Wo, pad_out, stats_in=None, g_in=None,
               b_in=None, xsc=None, wsc=None, inv_m=0.0):
    N = x.shape[0]
    in_affine = stats_in is not None
    has_sc = xsc is not None
    Co = w.shape[-1]

    inputs, in_specs = [], []
    out_shape, out_specs = [], []
    bb = 0

    def add_in(arr, block, imap):
        nonlocal bb
        inputs.append(arr)
        in_specs.append(pl.BlockSpec(block, imap))
        bb += _prod(block) * arr.dtype.itemsize

    def add_out(shape, dtype, block, imap):
        nonlocal bb
        out_shape.append(jax.ShapeDtypeStruct(shape, dtype))
        out_specs.append(pl.BlockSpec(block, imap))
        bb += _prod(block) * jnp.dtype(dtype).itemsize

    if mode == "halo":
        Hp, Wp, Ci = x.shape[1], x.shape[2], x.shape[3]
        add_in(x, (1, Hp, Wp, Ci), lambda i: (i, 0, 0, 0))
    else:
        Ci = x.shape[3]
        add_in(x, (1, 9, Ho * Wo, Ci), lambda i: (i, 0, 0, 0))
    if in_affine:
        add_in(stats_in, tuple(stats_in.shape), lambda i: (0, 0, 0))
        add_in(g_in, (1, Ci), lambda i: (0, 0))
        add_in(b_in, (1, Ci), lambda i: (0, 0))
    add_in(w, tuple(w.shape), lambda i: (0, 0, 0))
    if has_sc:
        add_in(xsc, (1, Ho * Wo, xsc.shape[2]), lambda i: (i, 0, 0))
        add_in(wsc, tuple(wsc.shape), lambda i: (0, 0))

    if pad_out:
        add_out((N, Ho + 2, Wo + 2, Co), jnp.bfloat16,
                (1, Ho + 2, Wo + 2, Co), lambda i: (i, 0, 0, 0))
    else:
        add_out((N, Ho, Wo, Co), jnp.bfloat16,
                (1, Ho, Wo, Co), lambda i: (i, 0, 0, 0))
    add_out((N, 8, Co), jnp.float32, (1, 8, Co), lambda i: (i, 0, 0))
    if has_sc:
        add_out((N, Ho, Wo, Co), jnp.bfloat16,
                (1, Ho, Wo, Co), lambda i: (i, 0, 0, 0))
        add_out((N, 8, Co), jnp.float32, (1, 8, Co), lambda i: (i, 0, 0))

    kernel = functools.partial(
        _conv_pass1_kernel, mode=mode, Ho=Ho, Wo=Wo, in_affine=in_affine,
        inv_m=inv_m, pad_out=pad_out, has_sc=has_sc)

    return pl.pallas_call(
        kernel,
        out_shape=tuple(out_shape),
        grid=(N,),
        in_specs=in_specs,
        out_specs=tuple(out_specs),
        compiler_params=pltpu.CompilerParams(
            dimension_semantics=("parallel",),
            vmem_limit_bytes=_vmem_limit(bb)),
    )(*inputs)


# ---------------------------------------------------------------------------
# Pass 2: bn2 affine (finalized in-kernel) + residual (identity or bn-affined
# projection) + ReLU.
# ---------------------------------------------------------------------------
def _bn_add_relu_kernel(*refs, Ho, Wo, inv_m, res_bn):
    it = iter(refs)
    y_ref = next(it)
    st_ref = next(it)
    g_ref = next(it)
    b_ref = next(it)
    r_ref = next(it)
    if res_bn:
        rst_ref = next(it)
        rg_ref = next(it)
        rb_ref = next(it)
    o_ref = next(it)

    Co = y_ref.shape[-1]
    a2, b2 = _bn_affine(st_ref[...], g_ref[...], b_ref[...], inv_m)
    out = (y_ref[0].astype(jnp.float32) * a2.reshape(1, 1, Co)
           + b2.reshape(1, 1, Co))
    if res_bn:
        ar, br = _bn_affine(rst_ref[...], rg_ref[...], rb_ref[...], inv_m)
        res = (r_ref[0].astype(jnp.float32) * ar.reshape(1, 1, Co)
               + br.reshape(1, 1, Co))
    else:
        # identity shortcut: residual is the interior of the spatially padded x
        res = r_ref[0, pl.ds(1, Ho), pl.ds(1, Wo), :].astype(jnp.float32)
    o_ref[0] = jnp.maximum(out + res, 0.0).astype(o_ref.dtype)


def bn_add_relu(y, stats, g, b, res, *, res_stats=None, res_g=None, res_b=None,
                inv_m, Ho, Wo):
    N, _, _, Co = y.shape
    res_bn = res_stats is not None

    inputs = [y, stats, g, b, res]
    in_specs = [
        pl.BlockSpec((1, Ho, Wo, Co), lambda i: (i, 0, 0, 0)),
        pl.BlockSpec(tuple(stats.shape), lambda i: (0, 0, 0)),
        pl.BlockSpec((1, Co), lambda i: (0, 0)),
        pl.BlockSpec((1, Co), lambda i: (0, 0)),
        pl.BlockSpec((1,) + tuple(res.shape[1:]), lambda i: (i, 0, 0, 0)),
    ]
    bb = (2 * Ho * Wo * Co * 2 + _prod(stats.shape) * 4 + 2 * Co * 4
          + _prod(res.shape[1:]) * res.dtype.itemsize)
    if res_bn:
        inputs += [res_stats, res_g, res_b]
        in_specs += [pl.BlockSpec(tuple(res_stats.shape), lambda i: (0, 0, 0)),
                     pl.BlockSpec((1, Co), lambda i: (0, 0)),
                     pl.BlockSpec((1, Co), lambda i: (0, 0))]
        bb += _prod(res_stats.shape) * 4 + 2 * Co * 4

    kernel = functools.partial(_bn_add_relu_kernel, Ho=Ho, Wo=Wo,
                               inv_m=inv_m, res_bn=res_bn)
    return pl.pallas_call(
        kernel,
        out_shape=jax.ShapeDtypeStruct((N, Ho, Wo, Co), jnp.bfloat16),
        grid=(N,),
        in_specs=in_specs,
        out_specs=pl.BlockSpec((1, Ho, Wo, Co), lambda i: (i, 0, 0, 0)),
        compiler_params=pltpu.CompilerParams(
            dimension_semantics=("parallel",),
            vmem_limit_bytes=_vmem_limit(bb)),
    )(*inputs)


# ---------------------------------------------------------------------------
# Glue: weight / parameter prep, XLA im2col fallback for the strided conv1.
# ---------------------------------------------------------------------------
def _prep_w3x3(w_oihw, ci_pad, co_pad):
    co, ci = w_oihw.shape[0], w_oihw.shape[1]
    w = jnp.transpose(w_oihw, (2, 3, 1, 0)).reshape(9, ci, co)
    w = jnp.pad(w, ((0, 0), (0, ci_pad - ci), (0, co_pad - co)))
    return w.astype(jnp.bfloat16)


def _prep_w1x1(w_oi11, ci_pad, co_pad):
    co, ci = w_oi11.shape[0], w_oi11.shape[1]
    w = jnp.pad(w_oi11.reshape(co, ci).T, ((0, ci_pad - ci), (0, co_pad - co)))
    return w.astype(jnp.bfloat16)


def _pad_vec(v, c_pad):
    return jnp.pad(v.astype(jnp.float32), (0, c_pad - v.shape[0])).reshape(1, c_pad)


def _im2col_taps(xp, Ho, Wo, stride):
    """xp: (N, H+2, W+2, Ci) padded NHWC.  Returns (N, 9, Ho*Wo, Ci)."""
    N, _, _, Ci = xp.shape
    cols = [xp[:, kh:kh + stride * (Ho - 1) + 1:stride,
               kw:kw + stride * (Wo - 1) + 1:stride, :]
            for kh in range(3) for kw in range(3)]
    return jnp.stack(cols, axis=1).reshape(N, 9, Ho * Wo, Ci)


def init_params(key, in_planes, planes, stride):
    ks = jax.random.split(key, 8)
    params = {
        "w1": jax.random.normal(ks[0], (planes, in_planes, 3, 3), jnp.float32) * 0.1,
        "g1": 1.0 + 0.1 * jax.random.normal(ks[1], (planes,), jnp.float32),
        "b1": 0.1 * jax.random.normal(ks[2], (planes,), jnp.float32),
        "w2": jax.random.normal(ks[3], (planes, planes, 3, 3), jnp.float32) * 0.1,
        "g2": 1.0 + 0.1 * jax.random.normal(ks[4], (planes,), jnp.float32),
        "b2": 0.1 * jax.random.normal(ks[5], (planes,), jnp.float32),
    }
    if stride != 1 or in_planes != planes:
        params["wsc"] = jax.random.normal(ks[6], (planes, in_planes, 1, 1),
                                          jnp.float32) * 0.1
        params["gsc"] = 1.0 + 0.05 * jax.random.normal(ks[7], (planes,), jnp.float32)
        params["bsc"] = jnp.zeros((planes,), jnp.float32) + 0.01
    return params


# ---------------------------------------------------------------------------
# Full BasicBlock forward.
# ---------------------------------------------------------------------------
def basic_block_forward(x_nchw, params, stride):
    N, cin, H, W = x_nchw.shape
    planes = params["w1"].shape[0]
    Ho = (H - 1) // stride + 1
    Wo = (W - 1) // stride + 1
    Cp = _round_up(planes, LANE)
    Cin_p = _round_up(cin, LANE)
    inv_m = 1.0 / (N * Ho * Wo)

    # NCHW -> NHWC bf16, channel pad, +1 spatial halo pad (one fused XLA pass).
    x = jnp.transpose(x_nchw, (0, 2, 3, 1)).astype(jnp.bfloat16)
    xp = jnp.pad(x, ((0, 0), (1, 1), (1, 1), (0, Cin_p - cin)))

    w1 = _prep_w3x3(params["w1"], Cin_p, Cp)
    w2 = _prep_w3x3(params["w2"], Cp, Cp)
    g1, b1 = _pad_vec(params["g1"], Cp), _pad_vec(params["b1"], Cp)
    g2, b2 = _pad_vec(params["g2"], Cp), _pad_vec(params["b2"], Cp)

    has_proj = "wsc" in params

    if not has_proj:
        # conv1 (stride 1): in-kernel halo im2col; raw conv output is written
        # directly in spatially padded layout for conv2's haloed input.
        y1p, st1 = conv_pass1(xp, w1, mode="halo", Ho=Ho, Wo=Wo, pad_out=True)
    else:
        # conv1 (stride != 1 / channel change): XLA im2col fallback, with the
        # 1x1 projection shortcut fused as a second matmul in the same kernel.
        # TODO(synk): in-kernel stride-2 im2col via 2x2 phase decomposition.
        p1 = _im2col_taps(xp, Ho, Wo, stride)
        xsc = xp[:, 1:1 + H:stride, 1:1 + W:stride, :].reshape(N, Ho * Wo, Cin_p)
        wsc = _prep_w1x1(params["wsc"], Cin_p, Cp)
        y1p, st1, ysc, stsc = conv_pass1(
            p1, w1, mode="patches", Ho=Ho, Wo=Wo, pad_out=True,
            xsc=xsc, wsc=wsc)
        gsc, bsc = _pad_vec(params["gsc"], Cp), _pad_vec(params["bsc"], Cp)

    # conv2 with bn1 affine + ReLU fused into the in-kernel halo im2col.
    y2, st2 = conv_pass1(y1p, w2, mode="halo", Ho=Ho, Wo=Wo, pad_out=False,
                         stats_in=st1, g_in=g1, b_in=b1, inv_m=inv_m)

    # bn2 + shortcut (+ its bn) + add + ReLU.
    if has_proj:
        out = bn_add_relu(y2, st2, g2, b2, ysc, res_stats=stsc, res_g=gsc,
                          res_b=bsc, inv_m=inv_m, Ho=Ho, Wo=Wo)
    else:
        out = bn_add_relu(y2, st2, g2, b2, xp, inv_m=inv_m, Ho=Ho, Wo=Wo)

    out = out[..., :planes].astype(jnp.float32)
    return jnp.transpose(out, (0, 3, 1, 2))        # back to NCHW


# ---------------------------------------------------------------------------
# Pure-JAX f32 reference (lax conv + training-mode BN) for correctness check.
# ---------------------------------------------------------------------------
def _bn_train(y_nchw, gamma, beta):
    mu = jnp.mean(y_nchw, axis=(0, 2, 3), keepdims=True)
    var = jnp.mean(jnp.square(y_nchw - mu), axis=(0, 2, 3), keepdims=True)
    return (y_nchw - mu) * jax.lax.rsqrt(var + EPS) * gamma.reshape(1, -1, 1, 1) \
        + beta.reshape(1, -1, 1, 1)


def reference_forward(x_nchw, params, stride):
    dn = ("NCHW", "OIHW", "NCHW")
    conv = lambda x, w, s, p: jax.lax.conv_general_dilated(
        x, w, window_strides=(s, s), padding=[(p, p), (p, p)],
        dimension_numbers=dn)
    out = jax.nn.relu(_bn_train(conv(x_nchw, params["w1"], stride, 1),
                                params["g1"], params["b1"]))
    out = _bn_train(conv(out, params["w2"], 1, 1), params["g2"], params["b2"])
    if "wsc" in params:
        sc = _bn_train(conv(x_nchw, params["wsc"], stride, 0),
                       params["gsc"], params["bsc"])
    else:
        sc = x_nchw
    return jax.nn.relu(out + sc)


if __name__ == "__main__":
    key = jax.random.PRNGKey(0)
    configs = [
        # projection shortcut path (stride != 1, channel change)
        dict(N=2, in_planes=4, planes=8, HW=16, stride=2),
        # identity shortcut path
        dict(N=2, in_planes=8, planes=8, HW=16, stride=1),
    ]
    fwd = jax.jit(basic_block_forward, static_argnames=("stride",))
    for cfg in configs:
        key, kx, kp = jax.random.split(key, 3)
        x = jax.random.normal(
            kx, (cfg["N"], cfg["in_planes"], cfg["HW"], cfg["HW"]), jnp.float32)
        params = init_params(kp, cfg["in_planes"], cfg["planes"], cfg["stride"])

        out = jax.block_until_ready(fwd(x, params, stride=cfg["stride"]))
        ref = jax.block_until_ready(reference_forward(x, params, cfg["stride"]))

        Ho = (cfg["HW"] - 1) // cfg["stride"] + 1
        assert out.shape == (cfg["N"], cfg["planes"], Ho, Ho), out.shape
        # bf16 operands / intermediates / final store -> loose-but-safe tol.
        max_err = float(jnp.max(jnp.abs(out - ref)))
        assert jnp.allclose(out, ref, atol=1e-1, rtol=1e-1), max_err

    print("KERNEL_OK")
</pallas_src>

<mosaic_0001>
module attributes {stable_mosaic.version = 11 : i64} {
  func.func @_conv_pass1_kernel(%arg0: i32, %arg1: memref<1x9x64x128xbf16, #tpu.memory_space<vmem>>, %arg2: memref<9x128x128xbf16, #tpu.memory_space<vmem>>, %arg3: memref<1x64x128xbf16, #tpu.memory_space<vmem>>, %arg4: memref<128x128xbf16, #tpu.memory_space<vmem>>, %arg5: memref<1x10x10x128xbf16, #tpu.memory_space<vmem>>, %arg6: memref<1x8x128xf32, #tpu.memory_space<vmem>>, %arg7: memref<1x8x8x128xbf16, #tpu.memory_space<vmem>>, %arg8: memref<1x8x128xf32, #tpu.memory_space<vmem>>) attributes {dimension_semantics = [#tpu.dimension_semantics<parallel>], iteration_bounds = array<i64: 2>, scalar_prefetch = 0 : i64, scratch_operands = 0 : i64, tpu.core_type = #tpu.core_type<tc>, window_params = [{transform_indices = @transform_0, window_bounds = array<i64: 1, 9, 64, 128>}, {pipeline_mode = #tpu.pipeline_mode<synchronous>, transform_indices = @transform_1, window_bounds = array<i64: 9, 128, 128>}, {transform_indices = @transform_2, window_bounds = array<i64: 1, 64, 128>}, {pipeline_mode = #tpu.pipeline_mode<synchronous>, transform_indices = @transform_3, window_bounds = array<i64: 128, 128>}, {transform_indices = @transform_4, window_bounds = array<i64: 1, 10, 10, 128>}, {transform_indices = @transform_5, window_bounds = array<i64: 1, 8, 128>}, {transform_indices = @transform_6, window_bounds = array<i64: 1, 8, 8, 128>}, {transform_indices = @transform_7, window_bounds = array<i64: 1, 8, 128>}]} {
    %c0 = arith.constant 0 : index
    %c0_0 = arith.constant 0 : index
    %c0_1 = arith.constant 0 : index
    %c0_2 = arith.constant 0 : index
    %0 = vector.load %arg1[%c0, %c0_0, %c0_1, %c0_2] : memref<1x9x64x128xbf16, #tpu.memory_space<vmem>>, vector<1x1x64x128xbf16>
    %1 = vector.shape_cast %0 : vector<1x1x64x128xbf16> to vector<64x128xbf16>
    %c0_3 = arith.constant 0 : index
    %c0_4 = arith.constant 0 : index
    %c0_5 = arith.constant 0 : index
    %2 = vector.load %arg2[%c0_3, %c0_4, %c0_5] : memref<9x128x128xbf16, #tpu.memory_space<vmem>>, vector<1x128x128xbf16>
    %3 = vector.shape_cast %2 : vector<1x128x128xbf16> to vector<128x128xbf16>
    %cst = arith.constant dense<0.000000e+00> : vector<64x128xf32>
    %4 = tpu.matmul %1, %3, %cst {dimension_numbers = #tpu.dot_dimension_numbers<[1], [0], [0], [1], [0, 0, 1, 1], [], []>} : vector<64x128xbf16>, vector<128x128xbf16>, vector<64x128xf32> -> vector<64x128xf32>
    %c0_6 = arith.constant 0 : index
    %c1 = arith.constant 1 : index
    %c0_7 = arith.constant 0 : index
    %c0_8 = arith.constant 0 : index
    %5 = vector.load %arg1[%c0_6, %c1, %c0_7, %c0_8] : memref<1x9x64x128xbf16, #tpu.memory_space<vmem>>, vector<1x1x64x128xbf16>
    %6 = vector.shape_cast %5 : vector<1x1x64x128xbf16> to vector<64x128xbf16>
    %c1_9 = arith.constant 1 : index
    %c0_10 = arith.constant 0 : index
    %c0_11 = arith.constant 0 : index
    %7 = vector.load %arg2[%c1_9, %c0_10, %c0_11] : memref<9x128x128xbf16, #tpu.memory_space<vmem>>, vector<1x128x128xbf16>
    %8 = vector.shape_cast %7 : vector<1x128x128xbf16> to vector<128x128xbf16>
    %cst_12 = arith.constant dense<0.000000e+00> : vector<64x128xf32>
    %9 = tpu.matmul %6, %8, %cst_12 {dimension_numbers = #tpu.dot_dimension_numbers<[1], [0], [0], [1], [0, 0, 1, 1], [], []>} : vector<64x128xbf16>, vector<128x128xbf16>, vector<64x128xf32> -> vector<64x128xf32>
    %10 = arith.addf %4, %9 : vector<64x128xf32>
    %c0_13 = arith.constant 0 : index
    %c2 = arith.constant 2 : index
    %c0_14 = arith.constant 0 : index
    %c0_15 = arith.constant 0 : index
    %11 = vector.load %arg1[%c0_13, %c2, %c0_14, %c0_15] : memref<1x9x64x128xbf16, #tpu.memory_space<vmem>>, vector<1x1x64x128xbf16>
    %12 = vector.shape_cast %11 : vector<1x1x64x128xbf16> to vector<64x128xbf16>
    %c2_16 = arith.constant 2 : index
    %c0_17 = arith.constant 0 : index
    %c0_18 = arith.constant 0 : index
    %13 = vector.load %arg2[%c2_16, %c0_17, %c0_18] : memref<9x128x128xbf16, #tpu.memory_space<vmem>>, vector<1x128x128xbf16>
    %14 = vector.shape_cast %13 : vector<1x128x128xbf16> to vector<128x128xbf16>
    %cst_19 = arith.constant dense<0.000000e+00> : vector<64x128xf32>
    %15 = tpu.matmul %12, %14, %cst_19 {dimension_numbers = #tpu.dot_dimension_numbers<[1], [0], [0], [1], [0, 0, 1, 1], [], []>} : vector<64x128xbf16>, vector<128x128xbf16>, vector<64x128xf32> -> vector<64x128xf32>
    %16 = arith.addf %10, %15 : vector<64x128xf32>
    %c0_20 = arith.constant 0 : index
    %c3 = arith.constant 3 : index
    %c0_21 = arith.constant 0 : index
    %c0_22 = arith.constant 0 : index
    %17 = vector.load %arg1[%c0_20, %c3, %c0_21, %c0_22] : memref<1x9x64x128xbf16, #tpu.memory_space<vmem>>, vector<1x1x64x128xbf16>
    %18 = vector.shape_cast %17 : vector<1x1x64x128xbf16> to vector<64x128xbf16>
    %c3_23 = arith.constant 3 : index
    %c0_24 = arith.constant 0 : index
    %c0_25 = arith.constant 0 : index
    %19 = vector.load %arg2[%c3_23, %c0_24, %c0_25] : memref<9x128x128xbf16, #tpu.memory_space<vmem>>, vector<1x128x128xbf16>
    %20 = vector.shape_cast %19 : vector<1x128x128xbf16> to vector<128x128xbf16>
    %cst_26 = arith.constant dense<0.000000e+00> : vector<64x128xf32>
    %21 = tpu.matmul %18, %20, %cst_26 {dimension_numbers = #tpu.dot_dimension_numbers<[1], [0], [0], [1], [0, 0, 1, 1], [], []>} : vector<64x128xbf16>, vector<128x128xbf16>, vector<64x128xf32> -> vector<64x128xf32>
    %22 = arith.addf %16, %21 : vector<64x128xf32>
    %c0_27 = arith.constant 0 : index
    %c4 = arith.constant 4 : index
    %c0_28 = arith.constant 0 : index
    %c0_29 = arith.constant 0 : index
    %23 = vector.load %arg1[%c0_27, %c4, %c0_28, %c0_29] : memref<1x9x64x128xbf16, #tpu.memory_space<vmem>>, vector<1x1x64x128xbf16>
    %24 = vector.shape_cast %23 : vector<1x1x64x128xbf16> to vector<64x128xbf16>
    %c4_30 = arith.constant 4 : index
    %c0_31 = arith.constant 0 : index
    %c0_32 = arith.constant 0 : index
    %25 = vector.load %arg2[%c4_30, %c0_31, %c0_32] : memref<9x128x128xbf16, #tpu.memory_space<vmem>>, vector<1x128x128xbf16>
    %26 = vector.shape_cast %25 : vector<1x128x128xbf16> to vector<128x128xbf16>
    %cst_33 = arith.constant dense<0.000000e+00> : vector<64x128xf32>
    %27 = tpu.matmul %24, %26, %cst_33 {dimension_numbers = #tpu.dot_dimension_numbers<[1], [0], [0], [1], [0, 0, 1, 1], [], []>} : vector<64x128xbf16>, vector<128x128xbf16>, vector<64x128xf32> -> vector<64x128xf32>
    %28 = arith.addf %22, %27 : vector<64x128xf32>
    %c0_34 = arith.constant 0 : index
    %c5 = arith.constant 5 : index
    %c0_35 = arith.constant 0 : index
    %c0_36 = arith.constant 0 : index
    %29 = vector.load %arg1[%c0_34, %c5, %c0_35, %c0_36] : memref<1x9x64x128xbf16, #tpu.memory_space<vmem>>, vector<1x1x64x128xbf16>
    %30 = vector.shape_cast %29 : vector<1x1x64x128xbf16> to vector<64x128xbf16>
    %c5_37 = arith.constant 5 : index
    %c0_38 = arith.constant 0 : index
    %c0_39 = arith.constant 0 : index
    %31 = vector.load %arg2[%c5_37, %c0_38, %c0_39] : memref<9x128x128xbf16, #tpu.memory_space<vmem>>, vector<1x128x128xbf16>
    %32 = vector.shape_cast %31 : vector<1x128x128xbf16> to vector<128x128xbf16>
    %cst_40 = arith.constant dense<0.000000e+00> : vector<64x128xf32>
    %33 = tpu.matmul %30, %32, %cst_40 {dimension_numbers = #tpu.dot_dimension_numbers<[1], [0], [0], [1], [0, 0, 1, 1], [], []>} : vector<64x128xbf16>, vector<128x128xbf16>, vector<64x128xf32> -> vector<64x128xf32>
    %34 = arith.addf %28, %33 : vector<64x128xf32>
    %c0_41 = arith.constant 0 : index
    %c6 = arith.constant 6 : index
    %c0_42 = arith.constant 0 : index
    %c0_43 = arith.constant 0 : index
    %35 = vector.load %arg1[%c0_41, %c6, %c0_42, %c0_43] : memref<1x9x64x128xbf16, #tpu.memory_space<vmem>>, vector<1x1x64x128xbf16>
    %36 = vector.shape_cast %35 : vector<1x1x64x128xbf16> to vector<64x128xbf16>
    %c6_44 = arith.constant 6 : index
    %c0_45 = arith.constant 0 : index
    %c0_46 = arith.constant 0 : index
    %37 = vector.load %arg2[%c6_44, %c0_45, %c0_46] : memref<9x128x128xbf16, #tpu.memory_space<vmem>>, vector<1x128x128xbf16>
    %38 = vector.shape_cast %37 : vector<1x128x128xbf16> to vector<128x128xbf16>
    %cst_47 = arith.constant dense<0.000000e+00> : vector<64x128xf32>
    %39 = tpu.matmul %36, %38, %cst_47 {dimension_numbers = #tpu.dot_dimension_numbers<[1], [0], [0], [1], [0, 0, 1, 1], [], []>} : vector<64x128xbf16>, vector<128x128xbf16>, vector<64x128xf32> -> vector<64x128xf32>
    %40 = arith.addf %34, %39 : vector<64x128xf32>
    %c0_48 = arith.constant 0 : index
    %c7 = arith.constant 7 : index
    %c0_49 = arith.constant 0 : index
    %c0_50 = arith.constant 0 : index
    %41 = vector.load %arg1[%c0_48, %c7, %c0_49, %c0_50] : memref<1x9x64x128xbf16, #tpu.memory_space<vmem>>, vector<1x1x64x128xbf16>
    %42 = vector.shape_cast %41 : vector<1x1x64x128xbf16> to vector<64x128xbf16>
    %c7_51 = arith.constant 7 : index
    %c0_52 = arith.constant 0 : index
    %c0_53 = arith.constant 0 : index
    %43 = vector.load %arg2[%c7_51, %c0_52, %c0_53] : memref<9x128x128xbf16, #tpu.memory_space<vmem>>, vector<1x128x128xbf16>
    %44 = vector.shape_cast %43 : vector<1x128x128xbf16> to vector<128x128xbf16>
    %cst_54 = arith.constant dense<0.000000e+00> : vector<64x128xf32>
    %45 = tpu.matmul %42, %44, %cst_54 {dimension_numbers = #tpu.dot_dimension_numbers<[1], [0], [0], [1], [0, 0, 1, 1], [], []>} : vector<64x128xbf16>, vector<128x128xbf16>, vector<64x128xf32> -> vector<64x128xf32>
    %46 = arith.addf %40, %45 : vector<64x128xf32>
    %c0_55 = arith.constant 0 : index
    %c8 = arith.constant 8 : index
    %c0_56 = arith.constant 0 : index
    %c0_57 = arith.constant 0 : index
    %47 = vector.load %arg1[%c0_55, %c8, %c0_56, %c0_57] : memref<1x9x64x128xbf16, #tpu.memory_space<vmem>>, vector<1x1x64x128xbf16>
    %48 = vector.shape_cast %47 : vector<1x1x64x128xbf16> to vector<64x128xbf16>
    %c8_58 = arith.constant 8 : index
    %c0_59 = arith.constant 0 : index
    %c0_60 = arith.constant 0 : index
    %49 = vector.load %arg2[%c8_58, %c0_59, %c0_60] : memref<9x128x128xbf16, #tpu.memory_space<vmem>>, vector<1x128x128xbf16>
    %50 = vector.shape_cast %49 : vector<1x128x128xbf16> to vector<128x128xbf16>
    %cst_61 = arith.constant dense<0.000000e+00> : vector<64x128xf32>
    %51 = tpu.matmul %48, %50, %cst_61 {dimension_numbers = #tpu.dot_dimension_numbers<[1], [0], [0], [1], [0, 0, 1, 1], [], []>} : vector<64x128xbf16>, vector<128x128xbf16>, vector<64x128xf32> -> vector<64x128xf32>
    %52 = arith.addf %46, %51 : vector<64x128xf32>
    %cst_62 = arith.constant dense<0.000000e+00> : vector<128xf32>
    %53 = vector.multi_reduction <add>, %52, %cst_62 [0] : vector<64x128xf32> to vector<128xf32>
    %54 = vector.shape_cast %53 : vector<128xf32> to vector<1x128xf32>
    %55 = arith.mulf %52, %52 : vector<64x128xf32>
    %cst_63 = arith.constant dense<0.000000e+00> : vector<128xf32>
    %56 = vector.multi_reduction <add>, %55, %cst_63 [0] : vector<64x128xf32> to vector<128xf32>
    %57 = vector.shape_cast %56 : vector<128xf32> to vector<1x128xf32>
    %58 = tpu.iota {dimensions = array<i32: 0>} : vector<8x128xi32>
    %c0_i32 = arith.constant 0 : i32
    %59 = vector.broadcast %c0_i32 : i32 to vector<8x128xi32>
    %60 = arith.cmpi eq, %58, %59 : vector<8x128xi32>
    %c1_i32 = arith.constant 1 : i32
    %61 = vector.broadcast %c1_i32 : i32 to vector<8x128xi32>
    %62 = arith.cmpi eq, %58, %61 : vector<8x128xi32>
    %cst_64 = arith.constant 0.000000e+00 : f32
    %63 = vector.shape_cast %57 : vector<1x128xf32> to vector<1x128xf32>
    %64 = vector.broadcast %63 : vector<1x128xf32> to vector<8x128xf32>
    %65 = vector.broadcast %cst_64 : f32 to vector<8x128xf32>
    %66 = arith.select %62, %64, %65 : vector<8x128xi1>, vector<8x128xf32>
    %67 = vector.shape_cast %54 : vector<1x128xf32> to vector<1x128xf32>
    %68 = vector.broadcast %67 : vector<1x128xf32> to vector<8x128xf32>
    %69 = arith.select %60, %68, %66 : vector<8x128xi1>, vector<8x128xf32>
    %c0_65 = arith.constant 0 : index
    %c0_66 = arith.constant 0 : index
    %c0_67 = arith.constant 0 : index
    %70 = vector.load %arg6[%c0_65, %c0_66, %c0_67] : memref<1x8x128xf32, #tpu.memory_space<vmem>>, vector<1x8x128xf32>
    %71 = vector.shape_cast %70 : vector<1x8x128xf32> to vector<8x128xf32>
    %72 = vector.shape_cast %69 : vector<8x128xf32> to vector<1x8x128xf32>
    tpu.vector_store %arg6[%c0_65, %c0_66, %c0_67], %72 {strides = array<i32>} : memref<1x8x128xf32, #tpu.memory_space<vmem>>, vector<1x8x128xf32>,
    %73 = arith.truncf %52 : vector<64x128xf32> to vector<64x128xbf16>
    %74 = vector.shape_cast %73 : vector<64x128xbf16> to vector<8x8x128xbf16>
    %cst_68 = arith.constant 0.000000e+00 : bf16
    %75 = vector.broadcast %cst_68 : bf16 to vector<1x10x10x128xbf16>
    %c0_69 = arith.constant 0 : index
    %c0_70 = arith.constant 0 : index
    %c0_71 = arith.constant 0 : index
    %c0_72 = arith.constant 0 : index
    %76 = vector.load %arg5[%c0_69, %c0_70, %c0_71, %c0_72] : memref<1x10x10x128xbf16, #tpu.memory_space<vmem>>, vector<1x10x10x128xbf16>
    tpu.vector_store %arg5[%c0_69, %c0_70, %c0_71, %c0_72], %75 {strides = array<i32>} : memref<1x10x10x128xbf16, #tpu.memory_space<vmem>>, vector<1x10x10x128xbf16>,
    %c0_73 = arith.constant 0 : index
    %c1_74 = arith.constant 1 : index
    %c1_75 = arith.constant 1 : index
    %c0_76 = arith.constant 0 : index
    %77 = vector.load %arg5[%c0_73, %c1_74, %c1_75, %c0_76] : memref<1x10x10x128xbf16, #tpu.memory_space<vmem>>, vector<1x8x8x128xbf16>
    %78 = vector.shape_cast %77 : vector<1x8x8x128xbf16> to vector<8x8x128xbf16>
    %79 = vector.shape_cast %74 : vector<8x8x128xbf16> to vector<1x8x8x128xbf16>
    tpu.vector_store %arg5[%c0_73, %c1_74, %c1_75, %c0_76], %79 {strides = array<i32>} : memref<1x10x10x128xbf16, #tpu.memory_space<vmem>>, vector<1x8x8x128xbf16>,
    %c0_77 = arith.constant 0 : index
    %c0_78 = arith.constant 0 : index
    %c0_79 = arith.constant 0 : index
    %80 = vector.load %arg3[%c0_77, %c0_78, %c0_79] : memref<1x64x128xbf16, #tpu.memory_space<vmem>>, vector<1x64x128xbf16>
    %81 = vector.shape_cast %80 : vector<1x64x128xbf16> to vector<64x128xbf16>
    %c0_80 = arith.constant 0 : index
    %c0_81 = arith.constant 0 : index
    %82 = vector.load %arg4[%c0_80, %c0_81] : memref<128x128xbf16, #tpu.memory_space<vmem>>, vector<128x128xbf16>
    %cst_82 = arith.constant dense<0.000000e+00> : vector<64x128xf32>
    %83 = tpu.matmul %81, %82, %cst_82 {dimension_numbers = #tpu.dot_dimension_numbers<[1], [0], [0], [1], [0, 0, 1, 1], [], []>} : vector<64x128xbf16>, vector<128x128xbf16>, vector<64x128xf32> -> vector<64x128xf32>
    %cst_83 = arith.constant dense<0.000000e+00> : vector<128xf32>
    %84 = vector.multi_reduction <add>, %83, %cst_83 [0] : vector<64x128xf32> to vector<128xf32>
    %85 = vector.shape_cast %84 : vector<128xf32> to vector<1x128xf32>
    %86 = arith.mulf %83, %83 : vector<64x128xf32>
    %cst_84 = arith.constant dense<0.000000e+00> : vector<128xf32>
    %87 = vector.multi_reduction <add>, %86, %cst_84 [0] : vector<64x128xf32> to vector<128xf32>
    %88 = vector.shape_cast %87 : vector<128xf32> to vector<1x128xf32>
    %89 = tpu.iota {dimensions = array<i32: 0>} : vector<8x128xi32>
    %c0_i32_85 = arith.constant 0 : i32
    %90 = vector.broadcast %c0_i32_85 : i32 to vector<8x128xi32>
    %91 = arith.cmpi eq, %89, %90 : vector<8x128xi32>
    %c1_i32_86 = arith.constant 1 : i32
    %92 = vector.broadcast %c1_i32_86 : i32 to vector<8x128xi32>
    %93 = arith.cmpi eq, %89, %92 : vector<8x128xi32>
    %cst_87 = arith.constant 0.000000e+00 : f32
    %94 = vector.shape_cast %88 : vector<1x128xf32> to vector<1x128xf32>
    %95 = vector.broadcast %94 : vector<1x128xf32> to vector<8x128xf32>
    %96 = vector.broadcast %cst_87 : f32 to vector<8x128xf32>
    %97 = arith.select %93, %95, %96 : vector<8x128xi1>, vector<8x128xf32>
    %98 = vector.shape_cast %85 : vector<1x128xf32> to vector<1x128xf32>
    %99 = vector.broadcast %98 : vector<1x128xf32> to vector<8x128xf32>
    %100 = arith.select %91, %99, %97 : vector<8x128xi1>, vector<8x128xf32>
    %c0_88 = arith.constant 0 : index
    %c0_89 = arith.constant 0 : index
    %c0_90 = arith.constant 0 : index
    %101 = vector.load %arg8[%c0_88, %c0_89, %c0_90] : memref<1x8x128xf32, #tpu.memory_space<vmem>>, vector<1x8x128xf32>
    %102 = vector.shape_cast %101 : vector<1x8x128xf32> to vector<8x128xf32>
    %103 = vector.shape_cast %100 : vector<8x128xf32> to vector<1x8x128xf32>
    tpu.vector_store %arg8[%c0_88, %c0_89, %c0_90], %103 {strides = array<i32>} : memref<1x8x128xf32, #tpu.memory_space<vmem>>, vector<1x8x128xf32>,
    %104 = arith.truncf %83 : vector<64x128xf32> to vector<64x128xbf16>
    %105 = vector.shape_cast %104 : vector<64x128xbf16> to vector<8x8x128xbf16>
    %c0_91 = arith.constant 0 : index
    %c0_92 = arith.constant 0 : index
    %c0_93 = arith.constant 0 : index
    %c0_94 = arith.constant 0 : index
    %106 = vector.load %arg7[%c0_91, %c0_92, %c0_93, %c0_94] : memref<1x8x8x128xbf16, #tpu.memory_space<vmem>>, vector<1x8x8x128xbf16>
    %107 = vector.shape_cast %106 : vector<1x8x8x128xbf16> to vector<8x8x128xbf16>
    %108 = vector.shape_cast %105 : vector<8x8x128xbf16> to vector<1x8x8x128xbf16>
    tpu.vector_store %arg7[%c0_91, %c0_92, %c0_93, %c0_94], %108 {strides = array<i32>} : memref<1x8x8x128xbf16, #tpu.memory_space<vmem>>, vector<1x8x8x128xbf16>,
    return
  }
  func.func @transform_0(%arg0: i32) -> (i32, i32, i32, i32) {
    %c0_i32 = arith.constant 0 : i32
    %c0_i32_0 = arith.constant 0 : i32
    %c0_i32_1 = arith.constant 0 : i32
    %c0_i32_2 = arith.constant 0 : i32
    return %arg0, %c0_i32, %c0_i32_0, %c0_i32_1 : i32, i32, i32, i32
  }
  func.func @transform_1(%arg0: i32) -> (i32, i32, i32) {
    %c0_i32 = arith.constant 0 : i32
    %c0_i32_0 = arith.constant 0 : i32
    %c0_i32_1 = arith.constant 0 : i32
    %c0_i32_2 = arith.constant 0 : i32
    return %c0_i32, %c0_i32_0, %c0_i32_1 : i32, i32, i32
  }
  func.func @transform_2(%arg0: i32) -> (i32, i32, i32) {
    %c0_i32 = arith.constant 0 : i32
    %c0_i32_0 = arith.constant 0 : i32
    %c0_i32_1 = arith.constant 0 : i32
    return %arg0, %c0_i32, %c0_i32_0 : i32, i32, i32
  }
  func.func @transform_3(%arg0: i32) -> (i32, i32) {
    %c0_i32 = arith.constant 0 : i32
    %c0_i32_0 = arith.constant 0 : i32
    %c0_i32_1 = arith.constant 0 : i32
    return %c0_i32, %c0_i32_0 : i32, i32
  }
  func.func @transform_4(%arg0: i32) -> (i32, i32, i32, i32) {
    %c0_i32 = arith.constant 0 : i32
    %c0_i32_0 = arith.constant 0 : i32
    %c0_i32_1 = arith.constant 0 : i32
    %c0_i32_2 = arith.constant 0 : i32
    return %arg0, %c0_i32, %c0_i32_0, %c0_i32_1 : i32, i32, i32, i32
  }
  func.func @transform_5(%arg0: i32) -> (i32, i32, i32) {
    %c0_i32 = arith.constant 0 : i32
    %c0_i32_0 = arith.constant 0 : i32
    %c0_i32_1 = arith.constant 0 : i32
    return %arg0, %c0_i32, %c0_i32_0 : i32, i32, i32
  }
  func.func @transform_6(%arg0: i32) -> (i32, i32, i32, i32) {
    %c0_i32 = arith.constant 0 : i32
    %c0_i32_0 = arith.constant 0 : i32
    %c0_i32_1 = arith.constant 0 : i32
    %c0_i32_2 = arith.constant 0 : i32
    return %arg0, %c0_i32, %c0_i32_0, %c0_i32_1 : i32, i32, i32, i32
  }
  func.func @transform_7(%arg0: i32) -> (i32, i32, i32) {
    %c0_i32 = arith.constant 0 : i32
    %c0_i32_0 = arith.constant 0 : i32
    %c0_i32_1 = arith.constant 0 : i32
    return %arg0, %c0_i32, %c0_i32_0 : i32, i32, i32
  }
}

module attributes {stable_mosaic.version = 11 : i64} {
  func.func @_conv_pass1_kernel(%arg0: i32, %arg1: memref<1x10x10x128xbf16, #tpu.memory_space<vmem>>, %arg2: memref<2x8x128xf32, #tpu.memory_space<vmem>>, %arg3: memref<1x128xf32, #tpu.memory_space<vmem>>, %arg4: memref<1x128xf32, #tpu.memory_space<vmem>>, %arg5: memref<9x128x128xbf16, #tpu.memory_space<vmem>>, %arg6: memref<1x8x8x128xbf16, #tpu.memory_space<vmem>>, %arg7: memref<1x8x128xf32, #tpu.memory_space<vmem>>) attributes {dimension_semantics = [#tpu.dimension_semantics<parallel>], iteration_bounds = array<i64: 2>, scalar_prefetch = 0 : i64, scratch_operands = 0 : i64, tpu.core_type = #tpu.core_type<tc>, window_params = [{transform_indices = @transform_0, window_bounds = array<i64: 1, 10, 10, 128>}, {pipeline_mode = #tpu.pipeline_mode<synchronous>, transform_indices = @transform_1, window_bounds = array<i64: 2, 8, 128>}, {pipeline_mode = #tpu.pipeline_mode<synchronous>, transform_indices = @transform_2, window_bounds = array<i64: 1, 128>}, {pipeline_mode = #tpu.pipeline_mode<synchronous>, transform_indices = @transform_3, window_bounds = array<i64: 1, 128>}, {pipeline_mode = #tpu.pipeline_mode<synchronous>, transform_indices = @transform_4, window_bounds = array<i64: 9, 128, 128>}, {transform_indices = @transform_5, window_bounds = array<i64: 1, 8, 8, 128>}, {transform_indices = @transform_6, window_bounds = array<i64: 1, 8, 128>}]} {
    %c0 = arith.constant 0 : index
    %c0_0 = arith.constant 0 : index
    %c0_1 = arith.constant 0 : index
    %0 = vector.load %arg2[%c0, %c0_0, %c0_1] : memref<2x8x128xf32, #tpu.memory_space<vmem>>, vector<2x8x128xf32>
    %c0_2 = arith.constant 0 : index
    %c0_3 = arith.constant 0 : index
    %1 = vector.load %arg3[%c0_2, %c0_3] : memref<1x128xf32, #tpu.memory_space<vmem>>, vector<1x128xf32>
    %c0_4 = arith.constant 0 : index
    %c0_5 = arith.constant 0 : index
    %2 = vector.load %arg4[%c0_4, %c0_5] : memref<1x128xf32, #tpu.memory_space<vmem>>, vector<1x128xf32>
    %3 = vector.extract_strided_slice %0 {offsets = [0, 0, 0], sizes = [2, 1, 128], strides = [1, 1, 1]} : vector<2x8x128xf32> to vector<2x1x128xf32>
    %cst = arith.constant dense<0.000000e+00> : vector<1x128xf32>
    %4 = vector.multi_reduction <add>, %3, %cst [0] : vector<2x1x128xf32> to vector<1x128xf32>
    %5 = vector.extract_strided_slice %0 {offsets = [0, 1, 0], sizes = [2, 1, 128], strides = [1, 1, 1]} : vector<2x8x128xf32> to vector<2x1x128xf32>
    %cst_6 = arith.constant dense<0.000000e+00> : vector<1x128xf32>
    %6 = vector.multi_reduction <add>, %5, %cst_6 [0] : vector<2x1x128xf32> to vector<1x128xf32>
    %cst_7 = arith.constant 7.812500e-03 : f32
    %7 = vector.broadcast %cst_7 : f32 to vector<1x128xf32>
    %8 = arith.mulf %4, %7 : vector<1x128xf32>
    %cst_8 = arith.constant 7.812500e-03 : f32
    %9 = vector.broadcast %cst_8 : f32 to vector<1x128xf32>
    %10 = arith.mulf %6, %9 : vector<1x128xf32>
    %11 = arith.mulf %8, %8 : vector<1x128xf32>
    %12 = arith.subf %10, %11 : vector<1x128xf32>
    %cst_9 = arith.constant 0.000000e+00 : f32
    %13 = vector.broadcast %cst_9 : f32 to vector<1x128xf32>
    %14 = arith.maximumf %12, %13 : vector<1x128xf32>
    %cst_10 = arith.constant 9.99999974E-6 : f32
    %15 = vector.broadcast %cst_10 : f32 to vector<1x128xf32>
    %16 = arith.addf %14, %15 : vector<1x128xf32>
    %17 = math.rsqrt %16 : vector<1x128xf32>
    %18 = arith.mulf %1, %17 : vector<1x128xf32>
    %19 = arith.mulf %18, %8 : vector<1x128xf32>
    %20 = arith.subf %2, %19 : vector<1x128xf32>
    %21 = vector.shape_cast %18 : vector<1x128xf32> to vector<1x1x128xf32>
    %22 = vector.shape_cast %20 : vector<1x128xf32> to vector<1x1x128xf32>
    %23 = tpu.iota {dimensions = array<i32: 0>} : vector<8x8x128xi32>
    %24 = tpu.iota {dimensions = array<i32: 1>} : vector<8x8x128xi32>
    %c0_11 = arith.constant 0 : index
    %c0_12 = arith.constant 0 : index
    %c0_13 = arith.constant 0 : index
    %c0_14 = arith.constant 0 : index
    %25 = vector.load %arg1[%c0_11, %c0_12, %c0_13, %c0_14] : memref<1x10x10x128xbf16, #tpu.memory_space<vmem>>, vector<1x8x8x128xbf16>
    %26 = vector.shape_cast %25 : vector<1x8x8x128xbf16> to vector<8x8x128xbf16>
    %27 = arith.extf %26 : vector<8x8x128xbf16> to vector<8x8x128xf32>
    %28 = vector.broadcast %21 : vector<1x1x128xf32> to vector<8x8x128xf32>
    %29 = arith.mulf %27, %28 : vector<8x8x128xf32>
    %30 = vector.broadcast %22 : vector<1x1x128xf32> to vector<8x8x128xf32>
    %31 = arith.addf %29, %30 : vector<8x8x128xf32>
    %cst_15 = arith.constant 0.000000e+00 : f32
    %32 = vector.broadcast %cst_15 : f32 to vector<8x8x128xf32>
    %33 = arith.maximumf %31, %32 : vector<8x8x128xf32>
    %c0_i32 = arith.constant 0 : i32
    %34 = vector.broadcast %c0_i32 : i32 to vector<8x8x128xi32>
    %35 = arith.cmpi sgt, %23, %34 : vector<8x8x128xi32>
    %c0_i32_16 = arith.constant 0 : i32
    %36 = vector.broadcast %c0_i32_16 : i32 to vector<8x8x128xi32>
    %37 = arith.cmpi sgt, %24, %36 : vector<8x8x128xi32>
    %38 = arith.andi %35, %37 : vector<8x8x128xi1>
    %cst_17 = arith.constant 0.000000e+00 : f32
    %39 = vector.broadcast %cst_17 : f32 to vector<8x8x128xf32>
    %40 = arith.select %38, %33, %39 : vector<8x8x128xi1>, vector<8x8x128xf32>
    %41 = arith.truncf %40 : vector<8x8x128xf32> to vector<8x8x128xbf16>
    %42 = vector.shape_cast %41 : vector<8x8x128xbf16> to vector<64x128xbf16>
    %c0_18 = arith.constant 0 : index
    %c0_19 = arith.constant 0 : index
    %c0_20 = arith.constant 0 : index
    %43 = vector.load %arg5[%c0_18, %c0_19, %c0_20] : memref<9x128x128xbf16, #tpu.memory_space<vmem>>, vector<1x128x128xbf16>
    %44 = vector.shape_cast %43 : vector<1x128x128xbf16> to vector<128x128xbf16>
    %cst_21 = arith.constant dense<0.000000e+00> : vector<64x128xf32>
    %45 = tpu.matmul %42, %44, %cst_21 {dimension_numbers = #tpu.dot_dimension_numbers<[1], [0], [0], [1], [0, 0, 1, 1], [], []>} : vector<64x128xbf16>, vector<128x128xbf16>, vector<64x128xf32> -> vector<64x128xf32>
    %c0_22 = arith.constant 0 : index
    %c0_23 = arith.constant 0 : index
    %c1 = arith.constant 1 : index
    %c0_24 = arith.constant 0 : index
    %46 = vector.load %arg1[%c0_22, %c0_23, %c1, %c0_24] : memref<1x10x10x128xbf16, #tpu.memory_space<vmem>>, vector<1x8x8x128xbf16>
    %47 = vector.shape_cast %46 : vector<1x8x8x128xbf16> to vector<8x8x128xbf16>
    %48 = arith.extf %47 : vector<8x8x128xbf16> to vector<8x8x128xf32>
    %49 = vector.broadcast %21 : vector<1x1x128xf32> to vector<8x8x128xf32>
    %50 = arith.mulf %48, %49 : vector<8x8x128xf32>
    %51 = vector.broadcast %22 : vector<1x1x128xf32> to vector<8x8x128xf32>
    %52 = arith.addf %50, %51 : vector<8x8x128xf32>
    %cst_25 = arith.constant 0.000000e+00 : f32
    %53 = vector.broadcast %cst_25 : f32 to vector<8x8x128xf32>
    %54 = arith.maximumf %52, %53 : vector<8x8x128xf32>
    %c0_i32_26 = arith.constant 0 : i32
    %55 = vector.broadcast %c0_i32_26 : i32 to vector<8x8x128xi32>
    %56 = arith.cmpi sgt, %23, %55 : vector<8x8x128xi32>
    %cst_27 = arith.constant 0.000000e+00 : f32
    %57 = vector.broadcast %cst_27 : f32 to vector<8x8x128xf32>
    %58 = arith.select %56, %54, %57 : vector<8x8x128xi1>, vector<8x8x128xf32>
    %59 = arith.truncf %58 : vector<8x8x128xf32> to vector<8x8x128xbf16>
    %60 = vector.shape_cast %59 : vector<8x8x128xbf16> to vector<64x128xbf16>
    %c1_28 = arith.constant 1 : index
    %c0_29 = arith.constant 0 : index
    %c0_30 = arith.constant 0 : index
    %61 = vector.load %arg5[%c1_28, %c0_29, %c0_30] : memref<9x128x128xbf16, #tpu.memory_space<vmem>>, vector<1x128x128xbf16>
    %62 = vector.shape_cast %61 : vector<1x128x128xbf16> to vector<128x128xbf16>
    %cst_31 = arith.constant dense<0.000000e+00> : vector<64x128xf32>
    %63 = tpu.matmul %60, %62, %cst_31 {dimension_numbers = #tpu.dot_dimension_numbers<[1], [0], [0], [1], [0, 0, 1, 1], [], []>} : vector<64x128xbf16>, vector<128x128xbf16>, vector<64x128xf32> -> vector<64x128xf32>
    %64 = arith.addf %45, %63 : vector<64x128xf32>
    %c0_32 = arith.constant 0 : index
    %c0_33 = arith.constant 0 : index
    %c2 = arith.constant 2 : index
    %c0_34 = arith.constant 0 : index
    %65 = vector.load %arg1[%c0_32, %c0_33, %c2, %c0_34] : memref<1x10x10x128xbf16, #tpu.memory_space<vmem>>, vector<1x8x8x128xbf16>
    %66 = vector.shape_cast %65 : vector<1x8x8x128xbf16> to vector<8x8x128xbf16>
    %67 = arith.extf %66 : vector<8x8x128xbf16> to vector<8x8x128xf32>
    %68 = vector.broadcast %21 : vector<1x1x128xf32> to vector<8x8x128xf32>
    %69 = arith.mulf %67, %68 : vector<8x8x128xf32>
    %70 = vector.broadcast %22 : vector<1x1x128xf32> to vector<8x8x128xf32>
    %71 = arith.addf %69, %70 : vector<8x8x128xf32>
    %cst_35 = arith.constant 0.000000e+00 : f32
    %72 = vector.broadcast %cst_35 : f32 to vector<8x8x128xf32>
    %73 = arith.maximumf %71, %72 : vector<8x8x128xf32>
    %c0_i32_36 = arith.constant 0 : i32
    %74 = vector.broadcast %c0_i32_36 : i32 to vector<8x8x128xi32>
    %75 = arith.cmpi sgt, %23, %74 : vector<8x8x128xi32>
    %c7_i32 = arith.constant 7 : i32
    %76 = vector.broadcast %c7_i32 : i32 to vector<8x8x128xi32>
    %77 = arith.cmpi slt, %24, %76 : vector<8x8x128xi32>
    %78 = arith.andi %75, %77 : vector<8x8x128xi1>
    %cst_37 = arith.constant 0.000000e+00 : f32
    %79 = vector.broadcast %cst_37 : f32 to vector<8x8x128xf32>
    %80 = arith.select %78, %73, %79 : vector<8x8x128xi1>, vector<8x8x128xf32>
    %81 = arith.truncf %80 : vector<8x8x128xf32> to vector<8x8x128xbf16>
    %82 = vector.shape_cast %81 : vector<8x8x128xbf16> to vector<64x128xbf16>
    %c2_38 = arith.constant 2 : index
    %c0_39 = arith.constant 0 : index
    %c0_40 = arith.constant 0 : index
    %83 = vector.load %arg5[%c2_38, %c0_39, %c0_40] : memref<9x128x128xbf16, #tpu.memory_space<vmem>>, vector<1x128x128xbf16>
    %84 = vector.shape_cast %83 : vector<1x128x128xbf16> to vector<128x128xbf16>
    %cst_41 = arith.constant dense<0.000000e+00> : vector<64x128xf32>
    %85 = tpu.matmul %82, %84, %cst_41 {dimension_numbers = #tpu.dot_dimension_numbers<[1], [0], [0], [1], [0, 0, 1, 1], [], []>} : vector<64x128xbf16>, vector<128x128xbf16>, vector<64x128xf32> -> vector<64x128xf32>
    %86 = arith.addf %64, %85 : vector<64x128xf32>
    %c0_42 = arith.constant 0 : index
    %c1_43 = arith.constant 1 : index
    %c0_44 = arith.constant 0 : index
    %c0_45 = arith.constant 0 : index
    %87 = vector.load %arg1[%c0_42, %c1_43, %c0_44, %c0_45] : memref<1x10x10x128xbf16, #tpu.memory_space<vmem>>, vector<1x8x8x128xbf16>
    %88 = vector.shape_cast %87 : vector<1x8x8x128xbf16> to vector<8x8x128xbf16>
    %89 = arith.extf %88 : vector<8x8x128xbf16> to vector<8x8x128xf32>
    %90 = vector.broadcast %21 : vector<1x1x128xf32> to vector<8x8x128xf32>
    %91 = arith.mulf %89, %90 : vector<8x8x128xf32>
    %92 = vector.broadcast %22 : vector<1x1x128xf32> to vector<8x8x128xf32>
    %93 = arith.addf %91, %92 : vector<8x8x128xf32>
    %cst_46 = arith.constant 0.000000e+00 : f32
    %94 = vector.broadcast %cst_46 : f32 to vector<8x8x128xf32>
    %95 = arith.maximumf %93, %94 : vector<8x8x128xf32>
    %c0_i32_47 = arith.constant 0 : i32
    %96 = vector.broadcast %c0_i32_47 : i32 to vector<8x8x128xi32>
    %97 = arith.cmpi sgt, %24, %96 : vector<8x8x128xi32>
    %cst_48 = arith.constant 0.000000e+00 : f32
    %98 = vector.broadcast %cst_48 : f32 to vector<8x8x128xf32>
    %99 = arith.select %97, %95, %98 : vector<8x8x128xi1>, vector<8x8x128xf32>
    %100 = arith.truncf %99 : vector<8x8x128xf32> to vector<8x8x128xbf16>
    %101 = vector.shape_cast %100 : vector<8x8x128xbf16> to vector<64x128xbf16>
    %c3 = arith.constant 3 : index
    %c0_49 = arith.constant 0 : index
    %c0_50 = arith.constant 0 : index
    %102 = vector.load %arg5[%c3, %c0_49, %c0_50] : memref<9x128x128xbf16, #tpu.memory_space<vmem>>, vector<1x128x128xbf16>
    %103 = vector.shape_cast %102 : vector<1x128x128xbf16> to vector<128x128xbf16>
    %cst_51 = arith.constant dense<0.000000e+00> : vector<64x128xf32>
    %104 = tpu.matmul %101, %103, %cst_51 {dimension_numbers = #tpu.dot_dimension_numbers<[1], [0], [0], [1], [0, 0, 1, 1], [], []>} : vector<64x128xbf16>, vector<128x128xbf16>, vector<64x128xf32> -> vector<64x128xf32>
    %105 = arith.addf %86, %104 : vector<64x128xf32>
    %c0_52 = arith.constant 0 : index
    %c1_53 = arith.constant 1 : index
    %c1_54 = arith.constant 1 : index
    %c0_55 = arith.constant 0 : index
    %106 = vector.load %arg1[%c0_52, %c1_53, %c1_54, %c0_55] : memref<1x10x10x128xbf16, #tpu.memory_space<vmem>>, vector<1x8x8x128xbf16>
    %107 = vector.shape_cast %106 : vector<1x8x8x128xbf16> to vector<8x8x128xbf16>
    %108 = arith.extf %107 : vector<8x8x128xbf16> to vector<8x8x128xf32>
    %109 = vector.broadcast %21 : vector<1x1x128xf32> to vector<8x8x128xf32>
    %110 = arith.mulf %108, %109 : vector<8x8x128xf32>
    %111 = vector.broadcast %22 : vector<1x1x128xf32> to vector<8x8x128xf32>
    %112 = arith.addf %110, %111 : vector<8x8x128xf32>
    %cst_56 = arith.constant 0.000000e+00 : f32
    %113 = vector.broadcast %cst_56 : f32 to vector<8x8x128xf32>
    %114 = arith.maximumf %112, %113 : vector<8x8x128xf32>
    %115 = arith.truncf %114 : vector<8x8x128xf32> to vector<8x8x128xbf16>
    %116 = vector.shape_cast %115 : vector<8x8x128xbf16> to vector<64x128xbf16>
    %c4 = arith.constant 4 : index
    %c0_57 = arith.constant 0 : index
    %c0_58 = arith.constant 0 : index
    %117 = vector.load %arg5[%c4, %c0_57, %c0_58] : memref<9x128x128xbf16, #tpu.memory_space<vmem>>, vector<1x128x128xbf16>
    %118 = vector.shape_cast %117 : vector<1x128x128xbf16> to vector<128x128xbf16>
    %cst_59 = arith.constant dense<0.000000e+00> : vector<64x128xf32>
    %119 = tpu.matmul %116, %118, %cst_59 {dimension_numbers = #tpu.dot_dimension_numbers<[1], [0], [0], [1], [0, 0, 1, 1], [], []>} : vector<64x128xbf16>, vector<128x128xbf16>, vector<64x128xf32> -> vector<64x128xf32>
    %120 = arith.addf %105, %119 : vector<64x128xf32>
    %c0_60 = arith.constant 0 : index
    %c1_61 = arith.constant 1 : index
    %c2_62 = arith.constant 2 : index
    %c0_63 = arith.constant 0 : index
    %121 = vector.load %arg1[%c0_60, %c1_61, %c2_62, %c0_63] : memref<1x10x10x128xbf16, #tpu.memory_space<vmem>>, vector<1x8x8x128xbf16>
    %122 = vector.shape_cast %121 : vector<1x8x8x128xbf16> to vector<8x8x128xbf16>
    %123 = arith.extf %122 : vector<8x8x128xbf16> to vector<8x8x128xf32>
    %124 = vector.broadcast %21 : vector<1x1x128xf32> to vector<8x8x128xf32>
    %125 = arith.mulf %123, %124 : vector<8x8x128xf32>
    %126 = vector.broadcast %22 : vector<1x1x128xf32> to vector<8x8x128xf32>
    %127 = arith.addf %125, %126 : vector<8x8x128xf32>
    %cst_64 = arith.constant 0.000000e+00 : f32
    %128 = vector.broadcast %cst_64 : f32 to vector<8x8x128xf32>
    %129 = arith.maximumf %127, %128 : vector<8x8x128xf32>
    %c7_i32_65 = arith.constant 7 : i32
    %130 = vector.broadcast %c7_i32_65 : i32 to vector<8x8x128xi32>
    %131 = arith.cmpi slt, %24, %130 : vector<8x8x128xi32>
    %cst_66 = arith.constant 0.000000e+00 : f32
    %132 = vector.broadcast %cst_66 : f32 to vector<8x8x128xf32>
    %133 = arith.select %131, %129, %132 : vector<8x8x128xi1>, vector<8x8x128xf32>
    %134 = arith.truncf %133 : vector<8x8x128xf32> to vector<8x8x128xbf16>
    %135 = vector.shape_cast %134 : vector<8x8x128xbf16> to vector<64x128xbf16>
    %c5 = arith.constant 5 : index
    %c0_67 = arith.constant 0 : index
    %c0_68 = arith.constant 0 : index
    %136 = vector.load %arg5[%c5, %c0_67, %c0_68] : memref<9x128x128xbf16, #tpu.memory_space<vmem>>, vector<1x128x128xbf16>
    %137 = vector.shape_cast %136 : vector<1x128x128xbf16> to vector<128x128xbf16>
    %cst_69 = arith.constant dense<0.000000e+00> : vector<64x128xf32>
    %138 = tpu.matmul %135, %137, %cst_69 {dimension_numbers = #tpu.dot_dimension_numbers<[1], [0], [0], [1], [0, 0, 1, 1], [], []>} : vector<64x128xbf16>, vector<128x128xbf16>, vector<64x128xf32> -> vector<64x128xf32>
    %139 = arith.addf %120, %138 : vector<64x128xf32>
    %c0_70 = arith.constant 0 : index
    %c2_71 = arith.constant 2 : index
    %c0_72 = arith.constant 0 : index
    %c0_73 = arith.constant 0 : index
    %140 = vector.load %arg1[%c0_70, %c2_71, %c0_72, %c0_73] : memref<1x10x10x128xbf16, #tpu.memory_space<vmem>>, vector<1x8x8x128xbf16>
    %141 = vector.shape_cast %140 : vector<1x8x8x128xbf16> to vector<8x8x128xbf16>
    %142 = arith.extf %141 : vector<8x8x128xbf16> to vector<8x8x128xf32>
    %143 = vector.broadcast %21 : vector<1x1x128xf32> to vector<8x8x128xf32>
    %144 = arith.mulf %142, %143 : vector<8x8x128xf32>
    %145 = vector.broadcast %22 : vector<1x1x128xf32> to vector<8x8x128xf32>
    %146 = arith.addf %144, %145 : vector<8x8x128xf32>
    %cst_74 = arith.constant 0.000000e+00 : f32
    %147 = vector.broadcast %cst_74 : f32 to vector<8x8x128xf32>
    %148 = arith.maximumf %146, %147 : vector<8x8x128xf32>
    %c7_i32_75 = arith.constant 7 : i32
    %149 = vector.broadcast %c7_i32_75 : i32 to vector<8x8x128xi32>
    %150 = arith.cmpi slt, %23, %149 : vector<8x8x128xi32>
    %c0_i32_76 = arith.constant 0 : i32
    %151 = vector.broadcast %c0_i32_76 : i32 to vector<8x8x128xi32>
    %152 = arith.cmpi sgt, %24, %151 : vector<8x8x128xi32>
    %153 = arith.andi %150, %152 : vector<8x8x128xi1>
    %cst_77 = arith.constant 0.000000e+00 : f32
    %154 = vector.broadcast %cst_77 : f32 to vector<8x8x128xf32>
    %155 = arith.select %153, %148, %154 : vector<8x8x128xi1>, vector<8x8x128xf32>
    %156 = arith.truncf %155 : vector<8x8x128xf32> to vector<8x8x128xbf16>
    %157 = vector.shape_cast %156 : vector<8x8x128xbf16> to vector<64x128xbf16>
    %c6 = arith.constant 6 : index
    %c0_78 = arith.constant 0 : index
    %c0_79 = arith.constant 0 : index
    %158 = vector.load %arg5[%c6, %c0_78, %c0_79] : memref<9x128x128xbf16, #tpu.memory_space<vmem>>, vector<1x128x128xbf16>
    %159 = vector.shape_cast %158 : vector<1x128x128xbf16> to vector<128x128xbf16>
    %cst_80 = arith.constant dense<0.000000e+00> : vector<64x128xf32>
    %160 = tpu.matmul %157, %159, %cst_80 {dimension_numbers = #tpu.dot_dimension_numbers<[1], [0], [0], [1], [0, 0, 1, 1], [], []>} : vector<64x128xbf16>, vector<128x128xbf16>, vector<64x128xf32> -> vector<64x128xf32>
    %161 = arith.addf %139, %160 : vector<64x128xf32>
    %c0_81 = arith.constant 0 : index
    %c2_82 = arith.constant 2 : index
    %c1_83 = arith.constant 1 : index
    %c0_84 = arith.constant 0 : index
    %162 = vector.load %arg1[%c0_81, %c2_82, %c1_83, %c0_84] : memref<1x10x10x128xbf16, #tpu.memory_space<vmem>>, vector<1x8x8x128xbf16>
    %163 = vector.shape_cast %162 : vector<1x8x8x128xbf16> to vector<8x8x128xbf16>
    %164 = arith.extf %163 : vector<8x8x128xbf16> to vector<8x8x128xf32>
    %165 = vector.broadcast %21 : vector<1x1x128xf32> to vector<8x8x128xf32>
    %166 = arith.mulf %164, %165 : vector<8x8x128xf32>
    %167 = vector.broadcast %22 : vector<1x1x128xf32> to vector<8x8x128xf32>
    %168 = arith.addf %166, %167 : vector<8x8x128xf32>
    %cst_85 = arith.constant 0.000000e+00 : f32
    %169 = vector.broadcast %cst_85 : f32 to vector<8x8x128xf32>
    %170 = arith.maximumf %168, %169 : vector<8x8x128xf32>
    %c7_i32_86 = arith.constant 7 : i32
    %171 = vector.broadcast %c7_i32_86 : i32 to vector<8x8x128xi32>
    %172 = arith.cmpi slt, %23, %171 : vector<8x8x128xi32>
    %cst_87 = arith.constant 0.000000e+00 : f32
    %173 = vector.broadcast %cst_87 : f32 to vector<8x8x128xf32>
    %174 = arith.select %172, %170, %173 : vector<8x8x128xi1>, vector<8x8x128xf32>
    %175 = arith.truncf %174 : vector<8x8x128xf32> to vector<8x8x128xbf16>
    %176 = vector.shape_cast %175 : vector<8x8x128xbf16> to vector<64x128xbf16>
    %c7 = arith.constant 7 : index
    %c0_88 = arith.constant 0 : index
    %c0_89 = arith.constant 0 : index
    %177 = vector.load %arg5[%c7, %c0_88, %c0_89] : memref<9x128x128xbf16, #tpu.memory_space<vmem>>, vector<1x128x128xbf16>
    %178 = vector.shape_cast %177 : vector<1x128x128xbf16> to vector<128x128xbf16>
    %cst_90 = arith.constant dense<0.000000e+00> : vector<64x128xf32>
    %179 = tpu.matmul %176, %178, %cst_90 {dimension_numbers = #tpu.dot_dimension_numbers<[1], [0], [0], [1], [0, 0, 1, 1], [], []>} : vector<64x128xbf16>, vector<128x128xbf16>, vector<64x128xf32> -> vector<64x128xf32>
    %180 = arith.addf %161, %179 : vector<64x128xf32>
    %c0_91 = arith.constant 0 : index
    %c2_92 = arith.constant 2 : index
    %c2_93 = arith.constant 2 : index
    %c0_94 = arith.constant 0 : index
    %181 = vector.load %arg1[%c0_91, %c2_92, %c2_93, %c0_94] : memref<1x10x10x128xbf16, #tpu.memory_space<vmem>>, vector<1x8x8x128xbf16>
    %182 = vector.shape_cast %181 : vector<1x8x8x128xbf16> to vector<8x8x128xbf16>
    %183 = arith.extf %182 : vector<8x8x128xbf16> to vector<8x8x128xf32>
    %184 = vector.broadcast %21 : vector<1x1x128xf32> to vector<8x8x128xf32>
    %185 = arith.mulf %183, %184 : vector<8x8x128xf32>
    %186 = vector.broadcast %22 : vector<1x1x128xf32> to vector<8x8x128xf32>
    %187 = arith.addf %185, %186 : vector<8x8x128xf32>
    %cst_95 = arith.constant 0.000000e+00 : f32
    %188 = vector.broadcast %cst_95 : f32 to vector<8x8x128xf32>
    %189 = arith.maximumf %187, %188 : vector<8x8x128xf32>
    %c7_i32_96 = arith.constant 7 : i32
    %190 = vector.broadcast %c7_i32_96 : i32 to vector<8x8x128xi32>
    %191 = arith.cmpi slt, %23, %190 : vector<8x8x128xi32>
    %c7_i32_97 = arith.constant 7 : i32
    %192 = vector.broadcast %c7_i32_97 : i32 to vector<8x8x128xi32>
    %193 = arith.cmpi slt, %24, %192 : vector<8x8x128xi32>
    %194 = arith.andi %191, %193 : vector<8x8x128xi1>
    %cst_98 = arith.constant 0.000000e+00 : f32
    %195 = vector.broadcast %cst_98 : f32 to vector<8x8x128xf32>
    %196 = arith.select %194, %189, %195 : vector<8x8x128xi1>, vector<8x8x128xf32>
    %197 = arith.truncf %196 : vector<8x8x128xf32> to vector<8x8x128xbf16>
    %198 = vector.shape_cast %197 : vector<8x8x128xbf16> to vector<64x128xbf16>
    %c8 = arith.constant 8 : index
    %c0_99 = arith.constant 0 : index
    %c0_100 = arith.constant 0 : index
    %199 = vector.load %arg5[%c8, %c0_99, %c0_100] : memref<9x128x128xbf16, #tpu.memory_space<vmem>>, vector<1x128x128xbf16>
    %200 = vector.shape_cast %199 : vector<1x128x128xbf16> to vector<128x128xbf16>
    %cst_101 = arith.constant dense<0.000000e+00> : vector<64x128xf32>
    %201 = tpu.matmul %198, %200, %cst_101 {dimension_numbers = #tpu.dot_dimension_numbers<[1], [0], [0], [1], [0, 0, 1, 1], [], []>} : vector<64x128xbf16>, vector<128x128xbf16>, vector<64x128xf32> -> vector<64x128xf32>
    %202 = arith.addf %180, %201 : vector<64x128xf32>
    %cst_102 = arith.constant dense<0.000000e+00> : vector<128xf32>
    %203 = vector.multi_reduction <add>, %202, %cst_102 [0] : vector<64x128xf32> to vector<128xf32>
    %204 = vector.shape_cast %203 : vector<128xf32> to vector<1x128xf32>
    %205 = arith.mulf %202, %202 : vector<64x128xf32>
    %cst_103 = arith.constant dense<0.000000e+00> : vector<128xf32>
    %206 = vector.multi_reduction <add>, %205, %cst_103 [0] : vector<64x128xf32> to vector<128xf32>
    %207 = vector.shape_cast %206 : vector<128xf32> to vector<1x128xf32>
    %208 = tpu.iota {dimensions = array<i32: 0>} : vector<8x128xi32>
    %c0_i32_104 = arith.constant 0 : i32
    %209 = vector.broadcast %c0_i32_104 : i32 to vector<8x128xi32>
    %210 = arith.cmpi eq, %208, %209 : vector<8x128xi32>
    %c1_i32 = arith.constant 1 : i32
    %211 = vector.broadcast %c1_i32 : i32 to vector<8x128xi32>
    %212 = arith.cmpi eq, %208, %211 : vector<8x128xi32>
    %cst_105 = arith.constant 0.000000e+00 : f32
    %213 = vector.shape_cast %207 : vector<1x128xf32> to vector<1x128xf32>
    %214 = vector.broadcast %213 : vector<1x128xf32> to vector<8x128xf32>
    %215 = vector.broadcast %cst_105 : f32 to vector<8x128xf32>
    %216 = arith.select %212, %214, %215 : vector<8x128xi1>, vector<8x128xf32>
    %217 = vector.shape_cast %204 : vector<1x128xf32> to vector<1x128xf32>
    %218 = vector.broadcast %217 : vector<1x128xf32> to vector<8x128xf32>
    %219 = arith.select %210, %218, %216 : vector<8x128xi1>, vector<8x128xf32>
    %c0_106 = arith.constant 0 : index
    %c0_107 = arith.constant 0 : index
    %c0_108 = arith.constant 0 : index
    %220 = vector.load %arg7[%c0_106, %c0_107, %c0_108] : memref<1x8x128xf32, #tpu.memory_space<vmem>>, vector<1x8x128xf32>
    %221 = vector.shape_cast %220 : vector<1x8x128xf32> to vector<8x128xf32>
    %222 = vector.shape_cast %219 : vector<8x128xf32> to vector<1x8x128xf32>
    tpu.vector_store %arg7[%c0_106, %c0_107, %c0_108], %222 {strides = array<i32>} : memref<1x8x128xf32, #tpu.memory_space<vmem>>, vector<1x8x128xf32>,
    %223 = arith.truncf %202 : vector<64x128xf32> to vector<64x128xbf16>
    %224 = vector.shape_cast %223 : vector<64x128xbf16> to vector<8x8x128xbf16>
    %c0_109 = arith.constant 0 : index
    %c0_110 = arith.constant 0 : index
    %c0_111 = arith.constant 0 : index
    %c0_112 = arith.constant 0 : index
    %225 = vector.load %arg6[%c0_109, %c0_110, %c0_111, %c0_112] : memref<1x8x8x128xbf16, #tpu.memory_space<vmem>>, vector<1x8x8x128xbf16>
    %226 = vector.shape_cast %225 : vector<1x8x8x128xbf16> to vector<8x8x128xbf16>
    %227 = vector.shape_cast %224 : vector<8x8x128xbf16> to vector<1x8x8x128xbf16>
    tpu.vector_store %arg6[%c0_109, %c0_110, %c0_111, %c0_112], %227 {strides = array<i32>} : memref<1x8x8x128xbf16, #tpu.memory_space<vmem>>, vector<1x8x8x128xbf16>,
    return
  }
  func.func @transform_0(%arg0: i32) -> (i32, i32, i32, i32) {
    %c0_i32 = arith.constant 0 : i32
    %c0_i32_0 = arith.constant 0 : i32
    %c0_i32_1 = arith.constant 0 : i32
    %c0_i32_2 = arith.constant 0 : i32
    return %arg0, %c0_i32, %c0_i32_0, %c0_i32_1 : i32, i32, i32, i32
  }
  func.func @transform_1(%arg0: i32) -> (i32, i32, i32) {
    %c0_i32 = arith.constant 0 : i32
    %c0_i32_0 = arith.constant 0 : i32
    %c0_i32_1 = arith.constant 0 : i32
    %c0_i32_2 = arith.constant 0 : i32
    return %c0_i32, %c0_i32_0, %c0_i32_1 : i32, i32, i32
  }
  func.func @transform_2(%arg0: i32) -> (i32, i32) {
    %c0_i32 = arith.constant 0 : i32
    %c0_i32_0 = arith.constant 0 : i32
    %c0_i32_1 = arith.constant 0 : i32
    return %c0_i32, %c0_i32_0 : i32, i32
  }
  func.func @transform_3(%arg0: i32) -> (i32, i32) {
    %c0_i32 = arith.constant 0 : i32
    %c0_i32_0 = arith.constant 0 : i32
    %c0_i32_1 = arith.constant 0 : i32
    return %c0_i32, %c0_i32_0 : i32, i32
  }
  func.func @transform_4(%arg0: i32) -> (i32, i32, i32) {
    %c0_i32 = arith.constant 0 : i32
    %c0_i32_0 = arith.constant 0 : i32
    %c0_i32_1 = arith.constant 0 : i32
    %c0_i32_2 = arith.constant 0 : i32
    return %c0_i32, %c0_i32_0, %c0_i32_1 : i32, i32, i32
  }
  func.func @transform_5(%arg0: i32) -> (i32, i32, i32, i32) {
    %c0_i32 = arith.constant 0 : i32
    %c0_i32_0 = arith.constant 0 : i32
    %c0_i32_1 = arith.constant 0 : i32
    %c0_i32_2 = arith.constant 0 : i32
    return %arg0, %c0_i32, %c0_i32_0, %c0_i32_1 : i32, i32, i32, i32
  }
  func.func @transform_6(%arg0: i32) -> (i32, i32, i32) {
    %c0_i32 = arith.constant 0 : i32
    %c0_i32_0 = arith.constant 0 : i32
    %c0_i32_1 = arith.constant 0 : i32
    return %arg0, %c0_i32, %c0_i32_0 : i32, i32, i32
  }
}

module attributes {stable_mosaic.version = 11 : i64} {
  func.func @_bn_add_relu_kernel(%arg0: i32, %arg1: memref<1x8x8x128xbf16, #tpu.memory_space<vmem>>, %arg2: memref<2x8x128xf32, #tpu.memory_space<vmem>>, %arg3: memref<1x128xf32, #tpu.memory_space<vmem>>, %arg4: memref<1x128xf32, #tpu.memory_space<vmem>>, %arg5: memref<1x8x8x128xbf16, #tpu.memory_space<vmem>>, %arg6: memref<2x8x128xf32, #tpu.memory_space<vmem>>, %arg7: memref<1x128xf32, #tpu.memory_space<vmem>>, %arg8: memref<1x128xf32, #tpu.memory_space<vmem>>, %arg9: memref<1x8x8x128xbf16, #tpu.memory_space<vmem>>) attributes {dimension_semantics = [#tpu.dimension_semantics<parallel>], iteration_bounds = array<i64: 2>, scalar_prefetch = 0 : i64, scratch_operands = 0 : i64, tpu.core_type = #tpu.core_type<tc>, window_params = [{transform_indices = @transform_0, window_bounds = array<i64: 1, 8, 8, 128>}, {pipeline_mode = #tpu.pipeline_mode<synchronous>, transform_indices = @transform_1, window_bounds = array<i64: 2, 8, 128>}, {pipeline_mode = #tpu.pipeline_mode<synchronous>, transform_indices = @transform_2, window_bounds = array<i64: 1, 128>}, {pipeline_mode = #tpu.pipeline_mode<synchronous>, transform_indices = @transform_3, window_bounds = array<i64: 1, 128>}, {transform_indices = @transform_4, window_bounds = array<i64: 1, 8, 8, 128>}, {pipeline_mode = #tpu.pipeline_mode<synchronous>, transform_indices = @transform_5, window_bounds = array<i64: 2, 8, 128>}, {pipeline_mode = #tpu.pipeline_mode<synchronous>, transform_indices = @transform_6, window_bounds = array<i64: 1, 128>}, {pipeline_mode = #tpu.pipeline_mode<synchronous>, transform_indices = @transform_7, window_bounds = array<i64: 1, 128>}, {transform_indices = @transform_8, window_bounds = array<i64: 1, 8, 8, 128>}]} {
    %c0 = arith.constant 0 : index
    %c0_0 = arith.constant 0 : index
    %c0_1 = arith.constant 0 : index
    %0 = vector.load %arg2[%c0, %c0_0, %c0_1] : memref<2x8x128xf32, #tpu.memory_space<vmem>>, vector<2x8x128xf32>
    %c0_2 = arith.constant 0 : index
    %c0_3 = arith.constant 0 : index
    %1 = vector.load %arg3[%c0_2, %c0_3] : memref<1x128xf32, #tpu.memory_space<vmem>>, vector<1x128xf32>
    %c0_4 = arith.constant 0 : index
    %c0_5 = arith.constant 0 : index
    %2 = vector.load %arg4[%c0_4, %c0_5] : memref<1x128xf32, #tpu.memory_space<vmem>>, vector<1x128xf32>
    %3 = vector.extract_strided_slice %0 {offsets = [0, 0, 0], sizes = [2, 1, 128], strides = [1, 1, 1]} : vector<2x8x128xf32> to vector<2x1x128xf32>
    %cst = arith.constant dense<0.000000e+00> : vector<1x128xf32>
    %4 = vector.multi_reduction <add>, %3, %cst [0] : vector<2x1x128xf32> to vector<1x128xf32>
    %5 = vector.extract_strided_slice %0 {offsets = [0, 1, 0], sizes = [2, 1, 128], strides = [1, 1, 1]} : vector<2x8x128xf32> to vector<2x1x128xf32>
    %cst_6 = arith.constant dense<0.000000e+00> : vector<1x128xf32>
    %6 = vector.multi_reduction <add>, %5, %cst_6 [0] : vector<2x1x128xf32> to vector<1x128xf32>
    %cst_7 = arith.constant 7.812500e-03 : f32
    %7 = vector.broadcast %cst_7 : f32 to vector<1x128xf32>
    %8 = arith.mulf %4, %7 : vector<1x128xf32>
    %cst_8 = arith.constant 7.812500e-03 : f32
    %9 = vector.broadcast %cst_8 : f32 to vector<1x128xf32>
    %10 = arith.mulf %6, %9 : vector<1x128xf32>
    %11 = arith.mulf %8, %8 : vector<1x128xf32>
    %12 = arith.subf %10, %11 : vector<1x128xf32>
    %cst_9 = arith.constant 0.000000e+00 : f32
    %13 = vector.broadcast %cst_9 : f32 to vector<1x128xf32>
    %14 = arith.maximumf %12, %13 : vector<1x128xf32>
    %cst_10 = arith.constant 9.99999974E-6 : f32
    %15 = vector.broadcast %cst_10 : f32 to vector<1x128xf32>
    %16 = arith.addf %14, %15 : vector<1x128xf32>
    %17 = math.rsqrt %16 : vector<1x128xf32>
    %18 = arith.mulf %1, %17 : vector<1x128xf32>
    %19 = arith.mulf %18, %8 : vector<1x128xf32>
    %20 = arith.subf %2, %19 : vector<1x128xf32>
    %c0_11 = arith.constant 0 : index
    %c0_12 = arith.constant 0 : index
    %c0_13 = arith.constant 0 : index
    %c0_14 = arith.constant 0 : index
    %21 = vector.load %arg1[%c0_11, %c0_12, %c0_13, %c0_14] : memref<1x8x8x128xbf16, #tpu.memory_space<vmem>>, vector<1x8x8x128xbf16>
    %22 = vector.shape_cast %21 : vector<1x8x8x128xbf16> to vector<8x8x128xbf16>
    %23 = arith.extf %22 : vector<8x8x128xbf16> to vector<8x8x128xf32>
    %24 = vector.shape_cast %18 : vector<1x128xf32> to vector<1x1x128xf32>
    %25 = vector.broadcast %24 : vector<1x1x128xf32> to vector<8x8x128xf32>
    %26 = arith.mulf %23, %25 : vector<8x8x128xf32>
    %27 = vector.shape_cast %20 : vector<1x128xf32> to vector<1x1x128xf32>
    %28 = vector.broadcast %27 : vector<1x1x128xf32> to vector<8x8x128xf32>
    %29 = arith.addf %26, %28 : vector<8x8x128xf32>
    %c0_15 = arith.constant 0 : index
    %c0_16 = arith.constant 0 : index
    %c0_17 = arith.constant 0 : index
    %30 = vector.load %arg6[%c0_15, %c0_16, %c0_17] : memref<2x8x128xf32, #tpu.memory_space<vmem>>, vector<2x8x128xf32>
    %c0_18 = arith.constant 0 : index
    %c0_19 = arith.constant 0 : index
    %31 = vector.load %arg7[%c0_18, %c0_19] : memref<1x128xf32, #tpu.memory_space<vmem>>, vector<1x128xf32>
    %c0_20 = arith.constant 0 : index
    %c0_21 = arith.constant 0 : index
    %32 = vector.load %arg8[%c0_20, %c0_21] : memref<1x128xf32, #tpu.memory_space<vmem>>, vector<1x128xf32>
    %33 = vector.extract_strided_slice %30 {offsets = [0, 0, 0], sizes = [2, 1, 128], strides = [1, 1, 1]} : vector<2x8x128xf32> to vector<2x1x128xf32>
    %cst_22 = arith.constant dense<0.000000e+00> : vector<1x128xf32>
    %34 = vector.multi_reduction <add>, %33, %cst_22 [0] : vector<2x1x128xf32> to vector<1x128xf32>
    %35 = vector.extract_strided_slice %30 {offsets = [0, 1, 0], sizes = [2, 1, 128], strides = [1, 1, 1]} : vector<2x8x128xf32> to vector<2x1x128xf32>
    %cst_23 = arith.constant dense<0.000000e+00> : vector<1x128xf32>
    %36 = vector.multi_reduction <add>, %35, %cst_23 [0] : vector<2x1x128xf32> to vector<1x128xf32>
    %cst_24 = arith.constant 7.812500e-03 : f32
    %37 = vector.broadcast %cst_24 : f32 to vector<1x128xf32>
    %38 = arith.mulf %34, %37 : vector<1x128xf32>
    %cst_25 = arith.constant 7.812500e-03 : f32
    %39 = vector.broadcast %cst_25 : f32 to vector<1x128xf32>
    %40 = arith.mulf %36, %39 : vector<1x128xf32>
    %41 = arith.mulf %38, %38 : vector<1x128xf32>
    %42 = arith.subf %40, %41 : vector<1x128xf32>
    %cst_26 = arith.constant 0.000000e+00 : f32
    %43 = vector.broadcast %cst_26 : f32 to vector<1x128xf32>
    %44 = arith.maximumf %42, %43 : vector<1x128xf32>
    %cst_27 = arith.constant 9.99999974E-6 : f32
    %45 = vector.broadcast %cst_27 : f32 to vector<1x128xf32>
    %46 = arith.addf %44, %45 : vector<1x128xf32>
    %47 = math.rsqrt %46 : vector<1x128xf32>
    %48 = arith.mulf %31, %47 : vector<1x128xf32>
    %49 = arith.mulf %48, %38 : vector<1x128xf32>
    %50 = arith.subf %32, %49 : vector<1x128xf32>
    %c0_28 = arith.constant 0 : index
    %c0_29 = arith.constant 0 : index
    %c0_30 = arith.constant 0 : index
    %c0_31 = arith.constant 0 : index
    %51 = vector.load %arg5[%c0_28, %c0_29, %c0_30, %c0_31] : memref<1x8x8x128xbf16, #tpu.memory_space<vmem>>, vector<1x8x8x128xbf16>
    %52 = vector.shape_cast %51 : vector<1x8x8x128xbf16> to vector<8x8x128xbf16>
    %53 = arith.extf %52 : vector<8x8x128xbf16> to vector<8x8x128xf32>
    %54 = vector.shape_cast %48 : vector<1x128xf32> to vector<1x1x128xf32>
    %55 = vector.broadcast %54 : vector<1x1x128xf32> to vector<8x8x128xf32>
    %56 = arith.mulf %53, %55 : vector<8x8x128xf32>
    %57 = vector.shape_cast %50 : vector<1x128xf32> to vector<1x1x128xf32>
    %58 = vector.broadcast %57 : vector<1x1x128xf32> to vector<8x8x128xf32>
    %59 = arith.addf %56, %58 : vector<8x8x128xf32>
    %60 = arith.addf %29, %59 : vector<8x8x128xf32>
    %cst_32 = arith.constant 0.000000e+00 : f32
    %61 = vector.broadcast %cst_32 : f32 to vector<8x8x128xf32>
    %62 = arith.maximumf %60, %61 : vector<8x8x128xf32>
    %63 = arith.truncf %62 : vector<8x8x128xf32> to vector<8x8x128xbf16>
    %c0_33 = arith.constant 0 : index
    %c0_34 = arith.constant 0 : index
    %c0_35 = arith.constant 0 : index
    %c0_36 = arith.constant 0 : index
    %64 = vector.load %arg9[%c0_33, %c0_34, %c0_35, %c0_36] : memref<1x8x8x128xbf16, #tpu.memory_space<vmem>>, vector<1x8x8x128xbf16>
    %65 = vector.shape_cast %64 : vector<1x8x8x128xbf16> to vector<8x8x128xbf16>
    %66 = vector.shape_cast %63 : vector<8x8x128xbf16> to vector<1x8x8x128xbf16>
    tpu.vector_store %arg9[%c0_33, %c0_34, %c0_35, %c0_36], %66 {strides = array<i32>} : memref<1x8x8x128xbf16, #tpu.memory_space<vmem>>, vector<1x8x8x128xbf16>,
    return
  }
  func.func @transform_0(%arg0: i32) -> (i32, i32, i32, i32) {
    %c0_i32 = arith.constant 0 : i32
    %c0_i32_0 = arith.constant 0 : i32
    %c0_i32_1 = arith.constant 0 : i32
    %c0_i32_2 = arith.constant 0 : i32
    return %arg0, %c0_i32, %c0_i32_0, %c0_i32_1 : i32, i32, i32, i32
  }
  func.func @transform_1(%arg0: i32) -> (i32, i32, i32) {
    %c0_i32 = arith.constant 0 : i32
    %c0_i32_0 = arith.constant 0 : i32
    %c0_i32_1 = arith.constant 0 : i32
    %c0_i32_2 = arith.constant 0 : i32
    return %c0_i32, %c0_i32_0, %c0_i32_1 : i32, i32, i32
  }
  func.func @transform_2(%arg0: i32) -> (i32, i32) {
    %c0_i32 = arith.constant 0 : i32
    %c0_i32_0 = arith.constant 0 : i32
    %c0_i32_1 = arith.constant 0 : i32
    return %c0_i32, %c0_i32_0 : i32, i32
  }
  func.func @transform_3(%arg0: i32) -> (i32, i32) {
    %c0_i32 = arith.constant 0 : i32
    %c0_i32_0 = arith.constant 0 : i32
    %c0_i32_1 = arith.constant 0 : i32
    return %c0_i32, %c0_i32_0 : i32, i32
  }
  func.func @transform_4(%arg0: i32) -> (i32, i32, i32, i32) {
    %c0_i32 = arith.constant 0 : i32
    %c0_i32_0 = arith.constant 0 : i32
    %c0_i32_1 = arith.constant 0 : i32
    %c0_i32_2 = arith.constant 0 : i32
    return %arg0, %c0_i32, %c0_i32_0, %c0_i32_1 : i32, i32, i32, i32
  }
  func.func @transform_5(%arg0: i32) -> (i32, i32, i32) {
    %c0_i32 = arith.constant 0 : i32
    %c0_i32_0 = arith.constant 0 : i32
    %c0_i32_1 = arith.constant 0 : i32
    %c0_i32_2 = arith.constant 0 : i32
    return %c0_i32, %c0_i32_0, %c0_i32_1 : i32, i32, i32
  }
  func.func @transform_6(%arg0: i32) -> (i32, i32) {
    %c0_i32 = arith.constant 0 : i32
    %c0_i32_0 = arith.constant 0 : i32
    %c0_i32_1 = arith.constant 0 : i32
    return %c0_i32, %c0_i32_0 : i32, i32
  }
  func.func @transform_7(%arg0: i32) -> (i32, i32) {
    %c0_i32 = arith.constant 0 : i32
    %c0_i32_0 = arith.constant 0 : i32
    %c0_i32_1 = arith.constant 0 : i32
    return %c0_i32, %c0_i32_0 : i32, i32
  }
  func.func @transform_8(%arg0: i32) -> (i32, i32, i32, i32) {
    %c0_i32 = arith.constant 0 : i32
    %c0_i32_0 = arith.constant 0 : i32
    %c0_i32_1 = arith.constant 0 : i32
    %c0_i32_2 = arith.constant 0 : i32
    return %arg0, %c0_i32, %c0_i32_0, %c0_i32_1 : i32, i32, i32, i32
  }
}

</mosaic_0001>

<llo_original>
// kernel: basic_block_forward.5
$region0: #{basic_block_forward.5}
  #allocation0 [shape = 'u32[]', space=smem, size = 0x4, offset = 0x4, fixed_abs, tag = 'smem constant byte address 0x4 - core index']
  #allocation1 [shape = 'u32[144,128]{1,0:T(1,128)}', space=vmem, size = 0x12000, scoped, tag = 'internal scratch']
  %s0 = inlined_call_operand.vmem [shape: bf16[2,8,8,128], index: 0, kind: input, shape index: {}]
  %s1 = inlined_call_operand.vmem [shape: f32[2,8,128], index: 1, kind: input, shape index: {}]
  %s2 = inlined_call_operand.vmem [shape: f32[1,128], index: 2, kind: input, shape index: {}]
  %s3 = inlined_call_operand.vmem [shape: f32[1,128], index: 3, kind: input, shape index: {}]
  %s4 = inlined_call_operand.vmem [shape: bf16[2,8,8,128], index: 4, kind: input, shape index: {}]
  %s5 = inlined_call_operand.vmem [shape: f32[2,8,128], index: 5, kind: input, shape index: {}]
  %s6 = inlined_call_operand.vmem [shape: f32[1,128], index: 6, kind: input, shape index: {}]
  %s7 = inlined_call_operand.vmem [shape: f32[1,128], index: 7, kind: input, shape index: {}]
  %s8 = inlined_call_operand.vmem [shape: bf16[2,8,8,128], index: 8, kind: output, shape index: {}]
  %s9 = sld [smem:[#allocation0]]
  $region65: #{basic_block_forward.5} parent=0
    _
  %s11 = ssub.s32 1, %s9
  %s12 = scalar_select 0, %s11, %s9
  loop: start=0, step=1, limit=4
  $region2: #{basic_block_forward.5} parent=0 // loop_pre_header
    _
  $region3: #{basic_block_forward.5} parent=0 // loop_header
    %s14 = sphi 0, %s18
    %p15 = scmp.ge.s32.totalorder %s14, 4
    %s24 = sphi 0, %s26
    %s27 = sphi 0, %s24
    %s28 = sphi 0, %s27
    %s44 = sphi 0, %s28
    %s48 = sphi 0, %s48
    %s50 = sphi 0, %s48
    %s51 = sphi 0, %s50
    %s65 = sphi 0, %s51
    %s69 = sphi 0, %s69
    %s71 = sphi 0, %s69
    %s72 = sphi 0, %s71
    %s86 = sphi 0, %s72
    %s90 = sphi 0, %s90
    %s92 = sphi 0, %s90
    %s93 = sphi 0, %s92
    %s107 = sphi 0, %s93
    %s113 = sphi 0, %s115
    %s116 = sphi 0, %s113
    %s117 = sphi 0, %s116
    %s133 = sphi 0, %s117
    %s137 = sphi 0, %s137
    %s139 = sphi 0, %s137
    %s140 = sphi 0, %s139
    %s154 = sphi 0, %s140
    %s158 = sphi 0, %s158
    %s160 = sphi 0, %s158
    %s161 = sphi 0, %s160
    %s175 = sphi 0, %s161
    %s179 = sphi 0, %s179
    %s181 = sphi 0, %s179
    %s182 = sphi 0, %s181
    %s196 = sphi 0, %s182
    %s202 = sphi 0, %s204
    %s205 = sphi 0, %s202
    %s206 = sphi 0, %s205
    %s222 = sphi 0, %s206
  $region4: #{basic_block_forward.5} parent=0 // loop_header_branch
    %17 = sbr.rel (%p15) target = $region8
  $region5: #{basic_block_forward.5} parent=0 // loop_body
    %s19 = ssub.s32 %s14, 1
    %s20 = ssub.s32 %s14, 2
    %s21 = sadd.s32 %s14, 1
    %s22 = ssub.s32 %s14, %s21
    %p23 = scmp.eq.s32.totalorder %s22, 0
    %s25 = sadd.s32 %s24, 1
    %s26 = scalar_select %p23, %s24, %s25
    %p29 = pneg %p23
    %p30 = scmp.eq.s32.totalorder %s14, 1
    %p31 = por %p29, %p30
    %p32 = scmp.ne.s32.totalorder %s24, %s27
    %p33 = scmp.eq.s32.totalorder %s14, 0
    %p34 = por %p32, %p33
    %p35 = scmp.ne.s32.totalorder %s24, %s27
    %p36 = scmp.eq.s32.totalorder %s19, 1
    %p37 = por %p35, %p36
    %p38 = scmp.ne.s32.totalorder %s27, %s28
    %p39 = scmp.eq.s32.totalorder %s19, 0
    %p40 = por %p38, %p39
    %p41 = scmp.ne.s32.totalorder %s27, %s28
    %p42 = scmp.eq.s32.totalorder %s20, 1
    %p43 = por %p41, %p42
    %p45 = scmp.ne.s32.totalorder %s28, %s44
    %p46 = scmp.eq.s32.totalorder %s20, 0
    %p47 = por %p45, %p46
    %s49 = sadd.s32 %s48, 1
    %p52 = scmp.eq.s32.totalorder %s14, 1
    %p53 = scmp.ne.s32.totalorder %s48, %s50
    %p54 = scmp.eq.s32.totalorder %s14, 0
    %p55 = por %p53, %p54
    %p56 = scmp.ne.s32.totalorder %s48, %s50
    %p57 = scmp.eq.s32.totalorder %s19, 1
    %p58 = por %p56, %p57
    %p59 = scmp.ne.s32.totalorder %s50, %s51
    %p60 = scmp.eq.s32.totalorder %s19, 0
    %p61 = por %p59, %p60
    %p62 = scmp.ne.s32.totalorder %s50, %s51
    %p63 = scmp.eq.s32.totalorder %s20, 1
    %p64 = por %p62, %p63
    %p66 = scmp.ne.s32.totalorder %s51, %s65
    %p67 = scmp.eq.s32.totalorder %s20, 0
    %p68 = por %p66, %p67
    %s70 = sadd.s32 %s69, 1
    %p73 = scmp.eq.s32.totalorder %s14, 1
    %p74 = scmp.ne.s32.totalorder %s69, %s71
    %p75 = scmp.eq.s32.totalorder %s14, 0
    %p76 = por %p74, %p75
    %p77 = scmp.ne.s32.totalorder %s69, %s71
    %p78 = scmp.eq.s32.totalorder %s19, 1
    %p79 = por %p77, %p78
    %p80 = scmp.ne.s32.totalorder %s71, %s72
    %p81 = scmp.eq.s32.totalorder %s19, 0
    %p82 = por %p80, %p81
    %p83 = scmp.ne.s32.totalorder %s71, %s72
    %p84 = scmp.eq.s32.totalorder %s20, 1
    %p85 = por %p83, %p84
    %p87 = scmp.ne.s32.totalorder %s72, %s86
    %p88 = scmp.eq.s32.totalorder %s20, 0
    %p89 = por %p87, %p88
    %s91 = sadd.s32 %s90, 1
    %p94 = scmp.eq.s32.totalorder %s14, 1
    %p95 = scmp.ne.s32.totalorder %s90, %s92
    %p96 = scmp.eq.s32.totalorder %s14, 0
    %p97 = por %p95, %p96
    %p98 = scmp.ne.s32.totalorder %s90, %s92
    %p99 = scmp.eq.s32.totalorder %s19, 1
    %p100 = por %p98, %p99
    %p101 = scmp.ne.s32.totalorder %s92, %s93
    %p102 = scmp.eq.s32.totalorder %s19, 0
    %p103 = por %p101, %p102
    %p104 = scmp.ne.s32.totalorder %s92, %s93
    %p105 = scmp.eq.s32.totalorder %s20, 1
    %p106 = por %p104, %p105
    %p108 = scmp.ne.s32.totalorder %s93, %s107
    %p109 = scmp.eq.s32.totalorder %s20, 0
    %p110 = por %p108, %p109
    %s111 = ssub.s32 %s14, %s21
    %p112 = scmp.eq.s32.totalorder %s111, 0
    %s114 = sadd.s32 %s113, 1
    %s115 = scalar_select %p112, %s113, %s114
    %p118 = pneg %p112
    %p119 = scmp.eq.s32.totalorder %s14, 1
    %p120 = por %p118, %p119
    %p121 = scmp.ne.s32.totalorder %s113, %s116
    %p122 = scmp.eq.s32.totalorder %s14, 0
    %p123 = por %p121, %p122
    %p124 = scmp.ne.s32.totalorder %s113, %s116
    %p125 = scmp.eq.s32.totalorder %s19, 1
    %p126 = por %p124, %p125
    %p127 = scmp.ne.s32.totalorder %s116, %s117
    %p128 = scmp.eq.s32.totalorder %s19, 0
    %p129 = por %p127, %p128
    %p130 = scmp.ne.s32.totalorder %s116, %s117
    %p131 = scmp.eq.s32.totalorder %s20, 1
    %p132 = por %p130, %p131
    %p134 = scmp.ne.s32.totalorder %s117, %s133
    %p135 = scmp.eq.s32.totalorder %s20, 0
    %p136 = por %p134, %p135
    %s138 = sadd.s32 %s137, 1
    %p141 = scmp.eq.s32.totalorder %s14, 1
    %p142 = scmp.ne.s32.totalorder %s137, %s139
    %p143 = scmp.eq.s32.totalorder %s14, 0
    %p144 = por %p142, %p143
    %p145 = scmp.ne.s32.totalorder %s137, %s139
    %p146 = scmp.eq.s32.totalorder %s19, 1
    %p147 = por %p145, %p146
    %p148 = scmp.ne.s32.totalorder %s139, %s140
    %p149 = scmp.eq.s32.totalorder %s19, 0
    %p150 = por %p148, %p149
    %p151 = scmp.ne.s32.totalorder %s139, %s140
    %p152 = scmp.eq.s32.totalorder %s20, 1
    %p153 = por %p151, %p152
    %p155 = scmp.ne.s32.totalorder %s140, %s154
    %p156 = scmp.eq.s32.totalorder %s20, 0
    %p157 = por %p155, %p156
    %s159 = sadd.s32 %s158, 1
    %p162 = scmp.eq.s32.totalorder %s14, 1
    %p163 = scmp.ne.s32.totalorder %s158, %s160
    %p164 = scmp.eq.s32.totalorder %s14, 0
    %p165 = por %p163, %p164
    %p166 = scmp.ne.s32.totalorder %s158, %s160
    %p167 = scmp.eq.s32.totalorder %s19, 1
    %p168 = por %p166, %p167
    %p169 = scmp.ne.s32.totalorder %s160, %s161
    %p170 = scmp.eq.s32.totalorder %s19, 0
    %p171 = por %p169, %p170
    %p172 = scmp.ne.s32.totalorder %s160, %s161
    %p173 = scmp.eq.s32.totalorder %s20, 1
    %p174 = por %p172, %p173
    %p176 = scmp.ne.s32.totalorder %s161, %s175
    %p177 = scmp.eq.s32.totalorder %s20, 0
    %p178 = por %p176, %p177
    %s180 = sadd.s32 %s179, 1
    %p183 = scmp.eq.s32.totalorder %s14, 1
    %p184 = scmp.ne.s32.totalorder %s179, %s181
    %p185 = scmp.eq.s32.totalorder %s14, 0
    %p186 = por %p184, %p185
    %p187 = scmp.ne.s32.totalorder %s179, %s181
    %p188 = scmp.eq.s32.totalorder %s19, 1
    %p189 = por %p187, %p188
    %p190 = scmp.ne.s32.totalorder %s181, %s182
    %p191 = scmp.eq.s32.totalorder %s19, 0
    %p192 = por %p190, %p191
    %p193 = scmp.ne.s32.totalorder %s181, %s182
    %p194 = scmp.eq.s32.totalorder %s20, 1
    %p195 = por %p193, %p194
    %p197 = scmp.ne.s32.totalorder %s182, %s196
    %p198 = scmp.eq.s32.totalorder %s20, 0
    %p199 = por %p197, %p198
    %s200 = ssub.s32 %s14, %s21
    %p201 = scmp.eq.s32.totalorder %s200, 0
    %s203 = sadd.s32 %s202, 1
    %s204 = scalar_select %p201, %s202, %s203
    %p207 = pneg %p201
    %p208 = scmp.eq.s32.totalorder %s14, 1
    %p209 = por %p207, %p208
    %p210 = scmp.ne.s32.totalorder %s202, %s205
    %p211 = scmp.eq.s32.totalorder %s14, 0
    %p212 = por %p210, %p211
    %p213 = scmp.ne.s32.totalorder %s202, %s205
    %p214 = scmp.eq.s32.totalorder %s19, 1
    %p215 = por %p213, %p214
    %p216 = scmp.ne.s32.totalorder %s205, %s206
    %p217 = scmp.eq.s32.totalorder %s19, 0
    %p218 = por %p216, %p217
    %p219 = scmp.ne.s32.totalorder %s205, %s206
    %p220 = scmp.eq.s32.totalorder %s20, 1
    %p221 = por %p219, %p220
    %p223 = scmp.ne.s32.totalorder %s206, %s222
    %p224 = scmp.eq.s32.totalorder %s20, 0
    %p225 = por %p223, %p224
    %p226 = scmp.le.s32.totalorder 1, %s14
    %p227 = scmp.lt.s32.totalorder %s14, 3
    %p228 = pnand %p226, %p227
    %p229 = pneg %p228
    // Predicated region
    $region9: #{basic_block_forward.5} parent=5 // pred_check
      _
    $region10: #{basic_block_forward.5} parent=5 // pred_check_branch
      %231 = sbr.rel (%p228) target = $region12
    $region11: #{basic_block_forward.5} parent=5 // pred_region
      %s232 = ssub.s32 %s14, 1
      // Predicated region
      $region13: #{basic_block_forward.5} parent=11 // pred_check
        %p233 = pneg %p61
      $region14: #{basic_block_forward.5} parent=11 // pred_check_branch
        %235 = sbr.rel (%p233) target = $region16
      $region15: #{basic_block_forward.5} parent=11 // pred_region
        _
      $region16: #{basic_block_forward.5} parent=11 // pred_fallthru
        _
      // Predicated region
      $region17: #{basic_block_forward.5} parent=11 // pred_check
        %p236 = pneg %p82
      $region18: #{basic_block_forward.5} parent=11 // pred_check_branch
        %238 = sbr.rel (%p236) target = $region20
      $region19: #{basic_block_forward.5} parent=11 // pred_region
        _
      $region20: #{basic_block_forward.5} parent=11 // pred_fallthru
        _
      // Predicated region
      $region21: #{basic_block_forward.5} parent=11 // pred_check
        %p239 = pneg %p103
      $region22: #{basic_block_forward.5} parent=11 // pred_check_branch
        %241 = sbr.rel (%p239) target = $region24
      $region23: #{basic_block_forward.5} parent=11 // pred_region
        _
      $region24: #{basic_block_forward.5} parent=11 // pred_fallthru
        _
      // Predicated region
      $region25: #{basic_block_forward.5} parent=11 // pred_check
        %p242 = pneg %p150
      $region26: #{basic_block_forward.5} parent=11 // pred_check_branch
        %244 = sbr.rel (%p242) target = $region28
      $region27: #{basic_block_forward.5} parent=11 // pred_region
        _
      $region28: #{basic_block_forward.5} parent=11 // pred_fallthru
        _
      // Predicated region
      $region29: #{basic_block_forward.5} parent=11 // pred_check
        %p245 = pneg %p171
      $region30: #{basic_block_forward.5} parent=11 // pred_check_branch
        %247 = sbr.rel (%p245) target = $region32
      $region31: #{basic_block_forward.5} parent=11 // pred_region
        _
      $region32: #{basic_block_forward.5} parent=11 // pred_fallthru
        _
      // Predicated region
      $region33: #{basic_block_forward.5} parent=11 // pred_check
        %p248 = pneg %p192
      $region34: #{basic_block_forward.5} parent=11 // pred_check_branch
        %250 = sbr.rel (%p248) target = $region36
      $region35: #{basic_block_forward.5} parent=11 // pred_region
        _
      $region36: #{basic_block_forward.5} parent=11 // pred_fallthru
        _
    $region12: #{basic_block_forward.5} parent=5 // pred_fallthru
      _
    %p251 = scmp.lt.s32.totalorder %s14, 2
    // Predicated region
    $region37: #{basic_block_forward.5} parent=5 // pred_check
      %p252 = pneg %p251
    $region38: #{basic_block_forward.5} parent=5 // pred_check_branch
      %254 = sbr.rel (%p252) target = $region40
    $region39: #{basic_block_forward.5} parent=5 // pred_region
      // Predicated region
      $region41: #{basic_block_forward.5} parent=39 // pred_check
        %p255 = pneg %p34
      $region42: #{basic_block_forward.5} parent=39 // pred_check_branch
        %257 = sbr.rel (%p255) target = $region44
      $region43: #{basic_block_forward.5} parent=39 // pred_region
        %p258 = scmp.lt.s32.totalorder %s14, 1
        %s259 = scalar_select %p258, %s14, 1
        %s260 = smul.addr %s259, 8
        %s261 = smul.addr %s260, 4
        %s262 = scalar_lea.vmem %s0, %s261
      $region44: #{basic_block_forward.5} parent=39 // pred_fallthru
        _
      // Predicated region
      $region45: #{basic_block_forward.5} parent=39 // pred_check
        %p263 = pneg %p123
      $region46: #{basic_block_forward.5} parent=39 // pred_check_branch
        %265 = sbr.rel (%p263) target = $region48
      $region47: #{basic_block_forward.5} parent=39 // pred_region
        %p266 = scmp.lt.s32.totalorder %s14, 1
        %s267 = scalar_select %p266, %s14, 1
        %s268 = smul.addr %s267, 8
        %s269 = smul.addr %s268, 4
        %s270 = scalar_lea.vmem %s4, %s269
      $region48: #{basic_block_forward.5} parent=39 // pred_fallthru
        _
    $region40: #{basic_block_forward.5} parent=5 // pred_fallthru
      _
    %p271 = scmp.le.s32.totalorder 1, %s14
    %p272 = scmp.lt.s32.totalorder %s14, 3
    %p273 = pnand %p271, %p272
    %p274 = pneg %p273
    // Predicated region
    $region49: #{basic_block_forward.5} parent=5 // pred_check
      _
    $region50: #{basic_block_forward.5} parent=5 // pred_check_branch
      %276 = sbr.rel (%p273) target = $region52
    $region51: #{basic_block_forward.5} parent=5 // pred_region
      %s277 = ssub.s32 %s14, 1
      %p278 = scmp.lt.s32.totalorder %s19, 1
      %s279 = scalar_select %p278, %s19, 1
      %s280 = smul.addr %s279, 8
      %s281 = smul.addr %s280, 4
      %s282 = scalar_lea.vmem %s0, %s281
      %p283 = pneg %p40
      %p284 = pneg %p37
      %p285 = pneg %p61
      %p286 = pneg %p58
      %p287 = pneg %p82
      %p288 = pneg %p79
      %p289 = pneg %p103
      %p290 = pneg %p100
      %p291 = scmp.lt.s32.totalorder %s19, 1
      %s292 = scalar_select %p291, %s19, 1
      %s293 = smul.addr %s292, 8
      %s294 = smul.addr %s293, 4
      %s295 = scalar_lea.vmem %s4, %s294
      %p296 = pneg %p129
      %p297 = pneg %p126
      %p298 = pneg %p150
      %p299 = pneg %p147
      %p300 = pneg %p171
      %p301 = pneg %p168
      %p302 = pneg %p192
      %p303 = pneg %p189
      %p304 = pneg %p218
      %p305 = pneg %p215
      %p306 = scmp.lt.s32.totalorder %s19, 1
      %s307 = scalar_select %p306, %s19, 1
      %s308 = smul.addr %s307, 8
      %s309 = smul.addr %s308, 4
      %s310 = scalar_lea.vmem %s8, %s309
      %p311 = scmp.lt.s32.totalorder %s19, 1
      %s312 = scalar_select %p311, %s19, 1
      %s313 = smul.addr %s312, 8
      %s314 = smul.addr %s313, 4
      %s315 = scalar_lea.vmem %s0, %s314
      %p316 = scmp.lt.s32.totalorder %s19, 1
      %s317 = scalar_select %p316, %s19, 1
      %s318 = smul.addr %s317, 8
      %s319 = smul.addr %s318, 4
      %s320 = scalar_lea.vmem %s4, %s319
      %p321 = scmp.lt.s32.totalorder %s19, 1
      %s322 = scalar_select %p321, %s19, 1
      %s323 = smul.addr %s322, 8
      %s324 = smul.addr %s323, 4
      %s325 = scalar_lea.vmem %s8, %s324
      %v326 = vld [vmem:[%s1] sm:$0xff]
      %v327 = vld [vmem:[%s1 + $0x8] sm:$0xff]
      %v328 = vld [vmem:[%s2] sm:$0x1]
      %v329 = vld [vmem:[%s3] sm:$0x1]
      %vm330 = vcmask 1040384
      %v331 = vsel %vm330, %v326, 0.0
      %v332 = vsel %vm330, %v327, 0.0
      %v333 = vadd.f32 %v331, %v332
      %vm334 = vcmask 1041409
      %v335 = vsel %vm334, %v326, 0.0
      %v336 = vsel %vm334, %v327, 0.0
      %v337 = vadd.f32 %v335, %v336
      %v338 = vmul.f32 %v333, 0.0078125
      %v339 = vmul.f32 %v337, 0.0078125
      %v340 = vmul.f32 %v338, %v338
      %v342 = vrot.slane %v340, 7
      %v344 = vsub.f32 %v339, %v342
      %v345 = vmax.f32 %v344, 0.0
      %v346 = vadd.f32 %v345, 1e-05
      %v347 = vrsqrt.pop %v346
      %v350 = vunpack.c.l.s4 1966171168
      %v351 = vunpack.c.0.s8 %v350
      %v352 = vlaneseq
      %v353 = vshrl.u32 %v352, 7
      %v354 = vsub.s32 %v351, %v353
      %v355 = vrot.slane %v347, %v354
      %v356 = vcombine.high %v355, %v355
      %v358 = vunpack.c.l.s4 1966171168
      %v359 = vunpack.c.0.s8 %v358
      %v360 = vlaneseq
      %v361 = vshrl.u32 %v360, 7
      %v362 = vsub.s32 %v359, %v361
      %v363 = vrot.slane %v356, %v362
      %v365 = vmul.f32 %v328, %v363
      %v366 = vmul.f32 %v365, %v338
      %v367 = vsub.f32 %v329, %v366
      %v368 = vld [vmem:[%s315] sm:$0xf]
      %v369 = vld [vmem:[%s315 + $0x4] sm:$0xf]
      %v370 = vld [vmem:[%s315 + $0x8] sm:$0xf]
      %v371 = vld [vmem:[%s315 + $0xc] sm:$0xf]
      %v372 = vld [vmem:[%s315 + $0x10] sm:$0xf]
      %v373 = vld [vmem:[%s315 + $0x14] sm:$0xf]
      %v374 = vld [vmem:[%s315 + $0x18] sm:$0xf]
      %v375 = vld [vmem:[%s315 + $0x1c] sm:$0xf]
      %v376 = vunpack.c.l.bf16 %v368
      %v377 = vunpack.c.l.bf16 %v369
      %v378 = vunpack.c.l.bf16 %v370
      %v379 = vunpack.c.l.bf16 %v371
      %v380 = vunpack.c.l.bf16 %v372
      %v381 = vunpack.c.l.bf16 %v373
      %v382 = vunpack.c.l.bf16 %v374
      %v383 = vunpack.c.l.bf16 %v375
      %v385 = vlaneseq
      %v386 = vshrl.u32 %v385, 7
      %v387 = vsub.s32 0, %v386
      %v388 = vrot.slane %v365, %v387
      %v390 = vmul.f32 %v376, %v388
      %v391 = vmul.f32 %v377, %v388
      %v392 = vmul.f32 %v378, %v388
      %v393 = vmul.f32 %v379, %v388
      %v394 = vmul.f32 %v380, %v388
      %v395 = vmul.f32 %v381, %v388
      %v396 = vmul.f32 %v382, %v388
      %v397 = vmul.f32 %v383, %v388
      %v399 = vlaneseq
      %v400 = vshrl.u32 %v399, 7
      %v401 = vsub.s32 0, %v400
      %v402 = vrot.slane %v367, %v401
      %v404 = vadd.f32 %v390, %v402
      %v405 = vadd.f32 %v391, %v402
      %v406 = vadd.f32 %v392, %v402
      %v407 = vadd.f32 %v393, %v402
      %v408 = vadd.f32 %v394, %v402
      %v409 = vadd.f32 %v395, %v402
      %v410 = vadd.f32 %v396, %v402
      %v411 = vadd.f32 %v397, %v402
      %v412 = vld [vmem:[%s5] sm:$0xff]
      %v413 = vld [vmem:[%s5 + $0x8] sm:$0xff]
      %v414 = vld [vmem:[%s6] sm:$0x1]
      %v415 = vld [vmem:[%s7] sm:$0x1]
      %v416 = vsel %vm330, %v412, 0.0
      %v417 = vsel %vm330, %v413, 0.0
      %v418 = vadd.f32 %v416, %v417
      %v419 = vsel %vm334, %v412, 0.0
      %v420 = vsel %vm334, %v413, 0.0
      %v421 = vadd.f32 %v419, %v420
      %v422 = vmul.f32 %v418, 0.0078125
      %v423 = vmul.f32 %v421, 0.0078125
      %v424 = vmul.f32 %v422, %v422
      %v426 = vrot.slane %v424, 7
      %v428 = vsub.f32 %v423, %v426
      %v429 = vmax.f32 %v428, 0.0
      %v430 = vadd.f32 %v429, 1e-05
      %v431 = vrsqrt.pop %v430
      %v434 = vunpack.c.l.s4 1966171168
      %v435 = vunpack.c.0.s8 %v434
      %v436 = vlaneseq
      %v437 = vshrl.u32 %v436, 7
      %v438 = vsub.s32 %v435, %v437
      %v439 = vrot.slane %v431, %v438
      %v440 = vcombine.high %v439, %v439
      %v442 = vunpack.c.l.s4 1966171168
      %v443 = vunpack.c.0.s8 %v442
      %v444 = vlaneseq
      %v445 = vshrl.u32 %v444, 7
      %v446 = vsub.s32 %v443, %v445
      %v447 = vrot.slane %v440, %v446
      %v449 = vmul.f32 %v414, %v447
      %v450 = vmul.f32 %v449, %v422
      %v451 = vsub.f32 %v415, %v450
      %v452 = vld [vmem:[%s320] sm:$0xf]
      %v453 = vld [vmem:[%s320 + $0x4] sm:$0xf]
      %v454 = vld [vmem:[%s320 + $0x8] sm:$0xf]
      %v455 = vld [vmem:[%s320 + $0xc] sm:$0xf]
      %v456 = vld [vmem:[%s320 + $0x10] sm:$0xf]
      %v457 = vld [vmem:[%s320 + $0x14] sm:$0xf]
      %v458 = vld [vmem:[%s320 + $0x18] sm:$0xf]
      %v459 = vld [vmem:[%s320 + $0x1c] sm:$0xf]
      %v460 = vunpack.c.l.bf16 %v452
      %v461 = vunpack.c.l.bf16 %v453
      %v462 = vunpack.c.l.bf16 %v454
      %v463 = vunpack.c.l.bf16 %v455
      %v464 = vunpack.c.l.bf16 %v456
      %v465 = vunpack.c.l.bf16 %v457
      %v466 = vunpack.c.l.bf16 %v458
      %v467 = vunpack.c.l.bf16 %v459
      %v469 = vlaneseq
      %v470 = vshrl.u32 %v469, 7
      %v471 = vsub.s32 0, %v470
      %v472 = vrot.slane %v449, %v471
      %v474 = vmul.f32 %v460, %v472
      %v475 = vmul.f32 %v461, %v472
      %v476 = vmul.f32 %v462, %v472
      %v477 = vmul.f32 %v463, %v472
      %v478 = vmul.f32 %v464, %v472
      %v479 = vmul.f32 %v465, %v472
      %v480 = vmul.f32 %v466, %v472
      %v481 = vmul.f32 %v467, %v472
      %v483 = vlaneseq
      %v484 = vshrl.u32 %v483, 7
      %v485 = vsub.s32 0, %v484
      %v486 = vrot.slane %v451, %v485
      %v488 = vadd.f32 %v474, %v486
      %v489 = vadd.f32 %v475, %v486
      %v490 = vadd.f32 %v476, %v486
      %v491 = vadd.f32 %v477, %v486
      %v492 = vadd.f32 %v478, %v486
      %v493 = vadd.f32 %v479, %v486
      %v494 = vadd.f32 %v480, %v486
      %v495 = vadd.f32 %v481, %v486
      %v496 = vadd.f32 %v404, %v488
      %v497 = vadd.f32 %v405, %v489
      %v498 = vadd.f32 %v406, %v490
      %v499 = vadd.f32 %v407, %v491
      %v500 = vadd.f32 %v408, %v492
      %v501 = vadd.f32 %v409, %v493
      %v502 = vadd.f32 %v410, %v494
      %v503 = vadd.f32 %v411, %v495
      %v504 = vmax.f32 %v496, 0.0
      %v505 = vmax.f32 %v497, 0.0
      %v506 = vmax.f32 %v498, 0.0
      %v507 = vmax.f32 %v499, 0.0
      %v508 = vmax.f32 %v500, 0.0
      %v509 = vmax.f32 %v501, 0.0
      %v510 = vmax.f32 %v502, 0.0
      %v511 = vmax.f32 %v503, 0.0
      %v512 = vpack.c.bf16 %v504, %v504
      %v513 = vpack.c.bf16 %v505, %v505
      %v514 = vpack.c.bf16 %v506, %v506
      %v515 = vpack.c.bf16 %v507, %v507
      %v516 = vpack.c.bf16 %v508, %v508
      %v517 = vpack.c.bf16 %v509, %v509
      %v518 = vpack.c.bf16 %v510, %v510
      %v519 = vpack.c.bf16 %v511, %v511
      %520 = vst [vmem:[%s325] sm:$0xf] %v512
      %521 = vst [vmem:[%s325 + $0x4] sm:$0xf] %v513
      %522 = vst [vmem:[%s325 + $0x8] sm:$0xf] %v514
      %523 = vst [vmem:[%s325 + $0xc] sm:$0xf] %v515
      %524 = vst [vmem:[%s325 + $0x10] sm:$0xf] %v516
      %525 = vst [vmem:[%s325 + $0x14] sm:$0xf] %v517
      %526 = vst [vmem:[%s325 + $0x18] sm:$0xf] %v518
      %527 = vst [vmem:[%s325 + $0x1c] sm:$0xf] %v519
      %p528 = scmp.lt.s32.totalorder %s19, 1
      %s529 = scalar_select %p528, %s19, 1
      %s530 = smul.addr %s529, 8
      %s531 = smul.addr %s530, 4
      %s532 = scalar_lea.vmem %s8, %s531
      // Predicated region
      $region53: #{basic_block_forward.5} parent=51 // pred_check
        %p533 = pneg %p215
      $region54: #{basic_block_forward.5} parent=51 // pred_check_branch
        %535 = sbr.rel (%p533) target = $region56
      $region55: #{basic_block_forward.5} parent=51 // pred_region
        _
      $region56: #{basic_block_forward.5} parent=51 // pred_fallthru
        _
    $region52: #{basic_block_forward.5} parent=5 // pred_fallthru
      _
    %p536 = scmp.le.s32.totalorder 2, %s14
    // Predicated region
    $region57: #{basic_block_forward.5} parent=5 // pred_check
      %p537 = pneg %p536
    $region58: #{basic_block_forward.5} parent=5 // pred_check_branch
      %539 = sbr.rel (%p537) target = $region60
    $region59: #{basic_block_forward.5} parent=5 // pred_region
      %s540 = ssub.s32 %s14, 2
      // Predicated region
      $region61: #{basic_block_forward.5} parent=59 // pred_check
        %p541 = pneg %p221
      $region62: #{basic_block_forward.5} parent=59 // pred_check_branch
        %543 = sbr.rel (%p541) target = $region64
      $region63: #{basic_block_forward.5} parent=59 // pred_region
        %p544 = scmp.lt.s32.totalorder %s20, 1
        %s545 = scalar_select %p544, %s20, 1
        %s546 = smul.addr %s545, 8
        %s547 = smul.addr %s546, 4
        %s548 = scalar_lea.vmem %s8, %s547
      $region64: #{basic_block_forward.5} parent=59 // pred_fallthru
        _
    $region60: #{basic_block_forward.5} parent=5 // pred_fallthru
      _
  $region6: #{basic_block_forward.5} parent=0 // loop_footer
    %s18 = sadd.s32 1, %s14
  $region7: #{basic_block_forward.5} parent=0 // loop_footer_branch
    %13 = sbr.rel target = $region3
  $region8: #{basic_block_forward.5} parent=0 // loop_exit
    _

// kernel: basic_block_forward.3
$region0: #{basic_block_forward.3}
  #allocation0 [shape = 'u32[]', space=smem, size = 0x4, offset = 0x4, fixed_abs, tag = 'smem constant byte address 0x4 - core index']
  #allocation1 [shape = 'u32[144,128]{1,0:T(1,128)}', space=vmem, size = 0x12000, scoped, tag = 'internal scratch']
  %s0 = inlined_call_operand.vmem [shape: bf16[2,9,64,128], index: 0, kind: input, shape index: {}]
  %s1 = inlined_call_operand.vmem [shape: bf16[9,128,128], index: 1, kind: input, shape index: {}]
  %s2 = inlined_call_operand.vmem [shape: bf16[2,64,128], index: 2, kind: input, shape index: {}]
  %s3 = inlined_call_operand.vmem [shape: bf16[128,128], index: 3, kind: input, shape index: {}]
  %s4 = inlined_call_operand.vmem [shape: bf16[2,10,10,128], index: 4, kind: output, shape index: {0}]
  %s5 = inlined_call_operand.vmem [shape: f32[2,8,128], index: 5, kind: output, shape index: {1}]
  %s6 = inlined_call_operand.vmem [shape: bf16[2,8,8,128], index: 6, kind: output, shape index: {2}]
  %s7 = inlined_call_operand.vmem [shape: f32[2,8,128], index: 7, kind: output, shape index: {3}]
  %8 = xla_tuple %s4, %s5, %s6, %s7
  %s9 = sld [smem:[#allocation0]]
  $region73: #{basic_block_forward.3} parent=0
    _
  %s11 = ssub.s32 1, %s9
  %s12 = scalar_select 0, %s11, %s9
  loop: start=0, step=1, limit=4
  $region2: #{basic_block_forward.3} parent=0 // loop_pre_header
    _
  $region3: #{basic_block_forward.3} parent=0 // loop_header
    %s14 = sphi 0, %s18
    %p15 = scmp.ge.s32.totalorder %s14, 4
    %s24 = sphi 0, %s26
    %s27 = sphi 0, %s24
    %s28 = sphi 0, %s27
    %s44 = sphi 0, %s28
    %s48 = sphi 0, %s48
    %s50 = sphi 0, %s48
    %s51 = sphi 0, %s50
    %s65 = sphi 0, %s51
    %s71 = sphi 0, %s73
    %s74 = sphi 0, %s71
    %s75 = sphi 0, %s74
    %s91 = sphi 0, %s75
    %s95 = sphi 0, %s95
    %s97 = sphi 0, %s95
    %s98 = sphi 0, %s97
    %s112 = sphi 0, %s98
    %s118 = sphi 0, %s120
    %s121 = sphi 0, %s118
    %s122 = sphi 0, %s121
    %s138 = sphi 0, %s122
    %s144 = sphi 0, %s146
    %s147 = sphi 0, %s144
    %s148 = sphi 0, %s147
    %s164 = sphi 0, %s148
    %s170 = sphi 0, %s172
    %s173 = sphi 0, %s170
    %s174 = sphi 0, %s173
    %s190 = sphi 0, %s174
    %s196 = sphi 0, %s198
    %s199 = sphi 0, %s196
    %s200 = sphi 0, %s199
    %s216 = sphi 0, %s200
  $region4: #{basic_block_forward.3} parent=0 // loop_header_branch
    %17 = sbr.rel (%p15) target = $region8
  $region5: #{basic_block_forward.3} parent=0 // loop_body
    %s19 = ssub.s32 %s14, 1
    %s20 = ssub.s32 %s14, 2
    %s21 = sadd.s32 %s14, 1
    %s22 = ssub.s32 %s14, %s21
    %p23 = scmp.eq.s32.totalorder %s22, 0
    %s25 = sadd.s32 %s24, 1
    %s26 = scalar_select %p23, %s24, %s25
    %p29 = pneg %p23
    %p30 = scmp.eq.s32.totalorder %s14, 1
    %p31 = por %p29, %p30
    %p32 = scmp.ne.s32.totalorder %s24, %s27
    %p33 = scmp.eq.s32.totalorder %s14, 0
    %p34 = por %p32, %p33
    %p35 = scmp.ne.s32.totalorder %s24, %s27
    %p36 = scmp.eq.s32.totalorder %s19, 1
    %p37 = por %p35, %p36
    %p38 = scmp.ne.s32.totalorder %s27, %s28
    %p39 = scmp.eq.s32.totalorder %s19, 0
    %p40 = por %p38, %p39
    %p41 = scmp.ne.s32.totalorder %s27, %s28
    %p42 = scmp.eq.s32.totalorder %s20, 1
    %p43 = por %p41, %p42
    %p45 = scmp.ne.s32.totalorder %s28, %s44
    %p46 = scmp.eq.s32.totalorder %s20, 0
    %p47 = por %p45, %p46
    %s49 = sadd.s32 %s48, 1
    %p52 = scmp.eq.s32.totalorder %s14, 1
    %p53 = scmp.ne.s32.totalorder %s48, %s50
    %p54 = scmp.eq.s32.totalorder %s14, 0
    %p55 = por %p53, %p54
    %p56 = scmp.ne.s32.totalorder %s48, %s50
    %p57 = scmp.eq.s32.totalorder %s19, 1
    %p58 = por %p56, %p57
    %p59 = scmp.ne.s32.totalorder %s50, %s51
    %p60 = scmp.eq.s32.totalorder %s19, 0
    %p61 = por %p59, %p60
    %p62 = scmp.ne.s32.totalorder %s50, %s51
    %p63 = scmp.eq.s32.totalorder %s20, 1
    %p64 = por %p62, %p63
    %p66 = scmp.ne.s32.totalorder %s51, %s65
    %p67 = scmp.eq.s32.totalorder %s20, 0
    %p68 = por %p66, %p67
    %s69 = ssub.s32 %s14, %s21
    %p70 = scmp.eq.s32.totalorder %s69, 0
    %s72 = sadd.s32 %s71, 1
    %s73 = scalar_select %p70, %s71, %s72
    %p76 = pneg %p70
    %p77 = scmp.eq.s32.totalorder %s14, 1
    %p78 = por %p76, %p77
    %p79 = scmp.ne.s32.totalorder %s71, %s74
    %p80 = scmp.eq.s32.totalorder %s14, 0
    %p81 = por %p79, %p80
    %p82 = scmp.ne.s32.totalorder %s71, %s74
    %p83 = scmp.eq.s32.totalorder %s19, 1
    %p84 = por %p82, %p83
    %p85 = scmp.ne.s32.totalorder %s74, %s75
    %p86 = scmp.eq.s32.totalorder %s19, 0
    %p87 = por %p85, %p86
    %p88 = scmp.ne.s32.totalorder %s74, %s75
    %p89 = scmp.eq.s32.totalorder %s20, 1
    %p90 = por %p88, %p89
    %p92 = scmp.ne.s32.totalorder %s75, %s91
    %p93 = scmp.eq.s32.totalorder %s20, 0
    %p94 = por %p92, %p93
    %s96 = sadd.s32 %s95, 1
    %p99 = scmp.eq.s32.totalorder %s14, 1
    %p100 = scmp.ne.s32.totalorder %s95, %s97
    %p101 = scmp.eq.s32.totalorder %s14, 0
    %p102 = por %p100, %p101
    %p103 = scmp.ne.s32.totalorder %s95, %s97
    %p104 = scmp.eq.s32.totalorder %s19, 1
    %p105 = por %p103, %p104
    %p106 = scmp.ne.s32.totalorder %s97, %s98
    %p107 = scmp.eq.s32.totalorder %s19, 0
    %p108 = por %p106, %p107
    %p109 = scmp.ne.s32.totalorder %s97, %s98
    %p110 = scmp.eq.s32.totalorder %s20, 1
    %p111 = por %p109, %p110
    %p113 = scmp.ne.s32.totalorder %s98, %s112
    %p114 = scmp.eq.s32.totalorder %s20, 0
    %p115 = por %p113, %p114
    %s116 = ssub.s32 %s14, %s21
    %p117 = scmp.eq.s32.totalorder %s116, 0
    %s119 = sadd.s32 %s118, 1
    %s120 = scalar_select %p117, %s118, %s119
    %p123 = pneg %p117
    %p124 = scmp.eq.s32.totalorder %s14, 1
    %p125 = por %p123, %p124
    %p126 = scmp.ne.s32.totalorder %s118, %s121
    %p127 = scmp.eq.s32.totalorder %s14, 0
    %p128 = por %p126, %p127
    %p129 = scmp.ne.s32.totalorder %s118, %s121
    %p130 = scmp.eq.s32.totalorder %s19, 1
    %p131 = por %p129, %p130
    %p132 = scmp.ne.s32.totalorder %s121, %s122
    %p133 = scmp.eq.s32.totalorder %s19, 0
    %p134 = por %p132, %p133
    %p135 = scmp.ne.s32.totalorder %s121, %s122
    %p136 = scmp.eq.s32.totalorder %s20, 1
    %p137 = por %p135, %p136
    %p139 = scmp.ne.s32.totalorder %s122, %s138
    %p140 = scmp.eq.s32.totalorder %s20, 0
    %p141 = por %p139, %p140
    %s142 = ssub.s32 %s14, %s21
    %p143 = scmp.eq.s32.totalorder %s142, 0
    %s145 = sadd.s32 %s144, 1
    %s146 = scalar_select %p143, %s144, %s145
    %p149 = pneg %p143
    %p150 = scmp.eq.s32.totalorder %s14, 1
    %p151 = por %p149, %p150
    %p152 = scmp.ne.s32.totalorder %s144, %s147
    %p153 = scmp.eq.s32.totalorder %s14, 0
    %p154 = por %p152, %p153
    %p155 = scmp.ne.s32.totalorder %s144, %s147
    %p156 = scmp.eq.s32.totalorder %s19, 1
    %p157 = por %p155, %p156
    %p158 = scmp.ne.s32.totalorder %s147, %s148
    %p159 = scmp.eq.s32.totalorder %s19, 0
    %p160 = por %p158, %p159
    %p161 = scmp.ne.s32.totalorder %s147, %s148
    %p162 = scmp.eq.s32.totalorder %s20, 1
    %p163 = por %p161, %p162
    %p165 = scmp.ne.s32.totalorder %s148, %s164
    %p166 = scmp.eq.s32.totalorder %s20, 0
    %p167 = por %p165, %p166
    %s168 = ssub.s32 %s14, %s21
    %p169 = scmp.eq.s32.totalorder %s168, 0
    %s171 = sadd.s32 %s170, 1
    %s172 = scalar_select %p169, %s170, %s171
    %p175 = pneg %p169
    %p176 = scmp.eq.s32.totalorder %s14, 1
    %p177 = por %p175, %p176
    %p178 = scmp.ne.s32.totalorder %s170, %s173
    %p179 = scmp.eq.s32.totalorder %s14, 0
    %p180 = por %p178, %p179
    %p181 = scmp.ne.s32.totalorder %s170, %s173
    %p182 = scmp.eq.s32.totalorder %s19, 1
    %p183 = por %p181, %p182
    %p184 = scmp.ne.s32.totalorder %s173, %s174
    %p185 = scmp.eq.s32.totalorder %s19, 0
    %p186 = por %p184, %p185
    %p187 = scmp.ne.s32.totalorder %s173, %s174
    %p188 = scmp.eq.s32.totalorder %s20, 1
    %p189 = por %p187, %p188
    %p191 = scmp.ne.s32.totalorder %s174, %s190
    %p192 = scmp.eq.s32.totalorder %s20, 0
    %p193 = por %p191, %p192
    %s194 = ssub.s32 %s14, %s21
    %p195 = scmp.eq.s32.totalorder %s194, 0
    %s197 = sadd.s32 %s196, 1
    %s198 = scalar_select %p195, %s196, %s197
    %p201 = pneg %p195
    %p202 = scmp.eq.s32.totalorder %s14, 1
    %p203 = por %p201, %p202
    %p204 = scmp.ne.s32.totalorder %s196, %s199
    %p205 = scmp.eq.s32.totalorder %s14, 0
    %p206 = por %p204, %p205
    %p207 = scmp.ne.s32.totalorder %s196, %s199
    %p208 = scmp.eq.s32.totalorder %s19, 1
    %p209 = por %p207, %p208
    %p210 = scmp.ne.s32.totalorder %s199, %s200
    %p211 = scmp.eq.s32.totalorder %s19, 0
    %p212 = por %p210, %p211
    %p213 = scmp.ne.s32.totalorder %s199, %s200
    %p214 = scmp.eq.s32.totalorder %s20, 1
    %p215 = por %p213, %p214
    %p217 = scmp.ne.s32.totalorder %s200, %s216
    %p218 = scmp.eq.s32.totalorder %s20, 0
    %p219 = por %p217, %p218
    %p220 = scmp.le.s32.totalorder 1, %s14
    %p221 = scmp.lt.s32.totalorder %s14, 3
    %p222 = pnand %p220, %p221
    %p223 = pneg %p222
    // Predicated region
    $region9: #{basic_block_forward.3} parent=5 // pred_check
      _
    $region10: #{basic_block_forward.3} parent=5 // pred_check_branch
      %225 = sbr.rel (%p222) target = $region12
    $region11: #{basic_block_forward.3} parent=5 // pred_region
      %s226 = ssub.s32 %s14, 1
      // Predicated region
      $region13: #{basic_block_forward.3} parent=11 // pred_check
        %p227 = pneg %p61
      $region14: #{basic_block_forward.3} parent=11 // pred_check_branch
        %229 = sbr.rel (%p227) target = $region16
      $region15: #{basic_block_forward.3} parent=11 // pred_region
        _
      $region16: #{basic_block_forward.3} parent=11 // pred_fallthru
        _
      // Predicated region
      $region17: #{basic_block_forward.3} parent=11 // pred_check
        %p230 = pneg %p108
      $region18: #{basic_block_forward.3} parent=11 // pred_check_branch
        %232 = sbr.rel (%p230) target = $region20
      $region19: #{basic_block_forward.3} parent=11 // pred_region
        _
      $region20: #{basic_block_forward.3} parent=11 // pred_fallthru
        _
    $region12: #{basic_block_forward.3} parent=5 // pred_fallthru
      _
    %p233 = scmp.lt.s32.totalorder %s14, 2
    // Predicated region
    $region21: #{basic_block_forward.3} parent=5 // pred_check
      %p234 = pneg %p233
    $region22: #{basic_block_forward.3} parent=5 // pred_check_branch
      %236 = sbr.rel (%p234) target = $region24
    $region23: #{basic_block_forward.3} parent=5 // pred_region
      // Predicated region
      $region25: #{basic_block_forward.3} parent=23 // pred_check
        %p237 = pneg %p34
      $region26: #{basic_block_forward.3} parent=23 // pred_check_branch
        %239 = sbr.rel (%p237) target = $region28
      $region27: #{basic_block_forward.3} parent=23 // pred_region
        %p240 = scmp.lt.s32.totalorder %s14, 1
        %s241 = scalar_select %p240, %s14, 1
        %s242 = smul.addr %s241, 72
        %s243 = smul.addr %s242, 4
        %s244 = scalar_lea.vmem %s0, %s243
      $region28: #{basic_block_forward.3} parent=23 // pred_fallthru
        _
      // Predicated region
      $region29: #{basic_block_forward.3} parent=23 // pred_check
        %p245 = pneg %p81
      $region30: #{basic_block_forward.3} parent=23 // pred_check_branch
        %247 = sbr.rel (%p245) target = $region32
      $region31: #{basic_block_forward.3} parent=23 // pred_region
        %p248 = scmp.lt.s32.totalorder %s14, 1
        %s249 = scalar_select %p248, %s14, 1
        %s250 = smul.addr %s249, 8
        %s251 = smul.addr %s250, 4
        %s252 = scalar_lea.vmem %s2, %s251
      $region32: #{basic_block_forward.3} parent=23 // pred_fallthru
        _
    $region24: #{basic_block_forward.3} parent=5 // pred_fallthru
      _
    %p253 = scmp.le.s32.totalorder 1, %s14
    %p254 = scmp.lt.s32.totalorder %s14, 3
    %p255 = pnand %p253, %p254
    %p256 = pneg %p255
    // Predicated region
    $region33: #{basic_block_forward.3} parent=5 // pred_check
      _
    $region34: #{basic_block_forward.3} parent=5 // pred_check_branch
      %258 = sbr.rel (%p255) target = $region36
    $region35: #{basic_block_forward.3} parent=5 // pred_region
      %s259 = ssub.s32 %s14, 1
      %p260 = scmp.lt.s32.totalorder %s19, 1
      %s261 = scalar_select %p260, %s19, 1
      %s262 = smul.addr %s261, 72
      %s263 = smul.addr %s262, 4
      %s264 = scalar_lea.vmem %s0, %s263
      %p265 = pneg %p40
      %p266 = pneg %p37
      %p267 = pneg %p61
      %p268 = pneg %p58
      %p269 = scmp.lt.s32.totalorder %s19, 1
      %s270 = scalar_select %p269, %s19, 1
      %s271 = smul.addr %s270, 8
      %s272 = smul.addr %s271, 4
      %s273 = scalar_lea.vmem %s2, %s272
      %p274 = pneg %p87
      %p275 = pneg %p84
      %p276 = pneg %p108
      %p277 = pneg %p105
      %p278 = pneg %p134
      %p279 = pneg %p131
      %p280 = scmp.lt.s32.totalorder %s19, 1
      %s281 = scalar_select %p280, %s19, 1
      %s282 = smul.addr %s281, 20
      %s283 = smul.addr %s282, 4
      %s284 = scalar_lea.vmem %s4, %s283
      %p285 = pneg %p160
      %p286 = pneg %p157
      %p287 = scmp.lt.s32.totalorder %s19, 1
      %s288 = scalar_select %p287, %s19, 1
      %s289 = smul.addr %s288, 8
      %s290 = scalar_lea.vmem %s5, %s289
      %p291 = pneg %p186
      %p292 = pneg %p183
      %p293 = scmp.lt.s32.totalorder %s19, 1
      %s294 = scalar_select %p293, %s19, 1
      %s295 = smul.addr %s294, 8
      %s296 = smul.addr %s295, 4
      %s297 = scalar_lea.vmem %s6, %s296
      %p298 = pneg %p212
      %p299 = pneg %p209
      %p300 = scmp.lt.s32.totalorder %s19, 1
      %s301 = scalar_select %p300, %s19, 1
      %s302 = smul.addr %s301, 8
      %s303 = scalar_lea.vmem %s7, %s302
      %p304 = scmp.lt.s32.totalorder %s19, 1
      %s305 = scalar_select %p304, %s19, 1
      %s306 = smul.addr %s305, 72
      %s307 = smul.addr %s306, 4
      %s308 = scalar_lea.vmem %s0, %s307
      %p309 = scmp.lt.s32.totalorder %s19, 1
      %s310 = scalar_select %p309, %s19, 1
      %s311 = smul.addr %s310, 8
      %s312 = smul.addr %s311, 4
      %s313 = scalar_lea.vmem %s2, %s312
      %p314 = scmp.lt.s32.totalorder %s19, 1
      %s315 = scalar_select %p314, %s19, 1
      %s316 = smul.addr %s315, 20
      %s317 = smul.addr %s316, 4
      %s318 = scalar_lea.vmem %s4, %s317
      %p319 = scmp.lt.s32.totalorder %s19, 1
      %s320 = scalar_select %p319, %s19, 1
      %s321 = smul.addr %s320, 8
      %s322 = scalar_lea.vmem %s5, %s321
      %p323 = scmp.lt.s32.totalorder %s19, 1
      %s324 = scalar_select %p323, %s19, 1
      %s325 = smul.addr %s324, 8
      %s326 = smul.addr %s325, 4
      %s327 = scalar_lea.vmem %s6, %s326
      %p328 = scmp.lt.s32.totalorder %s19, 1
      %s329 = scalar_select %p328, %s19, 1
      %s330 = smul.addr %s329, 8
      %s331 = scalar_lea.vmem %s7, %s330
      %v333 = vld [vmem:[%s308] sm:$0xf]
      %v334 = vld [vmem:[%s308 + $0x4] sm:$0xf]
      %v335 = vld [vmem:[%s308 + $0x8] sm:$0xf]
      %v336 = vld [vmem:[%s308 + $0xc] sm:$0xf]
      %v337 = vld [vmem:[%s308 + $0x10] sm:$0xf]
      %v338 = vld [vmem:[%s308 + $0x14] sm:$0xf]
      %v339 = vld [vmem:[%s308 + $0x18] sm:$0xf]
      %v340 = vld [vmem:[%s308 + $0x1c] sm:$0xf]
      %v341 = vld [vmem:[%s1] sm:$0xf]
      %v342 = vld [vmem:[%s1 + $0x4] sm:$0xf]
      %v343 = vld [vmem:[%s1 + $0x8] sm:$0xf]
      %v344 = vld [vmem:[%s1 + $0xc] sm:$0xf]
      %v345 = vld [vmem:[%s1 + $0x10] sm:$0xf]
      %v346 = vld [vmem:[%s1 + $0x14] sm:$0xf]
      %v347 = vld [vmem:[%s1 + $0x18] sm:$0xf]
      %v348 = vld [vmem:[%s1 + $0x1c] sm:$0xf]
      %v349 = vld [vmem:[%s1 + $0x20] sm:$0xf]
      %v350 = vld [vmem:[%s1 + $0x24] sm:$0xf]
      %v351 = vld [vmem:[%s1 + $0x28] sm:$0xf]
      %v352 = vld [vmem:[%s1 + $0x2c] sm:$0xf]
      %v353 = vld [vmem:[%s1 + $0x30] sm:$0xf]
      %v354 = vld [vmem:[%s1 + $0x34] sm:$0xf]
      %v355 = vld [vmem:[%s1 + $0x38] sm:$0xf]
      %v356 = vld [vmem:[%s1 + $0x3c] sm:$0xf]
      %s357 = scalar_lea.vmem %s308, 32
      %v358 = vld [vmem:[%s357] sm:$0xf]
      %v359 = vld [vmem:[%s357 + $0x4] sm:$0xf]
      %v360 = vld [vmem:[%s357 + $0x8] sm:$0xf]
      %v361 = vld [vmem:[%s357 + $0xc] sm:$0xf]
      %v362 = vld [vmem:[%s357 + $0x10] sm:$0xf]
      %v363 = vld [vmem:[%s357 + $0x14] sm:$0xf]
      %v364 = vld [vmem:[%s357 + $0x18] sm:$0xf]
      %v365 = vld [vmem:[%s357 + $0x1c] sm:$0xf]
      %s366 = scalar_lea.vmem %s1, 64
      %v367 = vld [vmem:[%s366] sm:$0xf]
      %v368 = vld [vmem:[%s366 + $0x4] sm:$0xf]
      %v369 = vld [vmem:[%s366 + $0x8] sm:$0xf]
      %v370 = vld [vmem:[%s366 + $0xc] sm:$0xf]
      %v371 = vld [vmem:[%s366 + $0x10] sm:$0xf]
      %v372 = vld [vmem:[%s366 + $0x14] sm:$0xf]
      %v373 = vld [vmem:[%s366 + $0x18] sm:$0xf]
      %v374 = vld [vmem:[%s366 + $0x1c] sm:$0xf]
      %v375 = vld [vmem:[%s366 + $0x20] sm:$0xf]
      %v376 = vld [vmem:[%s366 + $0x24] sm:$0xf]
      %v377 = vld [vmem:[%s366 + $0x28] sm:$0xf]
      %v378 = vld [vmem:[%s366 + $0x2c] sm:$0xf]
      %v379 = vld [vmem:[%s366 + $0x30] sm:$0xf]
      %v380 = vld [vmem:[%s366 + $0x34] sm:$0xf]
      %v381 = vld [vmem:[%s366 + $0x38] sm:$0xf]
      %v382 = vld [vmem:[%s366 + $0x3c] sm:$0xf]
      %v391 = vunpack.c.l.b16 %v358
      %v392 = vunpack.c.l.b16 %v359
      %v393 = vunpack.c.l.b16 %v360
      %v394 = vunpack.c.l.b16 %v361
      %v395 = vunpack.c.l.b16 %v362
      %v396 = vunpack.c.l.b16 %v363
      %v397 = vunpack.c.l.b16 %v364
      %v398 = vunpack.c.l.b16 %v365
      %v399 = vpack.c.b16 %v392, %v391
      %v400 = vpack.c.b16 %v394, %v393
      %v401 = vpack.c.b16 %v396, %v395
      %v402 = vpack.c.b16 %v398, %v397
      %v423 = vunpack.c.l.b16 %v367
      %v424 = vunpack.c.l.b16 %v368
      %v425 = vunpack.c.l.b16 %v369
      %v426 = vunpack.c.l.b16 %v370
      %v427 = vunpack.c.l.b16 %v371
      %v428 = vunpack.c.l.b16 %v372
      %v429 = vunpack.c.l.b16 %v373
      %v430 = vunpack.c.l.b16 %v374
      %v431 = vunpack.c.l.b16 %v375
      %v432 = vunpack.c.l.b16 %v376
      %v433 = vunpack.c.l.b16 %v377
      %v434 = vunpack.c.l.b16 %v378
      %v435 = vunpack.c.l.b16 %v379
      %v436 = vunpack.c.l.b16 %v380
      %v437 = vunpack.c.l.b16 %v381
      %v438 = vunpack.c.l.b16 %v382
      %v439 = vpack.c.b16 %v424, %v423
      %v440 = vpack.c.b16 %v426, %v425
      %v441 = vpack.c.b16 %v428, %v427
      %v442 = vpack.c.b16 %v430, %v429
      %v443 = vpack.c.b16 %v432, %v431
      %v444 = vpack.c.b16 %v434, %v433
      %v445 = vpack.c.b16 %v436, %v435
      %v446 = vpack.c.b16 %v438, %v437
      %455 = vmatprep.subr.bf16.mxu0 0
      %456 = vmatpush1.bf16.msra.mxu0 %v446
      %457 = vmatprep.subr.bf16.mxu0 0
      %458 = vmatpush1.bf16.msra.mxu0 %v445
      %459 = vmatprep.subr.bf16.mxu0 0
      %460 = vmatpush1.bf16.msra.mxu0 %v444
      %461 = vmatprep.subr.bf16.mxu0 0
      %462 = vmatpush1.bf16.msra.mxu0 %v443
      %463 = vmatprep.subr.bf16.mxu0 0
      %464 = vmatpush1.bf16.msra.mxu0 %v442
      %465 = vmatprep.subr.bf16.mxu0 0
      %466 = vmatpush1.bf16.msra.mxu0 %v441
      %467 = vmatprep.subr.bf16.mxu0 0
      %468 = vmatpush1.bf16.msra.mxu0 %v440
      %469 = vmatprep.subr.bf16.mxu0 0
      %470 = vmatpush1.bf16.msra.mxu0 %v439
      %471 = vmatprep.subr.bf16.mxu0 0
      %472 = vmatpush2.bf16.msra.mxu0 0
      %473 = vmatprep.subr.bf16.mxu0 0
      %474 = vmatpush2.bf16.msra.mxu0 0
      %475 = vmatprep.subr.bf16.mxu0 0
      %476 = vmatpush2.bf16.msra.mxu0 0
      %477 = vmatprep.subr.bf16.mxu0 0
      %478 = vmatpush2.bf16.msra.mxu0 0
      %479 = vmatprep.subr.bf16.mxu0 0
      %480 = vmatpush2.bf16.msra.mxu0 0
      %481 = vmatprep.subr.bf16.mxu0 0
      %482 = vmatpush2.bf16.msra.mxu0 0
      %483 = vmatprep.subr.bf16.mxu0 0
      %484 = vmatpush2.bf16.msra.mxu0 0
      %485 = vmatprep.subr.bf16.mxu0 0
      %486 = vmatpush2.bf16.msra.mxu0 0
      %487 = vmatprep.mubr.bf16.mxu0 0
      %488 = vmatmul.mubr.bf16.gmra.mxu0 %v399
      %v489 = vpop.f32.mrf.mxu0
      %v490 = vadd.f32 0.0, %v489
      %v491 = vpop.f32.mrf.mxu0
      %v492 = vpop.f32.mrf.mxu0
      %v493 = vadd.f32 0.0, %v492
      %v494 = vpop.f32.mrf.mxu0
      %495 = vmatprep.mubr.bf16.mxu0 0
      %496 = vmatmul.mubr.bf16.gmra.mxu0 %v400
      %v497 = vpop.f32.mrf.mxu0
      %v498 = vadd.f32 0.0, %v497
      %v499 = vpop.f32.mrf.mxu0
      %v500 = vpop.f32.mrf.mxu0
      %v501 = vadd.f32 0.0, %v500
      %v502 = vpop.f32.mrf.mxu0
      %503 = vmatprep.mubr.bf16.mxu0 0
      %504 = vmatmul.mubr.bf16.gmra.mxu0 %v401
      %v505 = vpop.f32.mrf.mxu0
      %v506 = vadd.f32 0.0, %v505
      %v507 = vpop.f32.mrf.mxu0
      %v508 = vpop.f32.mrf.mxu0
      %v509 = vadd.f32 0.0, %v508
      %v510 = vpop.f32.mrf.mxu0
      %511 = vmatprep.mubr.bf16.mxu0 0
      %512 = vmatmul.mubr.bf16.gmra.mxu0 %v402
      %v513 = vpop.f32.mrf.mxu0
      %v514 = vadd.f32 0.0, %v513
      %v515 = vpop.f32.mrf.mxu0
      %v516 = vpop.f32.mrf.mxu0
      %v517 = vadd.f32 0.0, %v516
      %v518 = vpop.f32.mrf.mxu0
      %519 = vdwg.mxu0
      %v528 = vunpack.c.l.b16 %v333
      %v529 = vunpack.c.l.b16 %v334
      %v530 = vunpack.c.l.b16 %v335
      %v531 = vunpack.c.l.b16 %v336
      %v532 = vunpack.c.l.b16 %v337
      %v533 = vunpack.c.l.b16 %v338
      %v534 = vunpack.c.l.b16 %v339
      %v535 = vunpack.c.l.b16 %v340
      %v536 = vpack.c.b16 %v529, %v528
      %v537 = vpack.c.b16 %v531, %v530
      %v538 = vpack.c.b16 %v533, %v532
      %v539 = vpack.c.b16 %v535, %v534
      %v560 = vunpack.c.l.b16 %v341
      %v561 = vunpack.c.l.b16 %v342
      %v562 = vunpack.c.l.b16 %v343
      %v563 = vunpack.c.l.b16 %v344
      %v564 = vunpack.c.l.b16 %v345
      %v565 = vunpack.c.l.b16 %v346
      %v566 = vunpack.c.l.b16 %v347
      %v567 = vunpack.c.l.b16 %v348
      %v568 = vunpack.c.l.b16 %v349
      %v569 = vunpack.c.l.b16 %v350
      %v570 = vunpack.c.l.b16 %v351
      %v571 = vunpack.c.l.b16 %v352
      %v572 = vunpack.c.l.b16 %v353
      %v573 = vunpack.c.l.b16 %v354
      %v574 = vunpack.c.l.b16 %v355
      %v575 = vunpack.c.l.b16 %v356
      %v576 = vpack.c.b16 %v561, %v560
      %v577 = vpack.c.b16 %v563, %v562
      %v578 = vpack.c.b16 %v565, %v564
      %v579 = vpack.c.b16 %v567, %v566
      %v580 = vpack.c.b16 %v569, %v568
      %v581 = vpack.c.b16 %v571, %v570
      %v582 = vpack.c.b16 %v573, %v572
      %v583 = vpack.c.b16 %v575, %v574
      %592 = vmatprep.subr.bf16.mxu0 0
      %593 = vmatpush1.bf16.msra.mxu0 %v583
      %594 = vmatprep.subr.bf16.mxu0 0
      %595 = vmatpush1.bf16.msra.mxu0 %v582
      %596 = vmatprep.subr.bf16.mxu0 0
      %597 = vmatpush1.bf16.msra.mxu0 %v581
      %598 = vmatprep.subr.bf16.mxu0 0
      %599 = vmatpush1.bf16.msra.mxu0 %v580
      %600 = vmatprep.subr.bf16.mxu0 0
      %601 = vmatpush1.bf16.msra.mxu0 %v579
      %602 = vmatprep.subr.bf16.mxu0 0
      %603 = vmatpush1.bf16.msra.mxu0 %v578
      %604 = vmatprep.subr.bf16.mxu0 0
      %605 = vmatpush1.bf16.msra.mxu0 %v577
      %606 = vmatprep.subr.bf16.mxu0 0
      %607 = vmatpush1.bf16.msra.mxu0 %v576
      %608 = vmatprep.subr.bf16.mxu0 0
      %609 = vmatpush2.bf16.msra.mxu0 0
      %610 = vmatprep.subr.bf16.mxu0 0
      %611 = vmatpush2.bf16.msra.mxu0 0
      %612 = vmatprep.subr.bf16.mxu0 0
      %613 = vmatpush2.bf16.msra.mxu0 0
      %614 = vmatprep.subr.bf16.mxu0 0
      %615 = vmatpush2.bf16.msra.mxu0 0
      %616 = vmatprep.subr.bf16.mxu0 0
      %617 = vmatpush2.bf16.msra.mxu0 0
      %618 = vmatprep.subr.bf16.mxu0 0
      %619 = vmatpush2.bf16.msra.mxu0 0
      %620 = vmatprep.subr.bf16.mxu0 0
      %621 = vmatpush2.bf16.msra.mxu0 0
      %622 = vmatprep.subr.bf16.mxu0 0
      %623 = vmatpush2.bf16.msra.mxu0 0
      %624 = vmatprep.mubr.bf16.mxu0 0
      %625 = vmatmul.mubr.bf16.gmra.mxu0 %v536
      %v626 = vpop.f32.mrf.mxu0
      %v627 = vadd.f32 %v490, %v626
      %v628 = vpop.f32.mrf.mxu0
      %v629 = vpop.f32.mrf.mxu0
      %v630 = vadd.f32 %v493, %v629
      %v631 = vpop.f32.mrf.mxu0
      %632 = vmatprep.mubr.bf16.mxu0 0
      %633 = vmatmul.mubr.bf16.gmra.mxu0 %v537
      %v634 = vpop.f32.mrf.mxu0
      %v635 = vadd.f32 %v498, %v634
      %v636 = vpop.f32.mrf.mxu0
      %v637 = vpop.f32.mrf.mxu0
      %v638 = vadd.f32 %v501, %v637
      %v639 = vpop.f32.mrf.mxu0
      %640 = vmatprep.mubr.bf16.mxu0 0
      %641 = vmatmul.mubr.bf16.gmra.mxu0 %v538
      %v642 = vpop.f32.mrf.mxu0
      %v643 = vadd.f32 %v506, %v642
      %v644 = vpop.f32.mrf.mxu0
      %v645 = vpop.f32.mrf.mxu0
      %v646 = vadd.f32 %v509, %v645
      %v647 = vpop.f32.mrf.mxu0
      %648 = vmatprep.mubr.bf16.mxu0 0
      %649 = vmatmul.mubr.bf16.gmra.mxu0 %v539
      %v650 = vpop.f32.mrf.mxu0
      %v651 = vadd.f32 %v514, %v650
      %v652 = vpop.f32.mrf.mxu0
      %v653 = vpop.f32.mrf.mxu0
      %v654 = vadd.f32 %v517, %v653
      %v655 = vpop.f32.mrf.mxu0
      %656 = vdwg.mxu0
      %s657 = scalar_lea.vmem %s308, 64
      %v658 = vld [vmem:[%s657] sm:$0xf]
      %v659 = vld [vmem:[%s657 + $0x4] sm:$0xf]
      %v660 = vld [vmem:[%s657 + $0x8] sm:$0xf]
      %v661 = vld [vmem:[%s657 + $0xc] sm:$0xf]
      %v662 = vld [vmem:[%s657 + $0x10] sm:$0xf]
      %v663 = vld [vmem:[%s657 + $0x14] sm:$0xf]
      %v664 = vld [vmem:[%s657 + $0x18] sm:$0xf]
      %v665 = vld [vmem:[%s657 + $0x1c] sm:$0xf]
      %s666 = scalar_lea.vmem %s1, 128
      %v667 = vld [vmem:[%s666] sm:$0xf]
      %v668 = vld [vmem:[%s666 + $0x4] sm:$0xf]
      %v669 = vld [vmem:[%s666 + $0x8] sm:$0xf]
      %v670 = vld [vmem:[%s666 + $0xc] sm:$0xf]
      %v671 = vld [vmem:[%s666 + $0x10] sm:$0xf]
      %v672 = vld [vmem:[%s666 + $0x14] sm:$0xf]
      %v673 = vld [vmem:[%s666 + $0x18] sm:$0xf]
      %v674 = vld [vmem:[%s666 + $0x1c] sm:$0xf]
      %v675 = vld [vmem:[%s666 + $0x20] sm:$0xf]
      %v676 = vld [vmem:[%s666 + $0x24] sm:$0xf]
      %v677 = vld [vmem:[%s666 + $0x28] sm:$0xf]
      %v678 = vld [vmem:[%s666 + $0x2c] sm:$0xf]
      %v679 = vld [vmem:[%s666 + $0x30] sm:$0xf]
      %v680 = vld [vmem:[%s666 + $0x34] sm:$0xf]
      %v681 = vld [vmem:[%s666 + $0x38] sm:$0xf]
      %v682 = vld [vmem:[%s666 + $0x3c] sm:$0xf]
      %v691 = vunpack.c.l.b16 %v658
      %v692 = vunpack.c.l.b16 %v659
      %v693 = vunpack.c.l.b16 %v660
      %v694 = vunpack.c.l.b16 %v661
      %v695 = vunpack.c.l.b16 %v662
      %v696 = vunpack.c.l.b16 %v663
      %v697 = vunpack.c.l.b16 %v664
      %v698 = vunpack.c.l.b16 %v665
      %v699 = vpack.c.b16 %v692, %v691
      %v700 = vpack.c.b16 %v694, %v693
      %v701 = vpack.c.b16 %v696, %v695
      %v702 = vpack.c.b16 %v698, %v697
      %v723 = vunpack.c.l.b16 %v667
      %v724 = vunpack.c.l.b16 %v668
      %v725 = vunpack.c.l.b16 %v669
      %v726 = vunpack.c.l.b16 %v670
      %v727 = vunpack.c.l.b16 %v671
      %v728 = vunpack.c.l.b16 %v672
      %v729 = vunpack.c.l.b16 %v673
      %v730 = vunpack.c.l.b16 %v674
      %v731 = vunpack.c.l.b16 %v675
      %v732 = vunpack.c.l.b16 %v676
      %v733 = vunpack.c.l.b16 %v677
      %v734 = vunpack.c.l.b16 %v678
      %v735 = vunpack.c.l.b16 %v679
      %v736 = vunpack.c.l.b16 %v680
      %v737 = vunpack.c.l.b16 %v681
      %v738 = vunpack.c.l.b16 %v682
      %v739 = vpack.c.b16 %v724, %v723
      %v740 = vpack.c.b16 %v726, %v725
      %v741 = vpack.c.b16 %v728, %v727
      %v742 = vpack.c.b16 %v730, %v729
      %v743 = vpack.c.b16 %v732, %v731
      %v744 = vpack.c.b16 %v734, %v733
      %v745 = vpack.c.b16 %v736, %v735
      %v746 = vpack.c.b16 %v738, %v737
      %755 = vmatprep.subr.bf16.mxu0 0
      %756 = vmatpush1.bf16.msra.mxu0 %v746
      %757 = vmatprep.subr.bf16.mxu0 0
      %758 = vmatpush1.bf16.msra.mxu0 %v745
      %759 = vmatprep.subr.bf16.mxu0 0
      %760 = vmatpush1.bf16.msra.mxu0 %v744
      %761 = vmatprep.subr.bf16.mxu0 0
      %762 = vmatpush1.bf16.msra.mxu0 %v743
      %763 = vmatprep.subr.bf16.mxu0 0
      %764 = vmatpush1.bf16.msra.mxu0 %v742
      %765 = vmatprep.subr.bf16.mxu0 0
      %766 = vmatpush1.bf16.msra.mxu0 %v741
      %767 = vmatprep.subr.bf16.mxu0 0
      %768 = vmatpush1.bf16.msra.mxu0 %v740
      %769 = vmatprep.subr.bf16.mxu0 0
      %770 = vmatpush1.bf16.msra.mxu0 %v739
      %771 = vmatprep.subr.bf16.mxu0 0
      %772 = vmatpush2.bf16.msra.mxu0 0
      %773 = vmatprep.subr.bf16.mxu0 0
      %774 = vmatpush2.bf16.msra.mxu0 0
      %775 = vmatprep.subr.bf16.mxu0 0
      %776 = vmatpush2.bf16.msra.mxu0 0
      %777 = vmatprep.subr.bf16.mxu0 0
      %778 = vmatpush2.bf16.msra.mxu0 0
      %779 = vmatprep.subr.bf16.mxu0 0
      %780 = vmatpush2.bf16.msra.mxu0 0
      %781 = vmatprep.subr.bf16.mxu0 0
      %782 = vmatpush2.bf16.msra.mxu0 0
      %783 = vmatprep.subr.bf16.mxu0 0
      %784 = vmatpush2.bf16.msra.mxu0 0
      %785 = vmatprep.subr.bf16.mxu0 0
      %786 = vmatpush2.bf16.msra.mxu0 0
      %787 = vmatprep.mubr.bf16.mxu0 0
      %788 = vmatmul.mubr.bf16.gmra.mxu0 %v699
      %v789 = vpop.f32.mrf.mxu0
      %v790 = vadd.f32 0.0, %v789
      %v791 = vpop.f32.mrf.mxu0
      %v792 = vpop.f32.mrf.mxu0
      %v793 = vadd.f32 0.0, %v792
      %v794 = vpop.f32.mrf.mxu0
      %795 = vmatprep.mubr.bf16.mxu0 0
      %796 = vmatmul.mubr.bf16.gmra.mxu0 %v700
      %v797 = vpop.f32.mrf.mxu0
      %v798 = vadd.f32 0.0, %v797
      %v799 = vpop.f32.mrf.mxu0
      %v800 = vpop.f32.mrf.mxu0
      %v801 = vadd.f32 0.0, %v800
      %v802 = vpop.f32.mrf.mxu0
      %803 = vmatprep.mubr.bf16.mxu0 0
      %804 = vmatmul.mubr.bf16.gmra.mxu0 %v701
      %v805 = vpop.f32.mrf.mxu0
      %v806 = vadd.f32 0.0, %v805
      %v807 = vpop.f32.mrf.mxu0
      %v808 = vpop.f32.mrf.mxu0
      %v809 = vadd.f32 0.0, %v808
      %v810 = vpop.f32.mrf.mxu0
      %811 = vmatprep.mubr.bf16.mxu0 0
      %812 = vmatmul.mubr.bf16.gmra.mxu0 %v702
      %v813 = vpop.f32.mrf.mxu0
      %v814 = vadd.f32 0.0, %v813
      %v815 = vpop.f32.mrf.mxu0
      %v816 = vpop.f32.mrf.mxu0
      %v817 = vadd.f32 0.0, %v816
      %v818 = vpop.f32.mrf.mxu0
      %819 = vdwg.mxu0
      %v820 = vadd.f32 %v627, %v790
      %v821 = vadd.f32 %v630, %v793
      %v822 = vadd.f32 %v635, %v798
      %v823 = vadd.f32 %v638, %v801
      %v824 = vadd.f32 %v643, %v806
      %v825 = vadd.f32 %v646, %v809
      %v826 = vadd.f32 %v651, %v814
      %v827 = vadd.f32 %v654, %v817
      %s828 = scalar_lea.vmem %s308, 96
      %v829 = vld [vmem:[%s828] sm:$0xf]
      %v830 = vld [vmem:[%s828 + $0x4] sm:$0xf]
      %v831 = vld [vmem:[%s828 + $0x8] sm:$0xf]
      %v832 = vld [vmem:[%s828 + $0xc] sm:$0xf]
      %v833 = vld [vmem:[%s828 + $0x10] sm:$0xf]
      %v834 = vld [vmem:[%s828 + $0x14] sm:$0xf]
      %v835 = vld [vmem:[%s828 + $0x18] sm:$0xf]
      %v836 = vld [vmem:[%s828 + $0x1c] sm:$0xf]
      %s837 = scalar_lea.vmem %s1, 192
      %v838 = vld [vmem:[%s837] sm:$0xf]
      %v839 = vld [vmem:[%s837 + $0x4] sm:$0xf]
      %v840 = vld [vmem:[%s837 + $0x8] sm:$0xf]
      %v841 = vld [vmem:[%s837 + $0xc] sm:$0xf]
      %v842 = vld [vmem:[%s837 + $0x10] sm:$0xf]
      %v843 = vld [vmem:[%s837 + $0x14] sm:$0xf]
      %v844 = vld [vmem:[%s837 + $0x18] sm:$0xf]
      %v845 = vld [vmem:[%s837 + $0x1c] sm:$0xf]
      %v846 = vld [vmem:[%s837 + $0x20] sm:$0xf]
      %v847 = vld [vmem:[%s837 + $0x24] sm:$0xf]
      %v848 = vld [vmem:[%s837 + $0x28] sm:$0xf]
      %v849 = vld [vmem:[%s837 + $0x2c] sm:$0xf]
      %v850 = vld [vmem:[%s837 + $0x30] sm:$0xf]
      %v851 = vld [vmem:[%s837 + $0x34] sm:$0xf]
      %v852 = vld [vmem:[%s837 + $0x38] sm:$0xf]
      %v853 = vld [vmem:[%s837 + $0x3c] sm:$0xf]
      %v862 = vunpack.c.l.b16 %v829
      %v863 = vunpack.c.l.b16 %v830
      %v864 = vunpack.c.l.b16 %v831
      %v865 = vunpack.c.l.b16 %v832
      %v866 = vunpack.c.l.b16 %v833
      %v867 = vunpack.c.l.b16 %v834
      %v868 = vunpack.c.l.b16 %v835
      %v869 = vunpack.c.l.b16 %v836
      %v870 = vpack.c.b16 %v863, %v862
      %v871 = vpack.c.b16 %v865, %v864
      %v872 = vpack.c.b16 %v867, %v866
      %v873 = vpack.c.b16 %v869, %v868
      %v894 = vunpack.c.l.b16 %v838
      %v895 = vunpack.c.l.b16 %v839
      %v896 = vunpack.c.l.b16 %v840
      %v897 = vunpack.c.l.b16 %v841
      %v898 = vunpack.c.l.b16 %v842
      %v899 = vunpack.c.l.b16 %v843
      %v900 = vunpack.c.l.b16 %v844
      %v901 = vunpack.c.l.b16 %v845
      %v902 = vunpack.c.l.b16 %v846
      %v903 = vunpack.c.l.b16 %v847
      %v904 = vunpack.c.l.b16 %v848
      %v905 = vunpack.c.l.b16 %v849
      %v906 = vunpack.c.l.b16 %v850
      %v907 = vunpack.c.l.b16 %v851
      %v908 = vunpack.c.l.b16 %v852
      %v909 = vunpack.c.l.b16 %v853
      %v910 = vpack.c.b16 %v895, %v894
      %v911 = vpack.c.b16 %v897, %v896
      %v912 = vpack.c.b16 %v899, %v898
      %v913 = vpack.c.b16 %v901, %v900
      %v914 = vpack.c.b16 %v903, %v902
      %v915 = vpack.c.b16 %v905, %v904
      %v916 = vpack.c.b16 %v907, %v906
      %v917 = vpack.c.b16 %v909, %v908
      %926 = vmatprep.subr.bf16.mxu0 0
      %927 = vmatpush1.bf16.msra.mxu0 %v917
      %928 = vmatprep.subr.bf16.mxu0 0
      %929 = vmatpush1.bf16.msra.mxu0 %v916
      %930 = vmatprep.subr.bf16.mxu0 0
      %931 = vmatpush1.bf16.msra.mxu0 %v915
      %932 = vmatprep.subr.bf16.mxu0 0
      %933 = vmatpush1.bf16.msra.mxu0 %v914
      %934 = vmatprep.subr.bf16.mxu0 0
      %935 = vmatpush1.bf16.msra.mxu0 %v913
      %936 = vmatprep.subr.bf16.mxu0 0
      %937 = vmatpush1.bf16.msra.mxu0 %v912
      %938 = vmatprep.subr.bf16.mxu0 0
      %939 = vmatpush1.bf16.msra.mxu0 %v911
      %940 = vmatprep.subr.bf16.mxu0 0
      %941 = vmatpush1.bf16.msra.mxu0 %v910
      %942 = vmatprep.subr.bf16.mxu0 0
      %943 = vmatpush2.bf16.msra.mxu0 0
      %944 = vmatprep.subr.bf16.mxu0 0
      %945 = vmatpush2.bf16.msra.mxu0 0
      %946 = vmatprep.subr.bf16.mxu0 0
      %947 = vmatpush2.bf16.msra.mxu0 0
      %948 = vmatprep.subr.bf16.mxu0 0
      %949 = vmatpush2.bf16.msra.mxu0 0
      %950 = vmatprep.subr.bf16.mxu0 0
      %951 = vmatpush2.bf16.msra.mxu0 0
      %952 = vmatprep.subr.bf16.mxu0 0
      %953 = vmatpush2.bf16.msra.mxu0 0
      %954 = vmatprep.subr.bf16.mxu0 0
      %955 = vmatpush2.bf16.msra.mxu0 0
      %956 = vmatprep.subr.bf16.mxu0 0
      %957 = vmatpush2.bf16.msra.mxu0 0
      %958 = vmatprep.mubr.bf16.mxu0 0
      %959 = vmatmul.mubr.bf16.gmra.mxu0 %v870
      %v960 = vpop.f32.mrf.mxu0
      %v961 = vadd.f32 0.0, %v960
      %v962 = vpop.f32.mrf.mxu0
      %v963 = vpop.f32.mrf.mxu0
      %v964 = vadd.f32 0.0, %v963
      %v965 = vpop.f32.mrf.mxu0
      %966 = vmatprep.mubr.bf16.mxu0 0
      %967 = vmatmul.mubr.bf16.gmra.mxu0 %v871
      %v968 = vpop.f32.mrf.mxu0
      %v969 = vadd.f32 0.0, %v968
      %v970 = vpop.f32.mrf.mxu0
      %v971 = vpop.f32.mrf.mxu0
      %v972 = vadd.f32 0.0, %v971
      %v973 = vpop.f32.mrf.mxu0
      %974 = vmatprep.mubr.bf16.mxu0 0
      %975 = vmatmul.mubr.bf16.gmra.mxu0 %v872
      %v976 = vpop.f32.mrf.mxu0
      %v977 = vadd.f32 0.0, %v976
      %v978 = vpop.f32.mrf.mxu0
      %v979 = vpop.f32.mrf.mxu0
      %v980 = vadd.f32 0.0, %v979
      %v981 = vpop.f32.mrf.mxu0
      %982 = vmatprep.mubr.bf16.mxu0 0
      %983 = vmatmul.mubr.bf16.gmra.mxu0 %v873
      %v984 = vpop.f32.mrf.mxu0
      %v985 = vadd.f32 0.0, %v984
      %v986 = vpop.f32.mrf.mxu0
      %v987 = vpop.f32.mrf.mxu0
      %v988 = vadd.f32 0.0, %v987
      %v989 = vpop.f32.mrf.mxu0
      %990 = vdwg.mxu0
      %v991 = vadd.f32 %v820, %v961
      %v992 = vadd.f32 %v821, %v964
      %v993 = vadd.f32 %v822, %v969
      %v994 = vadd.f32 %v823, %v972
      %v995 = vadd.f32 %v824, %v977
      %v996 = vadd.f32 %v825, %v980
      %v997 = vadd.f32 %v826, %v985
      %v998 = vadd.f32 %v827, %v988
      %s999 = scalar_lea.vmem %s308, 128
      %v1000 = vld [vmem:[%s999] sm:$0xf]
      %v1001 = vld [vmem:[%s999 + $0x4] sm:$0xf]
      %v1002 = vld [vmem:[%s999 + $0x8] sm:$0xf]
      %v1003 = vld [vmem:[%s999 + $0xc] sm:$0xf]
      %v1004 = vld [vmem:[%s999 + $0x10] sm:$0xf]
      %v1005 = vld [vmem:[%s999 + $0x14] sm:$0xf]
      %v1006 = vld [vmem:[%s999 + $0x18] sm:$0xf]
      %v1007 = vld [vmem:[%s999 + $0x1c] sm:$0xf]
      %s1008 = scalar_lea.vmem %s1, 256
      %v1009 = vld [vmem:[%s1008] sm:$0xf]
      %v1010 = vld [vmem:[%s1008 + $0x4] sm:$0xf]
      %v1011 = vld [vmem:[%s1008 + $0x8] sm:$0xf]
      %v1012 = vld [vmem:[%s1008 + $0xc] sm:$0xf]
      %v1013 = vld [vmem:[%s1008 + $0x10] sm:$0xf]
      %v1014 = vld [vmem:[%s1008 + $0x14] sm:$0xf]
      %v1015 = vld [vmem:[%s1008 + $0x18] sm:$0xf]
      %v1016 = vld [vmem:[%s1008 + $0x1c] sm:$0xf]
      %v1017 = vld [vmem:[%s1008 + $0x20] sm:$0xf]
      %v1018 = vld [vmem:[%s1008 + $0x24] sm:$0xf]
      %v1019 = vld [vmem:[%s1008 + $0x28] sm:$0xf]
      %v1020 = vld [vmem:[%s1008 + $0x2c] sm:$0xf]
      %v1021 = vld [vmem:[%s1008 + $0x30] sm:$0xf]
      %v1022 = vld [vmem:[%s1008 + $0x34] sm:$0xf]
      %v1023 = vld [vmem:[%s1008 + $0x38] sm:$0xf]
      %v1024 = vld [vmem:[%s1008 + $0x3c] sm:$0xf]
      %v1033 = vunpack.c.l.b16 %v1000
      %v1034 = vunpack.c.l.b16 %v1001
      %v1035 = vunpack.c.l.b16 %v1002
      %v1036 = vunpack.c.l.b16 %v1003
      %v1037 = vunpack.c.l.b16 %v1004
      %v1038 = vunpack.c.l.b16 %v1005
      %v1039 = vunpack.c.l.b16 %v1006
      %v1040 = vunpack.c.l.b16 %v1007
      %v1041 = vpack.c.b16 %v1034, %v1033
      %v1042 = vpack.c.b16 %v1036, %v1035
      %v1043 = vpack.c.b16 %v1038, %v1037
      %v1044 = vpack.c.b16 %v1040, %v1039
      %v1065 = vunpack.c.l.b16 %v1009
      %v1066 = vunpack.c.l.b16 %v1010
      %v1067 = vunpack.c.l.b16 %v1011
      %v1068 = vunpack.c.l.b16 %v1012
      %v1069 = vunpack.c.l.b16 %v1013
      %v1070 = vunpack.c.l.b16 %v1014
      %v1071 = vunpack.c.l.b16 %v1015
      %v1072 = vunpack.c.l.b16 %v1016
      %v1073 = vunpack.c.l.b16 %v1017
      %v1074 = vunpack.c.l.b16 %v1018
      %v1075 = vunpack.c.l.b16 %v1019
      %v1076 = vunpack.c.l.b16 %v1020
      %v1077 = vunpack.c.l.b16 %v1021
      %v1078 = vunpack.c.l.b16 %v1022
      %v1079 = vunpack.c.l.b16 %v1023
      %v1080 = vunpack.c.l.b16 %v1024
      %v1081 = vpack.c.b16 %v1066, %v1065
      %v1082 = vpack.c.b16 %v1068, %v1067
      %v1083 = vpack.c.b16 %v1070, %v1069
      %v1084 = vpack.c.b16 %v1072, %v1071
      %v1085 = vpack.c.b16 %v1074, %v1073
      %v1086 = vpack.c.b16 %v1076, %v1075
      %v1087 = vpack.c.b16 %v1078, %v1077
      %v1088 = vpack.c.b16 %v1080, %v1079
      %1097 = vmatprep.subr.bf16.mxu0 0
      %1098 = vmatpush1.bf16.msra.mxu0 %v1088
      %1099 = vmatprep.subr.bf16.mxu0 0
      %1100 = vmatpush1.bf16.msra.mxu0 %v1087
      %1101 = vmatprep.subr.bf16.mxu0 0
      %1102 = vmatpush1.bf16.msra.mxu0 %v1086
      %1103 = vmatprep.subr.bf16.mxu0 0
      %1104 = vmatpush1.bf16.msra.mxu0 %v1085
      %1105 = vmatprep.subr.bf16.mxu0 0
      %1106 = vmatpush1.bf16.msra.mxu0 %v1084
      %1107 = vmatprep.subr.bf16.mxu0 0
      %1108 = vmatpush1.bf16.msra.mxu0 %v1083
      %1109 = vmatprep.subr.bf16.mxu0 0
      %1110 = vmatpush1.bf16.msra.mxu0 %v1082
      %1111 = vmatprep.subr.bf16.mxu0 0
      %1112 = vmatpush1.bf16.msra.mxu0 %v1081
      %1113 = vmatprep.subr.bf16.mxu0 0
      %1114 = vmatpush2.bf16.msra.mxu0 0
      %1115 = vmatprep.subr.bf16.mxu0 0
      %1116 = vmatpush2.bf16.msra.mxu0 0
      %1117 = vmatprep.subr.bf16.mxu0 0
      %1118 = vmatpush2.bf16.msra.mxu0 0
      %1119 = vmatprep.subr.bf16.mxu0 0
      %1120 = vmatpush2.bf16.msra.mxu0 0
      %1121 = vmatprep.subr.bf16.mxu0 0
      %1122 = vmatpush2.bf16.msra.mxu0 0
      %1123 = vmatprep.subr.bf16.mxu0 0
      %1124 = vmatpush2.bf16.msra.mxu0 0
      %1125 = vmatprep.subr.bf16.mxu0 0
      %1126 = vmatpush2.bf16.msra.mxu0 0
      %1127 = vmatprep.subr.bf16.mxu0 0
      %1128 = vmatpush2.bf16.msra.mxu0 0
      %1129 = vmatprep.mubr.bf16.mxu0 0
      %1130 = vmatmul.mubr.bf16.gmra.mxu0 %v1041
      %v1131 = vpop.f32.mrf.mxu0
      %v1132 = vadd.f32 0.0, %v1131
      %v1133 = vpop.f32.mrf.mxu0
      %v1134 = vpop.f32.mrf.mxu0
      %v1135 = vadd.f32 0.0, %v1134
      %v1136 = vpop.f32.mrf.mxu0
      %1137 = vmatprep.mubr.bf16.mxu0 0
      %1138 = vmatmul.mubr.bf16.gmra.mxu0 %v1042
      %v1139 = vpop.f32.mrf.mxu0
      %v1140 = vadd.f32 0.0, %v1139
      %v1141 = vpop.f32.mrf.mxu0
      %v1142 = vpop.f32.mrf.mxu0
      %v1143 = vadd.f32 0.0, %v1142
      %v1144 = vpop.f32.mrf.mxu0
      %1145 = vmatprep.mubr.bf16.mxu0 0
      %1146 = vmatmul.mubr.bf16.gmra.mxu0 %v1043
      %v1147 = vpop.f32.mrf.mxu0
      %v1148 = vadd.f32 0.0, %v1147
      %v1149 = vpop.f32.mrf.mxu0
      %v1150 = vpop.f32.mrf.mxu0
      %v1151 = vadd.f32 0.0, %v1150
      %v1152 = vpop.f32.mrf.mxu0
      %1153 = vmatprep.mubr.bf16.mxu0 0
      %1154 = vmatmul.mubr.bf16.gmra.mxu0 %v1044
      %v1155 = vpop.f32.mrf.mxu0
      %v1156 = vadd.f32 0.0, %v1155
      %v1157 = vpop.f32.mrf.mxu0
      %v1158 = vpop.f32.mrf.mxu0
      %v1159 = vadd.f32 0.0, %v1158
      %v1160 = vpop.f32.mrf.mxu0
      %1161 = vdwg.mxu0
      %v1162 = vadd.f32 %v991, %v1132
      %v1163 = vadd.f32 %v992, %v1135
      %v1164 = vadd.f32 %v993, %v1140
      %v1165 = vadd.f32 %v994, %v1143
      %v1166 = vadd.f32 %v995, %v1148
      %v1167 = vadd.f32 %v996, %v1151
      %v1168 = vadd.f32 %v997, %v1156
      %v1169 = vadd.f32 %v998, %v1159
      %s1170 = scalar_lea.vmem %s308, 160
      %v1171 = vld [vmem:[%s1170] sm:$0xf]
      %v1172 = vld [vmem:[%s1170 + $0x4] sm:$0xf]
      %v1173 = vld [vmem:[%s1170 + $0x8] sm:$0xf]
      %v1174 = vld [vmem:[%s1170 + $0xc] sm:$0xf]
      %v1175 = vld [vmem:[%s1170 + $0x10] sm:$0xf]
      %v1176 = vld [vmem:[%s1170 + $0x14] sm:$0xf]
      %v1177 = vld [vmem:[%s1170 + $0x18] sm:$0xf]
      %v1178 = vld [vmem:[%s1170 + $0x1c] sm:$0xf]
      %s1179 = scalar_lea.vmem %s1, 320
      %v1180 = vld [vmem:[%s1179] sm:$0xf]
      %v1181 = vld [vmem:[%s1179 + $0x4] sm:$0xf]
      %v1182 = vld [vmem:[%s1179 + $0x8] sm:$0xf]
      %v1183 = vld [vmem:[%s1179 + $0xc] sm:$0xf]
      %v1184 = vld [vmem:[%s1179 + $0x10] sm:$0xf]
      %v1185 = vld [vmem:[%s1179 + $0x14] sm:$0xf]
      %v1186 = vld [vmem:[%s1179 + $0x18] sm:$0xf]
      %v1187 = vld [vmem:[%s1179 + $0x1c] sm:$0xf]
      %v1188 = vld [vmem:[%s1179 + $0x20] sm:$0xf]
      %v1189 = vld [vmem:[%s1179 + $0x24] sm:$0xf]
      %v1190 = vld [vmem:[%s1179 + $0x28] sm:$0xf]
      %v1191 = vld [vmem:[%s1179 + $0x2c] sm:$0xf]
      %v1192 = vld [vmem:[%s1179 + $0x30] sm:$0xf]
      %v1193 = vld [vmem:[%s1179 + $0x34] sm:$0xf]
      %v1194 = vld [vmem:[%s1179 + $0x38] sm:$0xf]
      %v1195 = vld [vmem:[%s1179 + $0x3c] sm:$0xf]
      %v1204 = vunpack.c.l.b16 %v1171
      %v1205 = vunpack.c.l.b16 %v1172
      %v1206 = vunpack.c.l.b16 %v1173
      %v1207 = vunpack.c.l.b16 %v1174
      %v1208 = vunpack.c.l.b16 %v1175
      %v1209 = vunpack.c.l.b16 %v1176
      %v1210 = vunpack.c.l.b16 %v1177
      %v1211 = vunpack.c.l.b16 %v1178
      %v1212 = vpack.c.b16 %v1205, %v1204
      %v1213 = vpack.c.b16 %v1207, %v1206
      %v1214 = vpack.c.b16 %v1209, %v1208
      %v1215 = vpack.c.b16 %v1211, %v1210
      %v1236 = vunpack.c.l.b16 %v1180
      %v1237 = vunpack.c.l.b16 %v1181
      %v1238 = vunpack.c.l.b16 %v1182
      %v1239 = vunpack.c.l.b16 %v1183
      %v1240 = vunpack.c.l.b16 %v1184
      %v1241 = vunpack.c.l.b16 %v1185
      %v1242 = vunpack.c.l.b16 %v1186
      %v1243 = vunpack.c.l.b16 %v1187
      %v1244 = vunpack.c.l.b16 %v1188
      %v1245 = vunpack.c.l.b16 %v1189
      %v1246 = vunpack.c.l.b16 %v1190
      %v1247 = vunpack.c.l.b16 %v1191
      %v1248 = vunpack.c.l.b16 %v1192
      %v1249 = vunpack.c.l.b16 %v1193
      %v1250 = vunpack.c.l.b16 %v1194
      %v1251 = vunpack.c.l.b16 %v1195
      %v1252 = vpack.c.b16 %v1237, %v1236
      %v1253 = vpack.c.b16 %v1239, %v1238
      %v1254 = vpack.c.b16 %v1241, %v1240
      %v1255 = vpack.c.b16 %v1243, %v1242
      %v1256 = vpack.c.b16 %v1245, %v1244
      %v1257 = vpack.c.b16 %v1247, %v1246
      %v1258 = vpack.c.b16 %v1249, %v1248
      %v1259 = vpack.c.b16 %v1251, %v1250
      %1268 = vmatprep.subr.bf16.mxu0 0
      %1269 = vmatpush1.bf16.msra.mxu0 %v1259
      %1270 = vmatprep.subr.bf16.mxu0 0
      %1271 = vmatpush1.bf16.msra.mxu0 %v1258
      %1272 = vmatprep.subr.bf16.mxu0 0
      %1273 = vmatpush1.bf16.msra.mxu0 %v1257
      %1274 = vmatprep.subr.bf16.mxu0 0
      %1275 = vmatpush1.bf16.msra.mxu0 %v1256
      %1276 = vmatprep.subr.bf16.mxu0 0
      %1277 = vmatpush1.bf16.msra.mxu0 %v1255
      %1278 = vmatprep.subr.bf16.mxu0 0
      %1279 = vmatpush1.bf16.msra.mxu0 %v1254
      %1280 = vmatprep.subr.bf16.mxu0 0
      %1281 = vmatpush1.bf16.msra.mxu0 %v1253
      %1282 = vmatprep.subr.bf16.mxu0 0
      %1283 = vmatpush1.bf16.msra.mxu0 %v1252
      %1284 = vmatprep.subr.bf16.mxu0 0
      %1285 = vmatpush2.bf16.msra.mxu0 0
      %1286 = vmatprep.subr.bf16.mxu0 0
      %1287 = vmatpush2.bf16.msra.mxu0 0
      %1288 = vmatprep.subr.bf16.mxu0 0
      %1289 = vmatpush2.bf16.msra.mxu0 0
      %1290 = vmatprep.subr.bf16.mxu0 0
      %1291 = vmatpush2.bf16.msra.mxu0 0
      %1292 = vmatprep.subr.bf16.mxu0 0
      %1293 = vmatpush2.bf16.msra.mxu0 0
      %1294 = vmatprep.subr.bf16.mxu0 0
      %1295 = vmatpush2.bf16.msra.mxu0 0
      %1296 = vmatprep.subr.bf16.mxu0 0
      %1297 = vmatpush2.bf16.msra.mxu0 0
      %1298 = vmatprep.subr.bf16.mxu0 0
      %1299 = vmatpush2.bf16.msra.mxu0 0
      %1300 = vmatprep.mubr.bf16.mxu0 0
      %1301 = vmatmul.mubr.bf16.gmra.mxu0 %v1212
      %v1302 = vpop.f32.mrf.mxu0
      %v1303 = vadd.f32 0.0, %v1302
      %v1304 = vpop.f32.mrf.mxu0
      %v1305 = vpop.f32.mrf.mxu0
      %v1306 = vadd.f32 0.0, %v1305
      %v1307 = vpop.f32.mrf.mxu0
      %1308 = vmatprep.mubr.bf16.mxu0 0
      %1309 = vmatmul.mubr.bf16.gmra.mxu0 %v1213
      %v1310 = vpop.f32.mrf.mxu0
      %v1311 = vadd.f32 0.0, %v1310
      %v1312 = vpop.f32.mrf.mxu0
      %v1313 = vpop.f32.mrf.mxu0
      %v1314 = vadd.f32 0.0, %v1313
      %v1315 = vpop.f32.mrf.mxu0
      %1316 = vmatprep.mubr.bf16.mxu0 0
      %1317 = vmatmul.mubr.bf16.gmra.mxu0 %v1214
      %v1318 = vpop.f32.mrf.mxu0
      %v1319 = vadd.f32 0.0, %v1318
      %v1320 = vpop.f32.mrf.mxu0
      %v1321 = vpop.f32.mrf.mxu0
      %v1322 = vadd.f32 0.0, %v1321
      %v1323 = vpop.f32.mrf.mxu0
      %1324 = vmatprep.mubr.bf16.mxu0 0
      %1325 = vmatmul.mubr.bf16.gmra.mxu0 %v1215
      %v1326 = vpop.f32.mrf.mxu0
      %v1327 = vadd.f32 0.0, %v1326
      %v1328 = vpop.f32.mrf.mxu0
      %v1329 = vpop.f32.mrf.mxu0
      %v1330 = vadd.f32 0.0, %v1329
      %v1331 = vpop.f32.mrf.mxu0
      %1332 = vdwg.mxu0
      %v1333 = vadd.f32 %v1162, %v1303
      %v1334 = vadd.f32 %v1163, %v1306
      %v1335 = vadd.f32 %v1164, %v1311
      %v1336 = vadd.f32 %v1165, %v1314
      %v1337 = vadd.f32 %v1166, %v1319
      %v1338 = vadd.f32 %v1167, %v1322
      %v1339 = vadd.f32 %v1168, %v1327
      %v1340 = vadd.f32 %v1169, %v1330
      %s1341 = scalar_lea.vmem %s308, 192
      %v1342 = vld [vmem:[%s1341] sm:$0xf]
      %v1343 = vld [vmem:[%s1341 + $0x4] sm:$0xf]
      %v1344 = vld [vmem:[%s1341 + $0x8] sm:$0xf]
      %v1345 = vld [vmem:[%s1341 + $0xc] sm:$0xf]
      %v1346 = vld [vmem:[%s1341 + $0x10] sm:$0xf]
      %v1347 = vld [vmem:[%s1341 + $0x14] sm:$0xf]
      %v1348 = vld [vmem:[%s1341 + $0x18] sm:$0xf]
      %v1349 = vld [vmem:[%s1341 + $0x1c] sm:$0xf]
      %s1350 = scalar_lea.vmem %s1, 384
      %v1351 = vld [vmem:[%s1350] sm:$0xf]
      %v1352 = vld [vmem:[%s1350 + $0x4] sm:$0xf]
      %v1353 = vld [vmem:[%s1350 + $0x8] sm:$0xf]
      %v1354 = vld [vmem:[%s1350 + $0xc] sm:$0xf]
      %v1355 = vld [vmem:[%s1350 + $0x10] sm:$0xf]
      %v1356 = vld [vmem:[%s1350 + $0x14] sm:$0xf]
      %v1357 = vld [vmem:[%s1350 + $0x18] sm:$0xf]
      %v1358 = vld [vmem:[%s1350 + $0x1c] sm:$0xf]
      %v1359 = vld [vmem:[%s1350 + $0x20] sm:$0xf]
      %v1360 = vld [vmem:[%s1350 + $0x24] sm:$0xf]
      %v1361 = vld [vmem:[%s1350 + $0x28] sm:$0xf]
      %v1362 = vld [vmem:[%s1350 + $0x2c] sm:$0xf]
      %v1363 = vld [vmem:[%s1350 + $0x30] sm:$0xf]
      %v1364 = vld [vmem:[%s1350 + $0x34] sm:$0xf]
      %v1365 = vld [vmem:[%s1350 + $0x38] sm:$0xf]
      %v1366 = vld [vmem:[%s1350 + $0x3c] sm:$0xf]
      %v1375 = vunpack.c.l.b16 %v1342
      %v1376 = vunpack.c.l.b16 %v1343
      %v1377 = vunpack.c.l.b16 %v1344
      %v1378 = vunpack.c.l.b16 %v1345
      %v1379 = vunpack.c.l.b16 %v1346
      %v1380 = vunpack.c.l.b16 %v1347
      %v1381 = vunpack.c.l.b16 %v1348
      %v1382 = vunpack.c.l.b16 %v1349
      %v1383 = vpack.c.b16 %v1376, %v1375
      %v1384 = vpack.c.b16 %v1378, %v1377
      %v1385 = vpack.c.b16 %v1380, %v1379
      %v1386 = vpack.c.b16 %v1382, %v1381
      %v1407 = vunpack.c.l.b16 %v1351
      %v1408 = vunpack.c.l.b16 %v1352
      %v1409 = vunpack.c.l.b16 %v1353
      %v1410 = vunpack.c.l.b16 %v1354
      %v1411 = vunpack.c.l.b16 %v1355
      %v1412 = vunpack.c.l.b16 %v1356
      %v1413 = vunpack.c.l.b16 %v1357
      %v1414 = vunpack.c.l.b16 %v1358
      %v1415 = vunpack.c.l.b16 %v1359
      %v1416 = vunpack.c.l.b16 %v1360
      %v1417 = vunpack.c.l.b16 %v1361
      %v1418 = vunpack.c.l.b16 %v1362
      %v1419 = vunpack.c.l.b16 %v1363
      %v1420 = vunpack.c.l.b16 %v1364
      %v1421 = vunpack.c.l.b16 %v1365
      %v1422 = vunpack.c.l.b16 %v1366
      %v1423 = vpack.c.b16 %v1408, %v1407
      %v1424 = vpack.c.b16 %v1410, %v1409
      %v1425 = vpack.c.b16 %v1412, %v1411
      %v1426 = vpack.c.b16 %v1414, %v1413
      %v1427 = vpack.c.b16 %v1416, %v1415
      %v1428 = vpack.c.b16 %v1418, %v1417
      %v1429 = vpack.c.b16 %v1420, %v1419
      %v1430 = vpack.c.b16 %v1422, %v1421
      %1439 = vmatprep.subr.bf16.mxu0 0
      %1440 = vmatpush1.bf16.msra.mxu0 %v1430
      %1441 = vmatprep.subr.bf16.mxu0 0
      %1442 = vmatpush1.bf16.msra.mxu0 %v1429
      %1443 = vmatprep.subr.bf16.mxu0 0
      %1444 = vmatpush1.bf16.msra.mxu0 %v1428
      %1445 = vmatprep.subr.bf16.mxu0 0
      %1446 = vmatpush1.bf16.msra.mxu0 %v1427
      %1447 = vmatprep.subr.bf16.mxu0 0
      %1448 = vmatpush1.bf16.msra.mxu0 %v1426
      %1449 = vmatprep.subr.bf16.mxu0 0
      %1450 = vmatpush1.bf16.msra.mxu0 %v1425
      %1451 = vmatprep.subr.bf16.mxu0 0
      %1452 = vmatpush1.bf16.msra.mxu0 %v1424
      %1453 = vmatprep.subr.bf16.mxu0 0
      %1454 = vmatpush1.bf16.msra.mxu0 %v1423
      %1455 = vmatprep.subr.bf16.mxu0 0
      %1456 = vmatpush2.bf16.msra.mxu0 0
      %1457 = vmatprep.subr.bf16.mxu0 0
      %1458 = vmatpush2.bf16.msra.mxu0 0
      %1459 = vmatprep.subr.bf16.mxu0 0
      %1460 = vmatpush2.bf16.msra.mxu0 0
      %1461 = vmatprep.subr.bf16.mxu0 0
      %1462 = vmatpush2.bf16.msra.mxu0 0
      %1463 = vmatprep.subr.bf16.mxu0 0
      %1464 = vmatpush2.bf16.msra.mxu0 0
      %1465 = vmatprep.subr.bf16.mxu0 0
      %1466 = vmatpush2.bf16.msra.mxu0 0
      %1467 = vmatprep.subr.bf16.mxu0 0
      %1468 = vmatpush2.bf16.msra.mxu0 0
      %1469 = vmatprep.subr.bf16.mxu0 0
      %1470 = vmatpush2.bf16.msra.mxu0 0
      %1471 = vmatprep.mubr.bf16.mxu0 0
      %1472 = vmatmul.mubr.bf16.gmra.mxu0 %v1383
      %v1473 = vpop.f32.mrf.mxu0
      %v1474 = vadd.f32 0.0, %v1473
      %v1475 = vpop.f32.mrf.mxu0
      %v1476 = vpop.f32.mrf.mxu0
      %v1477 = vadd.f32 0.0, %v1476
      %v1478 = vpop.f32.mrf.mxu0
      %1479 = vmatprep.mubr.bf16.mxu0 0
      %1480 = vmatmul.mubr.bf16.gmra.mxu0 %v1384
      %v1481 = vpop.f32.mrf.mxu0
      %v1482 = vadd.f32 0.0, %v1481
      %v1483 = vpop.f32.mrf.mxu0
      %v1484 = vpop.f32.mrf.mxu0
      %v1485 = vadd.f32 0.0, %v1484
      %v1486 = vpop.f32.mrf.mxu0
      %1487 = vmatprep.mubr.bf16.mxu0 0
      %1488 = vmatmul.mubr.bf16.gmra.mxu0 %v1385
      %v1489 = vpop.f32.mrf.mxu0
      %v1490 = vadd.f32 0.0, %v1489
      %v1491 = vpop.f32.mrf.mxu0
      %v1492 = vpop.f32.mrf.mxu0
      %v1493 = vadd.f32 0.0, %v1492
      %v1494 = vpop.f32.mrf.mxu0
      %1495 = vmatprep.mubr.bf16.mxu0 0
      %1496 = vmatmul.mubr.bf16.gmra.mxu0 %v1386
      %v1497 = vpop.f32.mrf.mxu0
      %v1498 = vadd.f32 0.0, %v1497
      %v1499 = vpop.f32.mrf.mxu0
      %v1500 = vpop.f32.mrf.mxu0
      %v1501 = vadd.f32 0.0, %v1500
      %v1502 = vpop.f32.mrf.mxu0
      %1503 = vdwg.mxu0
      %v1504 = vadd.f32 %v1333, %v1474
      %v1505 = vadd.f32 %v1334, %v1477
      %v1506 = vadd.f32 %v1335, %v1482
      %v1507 = vadd.f32 %v1336, %v1485
      %v1508 = vadd.f32 %v1337, %v1490
      %v1509 = vadd.f32 %v1338, %v1493
      %v1510 = vadd.f32 %v1339, %v1498
      %v1511 = vadd.f32 %v1340, %v1501
      %s1512 = scalar_lea.vmem %s308, 224
      %v1513 = vld [vmem:[%s1512] sm:$0xf]
      %v1514 = vld [vmem:[%s1512 + $0x4] sm:$0xf]
      %v1515 = vld [vmem:[%s1512 + $0x8] sm:$0xf]
      %v1516 = vld [vmem:[%s1512 + $0xc] sm:$0xf]
      %v1517 = vld [vmem:[%s1512 + $0x10] sm:$0xf]
      %v1518 = vld [vmem:[%s1512 + $0x14] sm:$0xf]
      %v1519 = vld [vmem:[%s1512 + $0x18] sm:$0xf]
      %v1520 = vld [vmem:[%s1512 + $0x1c] sm:$0xf]
      %s1521 = scalar_lea.vmem %s1, 448
      %v1522 = vld [vmem:[%s1521] sm:$0xf]
      %v1523 = vld [vmem:[%s1521 + $0x4] sm:$0xf]
      %v1524 = vld [vmem:[%s1521 + $0x8] sm:$0xf]
      %v1525 = vld [vmem:[%s1521 + $0xc] sm:$0xf]
      %v1526 = vld [vmem:[%s1521 + $0x10] sm:$0xf]
      %v1527 = vld [vmem:[%s1521 + $0x14] sm:$0xf]
      %v1528 = vld [vmem:[%s1521 + $0x18] sm:$0xf]
      %v1529 = vld [vmem:[%s1521 + $0x1c] sm:$0xf]
      %v1530 = vld [vmem:[%s1521 + $0x20] sm:$0xf]
      %v1531 = vld [vmem:[%s1521 + $0x24] sm:$0xf]
      %v1532 = vld [vmem:[%s1521 + $0x28] sm:$0xf]
      %v1533 = vld [vmem:[%s1521 + $0x2c] sm:$0xf]
      %v1534 = vld [vmem:[%s1521 + $0x30] sm:$0xf]
      %v1535 = vld [vmem:[%s1521 + $0x34] sm:$0xf]
      %v1536 = vld [vmem:[%s1521 + $0x38] sm:$0xf]
      %v1537 = vld [vmem:[%s1521 + $0x3c] sm:$0xf]
      %v1546 = vunpack.c.l.b16 %v1513
      %v1547 = vunpack.c.l.b16 %v1514
      %v1548 = vunpack.c.l.b16 %v1515
      %v1549 = vunpack.c.l.b16 %v1516
      %v1550 = vunpack.c.l.b16 %v1517
      %v1551 = vunpack.c.l.b16 %v1518
      %v1552 = vunpack.c.l.b16 %v1519
      %v1553 = vunpack.c.l.b16 %v1520
      %v1554 = vpack.c.b16 %v1547, %v1546
      %v1555 = vpack.c.b16 %v1549, %v1548
      %v1556 = vpack.c.b16 %v1551, %v1550
      %v1557 = vpack.c.b16 %v1553, %v1552
      %v1578 = vunpack.c.l.b16 %v1522
      %v1579 = vunpack.c.l.b16 %v1523
      %v1580 = vunpack.c.l.b16 %v1524
      %v1581 = vunpack.c.l.b16 %v1525
      %v1582 = vunpack.c.l.b16 %v1526
      %v1583 = vunpack.c.l.b16 %v1527
      %v1584 = vunpack.c.l.b16 %v1528
      %v1585 = vunpack.c.l.b16 %v1529
      %v1586 = vunpack.c.l.b16 %v1530
      %v1587 = vunpack.c.l.b16 %v1531
      %v1588 = vunpack.c.l.b16 %v1532
      %v1589 = vunpack.c.l.b16 %v1533
      %v1590 = vunpack.c.l.b16 %v1534
      %v1591 = vunpack.c.l.b16 %v1535
      %v1592 = vunpack.c.l.b16 %v1536
      %v1593 = vunpack.c.l.b16 %v1537
      %v1594 = vpack.c.b16 %v1579, %v1578
      %v1595 = vpack.c.b16 %v1581, %v1580
      %v1596 = vpack.c.b16 %v1583, %v1582
      %v1597 = vpack.c.b16 %v1585, %v1584
      %v1598 = vpack.c.b16 %v1587, %v1586
      %v1599 = vpack.c.b16 %v1589, %v1588
      %v1600 = vpack.c.b16 %v1591, %v1590
      %v1601 = vpack.c.b16 %v1593, %v1592
      %1610 = vmatprep.subr.bf16.mxu0 0
      %1611 = vmatpush1.bf16.msra.mxu0 %v1601
      %1612 = vmatprep.subr.bf16.mxu0 0
      %1613 = vmatpush1.bf16.msra.mxu0 %v1600
      %1614 = vmatprep.subr.bf16.mxu0 0
      %1615 = vmatpush1.bf16.msra.mxu0 %v1599
      %1616 = vmatprep.subr.bf16.mxu0 0
      %1617 = vmatpush1.bf16.msra.mxu0 %v1598
      %1618 = vmatprep.subr.bf16.mxu0 0
      %1619 = vmatpush1.bf16.msra.mxu0 %v1597
      %1620 = vmatprep.subr.bf16.mxu0 0
      %1621 = vmatpush1.bf16.msra.mxu0 %v1596
      %1622 = vmatprep.subr.bf16.mxu0 0
      %1623 = vmatpush1.bf16.msra.mxu0 %v1595
      %1624 = vmatprep.subr.bf16.mxu0 0
      %1625 = vmatpush1.bf16.msra.mxu0 %v1594
      %1626 = vmatprep.subr.bf16.mxu0 0
      %1627 = vmatpush2.bf16.msra.mxu0 0
      %1628 = vmatprep.subr.bf16.mxu0 0
      %1629 = vmatpush2.bf16.msra.mxu0 0
      %1630 = vmatprep.subr.bf16.mxu0 0
      %1631 = vmatpush2.bf16.msra.mxu0 0
      %1632 = vmatprep.subr.bf16.mxu0 0
      %1633 = vmatpush2.bf16.msra.mxu0 0
      %1634 = vmatprep.subr.bf16.mxu0 0
      %1635 = vmatpush2.bf16.msra.mxu0 0
      %1636 = vmatprep.subr.bf16.mxu0 0
      %1637 = vmatpush2.bf16.msra.mxu0 0
      %1638 = vmatprep.subr.bf16.mxu0 0
      %1639 = vmatpush2.bf16.msra.mxu0 0
      %1640 = vmatprep.subr.bf16.mxu0 0
      %1641 = vmatpush2.bf16.msra.mxu0 0
      %1642 = vmatprep.mubr.bf16.mxu0 0
      %1643 = vmatmul.mubr.bf16.gmra.mxu0 %v1554
      %v1644 = vpop.f32.mrf.mxu0
      %v1645 = vadd.f32 0.0, %v1644
      %v1646 = vpop.f32.mrf.mxu0
      %v1647 = vpop.f32.mrf.mxu0
      %v1648 = vadd.f32 0.0, %v1647
      %v1649 = vpop.f32.mrf.mxu0
      %1650 = vmatprep.mubr.bf16.mxu0 0
      %1651 = vmatmul.mubr.bf16.gmra.mxu0 %v1555
      %v1652 = vpop.f32.mrf.mxu0
      %v1653 = vadd.f32 0.0, %v1652
      %v1654 = vpop.f32.mrf.mxu0
      %v1655 = vpop.f32.mrf.mxu0
      %v1656 = vadd.f32 0.0, %v1655
      %v1657 = vpop.f32.mrf.mxu0
      %1658 = vmatprep.mubr.bf16.mxu0 0
      %1659 = vmatmul.mubr.bf16.gmra.mxu0 %v1556
      %v1660 = vpop.f32.mrf.mxu0
      %v1661 = vadd.f32 0.0, %v1660
      %v1662 = vpop.f32.mrf.mxu0
      %v1663 = vpop.f32.mrf.mxu0
      %v1664 = vadd.f32 0.0, %v1663
      %v1665 = vpop.f32.mrf.mxu0
      %1666 = vmatprep.mubr.bf16.mxu0 0
      %1667 = vmatmul.mubr.bf16.gmra.mxu0 %v1557
      %v1668 = vpop.f32.mrf.mxu0
      %v1669 = vadd.f32 0.0, %v1668
      %v1670 = vpop.f32.mrf.mxu0
      %v1671 = vpop.f32.mrf.mxu0
      %v1672 = vadd.f32 0.0, %v1671
      %v1673 = vpop.f32.mrf.mxu0
      %1674 = vdwg.mxu0
      %v1675 = vadd.f32 %v1504, %v1645
      %v1676 = vadd.f32 %v1505, %v1648
      %v1677 = vadd.f32 %v1506, %v1653
      %v1678 = vadd.f32 %v1507, %v1656
      %v1679 = vadd.f32 %v1508, %v1661
      %v1680 = vadd.f32 %v1509, %v1664
      %v1681 = vadd.f32 %v1510, %v1669
      %v1682 = vadd.f32 %v1511, %v1672
      %s1683 = scalar_lea.vmem %s308, 256
      %v1684 = vld [vmem:[%s1683] sm:$0xf]
      %v1685 = vld [vmem:[%s1683 + $0x4] sm:$0xf]
      %v1686 = vld [vmem:[%s1683 + $0x8] sm:$0xf]
      %v1687 = vld [vmem:[%s1683 + $0xc] sm:$0xf]
      %v1688 = vld [vmem:[%s1683 + $0x10] sm:$0xf]
      %v1689 = vld [vmem:[%s1683 + $0x14] sm:$0xf]
      %v1690 = vld [vmem:[%s1683 + $0x18] sm:$0xf]
      %v1691 = vld [vmem:[%s1683 + $0x1c] sm:$0xf]
      %s1692 = scalar_lea.vmem %s1, 512
      %v1693 = vld [vmem:[%s1692] sm:$0xf]
      %v1694 = vld [vmem:[%s1692 + $0x4] sm:$0xf]
      %v1695 = vld [vmem:[%s1692 + $0x8] sm:$0xf]
      %v1696 = vld [vmem:[%s1692 + $0xc] sm:$0xf]
      %v1697 = vld [vmem:[%s1692 + $0x10] sm:$0xf]
      %v1698 = vld [vmem:[%s1692 + $0x14] sm:$0xf]
      %v1699 = vld [vmem:[%s1692 + $0x18] sm:$0xf]
      %v1700 = vld [vmem:[%s1692 + $0x1c] sm:$0xf]
      %v1701 = vld [vmem:[%s1692 + $0x20] sm:$0xf]
      %v1702 = vld [vmem:[%s1692 + $0x24] sm:$0xf]
      %v1703 = vld [vmem:[%s1692 + $0x28] sm:$0xf]
      %v1704 = vld [vmem:[%s1692 + $0x2c] sm:$0xf]
      %v1705 = vld [vmem:[%s1692 + $0x30] sm:$0xf]
      %v1706 = vld [vmem:[%s1692 + $0x34] sm:$0xf]
      %v1707 = vld [vmem:[%s1692 + $0x38] sm:$0xf]
      %v1708 = vld [vmem:[%s1692 + $0x3c] sm:$0xf]
      %v1717 = vunpack.c.l.b16 %v1684
      %v1718 = vunpack.c.l.b16 %v1685
      %v1719 = vunpack.c.l.b16 %v1686
      %v1720 = vunpack.c.l.b16 %v1687
      %v1721 = vunpack.c.l.b16 %v1688
      %v1722 = vunpack.c.l.b16 %v1689
      %v1723 = vunpack.c.l.b16 %v1690
      %v1724 = vunpack.c.l.b16 %v1691
      %v1725 = vpack.c.b16 %v1718, %v1717
      %v1726 = vpack.c.b16 %v1720, %v1719
      %v1727 = vpack.c.b16 %v1722, %v1721
      %v1728 = vpack.c.b16 %v1724, %v1723
      %v1749 = vunpack.c.l.b16 %v1693
      %v1750 = vunpack.c.l.b16 %v1694
      %v1751 = vunpack.c.l.b16 %v1695
      %v1752 = vunpack.c.l.b16 %v1696
      %v1753 = vunpack.c.l.b16 %v1697
      %v1754 = vunpack.c.l.b16 %v1698
      %v1755 = vunpack.c.l.b16 %v1699
      %v1756 = vunpack.c.l.b16 %v1700
      %v1757 = vunpack.c.l.b16 %v1701
      %v1758 = vunpack.c.l.b16 %v1702
      %v1759 = vunpack.c.l.b16 %v1703
      %v1760 = vunpack.c.l.b16 %v1704
      %v1761 = vunpack.c.l.b16 %v1705
      %v1762 = vunpack.c.l.b16 %v1706
      %v1763 = vunpack.c.l.b16 %v1707
      %v1764 = vunpack.c.l.b16 %v1708
      %v1765 = vpack.c.b16 %v1750, %v1749
      %v1766 = vpack.c.b16 %v1752, %v1751
      %v1767 = vpack.c.b16 %v1754, %v1753
      %v1768 = vpack.c.b16 %v1756, %v1755
      %v1769 = vpack.c.b16 %v1758, %v1757
      %v1770 = vpack.c.b16 %v1760, %v1759
      %v1771 = vpack.c.b16 %v1762, %v1761
      %v1772 = vpack.c.b16 %v1764, %v1763
      %1781 = vmatprep.subr.bf16.mxu0 0
      %1782 = vmatpush1.bf16.msra.mxu0 %v1772
      %1783 = vmatprep.subr.bf16.mxu0 0
      %1784 = vmatpush1.bf16.msra.mxu0 %v1771
      %1785 = vmatprep.subr.bf16.mxu0 0
      %1786 = vmatpush1.bf16.msra.mxu0 %v1770
      %1787 = vmatprep.subr.bf16.mxu0 0
      %1788 = vmatpush1.bf16.msra.mxu0 %v1769
      %1789 = vmatprep.subr.bf16.mxu0 0
      %1790 = vmatpush1.bf16.msra.mxu0 %v1768
      %1791 = vmatprep.subr.bf16.mxu0 0
      %1792 = vmatpush1.bf16.msra.mxu0 %v1767
      %1793 = vmatprep.subr.bf16.mxu0 0
      %1794 = vmatpush1.bf16.msra.mxu0 %v1766
      %1795 = vmatprep.subr.bf16.mxu0 0
      %1796 = vmatpush1.bf16.msra.mxu0 %v1765
      %1797 = vmatprep.subr.bf16.mxu0 0
      %1798 = vmatpush2.bf16.msra.mxu0 0
      %1799 = vmatprep.subr.bf16.mxu0 0
      %1800 = vmatpush2.bf16.msra.mxu0 0
      %1801 = vmatprep.subr.bf16.mxu0 0
      %1802 = vmatpush2.bf16.msra.mxu0 0
      %1803 = vmatprep.subr.bf16.mxu0 0
      %1804 = vmatpush2.bf16.msra.mxu0 0
      %1805 = vmatprep.subr.bf16.mxu0 0
      %1806 = vmatpush2.bf16.msra.mxu0 0
      %1807 = vmatprep.subr.bf16.mxu0 0
      %1808 = vmatpush2.bf16.msra.mxu0 0
      %1809 = vmatprep.subr.bf16.mxu0 0
      %1810 = vmatpush2.bf16.msra.mxu0 0
      %1811 = vmatprep.subr.bf16.mxu0 0
      %1812 = vmatpush2.bf16.msra.mxu0 0
      %1813 = vmatprep.mubr.bf16.mxu0 0
      %1814 = vmatmul.mubr.bf16.gmra.mxu0 %v1725
      %v1815 = vpop.f32.mrf.mxu0
      %v1816 = vadd.f32 0.0, %v1815
      %v1817 = vpop.f32.mrf.mxu0
      %v1818 = vpop.f32.mrf.mxu0
      %v1819 = vadd.f32 0.0, %v1818
      %v1820 = vpop.f32.mrf.mxu0
      %1821 = vmatprep.mubr.bf16.mxu0 0
      %1822 = vmatmul.mubr.bf16.gmra.mxu0 %v1726
      %v1823 = vpop.f32.mrf.mxu0
      %v1824 = vadd.f32 0.0, %v1823
      %v1825 = vpop.f32.mrf.mxu0
      %v1826 = vpop.f32.mrf.mxu0
      %v1827 = vadd.f32 0.0, %v1826
      %v1828 = vpop.f32.mrf.mxu0
      %1829 = vmatprep.mubr.bf16.mxu0 0
      %1830 = vmatmul.mubr.bf16.gmra.mxu0 %v1727
      %v1831 = vpop.f32.mrf.mxu0
      %v1832 = vadd.f32 0.0, %v1831
      %v1833 = vpop.f32.mrf.mxu0
      %v1834 = vpop.f32.mrf.mxu0
      %v1835 = vadd.f32 0.0, %v1834
      %v1836 = vpop.f32.mrf.mxu0
      %1837 = vmatprep.mubr.bf16.mxu0 0
      %1838 = vmatmul.mubr.bf16.gmra.mxu0 %v1728
      %v1839 = vpop.f32.mrf.mxu0
      %v1840 = vadd.f32 0.0, %v1839
      %v1841 = vpop.f32.mrf.mxu0
      %v1842 = vpop.f32.mrf.mxu0
      %v1843 = vadd.f32 0.0, %v1842
      %v1844 = vpop.f32.mrf.mxu0
      %1845 = vdwg.mxu0
      %v1846 = vadd.f32 %v1675, %v1816
      %v1847 = vadd.f32 %v1676, %v1819
      %v1848 = vadd.f32 %v1677, %v1824
      %v1849 = vadd.f32 %v1678, %v1827
      %v1850 = vadd.f32 %v1679, %v1832
      %v1851 = vadd.f32 %v1680, %v1835
      %v1852 = vadd.f32 %v1681, %v1840
      %v1853 = vadd.f32 %v1682, %v1843
      %v1854 = vadd.f32 %v1846, %v1847
      %v1855 = vadd.f32 %v1854, %v1848
      %v1856 = vadd.f32 %v1855, %v1849
      %v1857 = vadd.f32 %v1856, %v1850
      %v1858 = vadd.f32 %v1857, %v1851
      %v1859 = vadd.f32 %v1858, %v1852
      %v1860 = vadd.f32 %v1859, %v1853
      %v1861 = vrot.slane %v1860, 4
      %v1862 = vadd.f32 %v1860, %v1861
      %v1863 = vrot.slane %v1862, 2
      %v1864 = vadd.f32 %v1862, %v1863
      %v1865 = vrot.slane %v1864, 1
      %v1866 = vadd.f32 %v1864, %v1865
      %v1867 = vmul.f32 %v1846, %v1846
      %v1868 = vmul.f32 %v1847, %v1847
      %v1869 = vmul.f32 %v1848, %v1848
      %v1870 = vmul.f32 %v1849, %v1849
      %v1871 = vmul.f32 %v1850, %v1850
      %v1872 = vmul.f32 %v1851, %v1851
      %v1873 = vmul.f32 %v1852, %v1852
      %v1874 = vmul.f32 %v1853, %v1853
      %v1875 = vadd.f32 %v1867, %v1868
      %v1876 = vadd.f32 %v1875, %v1869
      %v1877 = vadd.f32 %v1876, %v1870
      %v1878 = vadd.f32 %v1877, %v1871
      %v1879 = vadd.f32 %v1878, %v1872
      %v1880 = vadd.f32 %v1879, %v1873
      %v1881 = vadd.f32 %v1880, %v1874
      %v1882 = vrot.slane %v1881, 4
      %v1883 = vadd.f32 %v1881, %v1882
      %v1884 = vrot.slane %v1883, 2
      %v1885 = vadd.f32 %v1883, %v1884
      %v1886 = vrot.slane %v1885, 1
      %v1887 = vadd.f32 %v1885, %v1886
      %v1888 = vlaneseq
      %v1889 = vshrl.u32 %v1888, 7
      %vm1890 = vcmp.eq.s32.totalorder %v1889, 0
      %vm1891 = vcmp.eq.s32.totalorder %v1889, 1
      %v1892 = vsel %vm1891, %v1887, 0.0
      %v1893 = vsel %vm1890, %v1866, %v1892
      %1894 = vst [vmem:[%s322] sm:$0xff] %v1893
      %v1895 = vpack.c.bf16 %v1847, %v1846
      %v1896 = vpack.c.bf16 %v1849, %v1848
      %v1897 = vpack.c.bf16 %v1851, %v1850
      %v1898 = vpack.c.bf16 %v1853, %v1852
      %1899 = vst [vmem:[%s318] sm:$0xf] 0
      %1900 = vst [vmem:[%s318 + $0x4] sm:$0x1] 0
      %1901 = vst [vmem:[%s318 + $0x8] sm:$0xf] 0
      %1902 = vst [vmem:[%s318 + $0xc] sm:$0x1] 0
      %1903 = vst [vmem:[%s318 + $0x10] sm:$0xf] 0
      %1904 = vst [vmem:[%s318 + $0x14] sm:$0x1] 0
      %1905 = vst [vmem:[%s318 + $0x18] sm:$0xf] 0
      %1906 = vst [vmem:[%s318 + $0x1c] sm:$0x1] 0
      %1907 = vst [vmem:[%s318 + $0x20] sm:$0xf] 0
      %1908 = vst [vmem:[%s318 + $0x24] sm:$0x1] 0
      %1909 = vst [vmem:[%s318 + $0x28] sm:$0xf] 0
      %1910 = vst [vmem:[%s318 + $0x2c] sm:$0x1] 0
      %1911 = vst [vmem:[%s318 + $0x30] sm:$0xf] 0
      %1912 = vst [vmem:[%s318 + $0x34] sm:$0x1] 0
      %1913 = vst [vmem:[%s318 + $0x38] sm:$0xf] 0
      %1914 = vst [vmem:[%s318 + $0x3c] sm:$0x1] 0
      %1915 = vst [vmem:[%s318 + $0x40] sm:$0xf] 0
      %1916 = vst [vmem:[%s318 + $0x44] sm:$0x1] 0
      %1917 = vst [vmem:[%s318 + $0x48] sm:$0xf] 0
      %1918 = vst [vmem:[%s318 + $0x4c] sm:$0x1] 0
      %v1923 = vunpack.c.l.b16 %v1895
      %v1924 = vunpack.c.h.b16 %v1895
      %v1925 = vunpack.c.l.b16 %v1896
      %v1926 = vunpack.c.h.b16 %v1896
      %v1927 = vunpack.c.l.b16 %v1897
      %v1928 = vunpack.c.h.b16 %v1897
      %v1929 = vunpack.c.l.b16 %v1898
      %v1930 = vunpack.c.h.b16 %v1898
      %v1931 = vpack.c.b16 %v1923, %v1923
      %v1932 = vpack.c.b16 %v1924, %v1924
      %v1933 = vpack.c.b16 %v1925, %v1925
      %v1934 = vpack.c.b16 %v1926, %v1926
      %v1935 = vpack.c.b16 %v1927, %v1927
      %v1936 = vpack.c.b16 %v1928, %v1928
      %v1937 = vpack.c.b16 %v1929, %v1929
      %v1938 = vpack.c.b16 %v1930, %v1930
      %v1940 = vshrl.u32 %v1931, 16
      %v1942 = vrot.slane %v1940, 7
      %v1943 = vshll.u32 %v1931, 16
      %v1945 = vor.u32 %v1942, %v1943
      %v1946 = vrot.slane %v1942, 4
      %v1948 = vshrl.u32 %v1932, 16
      %v1950 = vrot.slane %v1948, 7
      %v1951 = vshll.u32 %v1932, 16
      %v1953 = vor.u32 %v1950, %v1951
      %v1954 = vrot.slane %v1950, 4
      %v1956 = vshrl.u32 %v1933, 16
      %v1958 = vrot.slane %v1956, 7
      %v1959 = vshll.u32 %v1933, 16
      %v1961 = vor.u32 %v1958, %v1959
      %v1962 = vrot.slane %v1958, 4
      %v1964 = vshrl.u32 %v1934, 16
      %v1966 = vrot.slane %v1964, 7
      %v1967 = vshll.u32 %v1934, 16
      %v1969 = vor.u32 %v1966, %v1967
      %v1970 = vrot.slane %v1966, 4
      %v1972 = vshrl.u32 %v1935, 16
      %v1974 = vrot.slane %v1972, 7
      %v1975 = vshll.u32 %v1935, 16
      %v1977 = vor.u32 %v1974, %v1975
      %v1978 = vrot.slane %v1974, 4
      %v1980 = vshrl.u32 %v1936, 16
      %v1982 = vrot.slane %v1980, 7
      %v1983 = vshll.u32 %v1936, 16
      %v1985 = vor.u32 %v1982, %v1983
      %v1986 = vrot.slane %v1982, 4
      %v1988 = vshrl.u32 %v1937, 16
      %v1990 = vrot.slane %v1988, 7
      %v1991 = vshll.u32 %v1937, 16
      %v1993 = vor.u32 %v1990, %v1991
      %v1994 = vrot.slane %v1990, 4
      %v1996 = vshrl.u32 %v1938, 16
      %v1998 = vrot.slane %v1996, 7
      %v1999 = vshll.u32 %v1938, 16
      %v2001 = vor.u32 %v1998, %v1999
      %v2002 = vrot.slane %v1998, 4
      %s2019 = scalar_lea.vmem %s318, 8
      %vm2020 = vcmask 1043456
      %vm2021 = vsmask.f32 7938
      %vm2022 = vmand %vm2020, %vm2021
      %v2023 = vld [vmem:[%s2019] sm:$0xf]
      %v2024 = vsel %vm2022, %v1945, %v2023
      %2025 = vst [vmem:[%s2019] sm:$0xf] %v2024
      %vm2026 = vcmask 1040384
      %vm2027 = vsmask.f32 256
      %vm2028 = vmand %vm2026, %vm2027
      %v2029 = vld [vmem:[%s2019 + $0x4] sm:$0x1]
      %v2030 = vsel %vm2028, %v1946, %v2029
      %2031 = vst [vmem:[%s2019 + $0x4] sm:$0x1] %v2030
      %v2032 = vld [vmem:[%s2019 + $0x8] sm:$0xf]
      %v2033 = vsel %vm2022, %v1953, %v2032
      %2034 = vst [vmem:[%s2019 + $0x8] sm:$0xf] %v2033
      %v2035 = vld [vmem:[%s2019 + $0xc] sm:$0x1]
      %v2036 = vsel %vm2028, %v1954, %v2035
      %2037 = vst [vmem:[%s2019 + $0xc] sm:$0x1] %v2036
      %v2038 = vld [vmem:[%s2019 + $0x10] sm:$0xf]
      %v2039 = vsel %vm2022, %v1961, %v2038
      %2040 = vst [vmem:[%s2019 + $0x10] sm:$0xf] %v2039
      %v2041 = vld [vmem:[%s2019 + $0x14] sm:$0x1]
      %v2042 = vsel %vm2028, %v1962, %v2041
      %2043 = vst [vmem:[%s2019 + $0x14] sm:$0x1] %v2042
      %v2044 = vld [vmem:[%s2019 + $0x18] sm:$0xf]
      %v2045 = vsel %vm2022, %v1969, %v2044
      %2046 = vst [vmem:[%s2019 + $0x18] sm:$0xf] %v2045
      %v2047 = vld [vmem:[%s2019 + $0x1c] sm:$0x1]
      %v2048 = vsel %vm2028, %v1970, %v2047
      %2049 = vst [vmem:[%s2019 + $0x1c] sm:$0x1] %v2048
      %v2050 = vld [vmem:[%s2019 + $0x20] sm:$0xf]
      %v2051 = vsel %vm2022, %v1977, %v2050
      %2052 = vst [vmem:[%s2019 + $0x20] sm:$0xf] %v2051
      %v2053 = vld [vmem:[%s2019 + $0x24] sm:$0x1]
      %v2054 = vsel %vm2028, %v1978, %v2053
      %2055 = vst [vmem:[%s2019 + $0x24] sm:$0x1] %v2054
      %v2056 = vld [vmem:[%s2019 + $0x28] sm:$0xf]
      %v2057 = vsel %vm2022, %v1985, %v2056
      %2058 = vst [vmem:[%s2019 + $0x28] sm:$0xf] %v2057
      %v2059 = vld [vmem:[%s2019 + $0x2c] sm:$0x1]
      %v2060 = vsel %vm2028, %v1986, %v2059
      %2061 = vst [vmem:[%s2019 + $0x2c] sm:$0x1] %v2060
      %v2062 = vld [vmem:[%s2019 + $0x30] sm:$0xf]
      %v2063 = vsel %vm2022, %v1993, %v2062
      %2064 = vst [vmem:[%s2019 + $0x30] sm:$0xf] %v2063
      %v2065 = vld [vmem:[%s2019 + $0x34] sm:$0x1]
      %v2066 = vsel %vm2028, %v1994, %v2065
      %2067 = vst [vmem:[%s2019 + $0x34] sm:$0x1] %v2066
      %v2068 = vld [vmem:[%s2019 + $0x38] sm:$0xf]
      %v2069 = vsel %vm2022, %v2001, %v2068
      %2070 = vst [vmem:[%s2019 + $0x38] sm:$0xf] %v2069
      %v2071 = vld [vmem:[%s2019 + $0x3c] sm:$0x1]
      %v2072 = vsel %vm2028, %v2002, %v2071
      %2073 = vst [vmem:[%s2019 + $0x3c] sm:$0x1] %v2072
      %v2074 = vld [vmem:[%s313] sm:$0xf]
      %v2075 = vld [vmem:[%s313 + $0x4] sm:$0xf]
      %v2076 = vld [vmem:[%s313 + $0x8] sm:$0xf]
      %v2077 = vld [vmem:[%s313 + $0xc] sm:$0xf]
      %v2078 = vld [vmem:[%s313 + $0x10] sm:$0xf]
      %v2079 = vld [vmem:[%s313 + $0x14] sm:$0xf]
      %v2080 = vld [vmem:[%s313 + $0x18] sm:$0xf]
      %v2081 = vld [vmem:[%s313 + $0x1c] sm:$0xf]
      %v2082 = vld [vmem:[%s3] sm:$0xf]
      %v2083 = vld [vmem:[%s3 + $0x4] sm:$0xf]
      %v2084 = vld [vmem:[%s3 + $0x8] sm:$0xf]
      %v2085 = vld [vmem:[%s3 + $0xc] sm:$0xf]
      %v2086 = vld [vmem:[%s3 + $0x10] sm:$0xf]
      %v2087 = vld [vmem:[%s3 + $0x14] sm:$0xf]
      %v2088 = vld [vmem:[%s3 + $0x18] sm:$0xf]
      %v2089 = vld [vmem:[%s3 + $0x1c] sm:$0xf]
      %v2090 = vld [vmem:[%s3 + $0x20] sm:$0xf]
      %v2091 = vld [vmem:[%s3 + $0x24] sm:$0xf]
      %v2092 = vld [vmem:[%s3 + $0x28] sm:$0xf]
      %v2093 = vld [vmem:[%s3 + $0x2c] sm:$0xf]
      %v2094 = vld [vmem:[%s3 + $0x30] sm:$0xf]
      %v2095 = vld [vmem:[%s3 + $0x34] sm:$0xf]
      %v2096 = vld [vmem:[%s3 + $0x38] sm:$0xf]
      %v2097 = vld [vmem:[%s3 + $0x3c] sm:$0xf]
      %v2106 = vunpack.c.l.b16 %v2074
      %v2107 = vunpack.c.l.b16 %v2075
      %v2108 = vunpack.c.l.b16 %v2076
      %v2109 = vunpack.c.l.b16 %v2077
      %v2110 = vunpack.c.l.b16 %v2078
      %v2111 = vunpack.c.l.b16 %v2079
      %v2112 = vunpack.c.l.b16 %v2080
      %v2113 = vunpack.c.l.b16 %v2081
      %v2114 = vpack.c.b16 %v2107, %v2106
      %v2115 = vpack.c.b16 %v2109, %v2108
      %v2116 = vpack.c.b16 %v2111, %v2110
      %v2117 = vpack.c.b16 %v2113, %v2112
      %v2138 = vunpack.c.l.b16 %v2082
      %v2139 = vunpack.c.l.b16 %v2083
      %v2140 = vunpack.c.l.b16 %v2084
      %v2141 = vunpack.c.l.b16 %v2085
      %v2142 = vunpack.c.l.b16 %v2086
      %v2143 = vunpack.c.l.b16 %v2087
      %v2144 = vunpack.c.l.b16 %v2088
      %v2145 = vunpack.c.l.b16 %v2089
      %v2146 = vunpack.c.l.b16 %v2090
      %v2147 = vunpack.c.l.b16 %v2091
      %v2148 = vunpack.c.l.b16 %v2092
      %v2149 = vunpack.c.l.b16 %v2093
      %v2150 = vunpack.c.l.b16 %v2094
      %v2151 = vunpack.c.l.b16 %v2095
      %v2152 = vunpack.c.l.b16 %v2096
      %v2153 = vunpack.c.l.b16 %v2097
      %v2154 = vpack.c.b16 %v2139, %v2138
      %v2155 = vpack.c.b16 %v2141, %v2140
      %v2156 = vpack.c.b16 %v2143, %v2142
      %v2157 = vpack.c.b16 %v2145, %v2144
      %v2158 = vpack.c.b16 %v2147, %v2146
      %v2159 = vpack.c.b16 %v2149, %v2148
      %v2160 = vpack.c.b16 %v2151, %v2150
      %v2161 = vpack.c.b16 %v2153, %v2152
      %2170 = vmatprep.subr.bf16.mxu0 0
      %2171 = vmatpush1.bf16.msra.mxu0 %v2161
      %2172 = vmatprep.subr.bf16.mxu0 0
      %2173 = vmatpush1.bf16.msra.mxu0 %v2160
      %2174 = vmatprep.subr.bf16.mxu0 0
      %2175 = vmatpush1.bf16.msra.mxu0 %v2159
      %2176 = vmatprep.subr.bf16.mxu0 0
      %2177 = vmatpush1.bf16.msra.mxu0 %v2158
      %2178 = vmatprep.subr.bf16.mxu0 0
      %2179 = vmatpush1.bf16.msra.mxu0 %v2157
      %2180 = vmatprep.subr.bf16.mxu0 0
      %2181 = vmatpush1.bf16.msra.mxu0 %v2156
      %2182 = vmatprep.subr.bf16.mxu0 0
      %2183 = vmatpush1.bf16.msra.mxu0 %v2155
      %2184 = vmatprep.subr.bf16.mxu0 0
      %2185 = vmatpush1.bf16.msra.mxu0 %v2154
      %2186 = vmatprep.subr.bf16.mxu0 0
      %2187 = vmatpush2.bf16.msra.mxu0 0
      %2188 = vmatprep.subr.bf16.mxu0 0
      %2189 = vmatpush2.bf16.msra.mxu0 0
      %2190 = vmatprep.subr.bf16.mxu0 0
      %2191 = vmatpush2.bf16.msra.mxu0 0
      %2192 = vmatprep.subr.bf16.mxu0 0
      %2193 = vmatpush2.bf16.msra.mxu0 0
      %2194 = vmatprep.subr.bf16.mxu0 0
      %2195 = vmatpush2.bf16.msra.mxu0 0
      %2196 = vmatprep.subr.bf16.mxu0 0
      %2197 = vmatpush2.bf16.msra.mxu0 0
      %2198 = vmatprep.subr.bf16.mxu0 0
      %2199 = vmatpush2.bf16.msra.mxu0 0
      %2200 = vmatprep.subr.bf16.mxu0 0
      %2201 = vmatpush2.bf16.msra.mxu0 0
      %2202 = vmatprep.mubr.bf16.mxu0 0
      %2203 = vmatmul.mubr.bf16.gmra.mxu0 %v2114
      %v2204 = vpop.f32.mrf.mxu0
      %v2205 = vadd.f32 0.0, %v2204
      %v2206 = vpop.f32.mrf.mxu0
      %v2207 = vpop.f32.mrf.mxu0
      %v2208 = vadd.f32 0.0, %v2207
      %v2209 = vpop.f32.mrf.mxu0
      %2210 = vmatprep.mubr.bf16.mxu0 0
      %2211 = vmatmul.mubr.bf16.gmra.mxu0 %v2115
      %v2212 = vpop.f32.mrf.mxu0
      %v2213 = vadd.f32 0.0, %v2212
      %v2214 = vpop.f32.mrf.mxu0
      %v2215 = vpop.f32.mrf.mxu0
      %v2216 = vadd.f32 0.0, %v2215
      %v2217 = vpop.f32.mrf.mxu0
      %2218 = vmatprep.mubr.bf16.mxu0 0
      %2219 = vmatmul.mubr.bf16.gmra.mxu0 %v2116
      %v2220 = vpop.f32.mrf.mxu0
      %v2221 = vadd.f32 0.0, %v2220
      %v2222 = vpop.f32.mrf.mxu0
      %v2223 = vpop.f32.mrf.mxu0
      %v2224 = vadd.f32 0.0, %v2223
      %v2225 = vpop.f32.mrf.mxu0
      %2226 = vmatprep.mubr.bf16.mxu0 0
      %2227 = vmatmul.mubr.bf16.gmra.mxu0 %v2117
      %v2228 = vpop.f32.mrf.mxu0
      %v2229 = vadd.f32 0.0, %v2228
      %v2230 = vpop.f32.mrf.mxu0
      %v2231 = vpop.f32.mrf.mxu0
      %v2232 = vadd.f32 0.0, %v2231
      %v2233 = vpop.f32.mrf.mxu0
      %2234 = vdwg.mxu0
      %v2235 = vadd.f32 %v2205, %v2208
      %v2236 = vadd.f32 %v2235, %v2213
      %v2237 = vadd.f32 %v2236, %v2216
      %v2238 = vadd.f32 %v2237, %v2221
      %v2239 = vadd.f32 %v2238, %v2224
      %v2240 = vadd.f32 %v2239, %v2229
      %v2241 = vadd.f32 %v2240, %v2232
      %v2242 = vrot.slane %v2241, 4
      %v2243 = vadd.f32 %v2241, %v2242
      %v2244 = vrot.slane %v2243, 2
      %v2245 = vadd.f32 %v2243, %v2244
      %v2246 = vrot.slane %v2245, 1
      %v2247 = vadd.f32 %v2245, %v2246
      %v2248 = vmul.f32 %v2205, %v2205
      %v2249 = vmul.f32 %v2208, %v2208
      %v2250 = vmul.f32 %v2213, %v2213
      %v2251 = vmul.f32 %v2216, %v2216
      %v2252 = vmul.f32 %v2221, %v2221
      %v2253 = vmul.f32 %v2224, %v2224
      %v2254 = vmul.f32 %v2229, %v2229
      %v2255 = vmul.f32 %v2232, %v2232
      %v2256 = vadd.f32 %v2248, %v2249
      %v2257 = vadd.f32 %v2256, %v2250
      %v2258 = vadd.f32 %v2257, %v2251
      %v2259 = vadd.f32 %v2258, %v2252
      %v2260 = vadd.f32 %v2259, %v2253
      %v2261 = vadd.f32 %v2260, %v2254
      %v2262 = vadd.f32 %v2261, %v2255
      %v2263 = vrot.slane %v2262, 4
      %v2264 = vadd.f32 %v2262, %v2263
      %v2265 = vrot.slane %v2264, 2
      %v2266 = vadd.f32 %v2264, %v2265
      %v2267 = vrot.slane %v2266, 1
      %v2268 = vadd.f32 %v2266, %v2267
      %v2269 = vsel %vm1891, %v2268, 0.0
      %v2270 = vsel %vm1890, %v2247, %v2269
      %2271 = vst [vmem:[%s331] sm:$0xff] %v2270
      %v2272 = vpack.c.bf16 %v2208, %v2205
      %v2273 = vpack.c.bf16 %v2216, %v2213
      %v2274 = vpack.c.bf16 %v2224, %v2221
      %v2275 = vpack.c.bf16 %v2232, %v2229
      %v2280 = vunpack.c.l.b16 %v2272
      %v2281 = vunpack.c.h.b16 %v2272
      %v2282 = vunpack.c.l.b16 %v2273
      %v2283 = vunpack.c.h.b16 %v2273
      %v2284 = vunpack.c.l.b16 %v2274
      %v2285 = vunpack.c.h.b16 %v2274
      %v2286 = vunpack.c.l.b16 %v2275
      %v2287 = vunpack.c.h.b16 %v2275
      %v2288 = vpack.c.b16 %v2280, %v2280
      %v2289 = vpack.c.b16 %v2281, %v2281
      %v2290 = vpack.c.b16 %v2282, %v2282
      %v2291 = vpack.c.b16 %v2283, %v2283
      %v2292 = vpack.c.b16 %v2284, %v2284
      %v2293 = vpack.c.b16 %v2285, %v2285
      %v2294 = vpack.c.b16 %v2286, %v2286
      %v2295 = vpack.c.b16 %v2287, %v2287
      %2304 = vst [vmem:[%s327] sm:$0xf] %v2288
      %2305 = vst [vmem:[%s327 + $0x4] sm:$0xf] %v2289
      %2306 = vst [vmem:[%s327 + $0x8] sm:$0xf] %v2290
      %2307 = vst [vmem:[%s327 + $0xc] sm:$0xf] %v2291
      %2308 = vst [vmem:[%s327 + $0x10] sm:$0xf] %v2292
      %2309 = vst [vmem:[%s327 + $0x14] sm:$0xf] %v2293
      %2310 = vst [vmem:[%s327 + $0x18] sm:$0xf] %v2294
      %2311 = vst [vmem:[%s327 + $0x1c] sm:$0xf] %v2295
      %p2312 = scmp.lt.s32.totalorder %s19, 1
      %s2313 = scalar_select %p2312, %s19, 1
      %s2314 = smul.addr %s2313, 20
      %s2315 = smul.addr %s2314, 4
      %s2316 = scalar_lea.vmem %s4, %s2315
      %p2317 = scmp.lt.s32.totalorder %s19, 1
      %s2318 = scalar_select %p2317, %s19, 1
      %s2319 = smul.addr %s2318, 8
      %s2320 = scalar_lea.vmem %s5, %s2319
      %p2321 = scmp.lt.s32.totalorder %s19, 1
      %s2322 = scalar_select %p2321, %s19, 1
      %s2323 = smul.addr %s2322, 8
      %s2324 = smul.addr %s2323, 4
      %s2325 = scalar_lea.vmem %s6, %s2324
      %p2326 = scmp.lt.s32.totalorder %s19, 1
      %s2327 = scalar_select %p2326, %s19, 1
      %s2328 = smul.addr %s2327, 8
      %s2329 = scalar_lea.vmem %s7, %s2328
      // Predicated region
      $region37: #{basic_block_forward.3} parent=35 // pred_check
        %p2330 = pneg %p131
      $region38: #{basic_block_forward.3} parent=35 // pred_check_branch
        %2332 = sbr.rel (%p2330) target = $region40
      $region39: #{basic_block_forward.3} parent=35 // pred_region
        _
      $region40: #{basic_block_forward.3} parent=35 // pred_fallthru
        _
      // Predicated region
      $region41: #{basic_block_forward.3} parent=35 // pred_check
        %p2333 = pneg %p157
      $region42: #{basic_block_forward.3} parent=35 // pred_check_branch
        %2335 = sbr.rel (%p2333) target = $region44
      $region43: #{basic_block_forward.3} parent=35 // pred_region
        _
      $region44: #{basic_block_forward.3} parent=35 // pred_fallthru
        _
      // Predicated region
      $region45: #{basic_block_forward.3} parent=35 // pred_check
        %p2336 = pneg %p183
      $region46: #{basic_block_forward.3} parent=35 // pred_check_branch
        %2338 = sbr.rel (%p2336) target = $region48
      $region47: #{basic_block_forward.3} parent=35 // pred_region
        _
      $region48: #{basic_block_forward.3} parent=35 // pred_fallthru
        _
      // Predicated region
      $region49: #{basic_block_forward.3} parent=35 // pred_check
        %p2339 = pneg %p209
      $region50: #{basic_block_forward.3} parent=35 // pred_check_branch
        %2341 = sbr.rel (%p2339) target = $region52
      $region51: #{basic_block_forward.3} parent=35 // pred_region
        _
      $region52: #{basic_block_forward.3} parent=35 // pred_fallthru
        _
    $region36: #{basic_block_forward.3} parent=5 // pred_fallthru
      _
    %p2342 = scmp.le.s32.totalorder 2, %s14
    // Predicated region
    $region53: #{basic_block_forward.3} parent=5 // pred_check
      %p2343 = pneg %p2342
    $region54: #{basic_block_forward.3} parent=5 // pred_check_branch
      %2345 = sbr.rel (%p2343) target = $region56
    $region55: #{basic_block_forward.3} parent=5 // pred_region
      %s2346 = ssub.s32 %s14, 2
      // Predicated region
      $region57: #{basic_block_forward.3} parent=55 // pred_check
        %p2347 = pneg %p137
      $region58: #{basic_block_forward.3} parent=55 // pred_check_branch
        %2349 = sbr.rel (%p2347) target = $region60
      $region59: #{basic_block_forward.3} parent=55 // pred_region
        %p2350 = scmp.lt.s32.totalorder %s20, 1
        %s2351 = scalar_select %p2350, %s20, 1
        %s2352 = smul.addr %s2351, 20
        %s2353 = smul.addr %s2352, 4
        %s2354 = scalar_lea.vmem %s4, %s2353
      $region60: #{basic_block_forward.3} parent=55 // pred_fallthru
        _
      // Predicated region
      $region61: #{basic_block_forward.3} parent=55 // pred_check
        %p2355 = pneg %p163
      $region62: #{basic_block_forward.3} parent=55 // pred_check_branch
        %2357 = sbr.rel (%p2355) target = $region64
      $region63: #{basic_block_forward.3} parent=55 // pred_region
        %p2358 = scmp.lt.s32.totalorder %s20, 1
        %s2359 = scalar_select %p2358, %s20, 1
        %s2360 = smul.addr %s2359, 8
        %s2361 = scalar_lea.vmem %s5, %s2360
      $region64: #{basic_block_forward.3} parent=55 // pred_fallthru
        _
      // Predicated region
      $region65: #{basic_block_forward.3} parent=55 // pred_check
        %p2362 = pneg %p189
      $region66: #{basic_block_forward.3} parent=55 // pred_check_branch
        %2364 = sbr.rel (%p2362) target = $region68
      $region67: #{basic_block_forward.3} parent=55 // pred_region
        %p2365 = scmp.lt.s32.totalorder %s20, 1
        %s2366 = scalar_select %p2365, %s20, 1
        %s2367 = smul.addr %s2366, 8
        %s2368 = smul.addr %s2367, 4
        %s2369 = scalar_lea.vmem %s6, %s2368
      $region68: #{basic_block_forward.3} parent=55 // pred_fallthru
        _
      // Predicated region
      $region69: #{basic_block_forward.3} parent=55 // pred_check
        %p2370 = pneg %p215
      $region70: #{basic_block_forward.3} parent=55 // pred_check_branch
        %2372 = sbr.rel (%p2370) target = $region72
      $region71: #{basic_block_forward.3} parent=55 // pred_region
        %p2373 = scmp.lt.s32.totalorder %s20, 1
        %s2374 = scalar_select %p2373, %s20, 1
        %s2375 = smul.addr %s2374, 8
        %s2376 = scalar_lea.vmem %s7, %s2375
      $region72: #{basic_block_forward.3} parent=55 // pred_fallthru
        _
    $region56: #{basic_block_forward.3} parent=5 // pred_fallthru
      _
  $region6: #{basic_block_forward.3} parent=0 // loop_footer
    %s18 = sadd.s32 1, %s14
  $region7: #{basic_block_forward.3} parent=0 // loop_footer_branch
    %13 = sbr.rel target = $region3
  $region8: #{basic_block_forward.3} parent=0 // loop_exit
    _

// kernel: basic_block_forward.4
$region0: #{basic_block_forward.4}
  #allocation0 [shape = 'u32[]', space=smem, size = 0x4, offset = 0x4, fixed_abs, tag = 'smem constant byte address 0x4 - core index']
  #allocation1 [shape = 'u32[144,128]{1,0:T(1,128)}', space=vmem, size = 0x12000, scoped, tag = 'internal scratch']
  %s0 = inlined_call_operand.vmem [shape: bf16[2,10,10,128], index: 0, kind: input, shape index: {}]
  %s1 = inlined_call_operand.vmem [shape: f32[2,8,128], index: 1, kind: input, shape index: {}]
  %s2 = inlined_call_operand.vmem [shape: f32[1,128], index: 2, kind: input, shape index: {}]
  %s3 = inlined_call_operand.vmem [shape: f32[1,128], index: 3, kind: input, shape index: {}]
  %s4 = inlined_call_operand.vmem [shape: bf16[9,128,128], index: 4, kind: input, shape index: {}]
  %s5 = inlined_call_operand.vmem [shape: bf16[2,8,8,128], index: 5, kind: output, shape index: {0}]
  %s6 = inlined_call_operand.vmem [shape: f32[2,8,128], index: 6, kind: output, shape index: {1}]
  %7 = xla_tuple %s5, %s6
  %s8 = sld [smem:[#allocation0]]
  $region61: #{basic_block_forward.4} parent=0
    _
  %s10 = ssub.s32 1, %s8
  %s11 = scalar_select 0, %s10, %s8
  loop: start=0, step=1, limit=4
  $region2: #{basic_block_forward.4} parent=0 // loop_pre_header
    _
  $region3: #{basic_block_forward.4} parent=0 // loop_header
    %s13 = sphi 0, %s17
    %p14 = scmp.ge.s32.totalorder %s13, 4
    %s23 = sphi 0, %s25
    %s26 = sphi 0, %s23
    %s27 = sphi 0, %s26
    %s43 = sphi 0, %s27
    %s47 = sphi 0, %s47
    %s49 = sphi 0, %s47
    %s50 = sphi 0, %s49
    %s64 = sphi 0, %s50
    %s68 = sphi 0, %s68
    %s70 = sphi 0, %s68
    %s71 = sphi 0, %s70
    %s85 = sphi 0, %s71
    %s89 = sphi 0, %s89
    %s91 = sphi 0, %s89
    %s92 = sphi 0, %s91
    %s106 = sphi 0, %s92
    %s110 = sphi 0, %s110
    %s112 = sphi 0, %s110
    %s113 = sphi 0, %s112
    %s127 = sphi 0, %s113
    %s133 = sphi 0, %s135
    %s136 = sphi 0, %s133
    %s137 = sphi 0, %s136
    %s153 = sphi 0, %s137
    %s159 = sphi 0, %s161
    %s162 = sphi 0, %s159
    %s163 = sphi 0, %s162
    %s179 = sphi 0, %s163
  $region4: #{basic_block_forward.4} parent=0 // loop_header_branch
    %16 = sbr.rel (%p14) target = $region8
  $region5: #{basic_block_forward.4} parent=0 // loop_body
    %s18 = ssub.s32 %s13, 1
    %s19 = ssub.s32 %s13, 2
    %s20 = sadd.s32 %s13, 1
    %s21 = ssub.s32 %s13, %s20
    %p22 = scmp.eq.s32.totalorder %s21, 0
    %s24 = sadd.s32 %s23, 1
    %s25 = scalar_select %p22, %s23, %s24
    %p28 = pneg %p22
    %p29 = scmp.eq.s32.totalorder %s13, 1
    %p30 = por %p28, %p29
    %p31 = scmp.ne.s32.totalorder %s23, %s26
    %p32 = scmp.eq.s32.totalorder %s13, 0
    %p33 = por %p31, %p32
    %p34 = scmp.ne.s32.totalorder %s23, %s26
    %p35 = scmp.eq.s32.totalorder %s18, 1
    %p36 = por %p34, %p35
    %p37 = scmp.ne.s32.totalorder %s26, %s27
    %p38 = scmp.eq.s32.totalorder %s18, 0
    %p39 = por %p37, %p38
    %p40 = scmp.ne.s32.totalorder %s26, %s27
    %p41 = scmp.eq.s32.totalorder %s19, 1
    %p42 = por %p40, %p41
    %p44 = scmp.ne.s32.totalorder %s27, %s43
    %p45 = scmp.eq.s32.totalorder %s19, 0
    %p46 = por %p44, %p45
    %s48 = sadd.s32 %s47, 1
    %p51 = scmp.eq.s32.totalorder %s13, 1
    %p52 = scmp.ne.s32.totalorder %s47, %s49
    %p53 = scmp.eq.s32.totalorder %s13, 0
    %p54 = por %p52, %p53
    %p55 = scmp.ne.s32.totalorder %s47, %s49
    %p56 = scmp.eq.s32.totalorder %s18, 1
    %p57 = por %p55, %p56
    %p58 = scmp.ne.s32.totalorder %s49, %s50
    %p59 = scmp.eq.s32.totalorder %s18, 0
    %p60 = por %p58, %p59
    %p61 = scmp.ne.s32.totalorder %s49, %s50
    %p62 = scmp.eq.s32.totalorder %s19, 1
    %p63 = por %p61, %p62
    %p65 = scmp.ne.s32.totalorder %s50, %s64
    %p66 = scmp.eq.s32.totalorder %s19, 0
    %p67 = por %p65, %p66
    %s69 = sadd.s32 %s68, 1
    %p72 = scmp.eq.s32.totalorder %s13, 1
    %p73 = scmp.ne.s32.totalorder %s68, %s70
    %p74 = scmp.eq.s32.totalorder %s13, 0
    %p75 = por %p73, %p74
    %p76 = scmp.ne.s32.totalorder %s68, %s70
    %p77 = scmp.eq.s32.totalorder %s18, 1
    %p78 = por %p76, %p77
    %p79 = scmp.ne.s32.totalorder %s70, %s71
    %p80 = scmp.eq.s32.totalorder %s18, 0
    %p81 = por %p79, %p80
    %p82 = scmp.ne.s32.totalorder %s70, %s71
    %p83 = scmp.eq.s32.totalorder %s19, 1
    %p84 = por %p82, %p83
    %p86 = scmp.ne.s32.totalorder %s71, %s85
    %p87 = scmp.eq.s32.totalorder %s19, 0
    %p88 = por %p86, %p87
    %s90 = sadd.s32 %s89, 1
    %p93 = scmp.eq.s32.totalorder %s13, 1
    %p94 = scmp.ne.s32.totalorder %s89, %s91
    %p95 = scmp.eq.s32.totalorder %s13, 0
    %p96 = por %p94, %p95
    %p97 = scmp.ne.s32.totalorder %s89, %s91
    %p98 = scmp.eq.s32.totalorder %s18, 1
    %p99 = por %p97, %p98
    %p100 = scmp.ne.s32.totalorder %s91, %s92
    %p101 = scmp.eq.s32.totalorder %s18, 0
    %p102 = por %p100, %p101
    %p103 = scmp.ne.s32.totalorder %s91, %s92
    %p104 = scmp.eq.s32.totalorder %s19, 1
    %p105 = por %p103, %p104
    %p107 = scmp.ne.s32.totalorder %s92, %s106
    %p108 = scmp.eq.s32.totalorder %s19, 0
    %p109 = por %p107, %p108
    %s111 = sadd.s32 %s110, 1
    %p114 = scmp.eq.s32.totalorder %s13, 1
    %p115 = scmp.ne.s32.totalorder %s110, %s112
    %p116 = scmp.eq.s32.totalorder %s13, 0
    %p117 = por %p115, %p116
    %p118 = scmp.ne.s32.totalorder %s110, %s112
    %p119 = scmp.eq.s32.totalorder %s18, 1
    %p120 = por %p118, %p119
    %p121 = scmp.ne.s32.totalorder %s112, %s113
    %p122 = scmp.eq.s32.totalorder %s18, 0
    %p123 = por %p121, %p122
    %p124 = scmp.ne.s32.totalorder %s112, %s113
    %p125 = scmp.eq.s32.totalorder %s19, 1
    %p126 = por %p124, %p125
    %p128 = scmp.ne.s32.totalorder %s113, %s127
    %p129 = scmp.eq.s32.totalorder %s19, 0
    %p130 = por %p128, %p129
    %s131 = ssub.s32 %s13, %s20
    %p132 = scmp.eq.s32.totalorder %s131, 0
    %s134 = sadd.s32 %s133, 1
    %s135 = scalar_select %p132, %s133, %s134
    %p138 = pneg %p132
    %p139 = scmp.eq.s32.totalorder %s13, 1
    %p140 = por %p138, %p139
    %p141 = scmp.ne.s32.totalorder %s133, %s136
    %p142 = scmp.eq.s32.totalorder %s13, 0
    %p143 = por %p141, %p142
    %p144 = scmp.ne.s32.totalorder %s133, %s136
    %p145 = scmp.eq.s32.totalorder %s18, 1
    %p146 = por %p144, %p145
    %p147 = scmp.ne.s32.totalorder %s136, %s137
    %p148 = scmp.eq.s32.totalorder %s18, 0
    %p149 = por %p147, %p148
    %p150 = scmp.ne.s32.totalorder %s136, %s137
    %p151 = scmp.eq.s32.totalorder %s19, 1
    %p152 = por %p150, %p151
    %p154 = scmp.ne.s32.totalorder %s137, %s153
    %p155 = scmp.eq.s32.totalorder %s19, 0
    %p156 = por %p154, %p155
    %s157 = ssub.s32 %s13, %s20
    %p158 = scmp.eq.s32.totalorder %s157, 0
    %s160 = sadd.s32 %s159, 1
    %s161 = scalar_select %p158, %s159, %s160
    %p164 = pneg %p158
    %p165 = scmp.eq.s32.totalorder %s13, 1
    %p166 = por %p164, %p165
    %p167 = scmp.ne.s32.totalorder %s159, %s162
    %p168 = scmp.eq.s32.totalorder %s13, 0
    %p169 = por %p167, %p168
    %p170 = scmp.ne.s32.totalorder %s159, %s162
    %p171 = scmp.eq.s32.totalorder %s18, 1
    %p172 = por %p170, %p171
    %p173 = scmp.ne.s32.totalorder %s162, %s163
    %p174 = scmp.eq.s32.totalorder %s18, 0
    %p175 = por %p173, %p174
    %p176 = scmp.ne.s32.totalorder %s162, %s163
    %p177 = scmp.eq.s32.totalorder %s19, 1
    %p178 = por %p176, %p177
    %p180 = scmp.ne.s32.totalorder %s163, %s179
    %p181 = scmp.eq.s32.totalorder %s19, 0
    %p182 = por %p180, %p181
    %p183 = scmp.le.s32.totalorder 1, %s13
    %p184 = scmp.lt.s32.totalorder %s13, 3
    %p185 = pnand %p183, %p184
    %p186 = pneg %p185
    // Predicated region
    $region9: #{basic_block_forward.4} parent=5 // pred_check
      _
    $region10: #{basic_block_forward.4} parent=5 // pred_check_branch
      %188 = sbr.rel (%p185) target = $region12
    $region11: #{basic_block_forward.4} parent=5 // pred_region
      %s189 = ssub.s32 %s13, 1
      // Predicated region
      $region13: #{basic_block_forward.4} parent=11 // pred_check
        %p190 = pneg %p60
      $region14: #{basic_block_forward.4} parent=11 // pred_check_branch
        %192 = sbr.rel (%p190) target = $region16
      $region15: #{basic_block_forward.4} parent=11 // pred_region
        _
      $region16: #{basic_block_forward.4} parent=11 // pred_fallthru
        _
      // Predicated region
      $region17: #{basic_block_forward.4} parent=11 // pred_check
        %p193 = pneg %p81
      $region18: #{basic_block_forward.4} parent=11 // pred_check_branch
        %195 = sbr.rel (%p193) target = $region20
      $region19: #{basic_block_forward.4} parent=11 // pred_region
        _
      $region20: #{basic_block_forward.4} parent=11 // pred_fallthru
        _
      // Predicated region
      $region21: #{basic_block_forward.4} parent=11 // pred_check
        %p196 = pneg %p102
      $region22: #{basic_block_forward.4} parent=11 // pred_check_branch
        %198 = sbr.rel (%p196) target = $region24
      $region23: #{basic_block_forward.4} parent=11 // pred_region
        _
      $region24: #{basic_block_forward.4} parent=11 // pred_fallthru
        _
      // Predicated region
      $region25: #{basic_block_forward.4} parent=11 // pred_check
        %p199 = pneg %p123
      $region26: #{basic_block_forward.4} parent=11 // pred_check_branch
        %201 = sbr.rel (%p199) target = $region28
      $region27: #{basic_block_forward.4} parent=11 // pred_region
        _
      $region28: #{basic_block_forward.4} parent=11 // pred_fallthru
        _
    $region12: #{basic_block_forward.4} parent=5 // pred_fallthru
      _
    %p202 = scmp.lt.s32.totalorder %s13, 2
    // Predicated region
    $region29: #{basic_block_forward.4} parent=5 // pred_check
      %p203 = pneg %p202
    $region30: #{basic_block_forward.4} parent=5 // pred_check_branch
      %205 = sbr.rel (%p203) target = $region32
    $region31: #{basic_block_forward.4} parent=5 // pred_region
      // Predicated region
      $region33: #{basic_block_forward.4} parent=31 // pred_check
        %p206 = pneg %p33
      $region34: #{basic_block_forward.4} parent=31 // pred_check_branch
        %208 = sbr.rel (%p206) target = $region36
      $region35: #{basic_block_forward.4} parent=31 // pred_region
        %p209 = scmp.lt.s32.totalorder %s13, 1
        %s210 = scalar_select %p209, %s13, 1
        %s211 = smul.addr %s210, 20
        %s212 = smul.addr %s211, 4
        %s213 = scalar_lea.vmem %s0, %s212
      $region36: #{basic_block_forward.4} parent=31 // pred_fallthru
        _
    $region32: #{basic_block_forward.4} parent=5 // pred_fallthru
      _
    %p214 = scmp.le.s32.totalorder 1, %s13
    %p215 = scmp.lt.s32.totalorder %s13, 3
    %p216 = pnand %p214, %p215
    %p217 = pneg %p216
    // Predicated region
    $region37: #{basic_block_forward.4} parent=5 // pred_check
      _
    $region38: #{basic_block_forward.4} parent=5 // pred_check_branch
      %219 = sbr.rel (%p216) target = $region40
    $region39: #{basic_block_forward.4} parent=5 // pred_region
      %s220 = ssub.s32 %s13, 1
      %p221 = scmp.lt.s32.totalorder %s18, 1
      %s222 = scalar_select %p221, %s18, 1
      %s223 = smul.addr %s222, 20
      %s224 = smul.addr %s223, 4
      %s225 = scalar_lea.vmem %s0, %s224
      %p226 = pneg %p39
      %p227 = pneg %p36
      %p228 = pneg %p60
      %p229 = pneg %p57
      %p230 = pneg %p81
      %p231 = pneg %p78
      %p232 = pneg %p102
      %p233 = pneg %p99
      %p234 = pneg %p123
      %p235 = pneg %p120
      %p236 = pneg %p149
      %p237 = pneg %p146
      %p238 = scmp.lt.s32.totalorder %s18, 1
      %s239 = scalar_select %p238, %s18, 1
      %s240 = smul.addr %s239, 8
      %s241 = smul.addr %s240, 4
      %s242 = scalar_lea.vmem %s5, %s241
      %p243 = pneg %p175
      %p244 = pneg %p172
      %p245 = scmp.lt.s32.totalorder %s18, 1
      %s246 = scalar_select %p245, %s18, 1
      %s247 = smul.addr %s246, 8
      %s248 = scalar_lea.vmem %s6, %s247
      %p249 = scmp.lt.s32.totalorder %s18, 1
      %s250 = scalar_select %p249, %s18, 1
      %s251 = smul.addr %s250, 20
      %s252 = smul.addr %s251, 4
      %s253 = scalar_lea.vmem %s0, %s252
      %p254 = scmp.lt.s32.totalorder %s18, 1
      %s255 = scalar_select %p254, %s18, 1
      %s256 = smul.addr %s255, 8
      %s257 = smul.addr %s256, 4
      %s258 = scalar_lea.vmem %s5, %s257
      %p259 = scmp.lt.s32.totalorder %s18, 1
      %s260 = scalar_select %p259, %s18, 1
      %s261 = smul.addr %s260, 8
      %s262 = scalar_lea.vmem %s6, %s261
      %v264 = vld [vmem:[%s1] sm:$0xff]
      %v265 = vld [vmem:[%s1 + $0x8] sm:$0xff]
      %v266 = vld [vmem:[%s2] sm:$0x1]
      %v267 = vld [vmem:[%s3] sm:$0x1]
      %vm268 = vcmask 1040384
      %v269 = vsel %vm268, %v264, 0.0
      %v270 = vsel %vm268, %v265, 0.0
      %v271 = vadd.f32 %v269, %v270
      %vm272 = vcmask 1041409
      %v273 = vsel %vm272, %v264, 0.0
      %v274 = vsel %vm272, %v265, 0.0
      %v275 = vadd.f32 %v273, %v274
      %v276 = vmul.f32 %v271, 0.0078125
      %v277 = vmul.f32 %v275, 0.0078125
      %v278 = vmul.f32 %v276, %v276
      %v280 = vrot.slane %v278, 7
      %v282 = vsub.f32 %v277, %v280
      %v283 = vmax.f32 %v282, 0.0
      %v284 = vadd.f32 %v283, 1e-05
      %v285 = vrsqrt.pop %v284
      %v288 = vunpack.c.l.s4 1966171168
      %v289 = vunpack.c.0.s8 %v288
      %v290 = vlaneseq
      %v291 = vshrl.u32 %v290, 7
      %v292 = vsub.s32 %v289, %v291
      %v293 = vrot.slane %v285, %v292
      %v294 = vcombine.high %v293, %v293
      %v296 = vunpack.c.l.s4 1966171168
      %v297 = vunpack.c.0.s8 %v296
      %v298 = vlaneseq
      %v299 = vshrl.u32 %v298, 7
      %v300 = vsub.s32 %v297, %v299
      %v301 = vrot.slane %v294, %v300
      %v303 = vmul.f32 %v266, %v301
      %v304 = vmul.f32 %v303, %v276
      %v305 = vsub.f32 %v267, %v304
      %v306 = vlaneseq
      %v307 = vshrl.u32 %v306, 7
      %v308 = vld [vmem:[%s253] sm:$0xf]
      %v309 = vld [vmem:[%s253 + $0x8] sm:$0xf]
      %v310 = vld [vmem:[%s253 + $0x10] sm:$0xf]
      %v311 = vld [vmem:[%s253 + $0x18] sm:$0xf]
      %v312 = vld [vmem:[%s253 + $0x20] sm:$0xf]
      %v313 = vld [vmem:[%s253 + $0x28] sm:$0xf]
      %v314 = vld [vmem:[%s253 + $0x30] sm:$0xf]
      %v315 = vld [vmem:[%s253 + $0x38] sm:$0xf]
      %v316 = vunpack.c.l.bf16 %v308
      %v317 = vunpack.c.l.bf16 %v309
      %v318 = vunpack.c.l.bf16 %v310
      %v319 = vunpack.c.l.bf16 %v311
      %v320 = vunpack.c.l.bf16 %v312
      %v321 = vunpack.c.l.bf16 %v313
      %v322 = vunpack.c.l.bf16 %v314
      %v323 = vunpack.c.l.bf16 %v315
      %v325 = vlaneseq
      %v326 = vshrl.u32 %v325, 7
      %v327 = vsub.s32 0, %v326
      %v328 = vrot.slane %v303, %v327
      %v330 = vmul.f32 %v316, %v328
      %v331 = vmul.f32 %v317, %v328
      %v332 = vmul.f32 %v318, %v328
      %v333 = vmul.f32 %v319, %v328
      %v334 = vmul.f32 %v320, %v328
      %v335 = vmul.f32 %v321, %v328
      %v336 = vmul.f32 %v322, %v328
      %v337 = vmul.f32 %v323, %v328
      %v339 = vlaneseq
      %v340 = vshrl.u32 %v339, 7
      %v341 = vsub.s32 0, %v340
      %v342 = vrot.slane %v305, %v341
      %v344 = vadd.f32 %v330, %v342
      %v345 = vadd.f32 %v331, %v342
      %v346 = vadd.f32 %v332, %v342
      %v347 = vadd.f32 %v333, %v342
      %v348 = vadd.f32 %v334, %v342
      %v349 = vadd.f32 %v335, %v342
      %v350 = vadd.f32 %v336, %v342
      %v351 = vadd.f32 %v337, %v342
      %v352 = vmax.f32 %v344, 0.0
      %v353 = vmax.f32 %v345, 0.0
      %v354 = vmax.f32 %v346, 0.0
      %v355 = vmax.f32 %v347, 0.0
      %v356 = vmax.f32 %v348, 0.0
      %v357 = vmax.f32 %v349, 0.0
      %v358 = vmax.f32 %v350, 0.0
      %v359 = vmax.f32 %v351, 0.0
      %vm360 = vcmp.gt.s32.totalorder %v307, 0
      %vm361 = vmand 0, %vm360
      %vm362 = vmand 1, %vm360
      %v363 = vsel %vm361, %v352, 0.0
      %v364 = vsel %vm362, %v353, 0.0
      %v365 = vsel %vm362, %v354, 0.0
      %v366 = vsel %vm362, %v355, 0.0
      %v367 = vsel %vm362, %v356, 0.0
      %v368 = vsel %vm362, %v357, 0.0
      %v369 = vsel %vm362, %v358, 0.0
      %v370 = vsel %vm362, %v359, 0.0
      %v371 = vpack.c.bf16 %v363, %v363
      %v372 = vpack.c.bf16 %v364, %v364
      %v373 = vpack.c.bf16 %v365, %v365
      %v374 = vpack.c.bf16 %v366, %v366
      %v375 = vpack.c.bf16 %v367, %v367
      %v376 = vpack.c.bf16 %v368, %v368
      %v377 = vpack.c.bf16 %v369, %v369
      %v378 = vpack.c.bf16 %v370, %v370
      %v379 = vld [vmem:[%s4] sm:$0xf]
      %v380 = vld [vmem:[%s4 + $0x4] sm:$0xf]
      %v381 = vld [vmem:[%s4 + $0x8] sm:$0xf]
      %v382 = vld [vmem:[%s4 + $0xc] sm:$0xf]
      %v383 = vld [vmem:[%s4 + $0x10] sm:$0xf]
      %v384 = vld [vmem:[%s4 + $0x14] sm:$0xf]
      %v385 = vld [vmem:[%s4 + $0x18] sm:$0xf]
      %v386 = vld [vmem:[%s4 + $0x1c] sm:$0xf]
      %v387 = vld [vmem:[%s4 + $0x20] sm:$0xf]
      %v388 = vld [vmem:[%s4 + $0x24] sm:$0xf]
      %v389 = vld [vmem:[%s4 + $0x28] sm:$0xf]
      %v390 = vld [vmem:[%s4 + $0x2c] sm:$0xf]
      %v391 = vld [vmem:[%s4 + $0x30] sm:$0xf]
      %v392 = vld [vmem:[%s4 + $0x34] sm:$0xf]
      %v393 = vld [vmem:[%s4 + $0x38] sm:$0xf]
      %v394 = vld [vmem:[%s4 + $0x3c] sm:$0xf]
      %v395 = vld [vmem:[%s253 + $0x4] sm:$0x1]
      %v396 = vld [vmem:[%s253 + $0xc] sm:$0x1]
      %v397 = vld [vmem:[%s253 + $0x14] sm:$0x1]
      %v398 = vld [vmem:[%s253 + $0x1c] sm:$0x1]
      %v399 = vld [vmem:[%s253 + $0x24] sm:$0x1]
      %v400 = vld [vmem:[%s253 + $0x2c] sm:$0x1]
      %v401 = vld [vmem:[%s253 + $0x34] sm:$0x1]
      %v402 = vld [vmem:[%s253 + $0x3c] sm:$0x1]
      %v403 = vunpack.c.l.bf16 %v395
      %v404 = vunpack.c.l.bf16 %v396
      %v405 = vunpack.c.l.bf16 %v397
      %v406 = vunpack.c.l.bf16 %v398
      %v407 = vunpack.c.l.bf16 %v399
      %v408 = vunpack.c.l.bf16 %v400
      %v409 = vunpack.c.l.bf16 %v401
      %v410 = vunpack.c.l.bf16 %v402
      %v411 = vmul.f32 %v403, %v328
      %v412 = vmul.f32 %v404, %v328
      %v413 = vmul.f32 %v405, %v328
      %v414 = vmul.f32 %v406, %v328
      %v415 = vmul.f32 %v407, %v328
      %v416 = vmul.f32 %v408, %v328
      %v417 = vmul.f32 %v409, %v328
      %v418 = vmul.f32 %v410, %v328
      %v419 = vadd.f32 %v411, %v342
      %v420 = vadd.f32 %v412, %v342
      %v421 = vadd.f32 %v413, %v342
      %v422 = vadd.f32 %v414, %v342
      %v423 = vadd.f32 %v415, %v342
      %v424 = vadd.f32 %v416, %v342
      %v425 = vadd.f32 %v417, %v342
      %v426 = vadd.f32 %v418, %v342
      %v427 = vmax.f32 %v419, 0.0
      %v428 = vmax.f32 %v420, 0.0
      %v429 = vmax.f32 %v421, 0.0
      %v430 = vmax.f32 %v422, 0.0
      %v431 = vmax.f32 %v423, 0.0
      %v432 = vmax.f32 %v424, 0.0
      %v433 = vmax.f32 %v425, 0.0
      %v434 = vmax.f32 %v426, 0.0
      %v435 = vsel 0, %v352, 0.0
      %v436 = vsel 0, %v427, 0.0
      %v437 = vsel 1, %v353, 0.0
      %v438 = vsel 1, %v428, 0.0
      %v439 = vsel 1, %v354, 0.0
      %v440 = vsel 1, %v429, 0.0
      %v441 = vsel 1, %v355, 0.0
      %v442 = vsel 1, %v430, 0.0
      %v443 = vsel 1, %v356, 0.0
      %v444 = vsel 1, %v431, 0.0
      %v445 = vsel 1, %v357, 0.0
      %v446 = vsel 1, %v432, 0.0
      %v447 = vsel 1, %v358, 0.0
      %v448 = vsel 1, %v433, 0.0
      %v449 = vsel 1, %v359, 0.0
      %v450 = vsel 1, %v434, 0.0
      %v451 = vpack.c.bf16 %v436, %v435
      %v452 = vpack.c.bf16 %v438, %v437
      %v453 = vpack.c.bf16 %v440, %v439
      %v454 = vpack.c.bf16 %v442, %v441
      %v455 = vpack.c.bf16 %v444, %v443
      %v456 = vpack.c.bf16 %v446, %v445
      %v457 = vpack.c.bf16 %v448, %v447
      %v458 = vpack.c.bf16 %v450, %v449
      %v467 = vunpack.c.l.b16 %v451
      %v468 = vunpack.c.h.b16 %v451
      %v469 = vunpack.c.l.b16 %v452
      %v470 = vunpack.c.h.b16 %v452
      %v471 = vunpack.c.l.b16 %v453
      %v472 = vunpack.c.h.b16 %v453
      %v473 = vunpack.c.l.b16 %v454
      %v474 = vunpack.c.h.b16 %v454
      %v475 = vunpack.c.l.b16 %v455
      %v476 = vunpack.c.h.b16 %v455
      %v477 = vunpack.c.l.b16 %v456
      %v478 = vunpack.c.h.b16 %v456
      %v479 = vunpack.c.l.b16 %v457
      %v480 = vunpack.c.h.b16 %v457
      %v481 = vunpack.c.l.b16 %v458
      %v482 = vunpack.c.h.b16 %v458
      %v483 = vpack.c.b16 %v467, %v467
      %v484 = vpack.c.b16 %v468, %v468
      %v485 = vpack.c.b16 %v469, %v469
      %v486 = vpack.c.b16 %v470, %v470
      %v487 = vpack.c.b16 %v471, %v471
      %v488 = vpack.c.b16 %v472, %v472
      %v489 = vpack.c.b16 %v473, %v473
      %v490 = vpack.c.b16 %v474, %v474
      %v491 = vpack.c.b16 %v475, %v475
      %v492 = vpack.c.b16 %v476, %v476
      %v493 = vpack.c.b16 %v477, %v477
      %v494 = vpack.c.b16 %v478, %v478
      %v495 = vpack.c.b16 %v479, %v479
      %v496 = vpack.c.b16 %v480, %v480
      %v497 = vpack.c.b16 %v481, %v481
      %v498 = vpack.c.b16 %v482, %v482
      %vm499 = vsmask.f32 3328
      %vm500 = vsmask.f32 7440
      %vm501 = vmor %vm499, %vm500
      %v503 = vshrl.u32 %v483, 16
      %v505 = vrot.slane %v503, 4
      %v506 = vshll.u32 %v483, 16
      %v508 = vrot.slane %v506, 5
      %v509 = vor.u32 %v505, %v508
      %v510 = vrot.slane %v509, 4
      %v512 = vshll.u32 %v484, 16
      %v514 = vrot.slane %v512, 5
      %v515 = vsel %vm501, %v510, %v514
      %v517 = vshrl.u32 %v485, 16
      %v519 = vrot.slane %v517, 4
      %v520 = vshll.u32 %v485, 16
      %v522 = vrot.slane %v520, 5
      %v523 = vor.u32 %v519, %v522
      %v524 = vrot.slane %v523, 4
      %v526 = vshll.u32 %v486, 16
      %v528 = vrot.slane %v526, 5
      %v529 = vsel %vm501, %v524, %v528
      %v531 = vshrl.u32 %v487, 16
      %v533 = vrot.slane %v531, 4
      %v534 = vshll.u32 %v487, 16
      %v536 = vrot.slane %v534, 5
      %v537 = vor.u32 %v533, %v536
      %v538 = vrot.slane %v537, 4
      %v540 = vshll.u32 %v488, 16
      %v542 = vrot.slane %v540, 5
      %v543 = vsel %vm501, %v538, %v542
      %v545 = vshrl.u32 %v489, 16
      %v547 = vrot.slane %v545, 4
      %v548 = vshll.u32 %v489, 16
      %v550 = vrot.slane %v548, 5
      %v551 = vor.u32 %v547, %v550
      %v552 = vrot.slane %v551, 4
      %v554 = vshll.u32 %v490, 16
      %v556 = vrot.slane %v554, 5
      %v557 = vsel %vm501, %v552, %v556
      %v559 = vshrl.u32 %v491, 16
      %v561 = vrot.slane %v559, 4
      %v562 = vshll.u32 %v491, 16
      %v564 = vrot.slane %v562, 5
      %v565 = vor.u32 %v561, %v564
      %v566 = vrot.slane %v565, 4
      %v568 = vshll.u32 %v492, 16
      %v570 = vrot.slane %v568, 5
      %v571 = vsel %vm501, %v566, %v570
      %v573 = vshrl.u32 %v493, 16
      %v575 = vrot.slane %v573, 4
      %v576 = vshll.u32 %v493, 16
      %v578 = vrot.slane %v576, 5
      %v579 = vor.u32 %v575, %v578
      %v580 = vrot.slane %v579, 4
      %v582 = vshll.u32 %v494, 16
      %v584 = vrot.slane %v582, 5
      %v585 = vsel %vm501, %v580, %v584
      %v587 = vshrl.u32 %v495, 16
      %v589 = vrot.slane %v587, 4
      %v590 = vshll.u32 %v495, 16
      %v592 = vrot.slane %v590, 5
      %v593 = vor.u32 %v589, %v592
      %v594 = vrot.slane %v593, 4
      %v596 = vshll.u32 %v496, 16
      %v598 = vrot.slane %v596, 5
      %v599 = vsel %vm501, %v594, %v598
      %v601 = vshrl.u32 %v497, 16
      %v603 = vrot.slane %v601, 4
      %v604 = vshll.u32 %v497, 16
      %v606 = vrot.slane %v604, 5
      %v607 = vor.u32 %v603, %v606
      %v608 = vrot.slane %v607, 4
      %v610 = vshll.u32 %v498, 16
      %v612 = vrot.slane %v610, 5
      %v613 = vsel %vm501, %v608, %v612
      %s614 = scalar_lea.vmem %s4, 64
      %v615 = vld [vmem:[%s614] sm:$0xf]
      %v616 = vld [vmem:[%s614 + $0x4] sm:$0xf]
      %v617 = vld [vmem:[%s614 + $0x8] sm:$0xf]
      %v618 = vld [vmem:[%s614 + $0xc] sm:$0xf]
      %v619 = vld [vmem:[%s614 + $0x10] sm:$0xf]
      %v620 = vld [vmem:[%s614 + $0x14] sm:$0xf]
      %v621 = vld [vmem:[%s614 + $0x18] sm:$0xf]
      %v622 = vld [vmem:[%s614 + $0x1c] sm:$0xf]
      %v623 = vld [vmem:[%s614 + $0x20] sm:$0xf]
      %v624 = vld [vmem:[%s614 + $0x24] sm:$0xf]
      %v625 = vld [vmem:[%s614 + $0x28] sm:$0xf]
      %v626 = vld [vmem:[%s614 + $0x2c] sm:$0xf]
      %v627 = vld [vmem:[%s614 + $0x30] sm:$0xf]
      %v628 = vld [vmem:[%s614 + $0x34] sm:$0xf]
      %v629 = vld [vmem:[%s614 + $0x38] sm:$0xf]
      %v630 = vld [vmem:[%s614 + $0x3c] sm:$0xf]
      %v631 = vunpack.c.l.b16 %v515
      %v632 = vunpack.c.l.b16 %v529
      %v633 = vunpack.c.l.b16 %v543
      %v634 = vunpack.c.l.b16 %v557
      %v635 = vunpack.c.l.b16 %v571
      %v636 = vunpack.c.l.b16 %v585
      %v637 = vunpack.c.l.b16 %v599
      %v638 = vunpack.c.l.b16 %v613
      %v639 = vpack.c.b16 %v632, %v631
      %v640 = vpack.c.b16 %v634, %v633
      %v641 = vpack.c.b16 %v636, %v635
      %v642 = vpack.c.b16 %v638, %v637
      %v663 = vunpack.c.l.b16 %v615
      %v664 = vunpack.c.l.b16 %v616
      %v665 = vunpack.c.l.b16 %v617
      %v666 = vunpack.c.l.b16 %v618
      %v667 = vunpack.c.l.b16 %v619
      %v668 = vunpack.c.l.b16 %v620
      %v669 = vunpack.c.l.b16 %v621
      %v670 = vunpack.c.l.b16 %v622
      %v671 = vunpack.c.l.b16 %v623
      %v672 = vunpack.c.l.b16 %v624
      %v673 = vunpack.c.l.b16 %v625
      %v674 = vunpack.c.l.b16 %v626
      %v675 = vunpack.c.l.b16 %v627
      %v676 = vunpack.c.l.b16 %v628
      %v677 = vunpack.c.l.b16 %v629
      %v678 = vunpack.c.l.b16 %v630
      %v679 = vpack.c.b16 %v664, %v663
      %v680 = vpack.c.b16 %v666, %v665
      %v681 = vpack.c.b16 %v668, %v667
      %v682 = vpack.c.b16 %v670, %v669
      %v683 = vpack.c.b16 %v672, %v671
      %v684 = vpack.c.b16 %v674, %v673
      %v685 = vpack.c.b16 %v676, %v675
      %v686 = vpack.c.b16 %v678, %v677
      %695 = vmatprep.subr.bf16.mxu0 0
      %696 = vmatpush1.bf16.msra.mxu0 %v686
      %697 = vmatprep.subr.bf16.mxu0 0
      %698 = vmatpush1.bf16.msra.mxu0 %v685
      %699 = vmatprep.subr.bf16.mxu0 0
      %700 = vmatpush1.bf16.msra.mxu0 %v684
      %701 = vmatprep.subr.bf16.mxu0 0
      %702 = vmatpush1.bf16.msra.mxu0 %v683
      %703 = vmatprep.subr.bf16.mxu0 0
      %704 = vmatpush1.bf16.msra.mxu0 %v682
      %705 = vmatprep.subr.bf16.mxu0 0
      %706 = vmatpush1.bf16.msra.mxu0 %v681
      %707 = vmatprep.subr.bf16.mxu0 0
      %708 = vmatpush1.bf16.msra.mxu0 %v680
      %709 = vmatprep.subr.bf16.mxu0 0
      %710 = vmatpush1.bf16.msra.mxu0 %v679
      %711 = vmatprep.subr.bf16.mxu0 0
      %712 = vmatpush2.bf16.msra.mxu0 0
      %713 = vmatprep.subr.bf16.mxu0 0
      %714 = vmatpush2.bf16.msra.mxu0 0
      %715 = vmatprep.subr.bf16.mxu0 0
      %716 = vmatpush2.bf16.msra.mxu0 0
      %717 = vmatprep.subr.bf16.mxu0 0
      %718 = vmatpush2.bf16.msra.mxu0 0
      %719 = vmatprep.subr.bf16.mxu0 0
      %720 = vmatpush2.bf16.msra.mxu0 0
      %721 = vmatprep.subr.bf16.mxu0 0
      %722 = vmatpush2.bf16.msra.mxu0 0
      %723 = vmatprep.subr.bf16.mxu0 0
      %724 = vmatpush2.bf16.msra.mxu0 0
      %725 = vmatprep.subr.bf16.mxu0 0
      %726 = vmatpush2.bf16.msra.mxu0 0
      %727 = vmatprep.mubr.bf16.mxu0 0
      %728 = vmatmul.mubr.bf16.gmra.mxu0 %v639
      %v729 = vpop.f32.mrf.mxu0
      %v730 = vadd.f32 0.0, %v729
      %v731 = vpop.f32.mrf.mxu0
      %v732 = vpop.f32.mrf.mxu0
      %v733 = vadd.f32 0.0, %v732
      %v734 = vpop.f32.mrf.mxu0
      %735 = vmatprep.mubr.bf16.mxu0 0
      %736 = vmatmul.mubr.bf16.gmra.mxu0 %v640
      %v737 = vpop.f32.mrf.mxu0
      %v738 = vadd.f32 0.0, %v737
      %v739 = vpop.f32.mrf.mxu0
      %v740 = vpop.f32.mrf.mxu0
      %v741 = vadd.f32 0.0, %v740
      %v742 = vpop.f32.mrf.mxu0
      %743 = vmatprep.mubr.bf16.mxu0 0
      %744 = vmatmul.mubr.bf16.gmra.mxu0 %v641
      %v745 = vpop.f32.mrf.mxu0
      %v746 = vadd.f32 0.0, %v745
      %v747 = vpop.f32.mrf.mxu0
      %v748 = vpop.f32.mrf.mxu0
      %v749 = vadd.f32 0.0, %v748
      %v750 = vpop.f32.mrf.mxu0
      %751 = vmatprep.mubr.bf16.mxu0 0
      %752 = vmatmul.mubr.bf16.gmra.mxu0 %v642
      %v753 = vpop.f32.mrf.mxu0
      %v754 = vadd.f32 0.0, %v753
      %v755 = vpop.f32.mrf.mxu0
      %v756 = vpop.f32.mrf.mxu0
      %v757 = vadd.f32 0.0, %v756
      %v758 = vpop.f32.mrf.mxu0
      %759 = vdwg.mxu0
      %v768 = vunpack.c.l.b16 %v371
      %v769 = vunpack.c.l.b16 %v372
      %v770 = vunpack.c.l.b16 %v373
      %v771 = vunpack.c.l.b16 %v374
      %v772 = vunpack.c.l.b16 %v375
      %v773 = vunpack.c.l.b16 %v376
      %v774 = vunpack.c.l.b16 %v377
      %v775 = vunpack.c.l.b16 %v378
      %v776 = vpack.c.b16 %v769, %v768
      %v777 = vpack.c.b16 %v771, %v770
      %v778 = vpack.c.b16 %v773, %v772
      %v779 = vpack.c.b16 %v775, %v774
      %v800 = vunpack.c.l.b16 %v379
      %v801 = vunpack.c.l.b16 %v380
      %v802 = vunpack.c.l.b16 %v381
      %v803 = vunpack.c.l.b16 %v382
      %v804 = vunpack.c.l.b16 %v383
      %v805 = vunpack.c.l.b16 %v384
      %v806 = vunpack.c.l.b16 %v385
      %v807 = vunpack.c.l.b16 %v386
      %v808 = vunpack.c.l.b16 %v387
      %v809 = vunpack.c.l.b16 %v388
      %v810 = vunpack.c.l.b16 %v389
      %v811 = vunpack.c.l.b16 %v390
      %v812 = vunpack.c.l.b16 %v391
      %v813 = vunpack.c.l.b16 %v392
      %v814 = vunpack.c.l.b16 %v393
      %v815 = vunpack.c.l.b16 %v394
      %v816 = vpack.c.b16 %v801, %v800
      %v817 = vpack.c.b16 %v803, %v802
      %v818 = vpack.c.b16 %v805, %v804
      %v819 = vpack.c.b16 %v807, %v806
      %v820 = vpack.c.b16 %v809, %v808
      %v821 = vpack.c.b16 %v811, %v810
      %v822 = vpack.c.b16 %v813, %v812
      %v823 = vpack.c.b16 %v815, %v814
      %832 = vmatprep.subr.bf16.mxu0 0
      %833 = vmatpush1.bf16.msra.mxu0 %v823
      %834 = vmatprep.subr.bf16.mxu0 0
      %835 = vmatpush1.bf16.msra.mxu0 %v822
      %836 = vmatprep.subr.bf16.mxu0 0
      %837 = vmatpush1.bf16.msra.mxu0 %v821
      %838 = vmatprep.subr.bf16.mxu0 0
      %839 = vmatpush1.bf16.msra.mxu0 %v820
      %840 = vmatprep.subr.bf16.mxu0 0
      %841 = vmatpush1.bf16.msra.mxu0 %v819
      %842 = vmatprep.subr.bf16.mxu0 0
      %843 = vmatpush1.bf16.msra.mxu0 %v818
      %844 = vmatprep.subr.bf16.mxu0 0
      %845 = vmatpush1.bf16.msra.mxu0 %v817
      %846 = vmatprep.subr.bf16.mxu0 0
      %847 = vmatpush1.bf16.msra.mxu0 %v816
      %848 = vmatprep.subr.bf16.mxu0 0
      %849 = vmatpush2.bf16.msra.mxu0 0
      %850 = vmatprep.subr.bf16.mxu0 0
      %851 = vmatpush2.bf16.msra.mxu0 0
      %852 = vmatprep.subr.bf16.mxu0 0
      %853 = vmatpush2.bf16.msra.mxu0 0
      %854 = vmatprep.subr.bf16.mxu0 0
      %855 = vmatpush2.bf16.msra.mxu0 0
      %856 = vmatprep.subr.bf16.mxu0 0
      %857 = vmatpush2.bf16.msra.mxu0 0
      %858 = vmatprep.subr.bf16.mxu0 0
      %859 = vmatpush2.bf16.msra.mxu0 0
      %860 = vmatprep.subr.bf16.mxu0 0
      %861 = vmatpush2.bf16.msra.mxu0 0
      %862 = vmatprep.subr.bf16.mxu0 0
      %863 = vmatpush2.bf16.msra.mxu0 0
      %864 = vmatprep.mubr.bf16.mxu0 0
      %865 = vmatmul.mubr.bf16.gmra.mxu0 %v776
      %v866 = vpop.f32.mrf.mxu0
      %v867 = vadd.f32 %v730, %v866
      %v868 = vpop.f32.mrf.mxu0
      %v869 = vpop.f32.mrf.mxu0
      %v870 = vadd.f32 %v733, %v869
      %v871 = vpop.f32.mrf.mxu0
      %872 = vmatprep.mubr.bf16.mxu0 0
      %873 = vmatmul.mubr.bf16.gmra.mxu0 %v777
      %v874 = vpop.f32.mrf.mxu0
      %v875 = vadd.f32 %v738, %v874
      %v876 = vpop.f32.mrf.mxu0
      %v877 = vpop.f32.mrf.mxu0
      %v878 = vadd.f32 %v741, %v877
      %v879 = vpop.f32.mrf.mxu0
      %880 = vmatprep.mubr.bf16.mxu0 0
      %881 = vmatmul.mubr.bf16.gmra.mxu0 %v778
      %v882 = vpop.f32.mrf.mxu0
      %v883 = vadd.f32 %v746, %v882
      %v884 = vpop.f32.mrf.mxu0
      %v885 = vpop.f32.mrf.mxu0
      %v886 = vadd.f32 %v749, %v885
      %v887 = vpop.f32.mrf.mxu0
      %888 = vmatprep.mubr.bf16.mxu0 0
      %889 = vmatmul.mubr.bf16.gmra.mxu0 %v779
      %v890 = vpop.f32.mrf.mxu0
      %v891 = vadd.f32 %v754, %v890
      %v892 = vpop.f32.mrf.mxu0
      %v893 = vpop.f32.mrf.mxu0
      %v894 = vadd.f32 %v757, %v893
      %v895 = vpop.f32.mrf.mxu0
      %896 = vdwg.mxu0
      %v897 = vld [vmem:[%s253] sm:$0xe]
      %v898 = vld [vmem:[%s253 + $0x8] sm:$0xe]
      %v899 = vld [vmem:[%s253 + $0x10] sm:$0xe]
      %v900 = vld [vmem:[%s253 + $0x18] sm:$0xe]
      %v901 = vld [vmem:[%s253 + $0x20] sm:$0xe]
      %v902 = vld [vmem:[%s253 + $0x28] sm:$0xe]
      %v903 = vld [vmem:[%s253 + $0x30] sm:$0xe]
      %v904 = vld [vmem:[%s253 + $0x38] sm:$0xe]
      %v905 = vunpack.c.l.bf16 %v897
      %v906 = vunpack.c.l.bf16 %v898
      %v907 = vunpack.c.l.bf16 %v899
      %v908 = vunpack.c.l.bf16 %v900
      %v909 = vunpack.c.l.bf16 %v901
      %v910 = vunpack.c.l.bf16 %v902
      %v911 = vunpack.c.l.bf16 %v903
      %v912 = vunpack.c.l.bf16 %v904
      %v913 = vmul.f32 %v905, %v328
      %v914 = vmul.f32 %v906, %v328
      %v915 = vmul.f32 %v907, %v328
      %v916 = vmul.f32 %v908, %v328
      %v917 = vmul.f32 %v909, %v328
      %v918 = vmul.f32 %v910, %v328
      %v919 = vmul.f32 %v911, %v328
      %v920 = vmul.f32 %v912, %v328
      %v921 = vadd.f32 %v913, %v342
      %v922 = vadd.f32 %v914, %v342
      %v923 = vadd.f32 %v915, %v342
      %v924 = vadd.f32 %v916, %v342
      %v925 = vadd.f32 %v917, %v342
      %v926 = vadd.f32 %v918, %v342
      %v927 = vadd.f32 %v919, %v342
      %v928 = vadd.f32 %v920, %v342
      %v929 = vmax.f32 %v921, 0.0
      %v930 = vmax.f32 %v922, 0.0
      %v931 = vmax.f32 %v923, 0.0
      %v932 = vmax.f32 %v924, 0.0
      %v933 = vmax.f32 %v925, 0.0
      %v934 = vmax.f32 %v926, 0.0
      %v935 = vmax.f32 %v927, 0.0
      %v936 = vmax.f32 %v928, 0.0
      %vm937 = vcmp.lt.s32.totalorder %v307, 7
      %vm938 = vmand 0, %vm937
      %vm939 = vmand 1, %vm937
      %vm956 = vcmask 1045504
      %v957 = vrot.slane %v929, 2
      %v958 = vrot.slane %v427, 2
      %v959 = vsel %vm956, %v957, %v958
      %v960 = vrot.slane %v930, 2
      %v961 = vrot.slane %v428, 2
      %v962 = vsel %vm956, %v960, %v961
      %v963 = vrot.slane %v931, 2
      %v964 = vrot.slane %v429, 2
      %v965 = vsel %vm956, %v963, %v964
      %v966 = vrot.slane %v932, 2
      %v967 = vrot.slane %v430, 2
      %v968 = vsel %vm956, %v966, %v967
      %v969 = vrot.slane %v933, 2
      %v970 = vrot.slane %v431, 2
      %v971 = vsel %vm956, %v969, %v970
      %v972 = vrot.slane %v934, 2
      %v973 = vrot.slane %v432, 2
      %v974 = vsel %vm956, %v972, %v973
      %v975 = vrot.slane %v935, 2
      %v976 = vrot.slane %v433, 2
      %v977 = vsel %vm956, %v975, %v976
      %v978 = vrot.slane %v936, 2
      %v979 = vrot.slane %v434, 2
      %v980 = vsel %vm956, %v978, %v979
      %v989 = vsel %vm938, %v959, 0.0
      %v990 = vsel %vm939, %v962, 0.0
      %v991 = vsel %vm939, %v965, 0.0
      %v992 = vsel %vm939, %v968, 0.0
      %v993 = vsel %vm939, %v971, 0.0
      %v994 = vsel %vm939, %v974, 0.0
      %v995 = vsel %vm939, %v977, 0.0
      %v996 = vsel %vm939, %v980, 0.0
      %v997 = vpack.c.bf16 %v989, %v989
      %v998 = vpack.c.bf16 %v990, %v990
      %v999 = vpack.c.bf16 %v991, %v991
      %v1000 = vpack.c.bf16 %v992, %v992
      %v1001 = vpack.c.bf16 %v993, %v993
      %v1002 = vpack.c.bf16 %v994, %v994
      %v1003 = vpack.c.bf16 %v995, %v995
      %v1004 = vpack.c.bf16 %v996, %v996
      %s1005 = scalar_lea.vmem %s4, 128
      %v1006 = vld [vmem:[%s1005] sm:$0xf]
      %v1007 = vld [vmem:[%s1005 + $0x4] sm:$0xf]
      %v1008 = vld [vmem:[%s1005 + $0x8] sm:$0xf]
      %v1009 = vld [vmem:[%s1005 + $0xc] sm:$0xf]
      %v1010 = vld [vmem:[%s1005 + $0x10] sm:$0xf]
      %v1011 = vld [vmem:[%s1005 + $0x14] sm:$0xf]
      %v1012 = vld [vmem:[%s1005 + $0x18] sm:$0xf]
      %v1013 = vld [vmem:[%s1005 + $0x1c] sm:$0xf]
      %v1014 = vld [vmem:[%s1005 + $0x20] sm:$0xf]
      %v1015 = vld [vmem:[%s1005 + $0x24] sm:$0xf]
      %v1016 = vld [vmem:[%s1005 + $0x28] sm:$0xf]
      %v1017 = vld [vmem:[%s1005 + $0x2c] sm:$0xf]
      %v1018 = vld [vmem:[%s1005 + $0x30] sm:$0xf]
      %v1019 = vld [vmem:[%s1005 + $0x34] sm:$0xf]
      %v1020 = vld [vmem:[%s1005 + $0x38] sm:$0xf]
      %v1021 = vld [vmem:[%s1005 + $0x3c] sm:$0xf]
      %v1030 = vunpack.c.l.b16 %v997
      %v1031 = vunpack.c.l.b16 %v998
      %v1032 = vunpack.c.l.b16 %v999
      %v1033 = vunpack.c.l.b16 %v1000
      %v1034 = vunpack.c.l.b16 %v1001
      %v1035 = vunpack.c.l.b16 %v1002
      %v1036 = vunpack.c.l.b16 %v1003
      %v1037 = vunpack.c.l.b16 %v1004
      %v1038 = vpack.c.b16 %v1031, %v1030
      %v1039 = vpack.c.b16 %v1033, %v1032
      %v1040 = vpack.c.b16 %v1035, %v1034
      %v1041 = vpack.c.b16 %v1037, %v1036
      %v1062 = vunpack.c.l.b16 %v1006
      %v1063 = vunpack.c.l.b16 %v1007
      %v1064 = vunpack.c.l.b16 %v1008
      %v1065 = vunpack.c.l.b16 %v1009
      %v1066 = vunpack.c.l.b16 %v1010
      %v1067 = vunpack.c.l.b16 %v1011
      %v1068 = vunpack.c.l.b16 %v1012
      %v1069 = vunpack.c.l.b16 %v1013
      %v1070 = vunpack.c.l.b16 %v1014
      %v1071 = vunpack.c.l.b16 %v1015
      %v1072 = vunpack.c.l.b16 %v1016
      %v1073 = vunpack.c.l.b16 %v1017
      %v1074 = vunpack.c.l.b16 %v1018
      %v1075 = vunpack.c.l.b16 %v1019
      %v1076 = vunpack.c.l.b16 %v1020
      %v1077 = vunpack.c.l.b16 %v1021
      %v1078 = vpack.c.b16 %v1063, %v1062
      %v1079 = vpack.c.b16 %v1065, %v1064
      %v1080 = vpack.c.b16 %v1067, %v1066
      %v1081 = vpack.c.b16 %v1069, %v1068
      %v1082 = vpack.c.b16 %v1071, %v1070
      %v1083 = vpack.c.b16 %v1073, %v1072
      %v1084 = vpack.c.b16 %v1075, %v1074
      %v1085 = vpack.c.b16 %v1077, %v1076
      %1094 = vmatprep.subr.bf16.mxu0 0
      %1095 = vmatpush1.bf16.msra.mxu0 %v1085
      %1096 = vmatprep.subr.bf16.mxu0 0
      %1097 = vmatpush1.bf16.msra.mxu0 %v1084
      %1098 = vmatprep.subr.bf16.mxu0 0
      %1099 = vmatpush1.bf16.msra.mxu0 %v1083
      %1100 = vmatprep.subr.bf16.mxu0 0
      %1101 = vmatpush1.bf16.msra.mxu0 %v1082
      %1102 = vmatprep.subr.bf16.mxu0 0
      %1103 = vmatpush1.bf16.msra.mxu0 %v1081
      %1104 = vmatprep.subr.bf16.mxu0 0
      %1105 = vmatpush1.bf16.msra.mxu0 %v1080
      %1106 = vmatprep.subr.bf16.mxu0 0
      %1107 = vmatpush1.bf16.msra.mxu0 %v1079
      %1108 = vmatprep.subr.bf16.mxu0 0
      %1109 = vmatpush1.bf16.msra.mxu0 %v1078
      %1110 = vmatprep.subr.bf16.mxu0 0
      %1111 = vmatpush2.bf16.msra.mxu0 0
      %1112 = vmatprep.subr.bf16.mxu0 0
      %1113 = vmatpush2.bf16.msra.mxu0 0
      %1114 = vmatprep.subr.bf16.mxu0 0
      %1115 = vmatpush2.bf16.msra.mxu0 0
      %1116 = vmatprep.subr.bf16.mxu0 0
      %1117 = vmatpush2.bf16.msra.mxu0 0
      %1118 = vmatprep.subr.bf16.mxu0 0
      %1119 = vmatpush2.bf16.msra.mxu0 0
      %1120 = vmatprep.subr.bf16.mxu0 0
      %1121 = vmatpush2.bf16.msra.mxu0 0
      %1122 = vmatprep.subr.bf16.mxu0 0
      %1123 = vmatpush2.bf16.msra.mxu0 0
      %1124 = vmatprep.subr.bf16.mxu0 0
      %1125 = vmatpush2.bf16.msra.mxu0 0
      %1126 = vmatprep.mubr.bf16.mxu0 0
      %1127 = vmatmul.mubr.bf16.gmra.mxu0 %v1038
      %v1128 = vpop.f32.mrf.mxu0
      %v1129 = vadd.f32 0.0, %v1128
      %v1130 = vpop.f32.mrf.mxu0
      %v1131 = vpop.f32.mrf.mxu0
      %v1132 = vadd.f32 0.0, %v1131
      %v1133 = vpop.f32.mrf.mxu0
      %1134 = vmatprep.mubr.bf16.mxu0 0
      %1135 = vmatmul.mubr.bf16.gmra.mxu0 %v1039
      %v1136 = vpop.f32.mrf.mxu0
      %v1137 = vadd.f32 0.0, %v1136
      %v1138 = vpop.f32.mrf.mxu0
      %v1139 = vpop.f32.mrf.mxu0
      %v1140 = vadd.f32 0.0, %v1139
      %v1141 = vpop.f32.mrf.mxu0
      %1142 = vmatprep.mubr.bf16.mxu0 0
      %1143 = vmatmul.mubr.bf16.gmra.mxu0 %v1040
      %v1144 = vpop.f32.mrf.mxu0
      %v1145 = vadd.f32 0.0, %v1144
      %v1146 = vpop.f32.mrf.mxu0
      %v1147 = vpop.f32.mrf.mxu0
      %v1148 = vadd.f32 0.0, %v1147
      %v1149 = vpop.f32.mrf.mxu0
      %1150 = vmatprep.mubr.bf16.mxu0 0
      %1151 = vmatmul.mubr.bf16.gmra.mxu0 %v1041
      %v1152 = vpop.f32.mrf.mxu0
      %v1153 = vadd.f32 0.0, %v1152
      %v1154 = vpop.f32.mrf.mxu0
      %v1155 = vpop.f32.mrf.mxu0
      %v1156 = vadd.f32 0.0, %v1155
      %v1157 = vpop.f32.mrf.mxu0
      %1158 = vdwg.mxu0
      %v1159 = vadd.f32 %v867, %v1129
      %v1160 = vadd.f32 %v870, %v1132
      %v1161 = vadd.f32 %v875, %v1137
      %v1162 = vadd.f32 %v878, %v1140
      %v1163 = vadd.f32 %v883, %v1145
      %v1164 = vadd.f32 %v886, %v1148
      %v1165 = vadd.f32 %v891, %v1153
      %v1166 = vadd.f32 %v894, %v1156
      %s1167 = scalar_lea.vmem %s253, 8
      %v1168 = vld [vmem:[%s1167] sm:$0xf]
      %v1169 = vld [vmem:[%s1167 + $0x8] sm:$0xf]
      %v1170 = vld [vmem:[%s1167 + $0x10] sm:$0xf]
      %v1171 = vld [vmem:[%s1167 + $0x18] sm:$0xf]
      %v1172 = vld [vmem:[%s1167 + $0x20] sm:$0xf]
      %v1173 = vld [vmem:[%s1167 + $0x28] sm:$0xf]
      %v1174 = vld [vmem:[%s1167 + $0x30] sm:$0xf]
      %v1175 = vld [vmem:[%s1167 + $0x38] sm:$0xf]
      %v1176 = vunpack.c.l.bf16 %v1168
      %v1177 = vunpack.c.l.bf16 %v1169
      %v1178 = vunpack.c.l.bf16 %v1170
      %v1179 = vunpack.c.l.bf16 %v1171
      %v1180 = vunpack.c.l.bf16 %v1172
      %v1181 = vunpack.c.l.bf16 %v1173
      %v1182 = vunpack.c.l.bf16 %v1174
      %v1183 = vunpack.c.l.bf16 %v1175
      %v1184 = vmul.f32 %v1176, %v328
      %v1185 = vmul.f32 %v1177, %v328
      %v1186 = vmul.f32 %v1178, %v328
      %v1187 = vmul.f32 %v1179, %v328
      %v1188 = vmul.f32 %v1180, %v328
      %v1189 = vmul.f32 %v1181, %v328
      %v1190 = vmul.f32 %v1182, %v328
      %v1191 = vmul.f32 %v1183, %v328
      %v1192 = vadd.f32 %v1184, %v342
      %v1193 = vadd.f32 %v1185, %v342
      %v1194 = vadd.f32 %v1186, %v342
      %v1195 = vadd.f32 %v1187, %v342
      %v1196 = vadd.f32 %v1188, %v342
      %v1197 = vadd.f32 %v1189, %v342
      %v1198 = vadd.f32 %v1190, %v342
      %v1199 = vadd.f32 %v1191, %v342
      %v1200 = vmax.f32 %v1192, 0.0
      %v1201 = vmax.f32 %v1193, 0.0
      %v1202 = vmax.f32 %v1194, 0.0
      %v1203 = vmax.f32 %v1195, 0.0
      %v1204 = vmax.f32 %v1196, 0.0
      %v1205 = vmax.f32 %v1197, 0.0
      %v1206 = vmax.f32 %v1198, 0.0
      %v1207 = vmax.f32 %v1199, 0.0
      %v1208 = vsel %vm360, %v1200, 0.0
      %v1209 = vsel %vm360, %v1201, 0.0
      %v1210 = vsel %vm360, %v1202, 0.0
      %v1211 = vsel %vm360, %v1203, 0.0
      %v1212 = vsel %vm360, %v1204, 0.0
      %v1213 = vsel %vm360, %v1205, 0.0
      %v1214 = vsel %vm360, %v1206, 0.0
      %v1215 = vsel %vm360, %v1207, 0.0
      %v1216 = vpack.c.bf16 %v1208, %v1208
      %v1217 = vpack.c.bf16 %v1209, %v1209
      %v1218 = vpack.c.bf16 %v1210, %v1210
      %v1219 = vpack.c.bf16 %v1211, %v1211
      %v1220 = vpack.c.bf16 %v1212, %v1212
      %v1221 = vpack.c.bf16 %v1213, %v1213
      %v1222 = vpack.c.bf16 %v1214, %v1214
      %v1223 = vpack.c.bf16 %v1215, %v1215
      %s1224 = scalar_lea.vmem %s4, 192
      %v1225 = vld [vmem:[%s1224] sm:$0xf]
      %v1226 = vld [vmem:[%s1224 + $0x4] sm:$0xf]
      %v1227 = vld [vmem:[%s1224 + $0x8] sm:$0xf]
      %v1228 = vld [vmem:[%s1224 + $0xc] sm:$0xf]
      %v1229 = vld [vmem:[%s1224 + $0x10] sm:$0xf]
      %v1230 = vld [vmem:[%s1224 + $0x14] sm:$0xf]
      %v1231 = vld [vmem:[%s1224 + $0x18] sm:$0xf]
      %v1232 = vld [vmem:[%s1224 + $0x1c] sm:$0xf]
      %v1233 = vld [vmem:[%s1224 + $0x20] sm:$0xf]
      %v1234 = vld [vmem:[%s1224 + $0x24] sm:$0xf]
      %v1235 = vld [vmem:[%s1224 + $0x28] sm:$0xf]
      %v1236 = vld [vmem:[%s1224 + $0x2c] sm:$0xf]
      %v1237 = vld [vmem:[%s1224 + $0x30] sm:$0xf]
      %v1238 = vld [vmem:[%s1224 + $0x34] sm:$0xf]
      %v1239 = vld [vmem:[%s1224 + $0x38] sm:$0xf]
      %v1240 = vld [vmem:[%s1224 + $0x3c] sm:$0xf]
      %v1249 = vunpack.c.l.b16 %v1216
      %v1250 = vunpack.c.l.b16 %v1217
      %v1251 = vunpack.c.l.b16 %v1218
      %v1252 = vunpack.c.l.b16 %v1219
      %v1253 = vunpack.c.l.b16 %v1220
      %v1254 = vunpack.c.l.b16 %v1221
      %v1255 = vunpack.c.l.b16 %v1222
      %v1256 = vunpack.c.l.b16 %v1223
      %v1257 = vpack.c.b16 %v1250, %v1249
      %v1258 = vpack.c.b16 %v1252, %v1251
      %v1259 = vpack.c.b16 %v1254, %v1253
      %v1260 = vpack.c.b16 %v1256, %v1255
      %v1281 = vunpack.c.l.b16 %v1225
      %v1282 = vunpack.c.l.b16 %v1226
      %v1283 = vunpack.c.l.b16 %v1227
      %v1284 = vunpack.c.l.b16 %v1228
      %v1285 = vunpack.c.l.b16 %v1229
      %v1286 = vunpack.c.l.b16 %v1230
      %v1287 = vunpack.c.l.b16 %v1231
      %v1288 = vunpack.c.l.b16 %v1232
      %v1289 = vunpack.c.l.b16 %v1233
      %v1290 = vunpack.c.l.b16 %v1234
      %v1291 = vunpack.c.l.b16 %v1235
      %v1292 = vunpack.c.l.b16 %v1236
      %v1293 = vunpack.c.l.b16 %v1237
      %v1294 = vunpack.c.l.b16 %v1238
      %v1295 = vunpack.c.l.b16 %v1239
      %v1296 = vunpack.c.l.b16 %v1240
      %v1297 = vpack.c.b16 %v1282, %v1281
      %v1298 = vpack.c.b16 %v1284, %v1283
      %v1299 = vpack.c.b16 %v1286, %v1285
      %v1300 = vpack.c.b16 %v1288, %v1287
      %v1301 = vpack.c.b16 %v1290, %v1289
      %v1302 = vpack.c.b16 %v1292, %v1291
      %v1303 = vpack.c.b16 %v1294, %v1293
      %v1304 = vpack.c.b16 %v1296, %v1295
      %1313 = vmatprep.subr.bf16.mxu0 0
      %1314 = vmatpush1.bf16.msra.mxu0 %v1304
      %1315 = vmatprep.subr.bf16.mxu0 0
      %1316 = vmatpush1.bf16.msra.mxu0 %v1303
      %1317 = vmatprep.subr.bf16.mxu0 0
      %1318 = vmatpush1.bf16.msra.mxu0 %v1302
      %1319 = vmatprep.subr.bf16.mxu0 0
      %1320 = vmatpush1.bf16.msra.mxu0 %v1301
      %1321 = vmatprep.subr.bf16.mxu0 0
      %1322 = vmatpush1.bf16.msra.mxu0 %v1300
      %1323 = vmatprep.subr.bf16.mxu0 0
      %1324 = vmatpush1.bf16.msra.mxu0 %v1299
      %1325 = vmatprep.subr.bf16.mxu0 0
      %1326 = vmatpush1.bf16.msra.mxu0 %v1298
      %1327 = vmatprep.subr.bf16.mxu0 0
      %1328 = vmatpush1.bf16.msra.mxu0 %v1297
      %1329 = vmatprep.subr.bf16.mxu0 0
      %1330 = vmatpush2.bf16.msra.mxu0 0
      %1331 = vmatprep.subr.bf16.mxu0 0
      %1332 = vmatpush2.bf16.msra.mxu0 0
      %1333 = vmatprep.subr.bf16.mxu0 0
      %1334 = vmatpush2.bf16.msra.mxu0 0
      %1335 = vmatprep.subr.bf16.mxu0 0
      %1336 = vmatpush2.bf16.msra.mxu0 0
      %1337 = vmatprep.subr.bf16.mxu0 0
      %1338 = vmatpush2.bf16.msra.mxu0 0
      %1339 = vmatprep.subr.bf16.mxu0 0
      %1340 = vmatpush2.bf16.msra.mxu0 0
      %1341 = vmatprep.subr.bf16.mxu0 0
      %1342 = vmatpush2.bf16.msra.mxu0 0
      %1343 = vmatprep.subr.bf16.mxu0 0
      %1344 = vmatpush2.bf16.msra.mxu0 0
      %1345 = vmatprep.mubr.bf16.mxu0 0
      %1346 = vmatmul.mubr.bf16.gmra.mxu0 %v1257
      %v1347 = vpop.f32.mrf.mxu0
      %v1348 = vadd.f32 0.0, %v1347
      %v1349 = vpop.f32.mrf.mxu0
      %v1350 = vpop.f32.mrf.mxu0
      %v1351 = vadd.f32 0.0, %v1350
      %v1352 = vpop.f32.mrf.mxu0
      %1353 = vmatprep.mubr.bf16.mxu0 0
      %1354 = vmatmul.mubr.bf16.gmra.mxu0 %v1258
      %v1355 = vpop.f32.mrf.mxu0
      %v1356 = vadd.f32 0.0, %v1355
      %v1357 = vpop.f32.mrf.mxu0
      %v1358 = vpop.f32.mrf.mxu0
      %v1359 = vadd.f32 0.0, %v1358
      %v1360 = vpop.f32.mrf.mxu0
      %1361 = vmatprep.mubr.bf16.mxu0 0
      %1362 = vmatmul.mubr.bf16.gmra.mxu0 %v1259
      %v1363 = vpop.f32.mrf.mxu0
      %v1364 = vadd.f32 0.0, %v1363
      %v1365 = vpop.f32.mrf.mxu0
      %v1366 = vpop.f32.mrf.mxu0
      %v1367 = vadd.f32 0.0, %v1366
      %v1368 = vpop.f32.mrf.mxu0
      %1369 = vmatprep.mubr.bf16.mxu0 0
      %1370 = vmatmul.mubr.bf16.gmra.mxu0 %v1260
      %v1371 = vpop.f32.mrf.mxu0
      %v1372 = vadd.f32 0.0, %v1371
      %v1373 = vpop.f32.mrf.mxu0
      %v1374 = vpop.f32.mrf.mxu0
      %v1375 = vadd.f32 0.0, %v1374
      %v1376 = vpop.f32.mrf.mxu0
      %1377 = vdwg.mxu0
      %v1378 = vadd.f32 %v1159, %v1348
      %v1379 = vadd.f32 %v1160, %v1351
      %v1380 = vadd.f32 %v1161, %v1356
      %v1381 = vadd.f32 %v1162, %v1359
      %v1382 = vadd.f32 %v1163, %v1364
      %v1383 = vadd.f32 %v1164, %v1367
      %v1384 = vadd.f32 %v1165, %v1372
      %v1385 = vadd.f32 %v1166, %v1375
      %v1386 = vld [vmem:[%s1167] sm:$0xf]
      %v1387 = vld [vmem:[%s1167 + $0x4] sm:$0x1]
      %v1388 = vld [vmem:[%s1167 + $0x8] sm:$0xf]
      %v1389 = vld [vmem:[%s1167 + $0xc] sm:$0x1]
      %v1390 = vld [vmem:[%s1167 + $0x10] sm:$0xf]
      %v1391 = vld [vmem:[%s1167 + $0x14] sm:$0x1]
      %v1392 = vld [vmem:[%s1167 + $0x18] sm:$0xf]
      %v1393 = vld [vmem:[%s1167 + $0x1c] sm:$0x1]
      %v1394 = vld [vmem:[%s1167 + $0x20] sm:$0xf]
      %v1395 = vld [vmem:[%s1167 + $0x24] sm:$0x1]
      %v1396 = vld [vmem:[%s1167 + $0x28] sm:$0xf]
      %v1397 = vld [vmem:[%s1167 + $0x2c] sm:$0x1]
      %v1398 = vld [vmem:[%s1167 + $0x30] sm:$0xf]
      %v1399 = vld [vmem:[%s1167 + $0x34] sm:$0x1]
      %v1400 = vld [vmem:[%s1167 + $0x38] sm:$0xf]
      %v1401 = vld [vmem:[%s1167 + $0x3c] sm:$0x1]
      %v1402 = vunpack.c.l.bf16 %v1386
      %v1403 = vunpack.c.l.bf16 %v1387
      %v1404 = vunpack.c.l.bf16 %v1388
      %v1405 = vunpack.c.l.bf16 %v1389
      %v1406 = vunpack.c.l.bf16 %v1390
      %v1407 = vunpack.c.l.bf16 %v1391
      %v1408 = vunpack.c.l.bf16 %v1392
      %v1409 = vunpack.c.l.bf16 %v1393
      %v1410 = vunpack.c.l.bf16 %v1394
      %v1411 = vunpack.c.l.bf16 %v1395
      %v1412 = vunpack.c.l.bf16 %v1396
      %v1413 = vunpack.c.l.bf16 %v1397
      %v1414 = vunpack.c.l.bf16 %v1398
      %v1415 = vunpack.c.l.bf16 %v1399
      %v1416 = vunpack.c.l.bf16 %v1400
      %v1417 = vunpack.c.l.bf16 %v1401
      %v1418 = vmul.f32 %v1402, %v328
      %v1419 = vmul.f32 %v1403, %v328
      %v1420 = vmul.f32 %v1404, %v328
      %v1421 = vmul.f32 %v1405, %v328
      %v1422 = vmul.f32 %v1406, %v328
      %v1423 = vmul.f32 %v1407, %v328
      %v1424 = vmul.f32 %v1408, %v328
      %v1425 = vmul.f32 %v1409, %v328
      %v1426 = vmul.f32 %v1410, %v328
      %v1427 = vmul.f32 %v1411, %v328
      %v1428 = vmul.f32 %v1412, %v328
      %v1429 = vmul.f32 %v1413, %v328
      %v1430 = vmul.f32 %v1414, %v328
      %v1431 = vmul.f32 %v1415, %v328
      %v1432 = vmul.f32 %v1416, %v328
      %v1433 = vmul.f32 %v1417, %v328
      %v1434 = vadd.f32 %v1418, %v342
      %v1435 = vadd.f32 %v1419, %v342
      %v1436 = vadd.f32 %v1420, %v342
      %v1437 = vadd.f32 %v1421, %v342
      %v1438 = vadd.f32 %v1422, %v342
      %v1439 = vadd.f32 %v1423, %v342
      %v1440 = vadd.f32 %v1424, %v342
      %v1441 = vadd.f32 %v1425, %v342
      %v1442 = vadd.f32 %v1426, %v342
      %v1443 = vadd.f32 %v1427, %v342
      %v1444 = vadd.f32 %v1428, %v342
      %v1445 = vadd.f32 %v1429, %v342
      %v1446 = vadd.f32 %v1430, %v342
      %v1447 = vadd.f32 %v1431, %v342
      %v1448 = vadd.f32 %v1432, %v342
      %v1449 = vadd.f32 %v1433, %v342
      %v1450 = vmax.f32 %v1434, 0.0
      %v1451 = vmax.f32 %v1435, 0.0
      %v1452 = vmax.f32 %v1436, 0.0
      %v1453 = vmax.f32 %v1437, 0.0
      %v1454 = vmax.f32 %v1438, 0.0
      %v1455 = vmax.f32 %v1439, 0.0
      %v1456 = vmax.f32 %v1440, 0.0
      %v1457 = vmax.f32 %v1441, 0.0
      %v1458 = vmax.f32 %v1442, 0.0
      %v1459 = vmax.f32 %v1443, 0.0
      %v1460 = vmax.f32 %v1444, 0.0
      %v1461 = vmax.f32 %v1445, 0.0
      %v1462 = vmax.f32 %v1446, 0.0
      %v1463 = vmax.f32 %v1447, 0.0
      %v1464 = vmax.f32 %v1448, 0.0
      %v1465 = vmax.f32 %v1449, 0.0
      %v1466 = vpack.c.bf16 %v1451, %v1450
      %v1467 = vpack.c.bf16 %v1453, %v1452
      %v1468 = vpack.c.bf16 %v1455, %v1454
      %v1469 = vpack.c.bf16 %v1457, %v1456
      %v1470 = vpack.c.bf16 %v1459, %v1458
      %v1471 = vpack.c.bf16 %v1461, %v1460
      %v1472 = vpack.c.bf16 %v1463, %v1462
      %v1473 = vpack.c.bf16 %v1465, %v1464
      %v1482 = vunpack.c.l.b16 %v1466
      %v1483 = vunpack.c.h.b16 %v1466
      %v1484 = vunpack.c.l.b16 %v1467
      %v1485 = vunpack.c.h.b16 %v1467
      %v1486 = vunpack.c.l.b16 %v1468
      %v1487 = vunpack.c.h.b16 %v1468
      %v1488 = vunpack.c.l.b16 %v1469
      %v1489 = vunpack.c.h.b16 %v1469
      %v1490 = vunpack.c.l.b16 %v1470
      %v1491 = vunpack.c.h.b16 %v1470
      %v1492 = vunpack.c.l.b16 %v1471
      %v1493 = vunpack.c.h.b16 %v1471
      %v1494 = vunpack.c.l.b16 %v1472
      %v1495 = vunpack.c.h.b16 %v1472
      %v1496 = vunpack.c.l.b16 %v1473
      %v1497 = vunpack.c.h.b16 %v1473
      %v1498 = vpack.c.b16 %v1482, %v1482
      %v1499 = vpack.c.b16 %v1483, %v1483
      %v1500 = vpack.c.b16 %v1484, %v1484
      %v1501 = vpack.c.b16 %v1485, %v1485
      %v1502 = vpack.c.b16 %v1486, %v1486
      %v1503 = vpack.c.b16 %v1487, %v1487
      %v1504 = vpack.c.b16 %v1488, %v1488
      %v1505 = vpack.c.b16 %v1489, %v1489
      %v1506 = vpack.c.b16 %v1490, %v1490
      %v1507 = vpack.c.b16 %v1491, %v1491
      %v1508 = vpack.c.b16 %v1492, %v1492
      %v1509 = vpack.c.b16 %v1493, %v1493
      %v1510 = vpack.c.b16 %v1494, %v1494
      %v1511 = vpack.c.b16 %v1495, %v1495
      %v1512 = vpack.c.b16 %v1496, %v1496
      %v1513 = vpack.c.b16 %v1497, %v1497
      %v1515 = vshrl.u32 %v1498, 16
      %v1517 = vrot.slane %v1515, 4
      %v1518 = vshll.u32 %v1498, 16
      %v1520 = vrot.slane %v1518, 5
      %v1521 = vor.u32 %v1517, %v1520
      %v1522 = vrot.slane %v1521, 4
      %v1524 = vshll.u32 %v1499, 16
      %v1526 = vrot.slane %v1524, 5
      %v1527 = vsel %vm501, %v1522, %v1526
      %v1529 = vshrl.u32 %v1500, 16
      %v1531 = vrot.slane %v1529, 4
      %v1532 = vshll.u32 %v1500, 16
      %v1534 = vrot.slane %v1532, 5
      %v1535 = vor.u32 %v1531, %v1534
      %v1536 = vrot.slane %v1535, 4
      %v1538 = vshll.u32 %v1501, 16
      %v1540 = vrot.slane %v1538, 5
      %v1541 = vsel %vm501, %v1536, %v1540
      %v1543 = vshrl.u32 %v1502, 16
      %v1545 = vrot.slane %v1543, 4
      %v1546 = vshll.u32 %v1502, 16
      %v1548 = vrot.slane %v1546, 5
      %v1549 = vor.u32 %v1545, %v1548
      %v1550 = vrot.slane %v1549, 4
      %v1552 = vshll.u32 %v1503, 16
      %v1554 = vrot.slane %v1552, 5
      %v1555 = vsel %vm501, %v1550, %v1554
      %v1557 = vshrl.u32 %v1504, 16
      %v1559 = vrot.slane %v1557, 4
      %v1560 = vshll.u32 %v1504, 16
      %v1562 = vrot.slane %v1560, 5
      %v1563 = vor.u32 %v1559, %v1562
      %v1564 = vrot.slane %v1563, 4
      %v1566 = vshll.u32 %v1505, 16
      %v1568 = vrot.slane %v1566, 5
      %v1569 = vsel %vm501, %v1564, %v1568
      %v1571 = vshrl.u32 %v1506, 16
      %v1573 = vrot.slane %v1571, 4
      %v1574 = vshll.u32 %v1506, 16
      %v1576 = vrot.slane %v1574, 5
      %v1577 = vor.u32 %v1573, %v1576
      %v1578 = vrot.slane %v1577, 4
      %v1580 = vshll.u32 %v1507, 16
      %v1582 = vrot.slane %v1580, 5
      %v1583 = vsel %vm501, %v1578, %v1582
      %v1585 = vshrl.u32 %v1508, 16
      %v1587 = vrot.slane %v1585, 4
      %v1588 = vshll.u32 %v1508, 16
      %v1590 = vrot.slane %v1588, 5
      %v1591 = vor.u32 %v1587, %v1590
      %v1592 = vrot.slane %v1591, 4
      %v1594 = vshll.u32 %v1509, 16
      %v1596 = vrot.slane %v1594, 5
      %v1597 = vsel %vm501, %v1592, %v1596
      %v1599 = vshrl.u32 %v1510, 16
      %v1601 = vrot.slane %v1599, 4
      %v1602 = vshll.u32 %v1510, 16
      %v1604 = vrot.slane %v1602, 5
      %v1605 = vor.u32 %v1601, %v1604
      %v1606 = vrot.slane %v1605, 4
      %v1608 = vshll.u32 %v1511, 16
      %v1610 = vrot.slane %v1608, 5
      %v1611 = vsel %vm501, %v1606, %v1610
      %v1613 = vshrl.u32 %v1512, 16
      %v1615 = vrot.slane %v1613, 4
      %v1616 = vshll.u32 %v1512, 16
      %v1618 = vrot.slane %v1616, 5
      %v1619 = vor.u32 %v1615, %v1618
      %v1620 = vrot.slane %v1619, 4
      %v1622 = vshll.u32 %v1513, 16
      %v1624 = vrot.slane %v1622, 5
      %v1625 = vsel %vm501, %v1620, %v1624
      %s1626 = scalar_lea.vmem %s4, 256
      %v1627 = vld [vmem:[%s1626] sm:$0xf]
      %v1628 = vld [vmem:[%s1626 + $0x4] sm:$0xf]
      %v1629 = vld [vmem:[%s1626 + $0x8] sm:$0xf]
      %v1630 = vld [vmem:[%s1626 + $0xc] sm:$0xf]
      %v1631 = vld [vmem:[%s1626 + $0x10] sm:$0xf]
      %v1632 = vld [vmem:[%s1626 + $0x14] sm:$0xf]
      %v1633 = vld [vmem:[%s1626 + $0x18] sm:$0xf]
      %v1634 = vld [vmem:[%s1626 + $0x1c] sm:$0xf]
      %v1635 = vld [vmem:[%s1626 + $0x20] sm:$0xf]
      %v1636 = vld [vmem:[%s1626 + $0x24] sm:$0xf]
      %v1637 = vld [vmem:[%s1626 + $0x28] sm:$0xf]
      %v1638 = vld [vmem:[%s1626 + $0x2c] sm:$0xf]
      %v1639 = vld [vmem:[%s1626 + $0x30] sm:$0xf]
      %v1640 = vld [vmem:[%s1626 + $0x34] sm:$0xf]
      %v1641 = vld [vmem:[%s1626 + $0x38] sm:$0xf]
      %v1642 = vld [vmem:[%s1626 + $0x3c] sm:$0xf]
      %v1643 = vunpack.c.l.b16 %v1527
      %v1644 = vunpack.c.l.b16 %v1541
      %v1645 = vunpack.c.l.b16 %v1555
      %v1646 = vunpack.c.l.b16 %v1569
      %v1647 = vunpack.c.l.b16 %v1583
      %v1648 = vunpack.c.l.b16 %v1597
      %v1649 = vunpack.c.l.b16 %v1611
      %v1650 = vunpack.c.l.b16 %v1625
      %v1651 = vpack.c.b16 %v1644, %v1643
      %v1652 = vpack.c.b16 %v1646, %v1645
      %v1653 = vpack.c.b16 %v1648, %v1647
      %v1654 = vpack.c.b16 %v1650, %v1649
      %v1675 = vunpack.c.l.b16 %v1627
      %v1676 = vunpack.c.l.b16 %v1628
      %v1677 = vunpack.c.l.b16 %v1629
      %v1678 = vunpack.c.l.b16 %v1630
      %v1679 = vunpack.c.l.b16 %v1631
      %v1680 = vunpack.c.l.b16 %v1632
      %v1681 = vunpack.c.l.b16 %v1633
      %v1682 = vunpack.c.l.b16 %v1634
      %v1683 = vunpack.c.l.b16 %v1635
      %v1684 = vunpack.c.l.b16 %v1636
      %v1685 = vunpack.c.l.b16 %v1637
      %v1686 = vunpack.c.l.b16 %v1638
      %v1687 = vunpack.c.l.b16 %v1639
      %v1688 = vunpack.c.l.b16 %v1640
      %v1689 = vunpack.c.l.b16 %v1641
      %v1690 = vunpack.c.l.b16 %v1642
      %v1691 = vpack.c.b16 %v1676, %v1675
      %v1692 = vpack.c.b16 %v1678, %v1677
      %v1693 = vpack.c.b16 %v1680, %v1679
      %v1694 = vpack.c.b16 %v1682, %v1681
      %v1695 = vpack.c.b16 %v1684, %v1683
      %v1696 = vpack.c.b16 %v1686, %v1685
      %v1697 = vpack.c.b16 %v1688, %v1687
      %v1698 = vpack.c.b16 %v1690, %v1689
      %1707 = vmatprep.subr.bf16.mxu0 0
      %1708 = vmatpush1.bf16.msra.mxu0 %v1698
      %1709 = vmatprep.subr.bf16.mxu0 0
      %1710 = vmatpush1.bf16.msra.mxu0 %v1697
      %1711 = vmatprep.subr.bf16.mxu0 0
      %1712 = vmatpush1.bf16.msra.mxu0 %v1696
      %1713 = vmatprep.subr.bf16.mxu0 0
      %1714 = vmatpush1.bf16.msra.mxu0 %v1695
      %1715 = vmatprep.subr.bf16.mxu0 0
      %1716 = vmatpush1.bf16.msra.mxu0 %v1694
      %1717 = vmatprep.subr.bf16.mxu0 0
      %1718 = vmatpush1.bf16.msra.mxu0 %v1693
      %1719 = vmatprep.subr.bf16.mxu0 0
      %1720 = vmatpush1.bf16.msra.mxu0 %v1692
      %1721 = vmatprep.subr.bf16.mxu0 0
      %1722 = vmatpush1.bf16.msra.mxu0 %v1691
      %1723 = vmatprep.subr.bf16.mxu0 0
      %1724 = vmatpush2.bf16.msra.mxu0 0
      %1725 = vmatprep.subr.bf16.mxu0 0
      %1726 = vmatpush2.bf16.msra.mxu0 0
      %1727 = vmatprep.subr.bf16.mxu0 0
      %1728 = vmatpush2.bf16.msra.mxu0 0
      %1729 = vmatprep.subr.bf16.mxu0 0
      %1730 = vmatpush2.bf16.msra.mxu0 0
      %1731 = vmatprep.subr.bf16.mxu0 0
      %1732 = vmatpush2.bf16.msra.mxu0 0
      %1733 = vmatprep.subr.bf16.mxu0 0
      %1734 = vmatpush2.bf16.msra.mxu0 0
      %1735 = vmatprep.subr.bf16.mxu0 0
      %1736 = vmatpush2.bf16.msra.mxu0 0
      %1737 = vmatprep.subr.bf16.mxu0 0
      %1738 = vmatpush2.bf16.msra.mxu0 0
      %1739 = vmatprep.mubr.bf16.mxu0 0
      %1740 = vmatmul.mubr.bf16.gmra.mxu0 %v1651
      %v1741 = vpop.f32.mrf.mxu0
      %v1742 = vadd.f32 0.0, %v1741
      %v1743 = vpop.f32.mrf.mxu0
      %v1744 = vpop.f32.mrf.mxu0
      %v1745 = vadd.f32 0.0, %v1744
      %v1746 = vpop.f32.mrf.mxu0
      %1747 = vmatprep.mubr.bf16.mxu0 0
      %1748 = vmatmul.mubr.bf16.gmra.mxu0 %v1652
      %v1749 = vpop.f32.mrf.mxu0
      %v1750 = vadd.f32 0.0, %v1749
      %v1751 = vpop.f32.mrf.mxu0
      %v1752 = vpop.f32.mrf.mxu0
      %v1753 = vadd.f32 0.0, %v1752
      %v1754 = vpop.f32.mrf.mxu0
      %1755 = vmatprep.mubr.bf16.mxu0 0
      %1756 = vmatmul.mubr.bf16.gmra.mxu0 %v1653
      %v1757 = vpop.f32.mrf.mxu0
      %v1758 = vadd.f32 0.0, %v1757
      %v1759 = vpop.f32.mrf.mxu0
      %v1760 = vpop.f32.mrf.mxu0
      %v1761 = vadd.f32 0.0, %v1760
      %v1762 = vpop.f32.mrf.mxu0
      %1763 = vmatprep.mubr.bf16.mxu0 0
      %1764 = vmatmul.mubr.bf16.gmra.mxu0 %v1654
      %v1765 = vpop.f32.mrf.mxu0
      %v1766 = vadd.f32 0.0, %v1765
      %v1767 = vpop.f32.mrf.mxu0
      %v1768 = vpop.f32.mrf.mxu0
      %v1769 = vadd.f32 0.0, %v1768
      %v1770 = vpop.f32.mrf.mxu0
      %1771 = vdwg.mxu0
      %v1772 = vadd.f32 %v1378, %v1742
      %v1773 = vadd.f32 %v1379, %v1745
      %v1774 = vadd.f32 %v1380, %v1750
      %v1775 = vadd.f32 %v1381, %v1753
      %v1776 = vadd.f32 %v1382, %v1758
      %v1777 = vadd.f32 %v1383, %v1761
      %v1778 = vadd.f32 %v1384, %v1766
      %v1779 = vadd.f32 %v1385, %v1769
      %v1780 = vld [vmem:[%s1167] sm:$0xe]
      %v1781 = vld [vmem:[%s1167 + $0x8] sm:$0xe]
      %v1782 = vld [vmem:[%s1167 + $0x10] sm:$0xe]
      %v1783 = vld [vmem:[%s1167 + $0x18] sm:$0xe]
      %v1784 = vld [vmem:[%s1167 + $0x20] sm:$0xe]
      %v1785 = vld [vmem:[%s1167 + $0x28] sm:$0xe]
      %v1786 = vld [vmem:[%s1167 + $0x30] sm:$0xe]
      %v1787 = vld [vmem:[%s1167 + $0x38] sm:$0xe]
      %v1788 = vunpack.c.l.bf16 %v1780
      %v1789 = vunpack.c.l.bf16 %v1781
      %v1790 = vunpack.c.l.bf16 %v1782
      %v1791 = vunpack.c.l.bf16 %v1783
      %v1792 = vunpack.c.l.bf16 %v1784
      %v1793 = vunpack.c.l.bf16 %v1785
      %v1794 = vunpack.c.l.bf16 %v1786
      %v1795 = vunpack.c.l.bf16 %v1787
      %v1796 = vmul.f32 %v1788, %v328
      %v1797 = vmul.f32 %v1789, %v328
      %v1798 = vmul.f32 %v1790, %v328
      %v1799 = vmul.f32 %v1791, %v328
      %v1800 = vmul.f32 %v1792, %v328
      %v1801 = vmul.f32 %v1793, %v328
      %v1802 = vmul.f32 %v1794, %v328
      %v1803 = vmul.f32 %v1795, %v328
      %v1804 = vadd.f32 %v1796, %v342
      %v1805 = vadd.f32 %v1797, %v342
      %v1806 = vadd.f32 %v1798, %v342
      %v1807 = vadd.f32 %v1799, %v342
      %v1808 = vadd.f32 %v1800, %v342
      %v1809 = vadd.f32 %v1801, %v342
      %v1810 = vadd.f32 %v1802, %v342
      %v1811 = vadd.f32 %v1803, %v342
      %v1812 = vmax.f32 %v1804, 0.0
      %v1813 = vmax.f32 %v1805, 0.0
      %v1814 = vmax.f32 %v1806, 0.0
      %v1815 = vmax.f32 %v1807, 0.0
      %v1816 = vmax.f32 %v1808, 0.0
      %v1817 = vmax.f32 %v1809, 0.0
      %v1818 = vmax.f32 %v1810, 0.0
      %v1819 = vmax.f32 %v1811, 0.0
      %v1836 = vrot.slane %v1812, 2
      %v1837 = vrot.slane %v1451, 2
      %v1838 = vsel %vm956, %v1836, %v1837
      %v1839 = vrot.slane %v1813, 2
      %v1840 = vrot.slane %v1453, 2
      %v1841 = vsel %vm956, %v1839, %v1840
      %v1842 = vrot.slane %v1814, 2
      %v1843 = vrot.slane %v1455, 2
      %v1844 = vsel %vm956, %v1842, %v1843
      %v1845 = vrot.slane %v1815, 2
      %v1846 = vrot.slane %v1457, 2
      %v1847 = vsel %vm956, %v1845, %v1846
      %v1848 = vrot.slane %v1816, 2
      %v1849 = vrot.slane %v1459, 2
      %v1850 = vsel %vm956, %v1848, %v1849
      %v1851 = vrot.slane %v1817, 2
      %v1852 = vrot.slane %v1461, 2
      %v1853 = vsel %vm956, %v1851, %v1852
      %v1854 = vrot.slane %v1818, 2
      %v1855 = vrot.slane %v1463, 2
      %v1856 = vsel %vm956, %v1854, %v1855
      %v1857 = vrot.slane %v1819, 2
      %v1858 = vrot.slane %v1465, 2
      %v1859 = vsel %vm956, %v1857, %v1858
      %v1868 = vsel %vm937, %v1838, 0.0
      %v1869 = vsel %vm937, %v1841, 0.0
      %v1870 = vsel %vm937, %v1844, 0.0
      %v1871 = vsel %vm937, %v1847, 0.0
      %v1872 = vsel %vm937, %v1850, 0.0
      %v1873 = vsel %vm937, %v1853, 0.0
      %v1874 = vsel %vm937, %v1856, 0.0
      %v1875 = vsel %vm937, %v1859, 0.0
      %v1876 = vpack.c.bf16 %v1868, %v1868
      %v1877 = vpack.c.bf16 %v1869, %v1869
      %v1878 = vpack.c.bf16 %v1870, %v1870
      %v1879 = vpack.c.bf16 %v1871, %v1871
      %v1880 = vpack.c.bf16 %v1872, %v1872
      %v1881 = vpack.c.bf16 %v1873, %v1873
      %v1882 = vpack.c.bf16 %v1874, %v1874
      %v1883 = vpack.c.bf16 %v1875, %v1875
      %s1884 = scalar_lea.vmem %s4, 320
      %v1885 = vld [vmem:[%s1884] sm:$0xf]
      %v1886 = vld [vmem:[%s1884 + $0x4] sm:$0xf]
      %v1887 = vld [vmem:[%s1884 + $0x8] sm:$0xf]
      %v1888 = vld [vmem:[%s1884 + $0xc] sm:$0xf]
      %v1889 = vld [vmem:[%s1884 + $0x10] sm:$0xf]
      %v1890 = vld [vmem:[%s1884 + $0x14] sm:$0xf]
      %v1891 = vld [vmem:[%s1884 + $0x18] sm:$0xf]
      %v1892 = vld [vmem:[%s1884 + $0x1c] sm:$0xf]
      %v1893 = vld [vmem:[%s1884 + $0x20] sm:$0xf]
      %v1894 = vld [vmem:[%s1884 + $0x24] sm:$0xf]
      %v1895 = vld [vmem:[%s1884 + $0x28] sm:$0xf]
      %v1896 = vld [vmem:[%s1884 + $0x2c] sm:$0xf]
      %v1897 = vld [vmem:[%s1884 + $0x30] sm:$0xf]
      %v1898 = vld [vmem:[%s1884 + $0x34] sm:$0xf]
      %v1899 = vld [vmem:[%s1884 + $0x38] sm:$0xf]
      %v1900 = vld [vmem:[%s1884 + $0x3c] sm:$0xf]
      %v1909 = vunpack.c.l.b16 %v1876
      %v1910 = vunpack.c.l.b16 %v1877
      %v1911 = vunpack.c.l.b16 %v1878
      %v1912 = vunpack.c.l.b16 %v1879
      %v1913 = vunpack.c.l.b16 %v1880
      %v1914 = vunpack.c.l.b16 %v1881
      %v1915 = vunpack.c.l.b16 %v1882
      %v1916 = vunpack.c.l.b16 %v1883
      %v1917 = vpack.c.b16 %v1910, %v1909
      %v1918 = vpack.c.b16 %v1912, %v1911
      %v1919 = vpack.c.b16 %v1914, %v1913
      %v1920 = vpack.c.b16 %v1916, %v1915
      %v1941 = vunpack.c.l.b16 %v1885
      %v1942 = vunpack.c.l.b16 %v1886
      %v1943 = vunpack.c.l.b16 %v1887
      %v1944 = vunpack.c.l.b16 %v1888
      %v1945 = vunpack.c.l.b16 %v1889
      %v1946 = vunpack.c.l.b16 %v1890
      %v1947 = vunpack.c.l.b16 %v1891
      %v1948 = vunpack.c.l.b16 %v1892
      %v1949 = vunpack.c.l.b16 %v1893
      %v1950 = vunpack.c.l.b16 %v1894
      %v1951 = vunpack.c.l.b16 %v1895
      %v1952 = vunpack.c.l.b16 %v1896
      %v1953 = vunpack.c.l.b16 %v1897
      %v1954 = vunpack.c.l.b16 %v1898
      %v1955 = vunpack.c.l.b16 %v1899
      %v1956 = vunpack.c.l.b16 %v1900
      %v1957 = vpack.c.b16 %v1942, %v1941
      %v1958 = vpack.c.b16 %v1944, %v1943
      %v1959 = vpack.c.b16 %v1946, %v1945
      %v1960 = vpack.c.b16 %v1948, %v1947
      %v1961 = vpack.c.b16 %v1950, %v1949
      %v1962 = vpack.c.b16 %v1952, %v1951
      %v1963 = vpack.c.b16 %v1954, %v1953
      %v1964 = vpack.c.b16 %v1956, %v1955
      %1973 = vmatprep.subr.bf16.mxu0 0
      %1974 = vmatpush1.bf16.msra.mxu0 %v1964
      %1975 = vmatprep.subr.bf16.mxu0 0
      %1976 = vmatpush1.bf16.msra.mxu0 %v1963
      %1977 = vmatprep.subr.bf16.mxu0 0
      %1978 = vmatpush1.bf16.msra.mxu0 %v1962
      %1979 = vmatprep.subr.bf16.mxu0 0
      %1980 = vmatpush1.bf16.msra.mxu0 %v1961
      %1981 = vmatprep.subr.bf16.mxu0 0
      %1982 = vmatpush1.bf16.msra.mxu0 %v1960
      %1983 = vmatprep.subr.bf16.mxu0 0
      %1984 = vmatpush1.bf16.msra.mxu0 %v1959
      %1985 = vmatprep.subr.bf16.mxu0 0
      %1986 = vmatpush1.bf16.msra.mxu0 %v1958
      %1987 = vmatprep.subr.bf16.mxu0 0
      %1988 = vmatpush1.bf16.msra.mxu0 %v1957
      %1989 = vmatprep.subr.bf16.mxu0 0
      %1990 = vmatpush2.bf16.msra.mxu0 0
      %1991 = vmatprep.subr.bf16.mxu0 0
      %1992 = vmatpush2.bf16.msra.mxu0 0
      %1993 = vmatprep.subr.bf16.mxu0 0
      %1994 = vmatpush2.bf16.msra.mxu0 0
      %1995 = vmatprep.subr.bf16.mxu0 0
      %1996 = vmatpush2.bf16.msra.mxu0 0
      %1997 = vmatprep.subr.bf16.mxu0 0
      %1998 = vmatpush2.bf16.msra.mxu0 0
      %1999 = vmatprep.subr.bf16.mxu0 0
      %2000 = vmatpush2.bf16.msra.mxu0 0
      %2001 = vmatprep.subr.bf16.mxu0 0
      %2002 = vmatpush2.bf16.msra.mxu0 0
      %2003 = vmatprep.subr.bf16.mxu0 0
      %2004 = vmatpush2.bf16.msra.mxu0 0
      %2005 = vmatprep.mubr.bf16.mxu0 0
      %2006 = vmatmul.mubr.bf16.gmra.mxu0 %v1917
      %v2007 = vpop.f32.mrf.mxu0
      %v2008 = vadd.f32 0.0, %v2007
      %v2009 = vpop.f32.mrf.mxu0
      %v2010 = vpop.f32.mrf.mxu0
      %v2011 = vadd.f32 0.0, %v2010
      %v2012 = vpop.f32.mrf.mxu0
      %2013 = vmatprep.mubr.bf16.mxu0 0
      %2014 = vmatmul.mubr.bf16.gmra.mxu0 %v1918
      %v2015 = vpop.f32.mrf.mxu0
      %v2016 = vadd.f32 0.0, %v2015
      %v2017 = vpop.f32.mrf.mxu0
      %v2018 = vpop.f32.mrf.mxu0
      %v2019 = vadd.f32 0.0, %v2018
      %v2020 = vpop.f32.mrf.mxu0
      %2021 = vmatprep.mubr.bf16.mxu0 0
      %2022 = vmatmul.mubr.bf16.gmra.mxu0 %v1919
      %v2023 = vpop.f32.mrf.mxu0
      %v2024 = vadd.f32 0.0, %v2023
      %v2025 = vpop.f32.mrf.mxu0
      %v2026 = vpop.f32.mrf.mxu0
      %v2027 = vadd.f32 0.0, %v2026
      %v2028 = vpop.f32.mrf.mxu0
      %2029 = vmatprep.mubr.bf16.mxu0 0
      %2030 = vmatmul.mubr.bf16.gmra.mxu0 %v1920
      %v2031 = vpop.f32.mrf.mxu0
      %v2032 = vadd.f32 0.0, %v2031
      %v2033 = vpop.f32.mrf.mxu0
      %v2034 = vpop.f32.mrf.mxu0
      %v2035 = vadd.f32 0.0, %v2034
      %v2036 = vpop.f32.mrf.mxu0
      %2037 = vdwg.mxu0
      %v2038 = vadd.f32 %v1772, %v2008
      %v2039 = vadd.f32 %v1773, %v2011
      %v2040 = vadd.f32 %v1774, %v2016
      %v2041 = vadd.f32 %v1775, %v2019
      %v2042 = vadd.f32 %v1776, %v2024
      %v2043 = vadd.f32 %v1777, %v2027
      %v2044 = vadd.f32 %v1778, %v2032
      %v2045 = vadd.f32 %v1779, %v2035
      %s2046 = scalar_lea.vmem %s253, 16
      %v2047 = vld [vmem:[%s2046] sm:$0xf]
      %v2048 = vld [vmem:[%s2046 + $0x8] sm:$0xf]
      %v2049 = vld [vmem:[%s2046 + $0x10] sm:$0xf]
      %v2050 = vld [vmem:[%s2046 + $0x18] sm:$0xf]
      %v2051 = vld [vmem:[%s2046 + $0x20] sm:$0xf]
      %v2052 = vld [vmem:[%s2046 + $0x28] sm:$0xf]
      %v2053 = vld [vmem:[%s2046 + $0x30] sm:$0xf]
      %v2054 = vld [vmem:[%s2046 + $0x38] sm:$0xf]
      %v2055 = vunpack.c.l.bf16 %v2047
      %v2056 = vunpack.c.l.bf16 %v2048
      %v2057 = vunpack.c.l.bf16 %v2049
      %v2058 = vunpack.c.l.bf16 %v2050
      %v2059 = vunpack.c.l.bf16 %v2051
      %v2060 = vunpack.c.l.bf16 %v2052
      %v2061 = vunpack.c.l.bf16 %v2053
      %v2062 = vunpack.c.l.bf16 %v2054
      %v2063 = vmul.f32 %v2055, %v328
      %v2064 = vmul.f32 %v2056, %v328
      %v2065 = vmul.f32 %v2057, %v328
      %v2066 = vmul.f32 %v2058, %v328
      %v2067 = vmul.f32 %v2059, %v328
      %v2068 = vmul.f32 %v2060, %v328
      %v2069 = vmul.f32 %v2061, %v328
      %v2070 = vmul.f32 %v2062, %v328
      %v2071 = vadd.f32 %v2063, %v342
      %v2072 = vadd.f32 %v2064, %v342
      %v2073 = vadd.f32 %v2065, %v342
      %v2074 = vadd.f32 %v2066, %v342
      %v2075 = vadd.f32 %v2067, %v342
      %v2076 = vadd.f32 %v2068, %v342
      %v2077 = vadd.f32 %v2069, %v342
      %v2078 = vadd.f32 %v2070, %v342
      %v2079 = vmax.f32 %v2071, 0.0
      %v2080 = vmax.f32 %v2072, 0.0
      %v2081 = vmax.f32 %v2073, 0.0
      %v2082 = vmax.f32 %v2074, 0.0
      %v2083 = vmax.f32 %v2075, 0.0
      %v2084 = vmax.f32 %v2076, 0.0
      %v2085 = vmax.f32 %v2077, 0.0
      %v2086 = vmax.f32 %v2078, 0.0
      %v2087 = vsel %vm362, %v2079, 0.0
      %v2088 = vsel %vm362, %v2080, 0.0
      %v2089 = vsel %vm362, %v2081, 0.0
      %v2090 = vsel %vm362, %v2082, 0.0
      %v2091 = vsel %vm362, %v2083, 0.0
      %v2092 = vsel %vm362, %v2084, 0.0
      %v2093 = vsel %vm362, %v2085, 0.0
      %v2094 = vsel %vm361, %v2086, 0.0
      %v2095 = vpack.c.bf16 %v2087, %v2087
      %v2096 = vpack.c.bf16 %v2088, %v2088
      %v2097 = vpack.c.bf16 %v2089, %v2089
      %v2098 = vpack.c.bf16 %v2090, %v2090
      %v2099 = vpack.c.bf16 %v2091, %v2091
      %v2100 = vpack.c.bf16 %v2092, %v2092
      %v2101 = vpack.c.bf16 %v2093, %v2093
      %v2102 = vpack.c.bf16 %v2094, %v2094
      %s2103 = scalar_lea.vmem %s4, 384
      %v2104 = vld [vmem:[%s2103] sm:$0xf]
      %v2105 = vld [vmem:[%s2103 + $0x4] sm:$0xf]
      %v2106 = vld [vmem:[%s2103 + $0x8] sm:$0xf]
      %v2107 = vld [vmem:[%s2103 + $0xc] sm:$0xf]
      %v2108 = vld [vmem:[%s2103 + $0x10] sm:$0xf]
      %v2109 = vld [vmem:[%s2103 + $0x14] sm:$0xf]
      %v2110 = vld [vmem:[%s2103 + $0x18] sm:$0xf]
      %v2111 = vld [vmem:[%s2103 + $0x1c] sm:$0xf]
      %v2112 = vld [vmem:[%s2103 + $0x20] sm:$0xf]
      %v2113 = vld [vmem:[%s2103 + $0x24] sm:$0xf]
      %v2114 = vld [vmem:[%s2103 + $0x28] sm:$0xf]
      %v2115 = vld [vmem:[%s2103 + $0x2c] sm:$0xf]
      %v2116 = vld [vmem:[%s2103 + $0x30] sm:$0xf]
      %v2117 = vld [vmem:[%s2103 + $0x34] sm:$0xf]
      %v2118 = vld [vmem:[%s2103 + $0x38] sm:$0xf]
      %v2119 = vld [vmem:[%s2103 + $0x3c] sm:$0xf]
      %v2128 = vunpack.c.l.b16 %v2095
      %v2129 = vunpack.c.l.b16 %v2096
      %v2130 = vunpack.c.l.b16 %v2097
      %v2131 = vunpack.c.l.b16 %v2098
      %v2132 = vunpack.c.l.b16 %v2099
      %v2133 = vunpack.c.l.b16 %v2100
      %v2134 = vunpack.c.l.b16 %v2101
      %v2135 = vunpack.c.l.b16 %v2102
      %v2136 = vpack.c.b16 %v2129, %v2128
      %v2137 = vpack.c.b16 %v2131, %v2130
      %v2138 = vpack.c.b16 %v2133, %v2132
      %v2139 = vpack.c.b16 %v2135, %v2134
      %v2160 = vunpack.c.l.b16 %v2104
      %v2161 = vunpack.c.l.b16 %v2105
      %v2162 = vunpack.c.l.b16 %v2106
      %v2163 = vunpack.c.l.b16 %v2107
      %v2164 = vunpack.c.l.b16 %v2108
      %v2165 = vunpack.c.l.b16 %v2109
      %v2166 = vunpack.c.l.b16 %v2110
      %v2167 = vunpack.c.l.b16 %v2111
      %v2168 = vunpack.c.l.b16 %v2112
      %v2169 = vunpack.c.l.b16 %v2113
      %v2170 = vunpack.c.l.b16 %v2114
      %v2171 = vunpack.c.l.b16 %v2115
      %v2172 = vunpack.c.l.b16 %v2116
      %v2173 = vunpack.c.l.b16 %v2117
      %v2174 = vunpack.c.l.b16 %v2118
      %v2175 = vunpack.c.l.b16 %v2119
      %v2176 = vpack.c.b16 %v2161, %v2160
      %v2177 = vpack.c.b16 %v2163, %v2162
      %v2178 = vpack.c.b16 %v2165, %v2164
      %v2179 = vpack.c.b16 %v2167, %v2166
      %v2180 = vpack.c.b16 %v2169, %v2168
      %v2181 = vpack.c.b16 %v2171, %v2170
      %v2182 = vpack.c.b16 %v2173, %v2172
      %v2183 = vpack.c.b16 %v2175, %v2174
      %2192 = vmatprep.subr.bf16.mxu0 0
      %2193 = vmatpush1.bf16.msra.mxu0 %v2183
      %2194 = vmatprep.subr.bf16.mxu0 0
      %2195 = vmatpush1.bf16.msra.mxu0 %v2182
      %2196 = vmatprep.subr.bf16.mxu0 0
      %2197 = vmatpush1.bf16.msra.mxu0 %v2181
      %2198 = vmatprep.subr.bf16.mxu0 0
      %2199 = vmatpush1.bf16.msra.mxu0 %v2180
      %2200 = vmatprep.subr.bf16.mxu0 0
      %2201 = vmatpush1.bf16.msra.mxu0 %v2179
      %2202 = vmatprep.subr.bf16.mxu0 0
      %2203 = vmatpush1.bf16.msra.mxu0 %v2178
      %2204 = vmatprep.subr.bf16.mxu0 0
      %2205 = vmatpush1.bf16.msra.mxu0 %v2177
      %2206 = vmatprep.subr.bf16.mxu0 0
      %2207 = vmatpush1.bf16.msra.mxu0 %v2176
      %2208 = vmatprep.subr.bf16.mxu0 0
      %2209 = vmatpush2.bf16.msra.mxu0 0
      %2210 = vmatprep.subr.bf16.mxu0 0
      %2211 = vmatpush2.bf16.msra.mxu0 0
      %2212 = vmatprep.subr.bf16.mxu0 0
      %2213 = vmatpush2.bf16.msra.mxu0 0
      %2214 = vmatprep.subr.bf16.mxu0 0
      %2215 = vmatpush2.bf16.msra.mxu0 0
      %2216 = vmatprep.subr.bf16.mxu0 0
      %2217 = vmatpush2.bf16.msra.mxu0 0
      %2218 = vmatprep.subr.bf16.mxu0 0
      %2219 = vmatpush2.bf16.msra.mxu0 0
      %2220 = vmatprep.subr.bf16.mxu0 0
      %2221 = vmatpush2.bf16.msra.mxu0 0
      %2222 = vmatprep.subr.bf16.mxu0 0
      %2223 = vmatpush2.bf16.msra.mxu0 0
      %2224 = vmatprep.mubr.bf16.mxu0 0
      %2225 = vmatmul.mubr.bf16.gmra.mxu0 %v2136
      %v2226 = vpop.f32.mrf.mxu0
      %v2227 = vadd.f32 0.0, %v2226
      %v2228 = vpop.f32.mrf.mxu0
      %v2229 = vpop.f32.mrf.mxu0
      %v2230 = vadd.f32 0.0, %v2229
      %v2231 = vpop.f32.mrf.mxu0
      %2232 = vmatprep.mubr.bf16.mxu0 0
      %2233 = vmatmul.mubr.bf16.gmra.mxu0 %v2137
      %v2234 = vpop.f32.mrf.mxu0
      %v2235 = vadd.f32 0.0, %v2234
      %v2236 = vpop.f32.mrf.mxu0
      %v2237 = vpop.f32.mrf.mxu0
      %v2238 = vadd.f32 0.0, %v2237
      %v2239 = vpop.f32.mrf.mxu0
      %2240 = vmatprep.mubr.bf16.mxu0 0
      %2241 = vmatmul.mubr.bf16.gmra.mxu0 %v2138
      %v2242 = vpop.f32.mrf.mxu0
      %v2243 = vadd.f32 0.0, %v2242
      %v2244 = vpop.f32.mrf.mxu0
      %v2245 = vpop.f32.mrf.mxu0
      %v2246 = vadd.f32 0.0, %v2245
      %v2247 = vpop.f32.mrf.mxu0
      %2248 = vmatprep.mubr.bf16.mxu0 0
      %2249 = vmatmul.mubr.bf16.gmra.mxu0 %v2139
      %v2250 = vpop.f32.mrf.mxu0
      %v2251 = vadd.f32 0.0, %v2250
      %v2252 = vpop.f32.mrf.mxu0
      %v2253 = vpop.f32.mrf.mxu0
      %v2254 = vadd.f32 0.0, %v2253
      %v2255 = vpop.f32.mrf.mxu0
      %2256 = vdwg.mxu0
      %v2257 = vadd.f32 %v2038, %v2227
      %v2258 = vadd.f32 %v2039, %v2230
      %v2259 = vadd.f32 %v2040, %v2235
      %v2260 = vadd.f32 %v2041, %v2238
      %v2261 = vadd.f32 %v2042, %v2243
      %v2262 = vadd.f32 %v2043, %v2246
      %v2263 = vadd.f32 %v2044, %v2251
      %v2264 = vadd.f32 %v2045, %v2254
      %v2265 = vld [vmem:[%s2046] sm:$0xf]
      %v2266 = vld [vmem:[%s2046 + $0x4] sm:$0x1]
      %v2267 = vld [vmem:[%s2046 + $0x8] sm:$0xf]
      %v2268 = vld [vmem:[%s2046 + $0xc] sm:$0x1]
      %v2269 = vld [vmem:[%s2046 + $0x10] sm:$0xf]
      %v2270 = vld [vmem:[%s2046 + $0x14] sm:$0x1]
      %v2271 = vld [vmem:[%s2046 + $0x18] sm:$0xf]
      %v2272 = vld [vmem:[%s2046 + $0x1c] sm:$0x1]
      %v2273 = vld [vmem:[%s2046 + $0x20] sm:$0xf]
      %v2274 = vld [vmem:[%s2046 + $0x24] sm:$0x1]
      %v2275 = vld [vmem:[%s2046 + $0x28] sm:$0xf]
      %v2276 = vld [vmem:[%s2046 + $0x2c] sm:$0x1]
      %v2277 = vld [vmem:[%s2046 + $0x30] sm:$0xf]
      %v2278 = vld [vmem:[%s2046 + $0x34] sm:$0x1]
      %v2279 = vld [vmem:[%s2046 + $0x38] sm:$0xf]
      %v2280 = vld [vmem:[%s2046 + $0x3c] sm:$0x1]
      %v2281 = vunpack.c.l.bf16 %v2265
      %v2282 = vunpack.c.l.bf16 %v2266
      %v2283 = vunpack.c.l.bf16 %v2267
      %v2284 = vunpack.c.l.bf16 %v2268
      %v2285 = vunpack.c.l.bf16 %v2269
      %v2286 = vunpack.c.l.bf16 %v2270
      %v2287 = vunpack.c.l.bf16 %v2271
      %v2288 = vunpack.c.l.bf16 %v2272
      %v2289 = vunpack.c.l.bf16 %v2273
      %v2290 = vunpack.c.l.bf16 %v2274
      %v2291 = vunpack.c.l.bf16 %v2275
      %v2292 = vunpack.c.l.bf16 %v2276
      %v2293 = vunpack.c.l.bf16 %v2277
      %v2294 = vunpack.c.l.bf16 %v2278
      %v2295 = vunpack.c.l.bf16 %v2279
      %v2296 = vunpack.c.l.bf16 %v2280
      %v2297 = vmul.f32 %v2281, %v328
      %v2298 = vmul.f32 %v2282, %v328
      %v2299 = vmul.f32 %v2283, %v328
      %v2300 = vmul.f32 %v2284, %v328
      %v2301 = vmul.f32 %v2285, %v328
      %v2302 = vmul.f32 %v2286, %v328
      %v2303 = vmul.f32 %v2287, %v328
      %v2304 = vmul.f32 %v2288, %v328
      %v2305 = vmul.f32 %v2289, %v328
      %v2306 = vmul.f32 %v2290, %v328
      %v2307 = vmul.f32 %v2291, %v328
      %v2308 = vmul.f32 %v2292, %v328
      %v2309 = vmul.f32 %v2293, %v328
      %v2310 = vmul.f32 %v2294, %v328
      %v2311 = vmul.f32 %v2295, %v328
      %v2312 = vmul.f32 %v2296, %v328
      %v2313 = vadd.f32 %v2297, %v342
      %v2314 = vadd.f32 %v2298, %v342
      %v2315 = vadd.f32 %v2299, %v342
      %v2316 = vadd.f32 %v2300, %v342
      %v2317 = vadd.f32 %v2301, %v342
      %v2318 = vadd.f32 %v2302, %v342
      %v2319 = vadd.f32 %v2303, %v342
      %v2320 = vadd.f32 %v2304, %v342
      %v2321 = vadd.f32 %v2305, %v342
      %v2322 = vadd.f32 %v2306, %v342
      %v2323 = vadd.f32 %v2307, %v342
      %v2324 = vadd.f32 %v2308, %v342
      %v2325 = vadd.f32 %v2309, %v342
      %v2326 = vadd.f32 %v2310, %v342
      %v2327 = vadd.f32 %v2311, %v342
      %v2328 = vadd.f32 %v2312, %v342
      %v2329 = vmax.f32 %v2313, 0.0
      %v2330 = vmax.f32 %v2314, 0.0
      %v2331 = vmax.f32 %v2315, 0.0
      %v2332 = vmax.f32 %v2316, 0.0
      %v2333 = vmax.f32 %v2317, 0.0
      %v2334 = vmax.f32 %v2318, 0.0
      %v2335 = vmax.f32 %v2319, 0.0
      %v2336 = vmax.f32 %v2320, 0.0
      %v2337 = vmax.f32 %v2321, 0.0
      %v2338 = vmax.f32 %v2322, 0.0
      %v2339 = vmax.f32 %v2323, 0.0
      %v2340 = vmax.f32 %v2324, 0.0
      %v2341 = vmax.f32 %v2325, 0.0
      %v2342 = vmax.f32 %v2326, 0.0
      %v2343 = vmax.f32 %v2327, 0.0
      %v2344 = vmax.f32 %v2328, 0.0
      %v2345 = vsel 1, %v2329, 0.0
      %v2346 = vsel 1, %v2330, 0.0
      %v2347 = vsel 1, %v2331, 0.0
      %v2348 = vsel 1, %v2332, 0.0
      %v2349 = vsel 1, %v2333, 0.0
      %v2350 = vsel 1, %v2334, 0.0
      %v2351 = vsel 1, %v2335, 0.0
      %v2352 = vsel 1, %v2336, 0.0
      %v2353 = vsel 1, %v2337, 0.0
      %v2354 = vsel 1, %v2338, 0.0
      %v2355 = vsel 1, %v2339, 0.0
      %v2356 = vsel 1, %v2340, 0.0
      %v2357 = vsel 1, %v2341, 0.0
      %v2358 = vsel 1, %v2342, 0.0
      %v2359 = vsel 0, %v2343, 0.0
      %v2360 = vsel 0, %v2344, 0.0
      %v2361 = vpack.c.bf16 %v2346, %v2345
      %v2362 = vpack.c.bf16 %v2348, %v2347
      %v2363 = vpack.c.bf16 %v2350, %v2349
      %v2364 = vpack.c.bf16 %v2352, %v2351
      %v2365 = vpack.c.bf16 %v2354, %v2353
      %v2366 = vpack.c.bf16 %v2356, %v2355
      %v2367 = vpack.c.bf16 %v2358, %v2357
      %v2368 = vpack.c.bf16 %v2360, %v2359
      %v2377 = vunpack.c.l.b16 %v2361
      %v2378 = vunpack.c.h.b16 %v2361
      %v2379 = vunpack.c.l.b16 %v2362
      %v2380 = vunpack.c.h.b16 %v2362
      %v2381 = vunpack.c.l.b16 %v2363
      %v2382 = vunpack.c.h.b16 %v2363
      %v2383 = vunpack.c.l.b16 %v2364
      %v2384 = vunpack.c.h.b16 %v2364
      %v2385 = vunpack.c.l.b16 %v2365
      %v2386 = vunpack.c.h.b16 %v2365
      %v2387 = vunpack.c.l.b16 %v2366
      %v2388 = vunpack.c.h.b16 %v2366
      %v2389 = vunpack.c.l.b16 %v2367
      %v2390 = vunpack.c.h.b16 %v2367
      %v2391 = vunpack.c.l.b16 %v2368
      %v2392 = vunpack.c.h.b16 %v2368
      %v2393 = vpack.c.b16 %v2377, %v2377
      %v2394 = vpack.c.b16 %v2378, %v2378
      %v2395 = vpack.c.b16 %v2379, %v2379
      %v2396 = vpack.c.b16 %v2380, %v2380
      %v2397 = vpack.c.b16 %v2381, %v2381
      %v2398 = vpack.c.b16 %v2382, %v2382
      %v2399 = vpack.c.b16 %v2383, %v2383
      %v2400 = vpack.c.b16 %v2384, %v2384
      %v2401 = vpack.c.b16 %v2385, %v2385
      %v2402 = vpack.c.b16 %v2386, %v2386
      %v2403 = vpack.c.b16 %v2387, %v2387
      %v2404 = vpack.c.b16 %v2388, %v2388
      %v2405 = vpack.c.b16 %v2389, %v2389
      %v2406 = vpack.c.b16 %v2390, %v2390
      %v2407 = vpack.c.b16 %v2391, %v2391
      %v2408 = vpack.c.b16 %v2392, %v2392
      %v2410 = vshrl.u32 %v2393, 16
      %v2412 = vrot.slane %v2410, 4
      %v2413 = vshll.u32 %v2393, 16
      %v2415 = vrot.slane %v2413, 5
      %v2416 = vor.u32 %v2412, %v2415
      %v2417 = vrot.slane %v2416, 4
      %v2419 = vshll.u32 %v2394, 16
      %v2421 = vrot.slane %v2419, 5
      %v2422 = vsel %vm501, %v2417, %v2421
      %v2424 = vshrl.u32 %v2395, 16
      %v2426 = vrot.slane %v2424, 4
      %v2427 = vshll.u32 %v2395, 16
      %v2429 = vrot.slane %v2427, 5
      %v2430 = vor.u32 %v2426, %v2429
      %v2431 = vrot.slane %v2430, 4
      %v2433 = vshll.u32 %v2396, 16
      %v2435 = vrot.slane %v2433, 5
      %v2436 = vsel %vm501, %v2431, %v2435
      %v2438 = vshrl.u32 %v2397, 16
      %v2440 = vrot.slane %v2438, 4
      %v2441 = vshll.u32 %v2397, 16
      %v2443 = vrot.slane %v2441, 5
      %v2444 = vor.u32 %v2440, %v2443
      %v2445 = vrot.slane %v2444, 4
      %v2447 = vshll.u32 %v2398, 16
      %v2449 = vrot.slane %v2447, 5
      %v2450 = vsel %vm501, %v2445, %v2449
      %v2452 = vshrl.u32 %v2399, 16
      %v2454 = vrot.slane %v2452, 4
      %v2455 = vshll.u32 %v2399, 16
      %v2457 = vrot.slane %v2455, 5
      %v2458 = vor.u32 %v2454, %v2457
      %v2459 = vrot.slane %v2458, 4
      %v2461 = vshll.u32 %v2400, 16
      %v2463 = vrot.slane %v2461, 5
      %v2464 = vsel %vm501, %v2459, %v2463
      %v2466 = vshrl.u32 %v2401, 16
      %v2468 = vrot.slane %v2466, 4
      %v2469 = vshll.u32 %v2401, 16
      %v2471 = vrot.slane %v2469, 5
      %v2472 = vor.u32 %v2468, %v2471
      %v2473 = vrot.slane %v2472, 4
      %v2475 = vshll.u32 %v2402, 16
      %v2477 = vrot.slane %v2475, 5
      %v2478 = vsel %vm501, %v2473, %v2477
      %v2480 = vshrl.u32 %v2403, 16
      %v2482 = vrot.slane %v2480, 4
      %v2483 = vshll.u32 %v2403, 16
      %v2485 = vrot.slane %v2483, 5
      %v2486 = vor.u32 %v2482, %v2485
      %v2487 = vrot.slane %v2486, 4
      %v2489 = vshll.u32 %v2404, 16
      %v2491 = vrot.slane %v2489, 5
      %v2492 = vsel %vm501, %v2487, %v2491
      %v2494 = vshrl.u32 %v2405, 16
      %v2496 = vrot.slane %v2494, 4
      %v2497 = vshll.u32 %v2405, 16
      %v2499 = vrot.slane %v2497, 5
      %v2500 = vor.u32 %v2496, %v2499
      %v2501 = vrot.slane %v2500, 4
      %v2503 = vshll.u32 %v2406, 16
      %v2505 = vrot.slane %v2503, 5
      %v2506 = vsel %vm501, %v2501, %v2505
      %v2508 = vshrl.u32 %v2407, 16
      %v2510 = vrot.slane %v2508, 4
      %v2511 = vshll.u32 %v2407, 16
      %v2513 = vrot.slane %v2511, 5
      %v2514 = vor.u32 %v2510, %v2513
      %v2515 = vrot.slane %v2514, 4
      %v2517 = vshll.u32 %v2408, 16
      %v2519 = vrot.slane %v2517, 5
      %v2520 = vsel %vm501, %v2515, %v2519
      %s2521 = scalar_lea.vmem %s4, 448
      %v2522 = vld [vmem:[%s2521] sm:$0xf]
      %v2523 = vld [vmem:[%s2521 + $0x4] sm:$0xf]
      %v2524 = vld [vmem:[%s2521 + $0x8] sm:$0xf]
      %v2525 = vld [vmem:[%s2521 + $0xc] sm:$0xf]
      %v2526 = vld [vmem:[%s2521 + $0x10] sm:$0xf]
      %v2527 = vld [vmem:[%s2521 + $0x14] sm:$0xf]
      %v2528 = vld [vmem:[%s2521 + $0x18] sm:$0xf]
      %v2529 = vld [vmem:[%s2521 + $0x1c] sm:$0xf]
      %v2530 = vld [vmem:[%s2521 + $0x20] sm:$0xf]
      %v2531 = vld [vmem:[%s2521 + $0x24] sm:$0xf]
      %v2532 = vld [vmem:[%s2521 + $0x28] sm:$0xf]
      %v2533 = vld [vmem:[%s2521 + $0x2c] sm:$0xf]
      %v2534 = vld [vmem:[%s2521 + $0x30] sm:$0xf]
      %v2535 = vld [vmem:[%s2521 + $0x34] sm:$0xf]
      %v2536 = vld [vmem:[%s2521 + $0x38] sm:$0xf]
      %v2537 = vld [vmem:[%s2521 + $0x3c] sm:$0xf]
      %v2538 = vunpack.c.l.b16 %v2422
      %v2539 = vunpack.c.l.b16 %v2436
      %v2540 = vunpack.c.l.b16 %v2450
      %v2541 = vunpack.c.l.b16 %v2464
      %v2542 = vunpack.c.l.b16 %v2478
      %v2543 = vunpack.c.l.b16 %v2492
      %v2544 = vunpack.c.l.b16 %v2506
      %v2545 = vunpack.c.l.b16 %v2520
      %v2546 = vpack.c.b16 %v2539, %v2538
      %v2547 = vpack.c.b16 %v2541, %v2540
      %v2548 = vpack.c.b16 %v2543, %v2542
      %v2549 = vpack.c.b16 %v2545, %v2544
      %v2570 = vunpack.c.l.b16 %v2522
      %v2571 = vunpack.c.l.b16 %v2523
      %v2572 = vunpack.c.l.b16 %v2524
      %v2573 = vunpack.c.l.b16 %v2525
      %v2574 = vunpack.c.l.b16 %v2526
      %v2575 = vunpack.c.l.b16 %v2527
      %v2576 = vunpack.c.l.b16 %v2528
      %v2577 = vunpack.c.l.b16 %v2529
      %v2578 = vunpack.c.l.b16 %v2530
      %v2579 = vunpack.c.l.b16 %v2531
      %v2580 = vunpack.c.l.b16 %v2532
      %v2581 = vunpack.c.l.b16 %v2533
      %v2582 = vunpack.c.l.b16 %v2534
      %v2583 = vunpack.c.l.b16 %v2535
      %v2584 = vunpack.c.l.b16 %v2536
      %v2585 = vunpack.c.l.b16 %v2537
      %v2586 = vpack.c.b16 %v2571, %v2570
      %v2587 = vpack.c.b16 %v2573, %v2572
      %v2588 = vpack.c.b16 %v2575, %v2574
      %v2589 = vpack.c.b16 %v2577, %v2576
      %v2590 = vpack.c.b16 %v2579, %v2578
      %v2591 = vpack.c.b16 %v2581, %v2580
      %v2592 = vpack.c.b16 %v2583, %v2582
      %v2593 = vpack.c.b16 %v2585, %v2584
      %2602 = vmatprep.subr.bf16.mxu0 0
      %2603 = vmatpush1.bf16.msra.mxu0 %v2593
      %2604 = vmatprep.subr.bf16.mxu0 0
      %2605 = vmatpush1.bf16.msra.mxu0 %v2592
      %2606 = vmatprep.subr.bf16.mxu0 0
      %2607 = vmatpush1.bf16.msra.mxu0 %v2591
      %2608 = vmatprep.subr.bf16.mxu0 0
      %2609 = vmatpush1.bf16.msra.mxu0 %v2590
      %2610 = vmatprep.subr.bf16.mxu0 0
      %2611 = vmatpush1.bf16.msra.mxu0 %v2589
      %2612 = vmatprep.subr.bf16.mxu0 0
      %2613 = vmatpush1.bf16.msra.mxu0 %v2588
      %2614 = vmatprep.subr.bf16.mxu0 0
      %2615 = vmatpush1.bf16.msra.mxu0 %v2587
      %2616 = vmatprep.subr.bf16.mxu0 0
      %2617 = vmatpush1.bf16.msra.mxu0 %v2586
      %2618 = vmatprep.subr.bf16.mxu0 0
      %2619 = vmatpush2.bf16.msra.mxu0 0
      %2620 = vmatprep.subr.bf16.mxu0 0
      %2621 = vmatpush2.bf16.msra.mxu0 0
      %2622 = vmatprep.subr.bf16.mxu0 0
      %2623 = vmatpush2.bf16.msra.mxu0 0
      %2624 = vmatprep.subr.bf16.mxu0 0
      %2625 = vmatpush2.bf16.msra.mxu0 0
      %2626 = vmatprep.subr.bf16.mxu0 0
      %2627 = vmatpush2.bf16.msra.mxu0 0
      %2628 = vmatprep.subr.bf16.mxu0 0
      %2629 = vmatpush2.bf16.msra.mxu0 0
      %2630 = vmatprep.subr.bf16.mxu0 0
      %2631 = vmatpush2.bf16.msra.mxu0 0
      %2632 = vmatprep.subr.bf16.mxu0 0
      %2633 = vmatpush2.bf16.msra.mxu0 0
      %2634 = vmatprep.mubr.bf16.mxu0 0
      %2635 = vmatmul.mubr.bf16.gmra.mxu0 %v2546
      %v2636 = vpop.f32.mrf.mxu0
      %v2637 = vadd.f32 0.0, %v2636
      %v2638 = vpop.f32.mrf.mxu0
      %v2639 = vpop.f32.mrf.mxu0
      %v2640 = vadd.f32 0.0, %v2639
      %v2641 = vpop.f32.mrf.mxu0
      %2642 = vmatprep.mubr.bf16.mxu0 0
      %2643 = vmatmul.mubr.bf16.gmra.mxu0 %v2547
      %v2644 = vpop.f32.mrf.mxu0
      %v2645 = vadd.f32 0.0, %v2644
      %v2646 = vpop.f32.mrf.mxu0
      %v2647 = vpop.f32.mrf.mxu0
      %v2648 = vadd.f32 0.0, %v2647
      %v2649 = vpop.f32.mrf.mxu0
      %2650 = vmatprep.mubr.bf16.mxu0 0
      %2651 = vmatmul.mubr.bf16.gmra.mxu0 %v2548
      %v2652 = vpop.f32.mrf.mxu0
      %v2653 = vadd.f32 0.0, %v2652
      %v2654 = vpop.f32.mrf.mxu0
      %v2655 = vpop.f32.mrf.mxu0
      %v2656 = vadd.f32 0.0, %v2655
      %v2657 = vpop.f32.mrf.mxu0
      %2658 = vmatprep.mubr.bf16.mxu0 0
      %2659 = vmatmul.mubr.bf16.gmra.mxu0 %v2549
      %v2660 = vpop.f32.mrf.mxu0
      %v2661 = vadd.f32 0.0, %v2660
      %v2662 = vpop.f32.mrf.mxu0
      %v2663 = vpop.f32.mrf.mxu0
      %v2664 = vadd.f32 0.0, %v2663
      %v2665 = vpop.f32.mrf.mxu0
      %2666 = vdwg.mxu0
      %v2667 = vadd.f32 %v2257, %v2637
      %v2668 = vadd.f32 %v2258, %v2640
      %v2669 = vadd.f32 %v2259, %v2645
      %v2670 = vadd.f32 %v2260, %v2648
      %v2671 = vadd.f32 %v2261, %v2653
      %v2672 = vadd.f32 %v2262, %v2656
      %v2673 = vadd.f32 %v2263, %v2661
      %v2674 = vadd.f32 %v2264, %v2664
      %v2675 = vld [vmem:[%s2046] sm:$0xe]
      %v2676 = vld [vmem:[%s2046 + $0x8] sm:$0xe]
      %v2677 = vld [vmem:[%s2046 + $0x10] sm:$0xe]
      %v2678 = vld [vmem:[%s2046 + $0x18] sm:$0xe]
      %v2679 = vld [vmem:[%s2046 + $0x20] sm:$0xe]
      %v2680 = vld [vmem:[%s2046 + $0x28] sm:$0xe]
      %v2681 = vld [vmem:[%s2046 + $0x30] sm:$0xe]
      %v2682 = vld [vmem:[%s2046 + $0x38] sm:$0xe]
      %v2683 = vunpack.c.l.bf16 %v2675
      %v2684 = vunpack.c.l.bf16 %v2676
      %v2685 = vunpack.c.l.bf16 %v2677
      %v2686 = vunpack.c.l.bf16 %v2678
      %v2687 = vunpack.c.l.bf16 %v2679
      %v2688 = vunpack.c.l.bf16 %v2680
      %v2689 = vunpack.c.l.bf16 %v2681
      %v2690 = vunpack.c.l.bf16 %v2682
      %v2691 = vmul.f32 %v2683, %v328
      %v2692 = vmul.f32 %v2684, %v328
      %v2693 = vmul.f32 %v2685, %v328
      %v2694 = vmul.f32 %v2686, %v328
      %v2695 = vmul.f32 %v2687, %v328
      %v2696 = vmul.f32 %v2688, %v328
      %v2697 = vmul.f32 %v2689, %v328
      %v2698 = vmul.f32 %v2690, %v328
      %v2699 = vadd.f32 %v2691, %v342
      %v2700 = vadd.f32 %v2692, %v342
      %v2701 = vadd.f32 %v2693, %v342
      %v2702 = vadd.f32 %v2694, %v342
      %v2703 = vadd.f32 %v2695, %v342
      %v2704 = vadd.f32 %v2696, %v342
      %v2705 = vadd.f32 %v2697, %v342
      %v2706 = vadd.f32 %v2698, %v342
      %v2707 = vmax.f32 %v2699, 0.0
      %v2708 = vmax.f32 %v2700, 0.0
      %v2709 = vmax.f32 %v2701, 0.0
      %v2710 = vmax.f32 %v2702, 0.0
      %v2711 = vmax.f32 %v2703, 0.0
      %v2712 = vmax.f32 %v2704, 0.0
      %v2713 = vmax.f32 %v2705, 0.0
      %v2714 = vmax.f32 %v2706, 0.0
      %v2731 = vrot.slane %v2707, 2
      %v2732 = vrot.slane %v2330, 2
      %v2733 = vsel %vm956, %v2731, %v2732
      %v2734 = vrot.slane %v2708, 2
      %v2735 = vrot.slane %v2332, 2
      %v2736 = vsel %vm956, %v2734, %v2735
      %v2737 = vrot.slane %v2709, 2
      %v2738 = vrot.slane %v2334, 2
      %v2739 = vsel %vm956, %v2737, %v2738
      %v2740 = vrot.slane %v2710, 2
      %v2741 = vrot.slane %v2336, 2
      %v2742 = vsel %vm956, %v2740, %v2741
      %v2743 = vrot.slane %v2711, 2
      %v2744 = vrot.slane %v2338, 2
      %v2745 = vsel %vm956, %v2743, %v2744
      %v2746 = vrot.slane %v2712, 2
      %v2747 = vrot.slane %v2340, 2
      %v2748 = vsel %vm956, %v2746, %v2747
      %v2749 = vrot.slane %v2713, 2
      %v2750 = vrot.slane %v2342, 2
      %v2751 = vsel %vm956, %v2749, %v2750
      %v2752 = vrot.slane %v2714, 2
      %v2753 = vrot.slane %v2344, 2
      %v2754 = vsel %vm956, %v2752, %v2753
      %v2763 = vsel %vm939, %v2733, 0.0
      %v2764 = vsel %vm939, %v2736, 0.0
      %v2765 = vsel %vm939, %v2739, 0.0
      %v2766 = vsel %vm939, %v2742, 0.0
      %v2767 = vsel %vm939, %v2745, 0.0
      %v2768 = vsel %vm939, %v2748, 0.0
      %v2769 = vsel %vm939, %v2751, 0.0
      %v2770 = vsel %vm938, %v2754, 0.0
      %v2771 = vpack.c.bf16 %v2763, %v2763
      %v2772 = vpack.c.bf16 %v2764, %v2764
      %v2773 = vpack.c.bf16 %v2765, %v2765
      %v2774 = vpack.c.bf16 %v2766, %v2766
      %v2775 = vpack.c.bf16 %v2767, %v2767
      %v2776 = vpack.c.bf16 %v2768, %v2768
      %v2777 = vpack.c.bf16 %v2769, %v2769
      %v2778 = vpack.c.bf16 %v2770, %v2770
      %s2779 = scalar_lea.vmem %s4, 512
      %v2780 = vld [vmem:[%s2779] sm:$0xf]
      %v2781 = vld [vmem:[%s2779 + $0x4] sm:$0xf]
      %v2782 = vld [vmem:[%s2779 + $0x8] sm:$0xf]
      %v2783 = vld [vmem:[%s2779 + $0xc] sm:$0xf]
      %v2784 = vld [vmem:[%s2779 + $0x10] sm:$0xf]
      %v2785 = vld [vmem:[%s2779 + $0x14] sm:$0xf]
      %v2786 = vld [vmem:[%s2779 + $0x18] sm:$0xf]
      %v2787 = vld [vmem:[%s2779 + $0x1c] sm:$0xf]
      %v2788 = vld [vmem:[%s2779 + $0x20] sm:$0xf]
      %v2789 = vld [vmem:[%s2779 + $0x24] sm:$0xf]
      %v2790 = vld [vmem:[%s2779 + $0x28] sm:$0xf]
      %v2791 = vld [vmem:[%s2779 + $0x2c] sm:$0xf]
      %v2792 = vld [vmem:[%s2779 + $0x30] sm:$0xf]
      %v2793 = vld [vmem:[%s2779 + $0x34] sm:$0xf]
      %v2794 = vld [vmem:[%s2779 + $0x38] sm:$0xf]
      %v2795 = vld [vmem:[%s2779 + $0x3c] sm:$0xf]
      %v2804 = vunpack.c.l.b16 %v2771
      %v2805 = vunpack.c.l.b16 %v2772
      %v2806 = vunpack.c.l.b16 %v2773
      %v2807 = vunpack.c.l.b16 %v2774
      %v2808 = vunpack.c.l.b16 %v2775
      %v2809 = vunpack.c.l.b16 %v2776
      %v2810 = vunpack.c.l.b16 %v2777
      %v2811 = vunpack.c.l.b16 %v2778
      %v2812 = vpack.c.b16 %v2805, %v2804
      %v2813 = vpack.c.b16 %v2807, %v2806
      %v2814 = vpack.c.b16 %v2809, %v2808
      %v2815 = vpack.c.b16 %v2811, %v2810
      %v2836 = vunpack.c.l.b16 %v2780
      %v2837 = vunpack.c.l.b16 %v2781
      %v2838 = vunpack.c.l.b16 %v2782
      %v2839 = vunpack.c.l.b16 %v2783
      %v2840 = vunpack.c.l.b16 %v2784
      %v2841 = vunpack.c.l.b16 %v2785
      %v2842 = vunpack.c.l.b16 %v2786
      %v2843 = vunpack.c.l.b16 %v2787
      %v2844 = vunpack.c.l.b16 %v2788
      %v2845 = vunpack.c.l.b16 %v2789
      %v2846 = vunpack.c.l.b16 %v2790
      %v2847 = vunpack.c.l.b16 %v2791
      %v2848 = vunpack.c.l.b16 %v2792
      %v2849 = vunpack.c.l.b16 %v2793
      %v2850 = vunpack.c.l.b16 %v2794
      %v2851 = vunpack.c.l.b16 %v2795
      %v2852 = vpack.c.b16 %v2837, %v2836
      %v2853 = vpack.c.b16 %v2839, %v2838
      %v2854 = vpack.c.b16 %v2841, %v2840
      %v2855 = vpack.c.b16 %v2843, %v2842
      %v2856 = vpack.c.b16 %v2845, %v2844
      %v2857 = vpack.c.b16 %v2847, %v2846
      %v2858 = vpack.c.b16 %v2849, %v2848
      %v2859 = vpack.c.b16 %v2851, %v2850
      %2868 = vmatprep.subr.bf16.mxu0 0
      %2869 = vmatpush1.bf16.msra.mxu0 %v2859
      %2870 = vmatprep.subr.bf16.mxu0 0
      %2871 = vmatpush1.bf16.msra.mxu0 %v2858
      %2872 = vmatprep.subr.bf16.mxu0 0
      %2873 = vmatpush1.bf16.msra.mxu0 %v2857
      %2874 = vmatprep.subr.bf16.mxu0 0
      %2875 = vmatpush1.bf16.msra.mxu0 %v2856
      %2876 = vmatprep.subr.bf16.mxu0 0
      %2877 = vmatpush1.bf16.msra.mxu0 %v2855
      %2878 = vmatprep.subr.bf16.mxu0 0
      %2879 = vmatpush1.bf16.msra.mxu0 %v2854
      %2880 = vmatprep.subr.bf16.mxu0 0
      %2881 = vmatpush1.bf16.msra.mxu0 %v2853
      %2882 = vmatprep.subr.bf16.mxu0 0
      %2883 = vmatpush1.bf16.msra.mxu0 %v2852
      %2884 = vmatprep.subr.bf16.mxu0 0
      %2885 = vmatpush2.bf16.msra.mxu0 0
      %2886 = vmatprep.subr.bf16.mxu0 0
      %2887 = vmatpush2.bf16.msra.mxu0 0
      %2888 = vmatprep.subr.bf16.mxu0 0
      %2889 = vmatpush2.bf16.msra.mxu0 0
      %2890 = vmatprep.subr.bf16.mxu0 0
      %2891 = vmatpush2.bf16.msra.mxu0 0
      %2892 = vmatprep.subr.bf16.mxu0 0
      %2893 = vmatpush2.bf16.msra.mxu0 0
      %2894 = vmatprep.subr.bf16.mxu0 0
      %2895 = vmatpush2.bf16.msra.mxu0 0
      %2896 = vmatprep.subr.bf16.mxu0 0
      %2897 = vmatpush2.bf16.msra.mxu0 0
      %2898 = vmatprep.subr.bf16.mxu0 0
      %2899 = vmatpush2.bf16.msra.mxu0 0
      %2900 = vmatprep.mubr.bf16.mxu0 0
      %2901 = vmatmul.mubr.bf16.gmra.mxu0 %v2812
      %v2902 = vpop.f32.mrf.mxu0
      %v2903 = vadd.f32 0.0, %v2902
      %v2904 = vpop.f32.mrf.mxu0
      %v2905 = vpop.f32.mrf.mxu0
      %v2906 = vadd.f32 0.0, %v2905
      %v2907 = vpop.f32.mrf.mxu0
      %2908 = vmatprep.mubr.bf16.mxu0 0
      %2909 = vmatmul.mubr.bf16.gmra.mxu0 %v2813
      %v2910 = vpop.f32.mrf.mxu0
      %v2911 = vadd.f32 0.0, %v2910
      %v2912 = vpop.f32.mrf.mxu0
      %v2913 = vpop.f32.mrf.mxu0
      %v2914 = vadd.f32 0.0, %v2913
      %v2915 = vpop.f32.mrf.mxu0
      %2916 = vmatprep.mubr.bf16.mxu0 0
      %2917 = vmatmul.mubr.bf16.gmra.mxu0 %v2814
      %v2918 = vpop.f32.mrf.mxu0
      %v2919 = vadd.f32 0.0, %v2918
      %v2920 = vpop.f32.mrf.mxu0
      %v2921 = vpop.f32.mrf.mxu0
      %v2922 = vadd.f32 0.0, %v2921
      %v2923 = vpop.f32.mrf.mxu0
      %2924 = vmatprep.mubr.bf16.mxu0 0
      %2925 = vmatmul.mubr.bf16.gmra.mxu0 %v2815
      %v2926 = vpop.f32.mrf.mxu0
      %v2927 = vadd.f32 0.0, %v2926
      %v2928 = vpop.f32.mrf.mxu0
      %v2929 = vpop.f32.mrf.mxu0
      %v2930 = vadd.f32 0.0, %v2929
      %v2931 = vpop.f32.mrf.mxu0
      %2932 = vdwg.mxu0
      %v2933 = vadd.f32 %v2667, %v2903
      %v2934 = vadd.f32 %v2668, %v2906
      %v2935 = vadd.f32 %v2669, %v2911
      %v2936 = vadd.f32 %v2670, %v2914
      %v2937 = vadd.f32 %v2671, %v2919
      %v2938 = vadd.f32 %v2672, %v2922
      %v2939 = vadd.f32 %v2673, %v2927
      %v2940 = vadd.f32 %v2674, %v2930
      %v2941 = vadd.f32 %v2933, %v2934
      %v2942 = vadd.f32 %v2941, %v2935
      %v2943 = vadd.f32 %v2942, %v2936
      %v2944 = vadd.f32 %v2943, %v2937
      %v2945 = vadd.f32 %v2944, %v2938
      %v2946 = vadd.f32 %v2945, %v2939
      %v2947 = vadd.f32 %v2946, %v2940
      %v2948 = vrot.slane %v2947, 4
      %v2949 = vadd.f32 %v2947, %v2948
      %v2950 = vrot.slane %v2949, 2
      %v2951 = vadd.f32 %v2949, %v2950
      %v2952 = vrot.slane %v2951, 1
      %v2953 = vadd.f32 %v2951, %v2952
      %v2954 = vmul.f32 %v2933, %v2933
      %v2955 = vmul.f32 %v2934, %v2934
      %v2956 = vmul.f32 %v2935, %v2935
      %v2957 = vmul.f32 %v2936, %v2936
      %v2958 = vmul.f32 %v2937, %v2937
      %v2959 = vmul.f32 %v2938, %v2938
      %v2960 = vmul.f32 %v2939, %v2939
      %v2961 = vmul.f32 %v2940, %v2940
      %v2962 = vadd.f32 %v2954, %v2955
      %v2963 = vadd.f32 %v2962, %v2956
      %v2964 = vadd.f32 %v2963, %v2957
      %v2965 = vadd.f32 %v2964, %v2958
      %v2966 = vadd.f32 %v2965, %v2959
      %v2967 = vadd.f32 %v2966, %v2960
      %v2968 = vadd.f32 %v2967, %v2961
      %v2969 = vrot.slane %v2968, 4
      %v2970 = vadd.f32 %v2968, %v2969
      %v2971 = vrot.slane %v2970, 2
      %v2972 = vadd.f32 %v2970, %v2971
      %v2973 = vrot.slane %v2972, 1
      %v2974 = vadd.f32 %v2972, %v2973
      %vm2975 = vcmp.eq.s32.totalorder %v307, 0
      %vm2976 = vcmp.eq.s32.totalorder %v307, 1
      %v2977 = vsel %vm2976, %v2974, 0.0
      %v2978 = vsel %vm2975, %v2953, %v2977
      %2979 = vst [vmem:[%s262] sm:$0xff] %v2978
      %v2980 = vpack.c.bf16 %v2934, %v2933
      %v2981 = vpack.c.bf16 %v2936, %v2935
      %v2982 = vpack.c.bf16 %v2938, %v2937
      %v2983 = vpack.c.bf16 %v2940, %v2939
      %v2988 = vunpack.c.l.b16 %v2980
      %v2989 = vunpack.c.h.b16 %v2980
      %v2990 = vunpack.c.l.b16 %v2981
      %v2991 = vunpack.c.h.b16 %v2981
      %v2992 = vunpack.c.l.b16 %v2982
      %v2993 = vunpack.c.h.b16 %v2982
      %v2994 = vunpack.c.l.b16 %v2983
      %v2995 = vunpack.c.h.b16 %v2983
      %v2996 = vpack.c.b16 %v2988, %v2988
      %v2997 = vpack.c.b16 %v2989, %v2989
      %v2998 = vpack.c.b16 %v2990, %v2990
      %v2999 = vpack.c.b16 %v2991, %v2991
      %v3000 = vpack.c.b16 %v2992, %v2992
      %v3001 = vpack.c.b16 %v2993, %v2993
      %v3002 = vpack.c.b16 %v2994, %v2994
      %v3003 = vpack.c.b16 %v2995, %v2995
      %3012 = vst [vmem:[%s258] sm:$0xf] %v2996
      %3013 = vst [vmem:[%s258 + $0x4] sm:$0xf] %v2997
      %3014 = vst [vmem:[%s258 + $0x8] sm:$0xf] %v2998
      %3015 = vst [vmem:[%s258 + $0xc] sm:$0xf] %v2999
      %3016 = vst [vmem:[%s258 + $0x10] sm:$0xf] %v3000
      %3017 = vst [vmem:[%s258 + $0x14] sm:$0xf] %v3001
      %3018 = vst [vmem:[%s258 + $0x18] sm:$0xf] %v3002
      %3019 = vst [vmem:[%s258 + $0x1c] sm:$0xf] %v3003
      %p3020 = scmp.lt.s32.totalorder %s18, 1
      %s3021 = scalar_select %p3020, %s18, 1
      %s3022 = smul.addr %s3021, 8
      %s3023 = smul.addr %s3022, 4
      %s3024 = scalar_lea.vmem %s5, %s3023
      %p3025 = scmp.lt.s32.totalorder %s18, 1
      %s3026 = scalar_select %p3025, %s18, 1
      %s3027 = smul.addr %s3026, 8
      %s3028 = scalar_lea.vmem %s6, %s3027
      // Predicated region
      $region41: #{basic_block_forward.4} parent=39 // pred_check
        %p3029 = pneg %p146
      $region42: #{basic_block_forward.4} parent=39 // pred_check_branch
        %3031 = sbr.rel (%p3029) target = $region44
      $region43: #{basic_block_forward.4} parent=39 // pred_region
        _
      $region44: #{basic_block_forward.4} parent=39 // pred_fallthru
        _
      // Predicated region
      $region45: #{basic_block_forward.4} parent=39 // pred_check
        %p3032 = pneg %p172
      $region46: #{basic_block_forward.4} parent=39 // pred_check_branch
        %3034 = sbr.rel (%p3032) target = $region48
      $region47: #{basic_block_forward.4} parent=39 // pred_region
        _
      $region48: #{basic_block_forward.4} parent=39 // pred_fallthru
        _
    $region40: #{basic_block_forward.4} parent=5 // pred_fallthru
      _
    %p3035 = scmp.le.s32.totalorder 2, %s13
    // Predicated region
    $region49: #{basic_block_forward.4} parent=5 // pred_check
      %p3036 = pneg %p3035
    $region50: #{basic_block_forward.4} parent=5 // pred_check_branch
      %3038 = sbr.rel (%p3036) target = $region52
    $region51: #{basic_block_forward.4} parent=5 // pred_region
      %s3039 = ssub.s32 %s13, 2
      // Predicated region
      $region53: #{basic_block_forward.4} parent=51 // pred_check
        %p3040 = pneg %p152
      $region54: #{basic_block_forward.4} parent=51 // pred_check_branch
        %3042 = sbr.rel (%p3040) target = $region56
      $region55: #{basic_block_forward.4} parent=51 // pred_region
        %p3043 = scmp.lt.s32.totalorder %s19, 1
        %s3044 = scalar_select %p3043, %s19, 1
        %s3045 = smul.addr %s3044, 8
        %s3046 = smul.addr %s3045, 4
        %s3047 = scalar_lea.vmem %s5, %s3046
      $region56: #{basic_block_forward.4} parent=51 // pred_fallthru
        _
      // Predicated region
      $region57: #{basic_block_forward.4} parent=51 // pred_check
        %p3048 = pneg %p178
      $region58: #{basic_block_forward.4} parent=51 // pred_check_branch
        %3050 = sbr.rel (%p3048) target = $region60
      $region59: #{basic_block_forward.4} parent=51 // pred_region
        %p3051 = scmp.lt.s32.totalorder %s19, 1
        %s3052 = scalar_select %p3051, %s19, 1
        %s3053 = smul.addr %s3052, 8
        %s3054 = scalar_lea.vmem %s6, %s3053
      $region60: #{basic_block_forward.4} parent=51 // pred_fallthru
        _
    $region52: #{basic_block_forward.4} parent=5 // pred_fallthru
      _
  $region6: #{basic_block_forward.4} parent=0 // loop_footer
    %s17 = sadd.s32 1, %s13
  $region7: #{basic_block_forward.4} parent=0 // loop_footer_branch
    %12 = sbr.rel target = $region3
  $region8: #{basic_block_forward.4} parent=0 // loop_exit
    _

</llo_original>
